<compile_context>
chip_gen: v6e
topology: v6e:2x2x1
jax: 0.10.0
libtpu: 0.0.40
codegen_flags: <defaults>
</compile_context>

<pallas_src>
import functools
import math

import jax
import jax.numpy as jnp
from jax.experimental import pallas as pl
from jax.experimental.pallas import tpu as pltpu

_SQRT1_2 = 0.7071067811865476   # 1/sqrt(2) for exact (erf) GELU
_NEG_INF = -1e30

# ---------------------------------------------------------------------------------
# Packed per-block parameter layout (indices into the stacked arrays)
# ---------------------------------------------------------------------------------
_NM = 17   # number of (C, C) matrices per block
_NV = 24   # number of (1, C) vectors per block
# (C, C) matrices
_M_WQ, _M_WK, _M_WV, _M_WO, _M_PW = 0, 1, 2, 3, 4
_M_MIX_L1 = (5, 6)            # mix1 / mix2 pointwise "linear1"
_M_FFN_W1, _M_FFN_W2 = 7, 8
_M_MIX_L2 = (9, 13)           # base index of the 4 per-slot (C, C) slices of "linear2"
# (1, C) vectors (gamma at index i, beta at i + 1 for the layernorms)
_V_LN1, _V_LN2, _V_LN3, _V_LN4 = 0, 2, 4, 6
_V_LNQ, _V_LNK, _V_LNV, _V_LNKV = 8, 10, 12, 14
_V_DWB, _V_PWB = 16, 17
_V_MIX_L1B = (18, 20)
_V_MIX_L2B = (19, 21)
_V_FFN_B1, _V_FFN_B2 = 22, 23


# ---------------------------------------------------------------------------------
# Fused encoder kernel (one pallas_call for the whole ViTEncoderBlock stack)
# ---------------------------------------------------------------------------------
def _make_encoder_kernel(L, C, H, NB):
    d = C // H
    Lred = ((L - 1) + 2 * 3 - 7) // 4 + 1        # DSconv(k=7, stride=4, pad=3) length
    Lkv = 1 + Lred                               # cls token + reduced tokens
    KV = 8 * ((Lkv + 7) // 8)                    # pad kv rows to a sublane multiple
    scale = 1.0 / math.sqrt(d)
    f32 = jnp.float32

    def kernel(x_ref, mats_ref, vecs_ref, dww_ref, cw_ref, cb_ref, o_ref):
        def mat(i):
            return mats_ref[i].astype(f32)                         # (C, C)

        def vec(i):
            return vecs_ref[i].astype(f32)                         # (1, C)

        def ln(z, vi):                                             # LayerNorm(eps=1e-5)
            mu = jnp.mean(z, axis=-1, keepdims=True)
            var = jnp.mean((z - mu) ** 2, axis=-1, keepdims=True)
            return (z - mu) * jax.lax.rsqrt(var + 1e-5) * vec(vi) + vec(vi + 1)

        def gelu(z):                                               # exact (erf) GELU
            return 0.5 * z * (1.0 + jax.lax.erf(z * _SQRT1_2))

        def mm(a, b):
            return jnp.dot(a, b, preferred_element_type=f32)

        # ---- constant helper tensors (built once, shared by all blocks) ----------
        rowL = jax.lax.broadcasted_iota(jnp.int32, (L, 1), 0)
        is_cls = rowL == 0

        # shift matrices for the MixFFN k=3 "same" depthwise conv:
        #   (sh_m1 @ a)[t] = a[t-1],  (sh_p1 @ a)[t] = a[t+1]   (zero outside)
        rr = jax.lax.broadcasted_iota(jnp.int32, (L, L), 0)
        cc = jax.lax.broadcasted_iota(jnp.int32, (L, L), 1)
        sh_m1 = (cc == rr - 1).astype(f32)
        sh_p1 = (cc == rr + 1).astype(f32)

        # gather matrices for the DSconv k=7 / stride=4 / pad=3 depthwise conv.
        #   (gath[k] @ h)[t] = token[4*(t-1) + k - 3]  for t in [1, Lred], else 0
        # (token r lives at row r+1 of h; out-of-range taps hit the zero padding)
        tK = jax.lax.broadcasted_iota(jnp.int32, (KV, L), 0)
        jK = jax.lax.broadcasted_iota(jnp.int32, (KV, L), 1)
        t_ok = (tK >= 1) & (tK <= Lred)
        gath = [((jK == 4 * tK + k - 6) & (jK >= 1) & t_ok).astype(f32)
                for k in range(7)]

        rowKV = jax.lax.broadcasted_iota(jnp.int32, (KV, 1), 0)
        colKV = jax.lax.broadcasted_iota(jnp.int32, (1, KV), 1)
        attn_bias = jnp.where(colKV < Lkv, 0.0, _NEG_INF).astype(f32)   # (1, KV)

        chan = jax.lax.broadcasted_iota(jnp.int32, (1, C), 1)
        head_masks = [((chan >= hh * d) & (chan < (hh + 1) * d)).astype(f32)
                      for hh in range(H)]

        # --------------------------------------------------------------------------
        def mhsa(h, blk):
            """MultiHeadSelfAttention with DSconv KV reducer; h = ln1(x), shape (L, C)."""
            mb, vb = blk * _NM, blk * _NV
            # depthwise conv (k=7, stride=4) emitted directly at rows 1..Lred of a
            # KV-row slab; row 0 is reserved for the cls token, extra rows are masked.
            red = vec(vb + _V_DWB)
            for k in range(7):
                red = red + dww_ref[blk * 7 + k].astype(f32) * mm(gath[k], h)
            red = mm(red, mat(mb + _M_PW)) + vec(vb + _V_PWB)      # pointwise 1x1 conv
            red = ln(red, vb + _V_LNKV)
            kv = jnp.where(rowKV == 0, h[0:1, :], red)             # (KV, C)

            q = ln(mm(h, mat(mb + _M_WQ)), vb + _V_LNQ) * scale
            kk = ln(mm(kv, mat(mb + _M_WK)), vb + _V_LNK)
            vv = ln(mm(kv, mat(mb + _M_WV)), vb + _V_LNV)

            ctx = jnp.zeros((L, C), f32)
            for hm in head_masks:                                  # all heads, one kernel
                s = jax.lax.dot_general(q * hm, kk, (((1,), (1,)), ((), ())),
                                        preferred_element_type=f32) + attn_bias
                s = s - jnp.max(s, axis=-1, keepdims=True)
                p = jnp.exp(s)
                p = p / jnp.sum(p, axis=-1, keepdims=True)
                ctx = ctx + mm(p, vv * hm)
            return mm(ctx, mat(mb + _M_WO))

        def mixffn(z, mi, blk):
            """MixFFN applied to the already layer-normed input z; cls row passes through."""
            mb, vb = blk * _NM, blk * _NV
            cwb = (blk * 2 + mi) * 4
            a = mm(z, mat(mb + _M_MIX_L1[mi])) + vec(vb + _V_MIX_L1B[mi])
            a = jnp.where(is_cls, 0.0, a)        # cls row acts as the conv's zero padding
            a_m1 = mm(sh_m1, a)
            a_p1 = mm(sh_p1, a)
            acc = jnp.zeros((L, C), f32)
            for s in range(4):                   # 4 output channels per group (groups=C)
                w3 = cw_ref[cwb + s].astype(f32)                   # (3, C)
                b3 = cb_ref[cwb + s].astype(f32)                   # (1, C)
                conv = b3 + w3[0:1, :] * a_m1 + w3[1:2, :] * a + w3[2:3, :] * a_p1
                acc = acc + mm(gelu(conv), mat(mb + _M_MIX_L2[mi] + s))
            acc = acc + vec(vb + _V_MIX_L2B[mi])
            return jnp.where(is_cls, z, acc)

        x = x_ref[...].astype(f32)                                 # (L, C)
        for blk in range(NB):
            vb, mb = blk * _NV, blk * _NM
            y = mhsa(ln(x, vb + _V_LN1), blk) + x
            m1 = mixffn(ln(y, vb + _V_LN2), 0, blk) + y
            m2 = mixffn(ln(m1, vb + _V_LN3), 1, blk) + m1
            # NOTE: matches the PyTorch reference exactly -- ln4 is applied to m1 (the
            # FIRST MixFFN output) while the residual is m2.
            f = ln(m1, vb + _V_LN4)
            f = gelu(mm(f, mat(mb + _M_FFN_W1)) + vec(vb + _V_FFN_B1))
            f = mm(f, mat(mb + _M_FFN_W2)) + vec(vb + _V_FFN_B2)
            x = f + m2
        o_ref[...] = x.astype(o_ref.dtype)

    return kernel


def vit_encoder_forward(x, packed, *, num_heads, block_num):
    """x: (B, L, C) float32; packed: output of pack_params()."""
    B, L, C = x.shape
    assert C % num_heads == 0
    mats, vecs, dww, cw, cb = packed
    kernel = _make_encoder_kernel(L, C, num_heads, block_num)

    def full(shape):
        return pl.BlockSpec(shape, lambda b: (0,) * len(shape))

    return pl.pallas_call(
        kernel,
        grid=(B,),
        in_specs=[
            pl.BlockSpec((None, L, C), lambda b: (b, 0, 0)),
            full(mats.shape),
            full(vecs.shape),
            full(dww.shape),
            full(cw.shape),
            full(cb.shape),
        ],
        out_specs=pl.BlockSpec((None, L, C), lambda b: (b, 0, 0)),
        out_shape=jax.ShapeDtypeStruct((B, L, C), x.dtype),
        compiler_params=pltpu.CompilerParams(dimension_semantics=("parallel",)),
    )(x, mats, vecs, dww, cw, cb)


# ---------------------------------------------------------------------------------
# Host-side parameter packing (torch-layout dicts -> a few stacked VMEM-friendly arrays)
# ---------------------------------------------------------------------------------
def pack_params(params, C):
    mats, vecs, dww, cw, cb = [], [], [], [], []
    for p in params:
        m, r = p["mhsa"], p["mhsa"]["reducer"]
        mats += [m["wq"], m["wk"], m["wv"], m["wo"], r["pw_w"],
                 p["mix1"]["l1_w"], p["mix2"]["l1_w"], p["ffn"]["w1"], p["ffn"]["w2"]]
        for name in ("mix1", "mix2"):
            l2 = p[name]["l2_w"]                          # (4C, C)
            mats += [l2[s::4, :] for s in range(4)]       # slot s: rows 4g+s
        vecs += [p["ln1_g"], p["ln1_b"], p["ln2_g"], p["ln2_b"],
                 p["ln3_g"], p["ln3_b"], p["ln4_g"], p["ln4_b"],
                 m["ln_q_g"], m["ln_q_b"], m["ln_k_g"], m["ln_k_b"],
                 m["ln_v_g"], m["ln_v_b"], m["ln_kv_g"], m["ln_kv_b"],
                 r["dw_b"], r["pw_b"],
                 p["mix1"]["l1_b"], p["mix1"]["l2_b"],
                 p["mix2"]["l1_b"], p["mix2"]["l2_b"],
                 p["ffn"]["b1"], p["ffn"]["b2"]]
        dww += [r["dw_w"][:, k] for k in range(7)]        # tap k, channels on lanes
        for name in ("mix1", "mix2"):
            w, b = p[name]["conv_w"], p[name]["conv_b"]   # (4C, 3), (4C,)
            for s in range(4):
                cw.append(w[s::4, :].T)                   # (3, C)
                cb.append(b[s::4])                        # (C,)
    mats = jnp.stack(mats).astype(jnp.float32)                                 # (NB*17, C, C)
    vecs = jnp.stack([v.reshape(1, C) for v in vecs]).astype(jnp.float32)      # (NB*24, 1, C)
    dww = jnp.stack([w.reshape(1, C) for w in dww]).astype(jnp.float32)        # (NB*7, 1, C)
    cw = jnp.stack(cw).astype(jnp.float32)                                     # (NB*8, 3, C)
    cb = jnp.stack([b.reshape(1, C) for b in cb]).astype(jnp.float32)          # (NB*8, 1, C)
    return mats, vecs, dww, cw, cb


# ---------------------------------------------------------------------------------
# Deterministic synthetic parameters (torch-equivalent shapes; linear weights stored
# as (in, out) == torch_weight.T so y = x @ w + b)
# ---------------------------------------------------------------------------------
class _KeyGen:
    def __init__(self, key):
        self._key = key

    def __call__(self):
        self._key, sub = jax.random.split(self._key)
        return sub


def _w(kg, shape, scale=0.05):
    return scale * jax.random.normal(kg(), shape, dtype=jnp.float32)


def init_block_params(kg, C):
    p = {}
    for name in ("ln1", "ln2", "ln3", "ln4"):
        p[name + "_g"] = 1.0 + _w(kg, (C,))
        p[name + "_b"] = _w(kg, (C,))
    p["mhsa"] = {
        "wq": _w(kg, (C, C)), "wk": _w(kg, (C, C)), "wv": _w(kg, (C, C)), "wo": _w(kg, (C, C)),
        "ln_q_g": 1.0 + _w(kg, (C,)), "ln_q_b": _w(kg, (C,)),
        "ln_k_g": 1.0 + _w(kg, (C,)), "ln_k_b": _w(kg, (C,)),
        "ln_v_g": 1.0 + _w(kg, (C,)), "ln_v_b": _w(kg, (C,)),
        "ln_kv_g": 1.0 + _w(kg, (C,)), "ln_kv_b": _w(kg, (C,)),
        "reducer": {
            "dw_w": _w(kg, (C, 7)), "dw_b": _w(kg, (C,)),     # depthwise Conv1d(C->C, k=7, s=4)
            "pw_w": _w(kg, (C, C)), "pw_b": _w(kg, (C,)),     # pointwise Conv1d(C->C, k=1)
        },
    }
    p["ffn"] = {"w1": _w(kg, (C, C)), "b1": _w(kg, (C,)),
                "w2": _w(kg, (C, C)), "b2": _w(kg, (C,))}
    for name in ("mix1", "mix2"):
        p[name] = {
            "l1_w": _w(kg, (C, C)), "l1_b": _w(kg, (C,)),              # Conv1d(C->C, k=1)
            "conv_w": _w(kg, (4 * C, 3)), "conv_b": _w(kg, (4 * C,)),  # Conv1d(C->4C, k=3, groups=C)
            "l2_w": _w(kg, (4 * C, C)), "l2_b": _w(kg, (C,)),          # Conv1d(4C->C, k=1)
        }
    return p


def init_params(key, C, block_num):
    kg = _KeyGen(key)
    return [init_block_params(kg, C) for _ in range(block_num)]


# ---------------------------------------------------------------------------------
# Pure-JAX reference of the PyTorch forward pass (eval mode), for in-script validation
# ---------------------------------------------------------------------------------
_HI = jax.lax.Precision.HIGHEST


def _ref_ln(z, g, b):
    mu = z.mean(-1, keepdims=True)
    var = ((z - mu) ** 2).mean(-1, keepdims=True)
    return (z - mu) / jnp.sqrt(var + 1e-5) * g + b


def _ref_gelu(z):
    return 0.5 * z * (1.0 + jax.lax.erf(z * _SQRT1_2))


def _ref_linear(x, w, b=None):
    y = jnp.einsum("...k,kn->...n", x, w, precision=_HI)
    return y if b is None else y + b


def _ref_dwconv1d(x_bcl, w, b, stride, pad):
    """torch Conv1d(groups=channels) on (B, C, L); w: (C, K), b: (C,)."""
    _, _, Lq = x_bcl.shape
    K = w.shape[1]
    xp = jnp.pad(x_bcl, ((0, 0), (0, 0), (pad, pad)))
    Lout = (Lq + 2 * pad - K) // stride + 1
    cols = [(xp[:, :, t * stride:t * stride + K] * w[None]).sum(-1) + b[None]
            for t in range(Lout)]
    return jnp.stack(cols, axis=-1)


def _ref_block(x, p, H):
    B, L, C = x.shape
    d = C // H
    m, r = p["mhsa"], p["mhsa"]["reducer"]

    def mhsa(h):
        cls_tok, tokens = h[:, :1, :], h[:, 1:, :]
        t_bcl = _ref_dwconv1d(jnp.transpose(tokens, (0, 2, 1)), r["dw_w"], r["dw_b"],
                              stride=4, pad=3)
        tokens = _ref_linear(jnp.transpose(t_bcl, (0, 2, 1)), r["pw_w"], r["pw_b"])
        tokens = _ref_ln(tokens, m["ln_kv_g"], m["ln_kv_b"])
        kv = jnp.concatenate([cls_tok, tokens], axis=1)
        q = _ref_ln(_ref_linear(h, m["wq"]), m["ln_q_g"], m["ln_q_b"])
        k = _ref_ln(_ref_linear(kv, m["wk"]), m["ln_k_g"], m["ln_k_b"])
        v = _ref_ln(_ref_linear(kv, m["wv"]), m["ln_v_g"], m["ln_v_b"])
        Lk = kv.shape[1]
        qh = q.reshape(B, L, H, d).transpose(0, 2, 1, 3)
        kh = k.reshape(B, Lk, H, d).transpose(0, 2, 1, 3)
        vh = v.reshape(B, Lk, H, d).transpose(0, 2, 1, 3)
        s = jnp.einsum("bhqd,bhkd->bhqk", qh, kh, precision=_HI) / math.sqrt(d)
        pr = jax.nn.softmax(s, axis=-1)
        o = jnp.einsum("bhqk,bhkd->bhqd", pr, vh, precision=_HI)
        o = o.transpose(0, 2, 1, 3).reshape(B, L, C)
        return _ref_linear(o, m["wo"])

    def mixffn(z, pm):
        x1, x2 = z[:, :1], z[:, 1:]
        h = _ref_linear(x2, pm["l1_w"], pm["l1_b"])
        h_rep = jnp.repeat(jnp.transpose(h, (0, 2, 1)), 4, axis=1)     # groups=C emulation
        hc = _ref_dwconv1d(h_rep, pm["conv_w"], pm["conv_b"], stride=1, pad=1)
        hc = _ref_gelu(jnp.transpose(hc, (0, 2, 1)))
        h3 = _ref_linear(hc, pm["l2_w"], pm["l2_b"])
        return jnp.concatenate([x1, h3], axis=1)

    def ffn(z):
        h = _ref_gelu(_ref_linear(z, p["ffn"]["w1"], p["ffn"]["b1"]))
        return _ref_linear(h, p["ffn"]["w2"], p["ffn"]["b2"])

    y = mhsa(_ref_ln(x, p["ln1_g"], p["ln1_b"])) + x
    m1 = mixffn(_ref_ln(y, p["ln2_g"], p["ln2_b"]), p["mix1"]) + y
    m2 = mixffn(_ref_ln(m1, p["ln3_g"], p["ln3_b"]), p["mix2"]) + m1
    return ffn(_ref_ln(m1, p["ln4_g"], p["ln4_b"])) + m2


def reference_forward(x, params, num_heads):
    for p in params:
        x = _ref_block(x, p, num_heads)
    return x


# ---------------------------------------------------------------------------------
if __name__ == "__main__":
    emb_dim, head_num, block_num = 32, 4, 2
    B, L = 2, 17                       # 1 cls token + 16 patch tokens

    key = jax.random.PRNGKey(0)
    k_x, k_p = jax.random.split(key)
    x = jax.random.normal(k_x, (B, L, emb_dim), dtype=jnp.float32)
    params = init_params(k_p, emb_dim, block_num)
    packed = pack_params(params, emb_dim)

    fwd = jax.jit(functools.partial(vit_encoder_forward,
                                    num_heads=head_num, block_num=block_num))
    out = jax.block_until_ready(fwd(x, packed))

    assert out.shape == (B, L, emb_dim), out.shape
    assert bool(jnp.all(jnp.isfinite(out)))

    # validate against a pure-JAX transcription of the PyTorch forward pass
    ref = jax.block_until_ready(reference_forward(x, params, head_num))
    max_err = float(jnp.max(jnp.abs(out - ref)))
    assert max_err < 3e-2, f"kernel/reference mismatch: max abs err = {max_err}"
    print("KERNEL_OK")
</pallas_src>

<mosaic_0001>
module attributes {stable_mosaic.version = 11 : i64} {
  func.func @kernel(%arg0: i32, %arg1: memref<1x17x32xf32, #tpu.memory_space<vmem>>, %arg2: memref<34x32x32xf32, #tpu.memory_space<vmem>>, %arg3: memref<48x1x32xf32, #tpu.memory_space<vmem>>, %arg4: memref<14x1x32xf32, #tpu.memory_space<vmem>>, %arg5: memref<16x3x32xf32, #tpu.memory_space<vmem>>, %arg6: memref<16x1x32xf32, #tpu.memory_space<vmem>>, %arg7: memref<1x17x32xf32, #tpu.memory_space<vmem>>) attributes {dimension_semantics = [#tpu.dimension_semantics<parallel>], iteration_bounds = array<i64: 2>, scalar_prefetch = 0 : i64, scratch_operands = 0 : i64, tpu.core_type = #tpu.core_type<tc>, window_params = [{transform_indices = @transform_0, window_bounds = array<i64: 1, 17, 32>}, {pipeline_mode = #tpu.pipeline_mode<synchronous>, transform_indices = @transform_1, window_bounds = array<i64: 34, 32, 32>}, {pipeline_mode = #tpu.pipeline_mode<synchronous>, transform_indices = @transform_2, window_bounds = array<i64: 48, 1, 32>}, {pipeline_mode = #tpu.pipeline_mode<synchronous>, transform_indices = @transform_3, window_bounds = array<i64: 14, 1, 32>}, {pipeline_mode = #tpu.pipeline_mode<synchronous>, transform_indices = @transform_4, window_bounds = array<i64: 16, 3, 32>}, {pipeline_mode = #tpu.pipeline_mode<synchronous>, transform_indices = @transform_5, window_bounds = array<i64: 16, 1, 32>}, {transform_indices = @transform_6, window_bounds = array<i64: 1, 17, 32>}]} {
    %0 = tpu.iota {dimensions = array<i32: 0>} : vector<17x1xi32>
    %c0_i32 = arith.constant 0 : i32
    %1 = vector.broadcast %c0_i32 : i32 to vector<17x1xi32>
    %2 = arith.cmpi eq, %0, %1 : vector<17x1xi32>
    %3 = tpu.iota {dimensions = array<i32: 0>} : vector<17x17xi32>
    %4 = tpu.iota {dimensions = array<i32: 1>} : vector<17x17xi32>
    %c1_i32 = arith.constant 1 : i32
    %5 = vector.broadcast %c1_i32 : i32 to vector<17x17xi32>
    %6 = arith.subi %3, %5 : vector<17x17xi32>
    %7 = arith.cmpi eq, %4, %6 : vector<17x17xi32>
    %8 = arith.extui %7 : vector<17x17xi1> to vector<17x17xi32>
    %9 = arith.sitofp %8 : vector<17x17xi32> to vector<17x17xf32>
    %c1_i32_0 = arith.constant 1 : i32
    %10 = vector.broadcast %c1_i32_0 : i32 to vector<17x17xi32>
    %11 = arith.addi %3, %10 : vector<17x17xi32>
    %12 = arith.cmpi eq, %4, %11 : vector<17x17xi32>
    %13 = arith.extui %12 : vector<17x17xi1> to vector<17x17xi32>
    %14 = arith.sitofp %13 : vector<17x17xi32> to vector<17x17xf32>
    %15 = tpu.iota {dimensions = array<i32: 0>} : vector<8x17xi32>
    %16 = tpu.iota {dimensions = array<i32: 1>} : vector<8x17xi32>
    %c1_i32_1 = arith.constant 1 : i32
    %17 = vector.broadcast %c1_i32_1 : i32 to vector<8x17xi32>
    %18 = arith.cmpi sge, %15, %17 : vector<8x17xi32>
    %c4_i32 = arith.constant 4 : i32
    %19 = vector.broadcast %c4_i32 : i32 to vector<8x17xi32>
    %20 = arith.cmpi sle, %15, %19 : vector<8x17xi32>
    %21 = arith.andi %18, %20 : vector<8x17xi1>
    %c4_i32_2 = arith.constant 4 : i32
    %22 = vector.broadcast %c4_i32_2 : i32 to vector<8x17xi32>
    %23 = arith.muli %22, %15 : vector<8x17xi32>
    %c0_i32_3 = arith.constant 0 : i32
    %24 = vector.broadcast %c0_i32_3 : i32 to vector<8x17xi32>
    %25 = arith.addi %23, %24 : vector<8x17xi32>
    %c6_i32 = arith.constant 6 : i32
    %26 = vector.broadcast %c6_i32 : i32 to vector<8x17xi32>
    %27 = arith.subi %25, %26 : vector<8x17xi32>
    %28 = arith.cmpi eq, %16, %27 : vector<8x17xi32>
    %c1_i32_4 = arith.constant 1 : i32
    %29 = vector.broadcast %c1_i32_4 : i32 to vector<8x17xi32>
    %30 = arith.cmpi sge, %16, %29 : vector<8x17xi32>
    %31 = arith.andi %28, %30 : vector<8x17xi1>
    %32 = arith.andi %31, %21 : vector<8x17xi1>
    %33 = arith.extui %32 : vector<8x17xi1> to vector<8x17xi32>
    %34 = arith.sitofp %33 : vector<8x17xi32> to vector<8x17xf32>
    %c4_i32_5 = arith.constant 4 : i32
    %35 = vector.broadcast %c4_i32_5 : i32 to vector<8x17xi32>
    %36 = arith.muli %35, %15 : vector<8x17xi32>
    %c1_i32_6 = arith.constant 1 : i32
    %37 = vector.broadcast %c1_i32_6 : i32 to vector<8x17xi32>
    %38 = arith.addi %36, %37 : vector<8x17xi32>
    %c6_i32_7 = arith.constant 6 : i32
    %39 = vector.broadcast %c6_i32_7 : i32 to vector<8x17xi32>
    %40 = arith.subi %38, %39 : vector<8x17xi32>
    %41 = arith.cmpi eq, %16, %40 : vector<8x17xi32>
    %c1_i32_8 = arith.constant 1 : i32
    %42 = vector.broadcast %c1_i32_8 : i32 to vector<8x17xi32>
    %43 = arith.cmpi sge, %16, %42 : vector<8x17xi32>
    %44 = arith.andi %41, %43 : vector<8x17xi1>
    %45 = arith.andi %44, %21 : vector<8x17xi1>
    %46 = arith.extui %45 : vector<8x17xi1> to vector<8x17xi32>
    %47 = arith.sitofp %46 : vector<8x17xi32> to vector<8x17xf32>
    %c4_i32_9 = arith.constant 4 : i32
    %48 = vector.broadcast %c4_i32_9 : i32 to vector<8x17xi32>
    %49 = arith.muli %48, %15 : vector<8x17xi32>
    %c2_i32 = arith.constant 2 : i32
    %50 = vector.broadcast %c2_i32 : i32 to vector<8x17xi32>
    %51 = arith.addi %49, %50 : vector<8x17xi32>
    %c6_i32_10 = arith.constant 6 : i32
    %52 = vector.broadcast %c6_i32_10 : i32 to vector<8x17xi32>
    %53 = arith.subi %51, %52 : vector<8x17xi32>
    %54 = arith.cmpi eq, %16, %53 : vector<8x17xi32>
    %c1_i32_11 = arith.constant 1 : i32
    %55 = vector.broadcast %c1_i32_11 : i32 to vector<8x17xi32>
    %56 = arith.cmpi sge, %16, %55 : vector<8x17xi32>
    %57 = arith.andi %54, %56 : vector<8x17xi1>
    %58 = arith.andi %57, %21 : vector<8x17xi1>
    %59 = arith.extui %58 : vector<8x17xi1> to vector<8x17xi32>
    %60 = arith.sitofp %59 : vector<8x17xi32> to vector<8x17xf32>
    %c4_i32_12 = arith.constant 4 : i32
    %61 = vector.broadcast %c4_i32_12 : i32 to vector<8x17xi32>
    %62 = arith.muli %61, %15 : vector<8x17xi32>
    %c3_i32 = arith.constant 3 : i32
    %63 = vector.broadcast %c3_i32 : i32 to vector<8x17xi32>
    %64 = arith.addi %62, %63 : vector<8x17xi32>
    %c6_i32_13 = arith.constant 6 : i32
    %65 = vector.broadcast %c6_i32_13 : i32 to vector<8x17xi32>
    %66 = arith.subi %64, %65 : vector<8x17xi32>
    %67 = arith.cmpi eq, %16, %66 : vector<8x17xi32>
    %c1_i32_14 = arith.constant 1 : i32
    %68 = vector.broadcast %c1_i32_14 : i32 to vector<8x17xi32>
    %69 = arith.cmpi sge, %16, %68 : vector<8x17xi32>
    %70 = arith.andi %67, %69 : vector<8x17xi1>
    %71 = arith.andi %70, %21 : vector<8x17xi1>
    %72 = arith.extui %71 : vector<8x17xi1> to vector<8x17xi32>
    %73 = arith.sitofp %72 : vector<8x17xi32> to vector<8x17xf32>
    %c4_i32_15 = arith.constant 4 : i32
    %74 = vector.broadcast %c4_i32_15 : i32 to vector<8x17xi32>
    %75 = arith.muli %74, %15 : vector<8x17xi32>
    %c4_i32_16 = arith.constant 4 : i32
    %76 = vector.broadcast %c4_i32_16 : i32 to vector<8x17xi32>
    %77 = arith.addi %75, %76 : vector<8x17xi32>
    %c6_i32_17 = arith.constant 6 : i32
    %78 = vector.broadcast %c6_i32_17 : i32 to vector<8x17xi32>
    %79 = arith.subi %77, %78 : vector<8x17xi32>
    %80 = arith.cmpi eq, %16, %79 : vector<8x17xi32>
    %c1_i32_18 = arith.constant 1 : i32
    %81 = vector.broadcast %c1_i32_18 : i32 to vector<8x17xi32>
    %82 = arith.cmpi sge, %16, %81 : vector<8x17xi32>
    %83 = arith.andi %80, %82 : vector<8x17xi1>
    %84 = arith.andi %83, %21 : vector<8x17xi1>
    %85 = arith.extui %84 : vector<8x17xi1> to vector<8x17xi32>
    %86 = arith.sitofp %85 : vector<8x17xi32> to vector<8x17xf32>
    %c4_i32_19 = arith.constant 4 : i32
    %87 = vector.broadcast %c4_i32_19 : i32 to vector<8x17xi32>
    %88 = arith.muli %87, %15 : vector<8x17xi32>
    %c5_i32 = arith.constant 5 : i32
    %89 = vector.broadcast %c5_i32 : i32 to vector<8x17xi32>
    %90 = arith.addi %88, %89 : vector<8x17xi32>
    %c6_i32_20 = arith.constant 6 : i32
    %91 = vector.broadcast %c6_i32_20 : i32 to vector<8x17xi32>
    %92 = arith.subi %90, %91 : vector<8x17xi32>
    %93 = arith.cmpi eq, %16, %92 : vector<8x17xi32>
    %c1_i32_21 = arith.constant 1 : i32
    %94 = vector.broadcast %c1_i32_21 : i32 to vector<8x17xi32>
    %95 = arith.cmpi sge, %16, %94 : vector<8x17xi32>
    %96 = arith.andi %93, %95 : vector<8x17xi1>
    %97 = arith.andi %96, %21 : vector<8x17xi1>
    %98 = arith.extui %97 : vector<8x17xi1> to vector<8x17xi32>
    %99 = arith.sitofp %98 : vector<8x17xi32> to vector<8x17xf32>
    %c4_i32_22 = arith.constant 4 : i32
    %100 = vector.broadcast %c4_i32_22 : i32 to vector<8x17xi32>
    %101 = arith.muli %100, %15 : vector<8x17xi32>
    %c6_i32_23 = arith.constant 6 : i32
    %102 = vector.broadcast %c6_i32_23 : i32 to vector<8x17xi32>
    %103 = arith.addi %101, %102 : vector<8x17xi32>
    %c6_i32_24 = arith.constant 6 : i32
    %104 = vector.broadcast %c6_i32_24 : i32 to vector<8x17xi32>
    %105 = arith.subi %103, %104 : vector<8x17xi32>
    %106 = arith.cmpi eq, %16, %105 : vector<8x17xi32>
    %c1_i32_25 = arith.constant 1 : i32
    %107 = vector.broadcast %c1_i32_25 : i32 to vector<8x17xi32>
    %108 = arith.cmpi sge, %16, %107 : vector<8x17xi32>
    %109 = arith.andi %106, %108 : vector<8x17xi1>
    %110 = arith.andi %109, %21 : vector<8x17xi1>
    %111 = arith.extui %110 : vector<8x17xi1> to vector<8x17xi32>
    %112 = arith.sitofp %111 : vector<8x17xi32> to vector<8x17xf32>
    %113 = tpu.iota {dimensions = array<i32: 0>} : vector<8x1xi32>
    %114 = tpu.iota {dimensions = array<i32: 1>} : vector<1x8xi32>
    %c5_i32_26 = arith.constant 5 : i32
    %115 = vector.broadcast %c5_i32_26 : i32 to vector<1x8xi32>
    %116 = arith.cmpi slt, %114, %115 : vector<1x8xi32>
    %cst = arith.constant 0.000000e+00 : f32
    %cst_27 = arith.constant -1.000000e+30 : f32
    %117 = vector.broadcast %cst : f32 to vector<1x8xf32>
    %118 = vector.broadcast %cst_27 : f32 to vector<1x8xf32>
    %119 = arith.select %116, %117, %118 : vector<1x8xi1>, vector<1x8xf32>
    %120 = tpu.iota {dimensions = array<i32: 1>} : vector<1x32xi32>
    %c0_i32_28 = arith.constant 0 : i32
    %121 = vector.broadcast %c0_i32_28 : i32 to vector<1x32xi32>
    %122 = arith.cmpi sge, %120, %121 : vector<1x32xi32>
    %c8_i32 = arith.constant 8 : i32
    %123 = vector.broadcast %c8_i32 : i32 to vector<1x32xi32>
    %124 = arith.cmpi slt, %120, %123 : vector<1x32xi32>
    %125 = arith.andi %122, %124 : vector<1x32xi1>
    %126 = arith.extui %125 : vector<1x32xi1> to vector<1x32xi32>
    %127 = arith.sitofp %126 : vector<1x32xi32> to vector<1x32xf32>
    %c8_i32_29 = arith.constant 8 : i32
    %128 = vector.broadcast %c8_i32_29 : i32 to vector<1x32xi32>
    %129 = arith.cmpi sge, %120, %128 : vector<1x32xi32>
    %c16_i32 = arith.constant 16 : i32
    %130 = vector.broadcast %c16_i32 : i32 to vector<1x32xi32>
    %131 = arith.cmpi slt, %120, %130 : vector<1x32xi32>
    %132 = arith.andi %129, %131 : vector<1x32xi1>
    %133 = arith.extui %132 : vector<1x32xi1> to vector<1x32xi32>
    %134 = arith.sitofp %133 : vector<1x32xi32> to vector<1x32xf32>
    %c16_i32_30 = arith.constant 16 : i32
    %135 = vector.broadcast %c16_i32_30 : i32 to vector<1x32xi32>
    %136 = arith.cmpi sge, %120, %135 : vector<1x32xi32>
    %c24_i32 = arith.constant 24 : i32
    %137 = vector.broadcast %c24_i32 : i32 to vector<1x32xi32>
    %138 = arith.cmpi slt, %120, %137 : vector<1x32xi32>
    %139 = arith.andi %136, %138 : vector<1x32xi1>
    %140 = arith.extui %139 : vector<1x32xi1> to vector<1x32xi32>
    %141 = arith.sitofp %140 : vector<1x32xi32> to vector<1x32xf32>
    %c24_i32_31 = arith.constant 24 : i32
    %142 = vector.broadcast %c24_i32_31 : i32 to vector<1x32xi32>
    %143 = arith.cmpi sge, %120, %142 : vector<1x32xi32>
    %c32_i32 = arith.constant 32 : i32
    %144 = vector.broadcast %c32_i32 : i32 to vector<1x32xi32>
    %145 = arith.cmpi slt, %120, %144 : vector<1x32xi32>
    %146 = arith.andi %143, %145 : vector<1x32xi1>
    %147 = arith.extui %146 : vector<1x32xi1> to vector<1x32xi32>
    %148 = arith.sitofp %147 : vector<1x32xi32> to vector<1x32xf32>
    %c0 = arith.constant 0 : index
    %c0_32 = arith.constant 0 : index
    %c0_33 = arith.constant 0 : index
    %149 = vector.load %arg1[%c0, %c0_32, %c0_33] : memref<1x17x32xf32, #tpu.memory_space<vmem>>, vector<1x17x32xf32>
    %150 = vector.shape_cast %149 : vector<1x17x32xf32> to vector<17x32xf32>
    %cst_34 = arith.constant dense<0.000000e+00> : vector<17xf32>
    %151 = vector.multi_reduction <add>, %150, %cst_34 [1] : vector<17x32xf32> to vector<17xf32>
    %152 = vector.shape_cast %151 : vector<17xf32> to vector<17x1xf32>
    %cst_35 = arith.constant 3.200000e+01 : f32
    %153 = vector.broadcast %cst_35 : f32 to vector<17x1xf32>
    %154 = arith.divf %152, %153 : vector<17x1xf32>
    %155 = vector.broadcast %154 : vector<17x1xf32> to vector<17x32xf32>
    %156 = arith.subf %150, %155 : vector<17x32xf32>
    %157 = arith.mulf %156, %156 : vector<17x32xf32>
    %cst_36 = arith.constant dense<0.000000e+00> : vector<17xf32>
    %158 = vector.multi_reduction <add>, %157, %cst_36 [1] : vector<17x32xf32> to vector<17xf32>
    %159 = vector.shape_cast %158 : vector<17xf32> to vector<17x1xf32>
    %cst_37 = arith.constant 3.200000e+01 : f32
    %160 = vector.broadcast %cst_37 : f32 to vector<17x1xf32>
    %161 = arith.divf %159, %160 : vector<17x1xf32>
    %162 = vector.broadcast %154 : vector<17x1xf32> to vector<17x32xf32>
    %163 = arith.subf %150, %162 : vector<17x32xf32>
    %cst_38 = arith.constant 9.99999974E-6 : f32
    %164 = vector.broadcast %cst_38 : f32 to vector<17x1xf32>
    %165 = arith.addf %161, %164 : vector<17x1xf32>
    %166 = math.rsqrt %165 : vector<17x1xf32>
    %167 = vector.broadcast %166 : vector<17x1xf32> to vector<17x32xf32>
    %168 = arith.mulf %163, %167 : vector<17x32xf32>
    %c0_39 = arith.constant 0 : index
    %c0_40 = arith.constant 0 : index
    %c0_41 = arith.constant 0 : index
    %169 = vector.load %arg3[%c0_39, %c0_40, %c0_41] : memref<48x1x32xf32, #tpu.memory_space<vmem>>, vector<1x1x32xf32>
    %170 = vector.shape_cast %169 : vector<1x1x32xf32> to vector<1x32xf32>
    %171 = vector.broadcast %170 : vector<1x32xf32> to vector<17x32xf32>
    %172 = arith.mulf %168, %171 : vector<17x32xf32>
    %c1 = arith.constant 1 : index
    %c0_42 = arith.constant 0 : index
    %c0_43 = arith.constant 0 : index
    %173 = vector.load %arg3[%c1, %c0_42, %c0_43] : memref<48x1x32xf32, #tpu.memory_space<vmem>>, vector<1x1x32xf32>
    %174 = vector.shape_cast %173 : vector<1x1x32xf32> to vector<1x32xf32>
    %175 = vector.broadcast %174 : vector<1x32xf32> to vector<17x32xf32>
    %176 = arith.addf %172, %175 : vector<17x32xf32>
    %c16 = arith.constant 16 : index
    %c0_44 = arith.constant 0 : index
    %c0_45 = arith.constant 0 : index
    %177 = vector.load %arg3[%c16, %c0_44, %c0_45] : memref<48x1x32xf32, #tpu.memory_space<vmem>>, vector<1x1x32xf32>
    %178 = vector.shape_cast %177 : vector<1x1x32xf32> to vector<1x32xf32>
    %c0_46 = arith.constant 0 : index
    %c0_47 = arith.constant 0 : index
    %c0_48 = arith.constant 0 : index
    %179 = vector.load %arg4[%c0_46, %c0_47, %c0_48] : memref<14x1x32xf32, #tpu.memory_space<vmem>>, vector<1x1x32xf32>
    %180 = vector.shape_cast %179 : vector<1x1x32xf32> to vector<1x32xf32>
    %cst_49 = arith.constant dense<0.000000e+00> : vector<8x32xf32>
    %181 = tpu.matmul %34, %176, %cst_49 {dimension_numbers = #tpu.dot_dimension_numbers<[1], [0], [0], [1], [0, 0, 1, 1], [], []>} : vector<8x17xf32>, vector<17x32xf32>, vector<8x32xf32> -> vector<8x32xf32>
    %182 = vector.broadcast %180 : vector<1x32xf32> to vector<8x32xf32>
    %183 = arith.mulf %182, %181 : vector<8x32xf32>
    %184 = vector.broadcast %178 : vector<1x32xf32> to vector<8x32xf32>
    %185 = arith.addf %184, %183 : vector<8x32xf32>
    %c1_50 = arith.constant 1 : index
    %c0_51 = arith.constant 0 : index
    %c0_52 = arith.constant 0 : index
    %186 = vector.load %arg4[%c1_50, %c0_51, %c0_52] : memref<14x1x32xf32, #tpu.memory_space<vmem>>, vector<1x1x32xf32>
    %187 = vector.shape_cast %186 : vector<1x1x32xf32> to vector<1x32xf32>
    %cst_53 = arith.constant dense<0.000000e+00> : vector<8x32xf32>
    %188 = tpu.matmul %47, %176, %cst_53 {dimension_numbers = #tpu.dot_dimension_numbers<[1], [0], [0], [1], [0, 0, 1, 1], [], []>} : vector<8x17xf32>, vector<17x32xf32>, vector<8x32xf32> -> vector<8x32xf32>
    %189 = vector.broadcast %187 : vector<1x32xf32> to vector<8x32xf32>
    %190 = arith.mulf %189, %188 : vector<8x32xf32>
    %191 = arith.addf %185, %190 : vector<8x32xf32>
    %c2 = arith.constant 2 : index
    %c0_54 = arith.constant 0 : index
    %c0_55 = arith.constant 0 : index
    %192 = vector.load %arg4[%c2, %c0_54, %c0_55] : memref<14x1x32xf32, #tpu.memory_space<vmem>>, vector<1x1x32xf32>
    %193 = vector.shape_cast %192 : vector<1x1x32xf32> to vector<1x32xf32>
    %cst_56 = arith.constant dense<0.000000e+00> : vector<8x32xf32>
    %194 = tpu.matmul %60, %176, %cst_56 {dimension_numbers = #tpu.dot_dimension_numbers<[1], [0], [0], [1], [0, 0, 1, 1], [], []>} : vector<8x17xf32>, vector<17x32xf32>, vector<8x32xf32> -> vector<8x32xf32>
    %195 = vector.broadcast %193 : vector<1x32xf32> to vector<8x32xf32>
    %196 = arith.mulf %195, %194 : vector<8x32xf32>
    %197 = arith.addf %191, %196 : vector<8x32xf32>
    %c3 = arith.constant 3 : index
    %c0_57 = arith.constant 0 : index
    %c0_58 = arith.constant 0 : index
    %198 = vector.load %arg4[%c3, %c0_57, %c0_58] : memref<14x1x32xf32, #tpu.memory_space<vmem>>, vector<1x1x32xf32>
    %199 = vector.shape_cast %198 : vector<1x1x32xf32> to vector<1x32xf32>
    %cst_59 = arith.constant dense<0.000000e+00> : vector<8x32xf32>
    %200 = tpu.matmul %73, %176, %cst_59 {dimension_numbers = #tpu.dot_dimension_numbers<[1], [0], [0], [1], [0, 0, 1, 1], [], []>} : vector<8x17xf32>, vector<17x32xf32>, vector<8x32xf32> -> vector<8x32xf32>
    %201 = vector.broadcast %199 : vector<1x32xf32> to vector<8x32xf32>
    %202 = arith.mulf %201, %200 : vector<8x32xf32>
    %203 = arith.addf %197, %202 : vector<8x32xf32>
    %c4 = arith.constant 4 : index
    %c0_60 = arith.constant 0 : index
    %c0_61 = arith.constant 0 : index
    %204 = vector.load %arg4[%c4, %c0_60, %c0_61] : memref<14x1x32xf32, #tpu.memory_space<vmem>>, vector<1x1x32xf32>
    %205 = vector.shape_cast %204 : vector<1x1x32xf32> to vector<1x32xf32>
    %cst_62 = arith.constant dense<0.000000e+00> : vector<8x32xf32>
    %206 = tpu.matmul %86, %176, %cst_62 {dimension_numbers = #tpu.dot_dimension_numbers<[1], [0], [0], [1], [0, 0, 1, 1], [], []>} : vector<8x17xf32>, vector<17x32xf32>, vector<8x32xf32> -> vector<8x32xf32>
    %207 = vector.broadcast %205 : vector<1x32xf32> to vector<8x32xf32>
    %208 = arith.mulf %207, %206 : vector<8x32xf32>
    %209 = arith.addf %203, %208 : vector<8x32xf32>
    %c5 = arith.constant 5 : index
    %c0_63 = arith.constant 0 : index
    %c0_64 = arith.constant 0 : index
    %210 = vector.load %arg4[%c5, %c0_63, %c0_64] : memref<14x1x32xf32, #tpu.memory_space<vmem>>, vector<1x1x32xf32>
    %211 = vector.shape_cast %210 : vector<1x1x32xf32> to vector<1x32xf32>
    %cst_65 = arith.constant dense<0.000000e+00> : vector<8x32xf32>
    %212 = tpu.matmul %99, %176, %cst_65 {dimension_numbers = #tpu.dot_dimension_numbers<[1], [0], [0], [1], [0, 0, 1, 1], [], []>} : vector<8x17xf32>, vector<17x32xf32>, vector<8x32xf32> -> vector<8x32xf32>
    %213 = vector.broadcast %211 : vector<1x32xf32> to vector<8x32xf32>
    %214 = arith.mulf %213, %212 : vector<8x32xf32>
    %215 = arith.addf %209, %214 : vector<8x32xf32>
    %c6 = arith.constant 6 : index
    %c0_66 = arith.constant 0 : index
    %c0_67 = arith.constant 0 : index
    %216 = vector.load %arg4[%c6, %c0_66, %c0_67] : memref<14x1x32xf32, #tpu.memory_space<vmem>>, vector<1x1x32xf32>
    %217 = vector.shape_cast %216 : vector<1x1x32xf32> to vector<1x32xf32>
    %cst_68 = arith.constant dense<0.000000e+00> : vector<8x32xf32>
    %218 = tpu.matmul %112, %176, %cst_68 {dimension_numbers = #tpu.dot_dimension_numbers<[1], [0], [0], [1], [0, 0, 1, 1], [], []>} : vector<8x17xf32>, vector<17x32xf32>, vector<8x32xf32> -> vector<8x32xf32>
    %219 = vector.broadcast %217 : vector<1x32xf32> to vector<8x32xf32>
    %220 = arith.mulf %219, %218 : vector<8x32xf32>
    %221 = arith.addf %215, %220 : vector<8x32xf32>
    %c4_69 = arith.constant 4 : index
    %c0_70 = arith.constant 0 : index
    %c0_71 = arith.constant 0 : index
    %222 = vector.load %arg2[%c4_69, %c0_70, %c0_71] : memref<34x32x32xf32, #tpu.memory_space<vmem>>, vector<1x32x32xf32>
    %223 = vector.shape_cast %222 : vector<1x32x32xf32> to vector<32x32xf32>
    %cst_72 = arith.constant dense<0.000000e+00> : vector<8x32xf32>
    %224 = tpu.matmul %221, %223, %cst_72 {dimension_numbers = #tpu.dot_dimension_numbers<[1], [0], [0], [1], [0, 0, 1, 1], [], []>} : vector<8x32xf32>, vector<32x32xf32>, vector<8x32xf32> -> vector<8x32xf32>
    %c17 = arith.constant 17 : index
    %c0_73 = arith.constant 0 : index
    %c0_74 = arith.constant 0 : index
    %225 = vector.load %arg3[%c17, %c0_73, %c0_74] : memref<48x1x32xf32, #tpu.memory_space<vmem>>, vector<1x1x32xf32>
    %226 = vector.shape_cast %225 : vector<1x1x32xf32> to vector<1x32xf32>
    %227 = vector.broadcast %226 : vector<1x32xf32> to vector<8x32xf32>
    %228 = arith.addf %224, %227 : vector<8x32xf32>
    %cst_75 = arith.constant dense<0.000000e+00> : vector<8xf32>
    %229 = vector.multi_reduction <add>, %228, %cst_75 [1] : vector<8x32xf32> to vector<8xf32>
    %230 = vector.shape_cast %229 : vector<8xf32> to vector<8x1xf32>
    %cst_76 = arith.constant 3.200000e+01 : f32
    %231 = vector.broadcast %cst_76 : f32 to vector<8x1xf32>
    %232 = arith.divf %230, %231 : vector<8x1xf32>
    %233 = vector.broadcast %232 : vector<8x1xf32> to vector<8x32xf32>
    %234 = arith.subf %228, %233 : vector<8x32xf32>
    %235 = arith.mulf %234, %234 : vector<8x32xf32>
    %cst_77 = arith.constant dense<0.000000e+00> : vector<8xf32>
    %236 = vector.multi_reduction <add>, %235, %cst_77 [1] : vector<8x32xf32> to vector<8xf32>
    %237 = vector.shape_cast %236 : vector<8xf32> to vector<8x1xf32>
    %cst_78 = arith.constant 3.200000e+01 : f32
    %238 = vector.broadcast %cst_78 : f32 to vector<8x1xf32>
    %239 = arith.divf %237, %238 : vector<8x1xf32>
    %240 = vector.broadcast %232 : vector<8x1xf32> to vector<8x32xf32>
    %241 = arith.subf %228, %240 : vector<8x32xf32>
    %cst_79 = arith.constant 9.99999974E-6 : f32
    %242 = vector.broadcast %cst_79 : f32 to vector<8x1xf32>
    %243 = arith.addf %239, %242 : vector<8x1xf32>
    %244 = math.rsqrt %243 : vector<8x1xf32>
    %245 = vector.broadcast %244 : vector<8x1xf32> to vector<8x32xf32>
    %246 = arith.mulf %241, %245 : vector<8x32xf32>
    %c14 = arith.constant 14 : index
    %c0_80 = arith.constant 0 : index
    %c0_81 = arith.constant 0 : index
    %247 = vector.load %arg3[%c14, %c0_80, %c0_81] : memref<48x1x32xf32, #tpu.memory_space<vmem>>, vector<1x1x32xf32>
    %248 = vector.shape_cast %247 : vector<1x1x32xf32> to vector<1x32xf32>
    %249 = vector.broadcast %248 : vector<1x32xf32> to vector<8x32xf32>
    %250 = arith.mulf %246, %249 : vector<8x32xf32>
    %c15 = arith.constant 15 : index
    %c0_82 = arith.constant 0 : index
    %c0_83 = arith.constant 0 : index
    %251 = vector.load %arg3[%c15, %c0_82, %c0_83] : memref<48x1x32xf32, #tpu.memory_space<vmem>>, vector<1x1x32xf32>
    %252 = vector.shape_cast %251 : vector<1x1x32xf32> to vector<1x32xf32>
    %253 = vector.broadcast %252 : vector<1x32xf32> to vector<8x32xf32>
    %254 = arith.addf %250, %253 : vector<8x32xf32>
    %c0_i32_84 = arith.constant 0 : i32
    %255 = vector.broadcast %c0_i32_84 : i32 to vector<8x1xi32>
    %256 = arith.cmpi eq, %113, %255 : vector<8x1xi32>
    %257 = vector.extract_strided_slice %176 {offsets = [0, 0], sizes = [1, 32], strides = [1, 1]} : vector<17x32xf32> to vector<1x32xf32>
    %258 = vector.shape_cast %256 : vector<8x1xi1> to vector<8x1xi1>
    %259 = vector.broadcast %258 : vector<8x1xi1> to vector<8x32xi1>
    %260 = vector.shape_cast %257 : vector<1x32xf32> to vector<1x32xf32>
    %261 = vector.broadcast %260 : vector<1x32xf32> to vector<8x32xf32>
    %262 = arith.select %259, %261, %254 : vector<8x32xi1>, vector<8x32xf32>
    %c0_85 = arith.constant 0 : index
    %c0_86 = arith.constant 0 : index
    %c0_87 = arith.constant 0 : index
    %263 = vector.load %arg2[%c0_85, %c0_86, %c0_87] : memref<34x32x32xf32, #tpu.memory_space<vmem>>, vector<1x32x32xf32>
    %264 = vector.shape_cast %263 : vector<1x32x32xf32> to vector<32x32xf32>
    %cst_88 = arith.constant dense<0.000000e+00> : vector<17x32xf32>
    %265 = tpu.matmul %176, %264, %cst_88 {dimension_numbers = #tpu.dot_dimension_numbers<[1], [0], [0], [1], [0, 0, 1, 1], [], []>} : vector<17x32xf32>, vector<32x32xf32>, vector<17x32xf32> -> vector<17x32xf32>
    %cst_89 = arith.constant dense<0.000000e+00> : vector<17xf32>
    %266 = vector.multi_reduction <add>, %265, %cst_89 [1] : vector<17x32xf32> to vector<17xf32>
    %267 = vector.shape_cast %266 : vector<17xf32> to vector<17x1xf32>
    %cst_90 = arith.constant 3.200000e+01 : f32
    %268 = vector.broadcast %cst_90 : f32 to vector<17x1xf32>
    %269 = arith.divf %267, %268 : vector<17x1xf32>
    %270 = vector.broadcast %269 : vector<17x1xf32> to vector<17x32xf32>
    %271 = arith.subf %265, %270 : vector<17x32xf32>
    %272 = arith.mulf %271, %271 : vector<17x32xf32>
    %cst_91 = arith.constant dense<0.000000e+00> : vector<17xf32>
    %273 = vector.multi_reduction <add>, %272, %cst_91 [1] : vector<17x32xf32> to vector<17xf32>
    %274 = vector.shape_cast %273 : vector<17xf32> to vector<17x1xf32>
    %cst_92 = arith.constant 3.200000e+01 : f32
    %275 = vector.broadcast %cst_92 : f32 to vector<17x1xf32>
    %276 = arith.divf %274, %275 : vector<17x1xf32>
    %277 = vector.broadcast %269 : vector<17x1xf32> to vector<17x32xf32>
    %278 = arith.subf %265, %277 : vector<17x32xf32>
    %cst_93 = arith.constant 9.99999974E-6 : f32
    %279 = vector.broadcast %cst_93 : f32 to vector<17x1xf32>
    %280 = arith.addf %276, %279 : vector<17x1xf32>
    %281 = math.rsqrt %280 : vector<17x1xf32>
    %282 = vector.broadcast %281 : vector<17x1xf32> to vector<17x32xf32>
    %283 = arith.mulf %278, %282 : vector<17x32xf32>
    %c8 = arith.constant 8 : index
    %c0_94 = arith.constant 0 : index
    %c0_95 = arith.constant 0 : index
    %284 = vector.load %arg3[%c8, %c0_94, %c0_95] : memref<48x1x32xf32, #tpu.memory_space<vmem>>, vector<1x1x32xf32>
    %285 = vector.shape_cast %284 : vector<1x1x32xf32> to vector<1x32xf32>
    %286 = vector.broadcast %285 : vector<1x32xf32> to vector<17x32xf32>
    %287 = arith.mulf %283, %286 : vector<17x32xf32>
    %c9 = arith.constant 9 : index
    %c0_96 = arith.constant 0 : index
    %c0_97 = arith.constant 0 : index
    %288 = vector.load %arg3[%c9, %c0_96, %c0_97] : memref<48x1x32xf32, #tpu.memory_space<vmem>>, vector<1x1x32xf32>
    %289 = vector.shape_cast %288 : vector<1x1x32xf32> to vector<1x32xf32>
    %290 = vector.broadcast %289 : vector<1x32xf32> to vector<17x32xf32>
    %291 = arith.addf %287, %290 : vector<17x32xf32>
    %cst_98 = arith.constant 0.353553385 : f32
    %292 = vector.broadcast %cst_98 : f32 to vector<17x32xf32>
    %293 = arith.mulf %291, %292 : vector<17x32xf32>
    %c1_99 = arith.constant 1 : index
    %c0_100 = arith.constant 0 : index
    %c0_101 = arith.constant 0 : index
    %294 = vector.load %arg2[%c1_99, %c0_100, %c0_101] : memref<34x32x32xf32, #tpu.memory_space<vmem>>, vector<1x32x32xf32>
    %295 = vector.shape_cast %294 : vector<1x32x32xf32> to vector<32x32xf32>
    %cst_102 = arith.constant dense<0.000000e+00> : vector<8x32xf32>
    %296 = tpu.matmul %262, %295, %cst_102 {dimension_numbers = #tpu.dot_dimension_numbers<[1], [0], [0], [1], [0, 0, 1, 1], [], []>} : vector<8x32xf32>, vector<32x32xf32>, vector<8x32xf32> -> vector<8x32xf32>
    %cst_103 = arith.constant dense<0.000000e+00> : vector<8xf32>
    %297 = vector.multi_reduction <add>, %296, %cst_103 [1] : vector<8x32xf32> to vector<8xf32>
    %298 = vector.shape_cast %297 : vector<8xf32> to vector<8x1xf32>
    %cst_104 = arith.constant 3.200000e+01 : f32
    %299 = vector.broadcast %cst_104 : f32 to vector<8x1xf32>
    %300 = arith.divf %298, %299 : vector<8x1xf32>
    %301 = vector.broadcast %300 : vector<8x1xf32> to vector<8x32xf32>
    %302 = arith.subf %296, %301 : vector<8x32xf32>
    %303 = arith.mulf %302, %302 : vector<8x32xf32>
    %cst_105 = arith.constant dense<0.000000e+00> : vector<8xf32>
    %304 = vector.multi_reduction <add>, %303, %cst_105 [1] : vector<8x32xf32> to vector<8xf32>
    %305 = vector.shape_cast %304 : vector<8xf32> to vector<8x1xf32>
    %cst_106 = arith.constant 3.200000e+01 : f32
    %306 = vector.broadcast %cst_106 : f32 to vector<8x1xf32>
    %307 = arith.divf %305, %306 : vector<8x1xf32>
    %308 = vector.broadcast %300 : vector<8x1xf32> to vector<8x32xf32>
    %309 = arith.subf %296, %308 : vector<8x32xf32>
    %cst_107 = arith.constant 9.99999974E-6 : f32
    %310 = vector.broadcast %cst_107 : f32 to vector<8x1xf32>
    %311 = arith.addf %307, %310 : vector<8x1xf32>
    %312 = math.rsqrt %311 : vector<8x1xf32>
    %313 = vector.broadcast %312 : vector<8x1xf32> to vector<8x32xf32>
    %314 = arith.mulf %309, %313 : vector<8x32xf32>
    %c10 = arith.constant 10 : index
    %c0_108 = arith.constant 0 : index
    %c0_109 = arith.constant 0 : index
    %315 = vector.load %arg3[%c10, %c0_108, %c0_109] : memref<48x1x32xf32, #tpu.memory_space<vmem>>, vector<1x1x32xf32>
    %316 = vector.shape_cast %315 : vector<1x1x32xf32> to vector<1x32xf32>
    %317 = vector.broadcast %316 : vector<1x32xf32> to vector<8x32xf32>
    %318 = arith.mulf %314, %317 : vector<8x32xf32>
    %c11 = arith.constant 11 : index
    %c0_110 = arith.constant 0 : index
    %c0_111 = arith.constant 0 : index
    %319 = vector.load %arg3[%c11, %c0_110, %c0_111] : memref<48x1x32xf32, #tpu.memory_space<vmem>>, vector<1x1x32xf32>
    %320 = vector.shape_cast %319 : vector<1x1x32xf32> to vector<1x32xf32>
    %321 = vector.broadcast %320 : vector<1x32xf32> to vector<8x32xf32>
    %322 = arith.addf %318, %321 : vector<8x32xf32>
    %c2_112 = arith.constant 2 : index
    %c0_113 = arith.constant 0 : index
    %c0_114 = arith.constant 0 : index
    %323 = vector.load %arg2[%c2_112, %c0_113, %c0_114] : memref<34x32x32xf32, #tpu.memory_space<vmem>>, vector<1x32x32xf32>
    %324 = vector.shape_cast %323 : vector<1x32x32xf32> to vector<32x32xf32>
    %cst_115 = arith.constant dense<0.000000e+00> : vector<8x32xf32>
    %325 = tpu.matmul %262, %324, %cst_115 {dimension_numbers = #tpu.dot_dimension_numbers<[1], [0], [0], [1], [0, 0, 1, 1], [], []>} : vector<8x32xf32>, vector<32x32xf32>, vector<8x32xf32> -> vector<8x32xf32>
    %cst_116 = arith.constant dense<0.000000e+00> : vector<8xf32>
    %326 = vector.multi_reduction <add>, %325, %cst_116 [1] : vector<8x32xf32> to vector<8xf32>
    %327 = vector.shape_cast %326 : vector<8xf32> to vector<8x1xf32>
    %cst_117 = arith.constant 3.200000e+01 : f32
    %328 = vector.broadcast %cst_117 : f32 to vector<8x1xf32>
    %329 = arith.divf %327, %328 : vector<8x1xf32>
    %330 = vector.broadcast %329 : vector<8x1xf32> to vector<8x32xf32>
    %331 = arith.subf %325, %330 : vector<8x32xf32>
    %332 = arith.mulf %331, %331 : vector<8x32xf32>
    %cst_118 = arith.constant dense<0.000000e+00> : vector<8xf32>
    %333 = vector.multi_reduction <add>, %332, %cst_118 [1] : vector<8x32xf32> to vector<8xf32>
    %334 = vector.shape_cast %333 : vector<8xf32> to vector<8x1xf32>
    %cst_119 = arith.constant 3.200000e+01 : f32
    %335 = vector.broadcast %cst_119 : f32 to vector<8x1xf32>
    %336 = arith.divf %334, %335 : vector<8x1xf32>
    %337 = vector.broadcast %329 : vector<8x1xf32> to vector<8x32xf32>
    %338 = arith.subf %325, %337 : vector<8x32xf32>
    %cst_120 = arith.constant 9.99999974E-6 : f32
    %339 = vector.broadcast %cst_120 : f32 to vector<8x1xf32>
    %340 = arith.addf %336, %339 : vector<8x1xf32>
    %341 = math.rsqrt %340 : vector<8x1xf32>
    %342 = vector.broadcast %341 : vector<8x1xf32> to vector<8x32xf32>
    %343 = arith.mulf %338, %342 : vector<8x32xf32>
    %c12 = arith.constant 12 : index
    %c0_121 = arith.constant 0 : index
    %c0_122 = arith.constant 0 : index
    %344 = vector.load %arg3[%c12, %c0_121, %c0_122] : memref<48x1x32xf32, #tpu.memory_space<vmem>>, vector<1x1x32xf32>
    %345 = vector.shape_cast %344 : vector<1x1x32xf32> to vector<1x32xf32>
    %346 = vector.broadcast %345 : vector<1x32xf32> to vector<8x32xf32>
    %347 = arith.mulf %343, %346 : vector<8x32xf32>
    %c13 = arith.constant 13 : index
    %c0_123 = arith.constant 0 : index
    %c0_124 = arith.constant 0 : index
    %348 = vector.load %arg3[%c13, %c0_123, %c0_124] : memref<48x1x32xf32, #tpu.memory_space<vmem>>, vector<1x1x32xf32>
    %349 = vector.shape_cast %348 : vector<1x1x32xf32> to vector<1x32xf32>
    %350 = vector.broadcast %349 : vector<1x32xf32> to vector<8x32xf32>
    %351 = arith.addf %347, %350 : vector<8x32xf32>
    %cst_125 = arith.constant 0.000000e+00 : f32
    %352 = vector.broadcast %cst_125 : f32 to vector<17x32xf32>
    %353 = vector.broadcast %127 : vector<1x32xf32> to vector<17x32xf32>
    %354 = arith.mulf %293, %353 : vector<17x32xf32>
    %cst_126 = arith.constant dense<0.000000e+00> : vector<17x8xf32>
    %355 = tpu.matmul %354, %322, %cst_126 {dimension_numbers = #tpu.dot_dimension_numbers<[1], [1], [0], [0], [0, 0, 1, 0], [], []>} : vector<17x32xf32>, vector<8x32xf32>, vector<17x8xf32> -> vector<17x8xf32>
    %356 = vector.broadcast %119 : vector<1x8xf32> to vector<17x8xf32>
    %357 = arith.addf %355, %356 : vector<17x8xf32>
    %cst_127 = arith.constant dense<0xFF800000> : vector<17xf32>
    %358 = vector.multi_reduction <maximumf>, %357, %cst_127 [1] : vector<17x8xf32> to vector<17xf32>
    %359 = vector.shape_cast %358 : vector<17xf32> to vector<17x1xf32>
    %360 = vector.broadcast %359 : vector<17x1xf32> to vector<17x8xf32>
    %361 = arith.subf %357, %360 : vector<17x8xf32>
    %362 = math.exp %361 : vector<17x8xf32>
    %cst_128 = arith.constant dense<0.000000e+00> : vector<17xf32>
    %363 = vector.multi_reduction <add>, %362, %cst_128 [1] : vector<17x8xf32> to vector<17xf32>
    %364 = vector.shape_cast %363 : vector<17xf32> to vector<17x1xf32>
    %365 = vector.broadcast %364 : vector<17x1xf32> to vector<17x8xf32>
    %366 = arith.divf %362, %365 : vector<17x8xf32>
    %367 = vector.broadcast %127 : vector<1x32xf32> to vector<8x32xf32>
    %368 = arith.mulf %351, %367 : vector<8x32xf32>
    %cst_129 = arith.constant dense<0.000000e+00> : vector<17x32xf32>
    %369 = tpu.matmul %366, %368, %cst_129 {dimension_numbers = #tpu.dot_dimension_numbers<[1], [0], [0], [1], [0, 0, 1, 1], [], []>} : vector<17x8xf32>, vector<8x32xf32>, vector<17x32xf32> -> vector<17x32xf32>
    %370 = arith.addf %352, %369 : vector<17x32xf32>
    %371 = vector.broadcast %134 : vector<1x32xf32> to vector<17x32xf32>
    %372 = arith.mulf %293, %371 : vector<17x32xf32>
    %cst_130 = arith.constant dense<0.000000e+00> : vector<17x8xf32>
    %373 = tpu.matmul %372, %322, %cst_130 {dimension_numbers = #tpu.dot_dimension_numbers<[1], [1], [0], [0], [0, 0, 1, 0], [], []>} : vector<17x32xf32>, vector<8x32xf32>, vector<17x8xf32> -> vector<17x8xf32>
    %374 = vector.broadcast %119 : vector<1x8xf32> to vector<17x8xf32>
    %375 = arith.addf %373, %374 : vector<17x8xf32>
    %cst_131 = arith.constant dense<0xFF800000> : vector<17xf32>
    %376 = vector.multi_reduction <maximumf>, %375, %cst_131 [1] : vector<17x8xf32> to vector<17xf32>
    %377 = vector.shape_cast %376 : vector<17xf32> to vector<17x1xf32>
    %378 = vector.broadcast %377 : vector<17x1xf32> to vector<17x8xf32>
    %379 = arith.subf %375, %378 : vector<17x8xf32>
    %380 = math.exp %379 : vector<17x8xf32>
    %cst_132 = arith.constant dense<0.000000e+00> : vector<17xf32>
    %381 = vector.multi_reduction <add>, %380, %cst_132 [1] : vector<17x8xf32> to vector<17xf32>
    %382 = vector.shape_cast %381 : vector<17xf32> to vector<17x1xf32>
    %383 = vector.broadcast %382 : vector<17x1xf32> to vector<17x8xf32>
    %384 = arith.divf %380, %383 : vector<17x8xf32>
    %385 = vector.broadcast %134 : vector<1x32xf32> to vector<8x32xf32>
    %386 = arith.mulf %351, %385 : vector<8x32xf32>
    %cst_133 = arith.constant dense<0.000000e+00> : vector<17x32xf32>
    %387 = tpu.matmul %384, %386, %cst_133 {dimension_numbers = #tpu.dot_dimension_numbers<[1], [0], [0], [1], [0, 0, 1, 1], [], []>} : vector<17x8xf32>, vector<8x32xf32>, vector<17x32xf32> -> vector<17x32xf32>
    %388 = arith.addf %370, %387 : vector<17x32xf32>
    %389 = vector.broadcast %141 : vector<1x32xf32> to vector<17x32xf32>
    %390 = arith.mulf %293, %389 : vector<17x32xf32>
    %cst_134 = arith.constant dense<0.000000e+00> : vector<17x8xf32>
    %391 = tpu.matmul %390, %322, %cst_134 {dimension_numbers = #tpu.dot_dimension_numbers<[1], [1], [0], [0], [0, 0, 1, 0], [], []>} : vector<17x32xf32>, vector<8x32xf32>, vector<17x8xf32> -> vector<17x8xf32>
    %392 = vector.broadcast %119 : vector<1x8xf32> to vector<17x8xf32>
    %393 = arith.addf %391, %392 : vector<17x8xf32>
    %cst_135 = arith.constant dense<0xFF800000> : vector<17xf32>
    %394 = vector.multi_reduction <maximumf>, %393, %cst_135 [1] : vector<17x8xf32> to vector<17xf32>
    %395 = vector.shape_cast %394 : vector<17xf32> to vector<17x1xf32>
    %396 = vector.broadcast %395 : vector<17x1xf32> to vector<17x8xf32>
    %397 = arith.subf %393, %396 : vector<17x8xf32>
    %398 = math.exp %397 : vector<17x8xf32>
    %cst_136 = arith.constant dense<0.000000e+00> : vector<17xf32>
    %399 = vector.multi_reduction <add>, %398, %cst_136 [1] : vector<17x8xf32> to vector<17xf32>
    %400 = vector.shape_cast %399 : vector<17xf32> to vector<17x1xf32>
    %401 = vector.broadcast %400 : vector<17x1xf32> to vector<17x8xf32>
    %402 = arith.divf %398, %401 : vector<17x8xf32>
    %403 = vector.broadcast %141 : vector<1x32xf32> to vector<8x32xf32>
    %404 = arith.mulf %351, %403 : vector<8x32xf32>
    %cst_137 = arith.constant dense<0.000000e+00> : vector<17x32xf32>
    %405 = tpu.matmul %402, %404, %cst_137 {dimension_numbers = #tpu.dot_dimension_numbers<[1], [0], [0], [1], [0, 0, 1, 1], [], []>} : vector<17x8xf32>, vector<8x32xf32>, vector<17x32xf32> -> vector<17x32xf32>
    %406 = arith.addf %388, %405 : vector<17x32xf32>
    %407 = vector.broadcast %148 : vector<1x32xf32> to vector<17x32xf32>
    %408 = arith.mulf %293, %407 : vector<17x32xf32>
    %cst_138 = arith.constant dense<0.000000e+00> : vector<17x8xf32>
    %409 = tpu.matmul %408, %322, %cst_138 {dimension_numbers = #tpu.dot_dimension_numbers<[1], [1], [0], [0], [0, 0, 1, 0], [], []>} : vector<17x32xf32>, vector<8x32xf32>, vector<17x8xf32> -> vector<17x8xf32>
    %410 = vector.broadcast %119 : vector<1x8xf32> to vector<17x8xf32>
    %411 = arith.addf %409, %410 : vector<17x8xf32>
    %cst_139 = arith.constant dense<0xFF800000> : vector<17xf32>
    %412 = vector.multi_reduction <maximumf>, %411, %cst_139 [1] : vector<17x8xf32> to vector<17xf32>
    %413 = vector.shape_cast %412 : vector<17xf32> to vector<17x1xf32>
    %414 = vector.broadcast %413 : vector<17x1xf32> to vector<17x8xf32>
    %415 = arith.subf %411, %414 : vector<17x8xf32>
    %416 = math.exp %415 : vector<17x8xf32>
    %cst_140 = arith.constant dense<0.000000e+00> : vector<17xf32>
    %417 = vector.multi_reduction <add>, %416, %cst_140 [1] : vector<17x8xf32> to vector<17xf32>
    %418 = vector.shape_cast %417 : vector<17xf32> to vector<17x1xf32>
    %419 = vector.broadcast %418 : vector<17x1xf32> to vector<17x8xf32>
    %420 = arith.divf %416, %419 : vector<17x8xf32>
    %421 = vector.broadcast %148 : vector<1x32xf32> to vector<8x32xf32>
    %422 = arith.mulf %351, %421 : vector<8x32xf32>
    %cst_141 = arith.constant dense<0.000000e+00> : vector<17x32xf32>
    %423 = tpu.matmul %420, %422, %cst_141 {dimension_numbers = #tpu.dot_dimension_numbers<[1], [0], [0], [1], [0, 0, 1, 1], [], []>} : vector<17x8xf32>, vector<8x32xf32>, vector<17x32xf32> -> vector<17x32xf32>
    %424 = arith.addf %406, %423 : vector<17x32xf32>
    %c3_142 = arith.constant 3 : index
    %c0_143 = arith.constant 0 : index
    %c0_144 = arith.constant 0 : index
    %425 = vector.load %arg2[%c3_142, %c0_143, %c0_144] : memref<34x32x32xf32, #tpu.memory_space<vmem>>, vector<1x32x32xf32>
    %426 = vector.shape_cast %425 : vector<1x32x32xf32> to vector<32x32xf32>
    %cst_145 = arith.constant dense<0.000000e+00> : vector<17x32xf32>
    %427 = tpu.matmul %424, %426, %cst_145 {dimension_numbers = #tpu.dot_dimension_numbers<[1], [0], [0], [1], [0, 0, 1, 1], [], []>} : vector<17x32xf32>, vector<32x32xf32>, vector<17x32xf32> -> vector<17x32xf32>
    %428 = arith.addf %427, %150 : vector<17x32xf32>
    %cst_146 = arith.constant dense<0.000000e+00> : vector<17xf32>
    %429 = vector.multi_reduction <add>, %428, %cst_146 [1] : vector<17x32xf32> to vector<17xf32>
    %430 = vector.shape_cast %429 : vector<17xf32> to vector<17x1xf32>
    %cst_147 = arith.constant 3.200000e+01 : f32
    %431 = vector.broadcast %cst_147 : f32 to vector<17x1xf32>
    %432 = arith.divf %430, %431 : vector<17x1xf32>
    %433 = vector.broadcast %432 : vector<17x1xf32> to vector<17x32xf32>
    %434 = arith.subf %428, %433 : vector<17x32xf32>
    %435 = arith.mulf %434, %434 : vector<17x32xf32>
    %cst_148 = arith.constant dense<0.000000e+00> : vector<17xf32>
    %436 = vector.multi_reduction <add>, %435, %cst_148 [1] : vector<17x32xf32> to vector<17xf32>
    %437 = vector.shape_cast %436 : vector<17xf32> to vector<17x1xf32>
    %cst_149 = arith.constant 3.200000e+01 : f32
    %438 = vector.broadcast %cst_149 : f32 to vector<17x1xf32>
    %439 = arith.divf %437, %438 : vector<17x1xf32>
    %440 = vector.broadcast %432 : vector<17x1xf32> to vector<17x32xf32>
    %441 = arith.subf %428, %440 : vector<17x32xf32>
    %cst_150 = arith.constant 9.99999974E-6 : f32
    %442 = vector.broadcast %cst_150 : f32 to vector<17x1xf32>
    %443 = arith.addf %439, %442 : vector<17x1xf32>
    %444 = math.rsqrt %443 : vector<17x1xf32>
    %445 = vector.broadcast %444 : vector<17x1xf32> to vector<17x32xf32>
    %446 = arith.mulf %441, %445 : vector<17x32xf32>
    %c2_151 = arith.constant 2 : index
    %c0_152 = arith.constant 0 : index
    %c0_153 = arith.constant 0 : index
    %447 = vector.load %arg3[%c2_151, %c0_152, %c0_153] : memref<48x1x32xf32, #tpu.memory_space<vmem>>, vector<1x1x32xf32>
    %448 = vector.shape_cast %447 : vector<1x1x32xf32> to vector<1x32xf32>
    %449 = vector.broadcast %448 : vector<1x32xf32> to vector<17x32xf32>
    %450 = arith.mulf %446, %449 : vector<17x32xf32>
    %c3_154 = arith.constant 3 : index
    %c0_155 = arith.constant 0 : index
    %c0_156 = arith.constant 0 : index
    %451 = vector.load %arg3[%c3_154, %c0_155, %c0_156] : memref<48x1x32xf32, #tpu.memory_space<vmem>>, vector<1x1x32xf32>
    %452 = vector.shape_cast %451 : vector<1x1x32xf32> to vector<1x32xf32>
    %453 = vector.broadcast %452 : vector<1x32xf32> to vector<17x32xf32>
    %454 = arith.addf %450, %453 : vector<17x32xf32>
    %c5_157 = arith.constant 5 : index
    %c0_158 = arith.constant 0 : index
    %c0_159 = arith.constant 0 : index
    %455 = vector.load %arg2[%c5_157, %c0_158, %c0_159] : memref<34x32x32xf32, #tpu.memory_space<vmem>>, vector<1x32x32xf32>
    %456 = vector.shape_cast %455 : vector<1x32x32xf32> to vector<32x32xf32>
    %cst_160 = arith.constant dense<0.000000e+00> : vector<17x32xf32>
    %457 = tpu.matmul %454, %456, %cst_160 {dimension_numbers = #tpu.dot_dimension_numbers<[1], [0], [0], [1], [0, 0, 1, 1], [], []>} : vector<17x32xf32>, vector<32x32xf32>, vector<17x32xf32> -> vector<17x32xf32>
    %c18 = arith.constant 18 : index
    %c0_161 = arith.constant 0 : index
    %c0_162 = arith.constant 0 : index
    %458 = vector.load %arg3[%c18, %c0_161, %c0_162] : memref<48x1x32xf32, #tpu.memory_space<vmem>>, vector<1x1x32xf32>
    %459 = vector.shape_cast %458 : vector<1x1x32xf32> to vector<1x32xf32>
    %460 = vector.broadcast %459 : vector<1x32xf32> to vector<17x32xf32>
    %461 = arith.addf %457, %460 : vector<17x32xf32>
    %cst_163 = arith.constant 0.000000e+00 : f32
    %462 = vector.shape_cast %2 : vector<17x1xi1> to vector<17x1xi1>
    %463 = vector.broadcast %462 : vector<17x1xi1> to vector<17x32xi1>
    %464 = vector.broadcast %cst_163 : f32 to vector<17x32xf32>
    %465 = arith.select %463, %464, %461 : vector<17x32xi1>, vector<17x32xf32>
    %cst_164 = arith.constant dense<0.000000e+00> : vector<17x32xf32>
    %466 = tpu.matmul %9, %465, %cst_164 {dimension_numbers = #tpu.dot_dimension_numbers<[1], [0], [0], [1], [0, 0, 1, 1], [], []>} : vector<17x17xf32>, vector<17x32xf32>, vector<17x32xf32> -> vector<17x32xf32>
    %cst_165 = arith.constant dense<0.000000e+00> : vector<17x32xf32>
    %467 = tpu.matmul %14, %465, %cst_165 {dimension_numbers = #tpu.dot_dimension_numbers<[1], [0], [0], [1], [0, 0, 1, 1], [], []>} : vector<17x17xf32>, vector<17x32xf32>, vector<17x32xf32> -> vector<17x32xf32>
    %cst_166 = arith.constant 0.000000e+00 : f32
    %468 = vector.broadcast %cst_166 : f32 to vector<17x32xf32>
    %c0_167 = arith.constant 0 : index
    %c0_168 = arith.constant 0 : index
    %c0_169 = arith.constant 0 : index
    %469 = vector.load %arg5[%c0_167, %c0_168, %c0_169] : memref<16x3x32xf32, #tpu.memory_space<vmem>>, vector<1x3x32xf32>
    %470 = vector.shape_cast %469 : vector<1x3x32xf32> to vector<3x32xf32>
    %c0_170 = arith.constant 0 : index
    %c0_171 = arith.constant 0 : index
    %c0_172 = arith.constant 0 : index
    %471 = vector.load %arg6[%c0_170, %c0_171, %c0_172] : memref<16x1x32xf32, #tpu.memory_space<vmem>>, vector<1x1x32xf32>
    %472 = vector.shape_cast %471 : vector<1x1x32xf32> to vector<1x32xf32>
    %473 = vector.extract_strided_slice %470 {offsets = [0, 0], sizes = [1, 32], strides = [1, 1]} : vector<3x32xf32> to vector<1x32xf32>
    %474 = vector.broadcast %473 : vector<1x32xf32> to vector<17x32xf32>
    %475 = arith.mulf %474, %466 : vector<17x32xf32>
    %476 = vector.broadcast %472 : vector<1x32xf32> to vector<17x32xf32>
    %477 = arith.addf %476, %475 : vector<17x32xf32>
    %478 = vector.extract_strided_slice %470 {offsets = [1, 0], sizes = [1, 32], strides = [1, 1]} : vector<3x32xf32> to vector<1x32xf32>
    %479 = vector.broadcast %478 : vector<1x32xf32> to vector<17x32xf32>
    %480 = arith.mulf %479, %465 : vector<17x32xf32>
    %481 = arith.addf %477, %480 : vector<17x32xf32>
    %482 = vector.extract_strided_slice %470 {offsets = [2, 0], sizes = [1, 32], strides = [1, 1]} : vector<3x32xf32> to vector<1x32xf32>
    %483 = vector.broadcast %482 : vector<1x32xf32> to vector<17x32xf32>
    %484 = arith.mulf %483, %467 : vector<17x32xf32>
    %485 = arith.addf %481, %484 : vector<17x32xf32>
    %cst_173 = arith.constant 5.000000e-01 : f32
    %486 = vector.broadcast %cst_173 : f32 to vector<17x32xf32>
    %487 = arith.mulf %486, %485 : vector<17x32xf32>
    %cst_174 = arith.constant 0.707106769 : f32
    %488 = vector.broadcast %cst_174 : f32 to vector<17x32xf32>
    %489 = arith.mulf %485, %488 : vector<17x32xf32>
    %490 = math.erf %489 : vector<17x32xf32>
    %cst_175 = arith.constant 1.000000e+00 : f32
    %491 = vector.broadcast %cst_175 : f32 to vector<17x32xf32>
    %492 = arith.addf %491, %490 : vector<17x32xf32>
    %493 = arith.mulf %487, %492 : vector<17x32xf32>
    %c9_176 = arith.constant 9 : index
    %c0_177 = arith.constant 0 : index
    %c0_178 = arith.constant 0 : index
    %494 = vector.load %arg2[%c9_176, %c0_177, %c0_178] : memref<34x32x32xf32, #tpu.memory_space<vmem>>, vector<1x32x32xf32>
    %495 = vector.shape_cast %494 : vector<1x32x32xf32> to vector<32x32xf32>
    %cst_179 = arith.constant dense<0.000000e+00> : vector<17x32xf32>
    %496 = tpu.matmul %493, %495, %cst_179 {dimension_numbers = #tpu.dot_dimension_numbers<[1], [0], [0], [1], [0, 0, 1, 1], [], []>} : vector<17x32xf32>, vector<32x32xf32>, vector<17x32xf32> -> vector<17x32xf32>
    %497 = arith.addf %468, %496 : vector<17x32xf32>
    %c1_180 = arith.constant 1 : index
    %c0_181 = arith.constant 0 : index
    %c0_182 = arith.constant 0 : index
    %498 = vector.load %arg5[%c1_180, %c0_181, %c0_182] : memref<16x3x32xf32, #tpu.memory_space<vmem>>, vector<1x3x32xf32>
    %499 = vector.shape_cast %498 : vector<1x3x32xf32> to vector<3x32xf32>
    %c1_183 = arith.constant 1 : index
    %c0_184 = arith.constant 0 : index
    %c0_185 = arith.constant 0 : index
    %500 = vector.load %arg6[%c1_183, %c0_184, %c0_185] : memref<16x1x32xf32, #tpu.memory_space<vmem>>, vector<1x1x32xf32>
    %501 = vector.shape_cast %500 : vector<1x1x32xf32> to vector<1x32xf32>
    %502 = vector.extract_strided_slice %499 {offsets = [0, 0], sizes = [1, 32], strides = [1, 1]} : vector<3x32xf32> to vector<1x32xf32>
    %503 = vector.broadcast %502 : vector<1x32xf32> to vector<17x32xf32>
    %504 = arith.mulf %503, %466 : vector<17x32xf32>
    %505 = vector.broadcast %501 : vector<1x32xf32> to vector<17x32xf32>
    %506 = arith.addf %505, %504 : vector<17x32xf32>
    %507 = vector.extract_strided_slice %499 {offsets = [1, 0], sizes = [1, 32], strides = [1, 1]} : vector<3x32xf32> to vector<1x32xf32>
    %508 = vector.broadcast %507 : vector<1x32xf32> to vector<17x32xf32>
    %509 = arith.mulf %508, %465 : vector<17x32xf32>
    %510 = arith.addf %506, %509 : vector<17x32xf32>
    %511 = vector.extract_strided_slice %499 {offsets = [2, 0], sizes = [1, 32], strides = [1, 1]} : vector<3x32xf32> to vector<1x32xf32>
    %512 = vector.broadcast %511 : vector<1x32xf32> to vector<17x32xf32>
    %513 = arith.mulf %512, %467 : vector<17x32xf32>
    %514 = arith.addf %510, %513 : vector<17x32xf32>
    %cst_186 = arith.constant 5.000000e-01 : f32
    %515 = vector.broadcast %cst_186 : f32 to vector<17x32xf32>
    %516 = arith.mulf %515, %514 : vector<17x32xf32>
    %cst_187 = arith.constant 0.707106769 : f32
    %517 = vector.broadcast %cst_187 : f32 to vector<17x32xf32>
    %518 = arith.mulf %514, %517 : vector<17x32xf32>
    %519 = math.erf %518 : vector<17x32xf32>
    %cst_188 = arith.constant 1.000000e+00 : f32
    %520 = vector.broadcast %cst_188 : f32 to vector<17x32xf32>
    %521 = arith.addf %520, %519 : vector<17x32xf32>
    %522 = arith.mulf %516, %521 : vector<17x32xf32>
    %c10_189 = arith.constant 10 : index
    %c0_190 = arith.constant 0 : index
    %c0_191 = arith.constant 0 : index
    %523 = vector.load %arg2[%c10_189, %c0_190, %c0_191] : memref<34x32x32xf32, #tpu.memory_space<vmem>>, vector<1x32x32xf32>
    %524 = vector.shape_cast %523 : vector<1x32x32xf32> to vector<32x32xf32>
    %cst_192 = arith.constant dense<0.000000e+00> : vector<17x32xf32>
    %525 = tpu.matmul %522, %524, %cst_192 {dimension_numbers = #tpu.dot_dimension_numbers<[1], [0], [0], [1], [0, 0, 1, 1], [], []>} : vector<17x32xf32>, vector<32x32xf32>, vector<17x32xf32> -> vector<17x32xf32>
    %526 = arith.addf %497, %525 : vector<17x32xf32>
    %c2_193 = arith.constant 2 : index
    %c0_194 = arith.constant 0 : index
    %c0_195 = arith.constant 0 : index
    %527 = vector.load %arg5[%c2_193, %c0_194, %c0_195] : memref<16x3x32xf32, #tpu.memory_space<vmem>>, vector<1x3x32xf32>
    %528 = vector.shape_cast %527 : vector<1x3x32xf32> to vector<3x32xf32>
    %c2_196 = arith.constant 2 : index
    %c0_197 = arith.constant 0 : index
    %c0_198 = arith.constant 0 : index
    %529 = vector.load %arg6[%c2_196, %c0_197, %c0_198] : memref<16x1x32xf32, #tpu.memory_space<vmem>>, vector<1x1x32xf32>
    %530 = vector.shape_cast %529 : vector<1x1x32xf32> to vector<1x32xf32>
    %531 = vector.extract_strided_slice %528 {offsets = [0, 0], sizes = [1, 32], strides = [1, 1]} : vector<3x32xf32> to vector<1x32xf32>
    %532 = vector.broadcast %531 : vector<1x32xf32> to vector<17x32xf32>
    %533 = arith.mulf %532, %466 : vector<17x32xf32>
    %534 = vector.broadcast %530 : vector<1x32xf32> to vector<17x32xf32>
    %535 = arith.addf %534, %533 : vector<17x32xf32>
    %536 = vector.extract_strided_slice %528 {offsets = [1, 0], sizes = [1, 32], strides = [1, 1]} : vector<3x32xf32> to vector<1x32xf32>
    %537 = vector.broadcast %536 : vector<1x32xf32> to vector<17x32xf32>
    %538 = arith.mulf %537, %465 : vector<17x32xf32>
    %539 = arith.addf %535, %538 : vector<17x32xf32>
    %540 = vector.extract_strided_slice %528 {offsets = [2, 0], sizes = [1, 32], strides = [1, 1]} : vector<3x32xf32> to vector<1x32xf32>
    %541 = vector.broadcast %540 : vector<1x32xf32> to vector<17x32xf32>
    %542 = arith.mulf %541, %467 : vector<17x32xf32>
    %543 = arith.addf %539, %542 : vector<17x32xf32>
    %cst_199 = arith.constant 5.000000e-01 : f32
    %544 = vector.broadcast %cst_199 : f32 to vector<17x32xf32>
    %545 = arith.mulf %544, %543 : vector<17x32xf32>
    %cst_200 = arith.constant 0.707106769 : f32
    %546 = vector.broadcast %cst_200 : f32 to vector<17x32xf32>
    %547 = arith.mulf %543, %546 : vector<17x32xf32>
    %548 = math.erf %547 : vector<17x32xf32>
    %cst_201 = arith.constant 1.000000e+00 : f32
    %549 = vector.broadcast %cst_201 : f32 to vector<17x32xf32>
    %550 = arith.addf %549, %548 : vector<17x32xf32>
    %551 = arith.mulf %545, %550 : vector<17x32xf32>
    %c11_202 = arith.constant 11 : index
    %c0_203 = arith.constant 0 : index
    %c0_204 = arith.constant 0 : index
    %552 = vector.load %arg2[%c11_202, %c0_203, %c0_204] : memref<34x32x32xf32, #tpu.memory_space<vmem>>, vector<1x32x32xf32>
    %553 = vector.shape_cast %552 : vector<1x32x32xf32> to vector<32x32xf32>
    %cst_205 = arith.constant dense<0.000000e+00> : vector<17x32xf32>
    %554 = tpu.matmul %551, %553, %cst_205 {dimension_numbers = #tpu.dot_dimension_numbers<[1], [0], [0], [1], [0, 0, 1, 1], [], []>} : vector<17x32xf32>, vector<32x32xf32>, vector<17x32xf32> -> vector<17x32xf32>
    %555 = arith.addf %526, %554 : vector<17x32xf32>
    %c3_206 = arith.constant 3 : index
    %c0_207 = arith.constant 0 : index
    %c0_208 = arith.constant 0 : index
    %556 = vector.load %arg5[%c3_206, %c0_207, %c0_208] : memref<16x3x32xf32, #tpu.memory_space<vmem>>, vector<1x3x32xf32>
    %557 = vector.shape_cast %556 : vector<1x3x32xf32> to vector<3x32xf32>
    %c3_209 = arith.constant 3 : index
    %c0_210 = arith.constant 0 : index
    %c0_211 = arith.constant 0 : index
    %558 = vector.load %arg6[%c3_209, %c0_210, %c0_211] : memref<16x1x32xf32, #tpu.memory_space<vmem>>, vector<1x1x32xf32>
    %559 = vector.shape_cast %558 : vector<1x1x32xf32> to vector<1x32xf32>
    %560 = vector.extract_strided_slice %557 {offsets = [0, 0], sizes = [1, 32], strides = [1, 1]} : vector<3x32xf32> to vector<1x32xf32>
    %561 = vector.broadcast %560 : vector<1x32xf32> to vector<17x32xf32>
    %562 = arith.mulf %561, %466 : vector<17x32xf32>
    %563 = vector.broadcast %559 : vector<1x32xf32> to vector<17x32xf32>
    %564 = arith.addf %563, %562 : vector<17x32xf32>
    %565 = vector.extract_strided_slice %557 {offsets = [1, 0], sizes = [1, 32], strides = [1, 1]} : vector<3x32xf32> to vector<1x32xf32>
    %566 = vector.broadcast %565 : vector<1x32xf32> to vector<17x32xf32>
    %567 = arith.mulf %566, %465 : vector<17x32xf32>
    %568 = arith.addf %564, %567 : vector<17x32xf32>
    %569 = vector.extract_strided_slice %557 {offsets = [2, 0], sizes = [1, 32], strides = [1, 1]} : vector<3x32xf32> to vector<1x32xf32>
    %570 = vector.broadcast %569 : vector<1x32xf32> to vector<17x32xf32>
    %571 = arith.mulf %570, %467 : vector<17x32xf32>
    %572 = arith.addf %568, %571 : vector<17x32xf32>
    %cst_212 = arith.constant 5.000000e-01 : f32
    %573 = vector.broadcast %cst_212 : f32 to vector<17x32xf32>
    %574 = arith.mulf %573, %572 : vector<17x32xf32>
    %cst_213 = arith.constant 0.707106769 : f32
    %575 = vector.broadcast %cst_213 : f32 to vector<17x32xf32>
    %576 = arith.mulf %572, %575 : vector<17x32xf32>
    %577 = math.erf %576 : vector<17x32xf32>
    %cst_214 = arith.constant 1.000000e+00 : f32
    %578 = vector.broadcast %cst_214 : f32 to vector<17x32xf32>
    %579 = arith.addf %578, %577 : vector<17x32xf32>
    %580 = arith.mulf %574, %579 : vector<17x32xf32>
    %c12_215 = arith.constant 12 : index
    %c0_216 = arith.constant 0 : index
    %c0_217 = arith.constant 0 : index
    %581 = vector.load %arg2[%c12_215, %c0_216, %c0_217] : memref<34x32x32xf32, #tpu.memory_space<vmem>>, vector<1x32x32xf32>
    %582 = vector.shape_cast %581 : vector<1x32x32xf32> to vector<32x32xf32>
    %cst_218 = arith.constant dense<0.000000e+00> : vector<17x32xf32>
    %583 = tpu.matmul %580, %582, %cst_218 {dimension_numbers = #tpu.dot_dimension_numbers<[1], [0], [0], [1], [0, 0, 1, 1], [], []>} : vector<17x32xf32>, vector<32x32xf32>, vector<17x32xf32> -> vector<17x32xf32>
    %584 = arith.addf %555, %583 : vector<17x32xf32>
    %c19 = arith.constant 19 : index
    %c0_219 = arith.constant 0 : index
    %c0_220 = arith.constant 0 : index
    %585 = vector.load %arg3[%c19, %c0_219, %c0_220] : memref<48x1x32xf32, #tpu.memory_space<vmem>>, vector<1x1x32xf32>
    %586 = vector.shape_cast %585 : vector<1x1x32xf32> to vector<1x32xf32>
    %587 = vector.broadcast %586 : vector<1x32xf32> to vector<17x32xf32>
    %588 = arith.addf %584, %587 : vector<17x32xf32>
    %589 = vector.shape_cast %2 : vector<17x1xi1> to vector<17x1xi1>
    %590 = vector.broadcast %589 : vector<17x1xi1> to vector<17x32xi1>
    %591 = arith.select %590, %454, %588 : vector<17x32xi1>, vector<17x32xf32>
    %592 = arith.addf %591, %428 : vector<17x32xf32>
    %cst_221 = arith.constant dense<0.000000e+00> : vector<17xf32>
    %593 = vector.multi_reduction <add>, %592, %cst_221 [1] : vector<17x32xf32> to vector<17xf32>
    %594 = vector.shape_cast %593 : vector<17xf32> to vector<17x1xf32>
    %cst_222 = arith.constant 3.200000e+01 : f32
    %595 = vector.broadcast %cst_222 : f32 to vector<17x1xf32>
    %596 = arith.divf %594, %595 : vector<17x1xf32>
    %597 = vector.broadcast %596 : vector<17x1xf32> to vector<17x32xf32>
    %598 = arith.subf %592, %597 : vector<17x32xf32>
    %599 = arith.mulf %598, %598 : vector<17x32xf32>
    %cst_223 = arith.constant dense<0.000000e+00> : vector<17xf32>
    %600 = vector.multi_reduction <add>, %599, %cst_223 [1] : vector<17x32xf32> to vector<17xf32>
    %601 = vector.shape_cast %600 : vector<17xf32> to vector<17x1xf32>
    %cst_224 = arith.constant 3.200000e+01 : f32
    %602 = vector.broadcast %cst_224 : f32 to vector<17x1xf32>
    %603 = arith.divf %601, %602 : vector<17x1xf32>
    %604 = vector.broadcast %596 : vector<17x1xf32> to vector<17x32xf32>
    %605 = arith.subf %592, %604 : vector<17x32xf32>
    %cst_225 = arith.constant 9.99999974E-6 : f32
    %606 = vector.broadcast %cst_225 : f32 to vector<17x1xf32>
    %607 = arith.addf %603, %606 : vector<17x1xf32>
    %608 = math.rsqrt %607 : vector<17x1xf32>
    %609 = vector.broadcast %608 : vector<17x1xf32> to vector<17x32xf32>
    %610 = arith.mulf %605, %609 : vector<17x32xf32>
    %c4_226 = arith.constant 4 : index
    %c0_227 = arith.constant 0 : index
    %c0_228 = arith.constant 0 : index
    %611 = vector.load %arg3[%c4_226, %c0_227, %c0_228] : memref<48x1x32xf32, #tpu.memory_space<vmem>>, vector<1x1x32xf32>
    %612 = vector.shape_cast %611 : vector<1x1x32xf32> to vector<1x32xf32>
    %613 = vector.broadcast %612 : vector<1x32xf32> to vector<17x32xf32>
    %614 = arith.mulf %610, %613 : vector<17x32xf32>
    %c5_229 = arith.constant 5 : index
    %c0_230 = arith.constant 0 : index
    %c0_231 = arith.constant 0 : index
    %615 = vector.load %arg3[%c5_229, %c0_230, %c0_231] : memref<48x1x32xf32, #tpu.memory_space<vmem>>, vector<1x1x32xf32>
    %616 = vector.shape_cast %615 : vector<1x1x32xf32> to vector<1x32xf32>
    %617 = vector.broadcast %616 : vector<1x32xf32> to vector<17x32xf32>
    %618 = arith.addf %614, %617 : vector<17x32xf32>
    %c6_232 = arith.constant 6 : index
    %c0_233 = arith.constant 0 : index
    %c0_234 = arith.constant 0 : index
    %619 = vector.load %arg2[%c6_232, %c0_233, %c0_234] : memref<34x32x32xf32, #tpu.memory_space<vmem>>, vector<1x32x32xf32>
    %620 = vector.shape_cast %619 : vector<1x32x32xf32> to vector<32x32xf32>
    %cst_235 = arith.constant dense<0.000000e+00> : vector<17x32xf32>
    %621 = tpu.matmul %618, %620, %cst_235 {dimension_numbers = #tpu.dot_dimension_numbers<[1], [0], [0], [1], [0, 0, 1, 1], [], []>} : vector<17x32xf32>, vector<32x32xf32>, vector<17x32xf32> -> vector<17x32xf32>
    %c20 = arith.constant 20 : index
    %c0_236 = arith.constant 0 : index
    %c0_237 = arith.constant 0 : index
    %622 = vector.load %arg3[%c20, %c0_236, %c0_237] : memref<48x1x32xf32, #tpu.memory_space<vmem>>, vector<1x1x32xf32>
    %623 = vector.shape_cast %622 : vector<1x1x32xf32> to vector<1x32xf32>
    %624 = vector.broadcast %623 : vector<1x32xf32> to vector<17x32xf32>
    %625 = arith.addf %621, %624 : vector<17x32xf32>
    %cst_238 = arith.constant 0.000000e+00 : f32
    %626 = vector.shape_cast %2 : vector<17x1xi1> to vector<17x1xi1>
    %627 = vector.broadcast %626 : vector<17x1xi1> to vector<17x32xi1>
    %628 = vector.broadcast %cst_238 : f32 to vector<17x32xf32>
    %629 = arith.select %627, %628, %625 : vector<17x32xi1>, vector<17x32xf32>
    %cst_239 = arith.constant dense<0.000000e+00> : vector<17x32xf32>
    %630 = tpu.matmul %9, %629, %cst_239 {dimension_numbers = #tpu.dot_dimension_numbers<[1], [0], [0], [1], [0, 0, 1, 1], [], []>} : vector<17x17xf32>, vector<17x32xf32>, vector<17x32xf32> -> vector<17x32xf32>
    %cst_240 = arith.constant dense<0.000000e+00> : vector<17x32xf32>
    %631 = tpu.matmul %14, %629, %cst_240 {dimension_numbers = #tpu.dot_dimension_numbers<[1], [0], [0], [1], [0, 0, 1, 1], [], []>} : vector<17x17xf32>, vector<17x32xf32>, vector<17x32xf32> -> vector<17x32xf32>
    %cst_241 = arith.constant 0.000000e+00 : f32
    %632 = vector.broadcast %cst_241 : f32 to vector<17x32xf32>
    %c4_242 = arith.constant 4 : index
    %c0_243 = arith.constant 0 : index
    %c0_244 = arith.constant 0 : index
    %633 = vector.load %arg5[%c4_242, %c0_243, %c0_244] : memref<16x3x32xf32, #tpu.memory_space<vmem>>, vector<1x3x32xf32>
    %634 = vector.shape_cast %633 : vector<1x3x32xf32> to vector<3x32xf32>
    %c4_245 = arith.constant 4 : index
    %c0_246 = arith.constant 0 : index
    %c0_247 = arith.constant 0 : index
    %635 = vector.load %arg6[%c4_245, %c0_246, %c0_247] : memref<16x1x32xf32, #tpu.memory_space<vmem>>, vector<1x1x32xf32>
    %636 = vector.shape_cast %635 : vector<1x1x32xf32> to vector<1x32xf32>
    %637 = vector.extract_strided_slice %634 {offsets = [0, 0], sizes = [1, 32], strides = [1, 1]} : vector<3x32xf32> to vector<1x32xf32>
    %638 = vector.broadcast %637 : vector<1x32xf32> to vector<17x32xf32>
    %639 = arith.mulf %638, %630 : vector<17x32xf32>
    %640 = vector.broadcast %636 : vector<1x32xf32> to vector<17x32xf32>
    %641 = arith.addf %640, %639 : vector<17x32xf32>
    %642 = vector.extract_strided_slice %634 {offsets = [1, 0], sizes = [1, 32], strides = [1, 1]} : vector<3x32xf32> to vector<1x32xf32>
    %643 = vector.broadcast %642 : vector<1x32xf32> to vector<17x32xf32>
    %644 = arith.mulf %643, %629 : vector<17x32xf32>
    %645 = arith.addf %641, %644 : vector<17x32xf32>
    %646 = vector.extract_strided_slice %634 {offsets = [2, 0], sizes = [1, 32], strides = [1, 1]} : vector<3x32xf32> to vector<1x32xf32>
    %647 = vector.broadcast %646 : vector<1x32xf32> to vector<17x32xf32>
    %648 = arith.mulf %647, %631 : vector<17x32xf32>
    %649 = arith.addf %645, %648 : vector<17x32xf32>
    %cst_248 = arith.constant 5.000000e-01 : f32
    %650 = vector.broadcast %cst_248 : f32 to vector<17x32xf32>
    %651 = arith.mulf %650, %649 : vector<17x32xf32>
    %cst_249 = arith.constant 0.707106769 : f32
    %652 = vector.broadcast %cst_249 : f32 to vector<17x32xf32>
    %653 = arith.mulf %649, %652 : vector<17x32xf32>
    %654 = math.erf %653 : vector<17x32xf32>
    %cst_250 = arith.constant 1.000000e+00 : f32
    %655 = vector.broadcast %cst_250 : f32 to vector<17x32xf32>
    %656 = arith.addf %655, %654 : vector<17x32xf32>
    %657 = arith.mulf %651, %656 : vector<17x32xf32>
    %c13_251 = arith.constant 13 : index
    %c0_252 = arith.constant 0 : index
    %c0_253 = arith.constant 0 : index
    %658 = vector.load %arg2[%c13_251, %c0_252, %c0_253] : memref<34x32x32xf32, #tpu.memory_space<vmem>>, vector<1x32x32xf32>
    %659 = vector.shape_cast %658 : vector<1x32x32xf32> to vector<32x32xf32>
    %cst_254 = arith.constant dense<0.000000e+00> : vector<17x32xf32>
    %660 = tpu.matmul %657, %659, %cst_254 {dimension_numbers = #tpu.dot_dimension_numbers<[1], [0], [0], [1], [0, 0, 1, 1], [], []>} : vector<17x32xf32>, vector<32x32xf32>, vector<17x32xf32> -> vector<17x32xf32>
    %661 = arith.addf %632, %660 : vector<17x32xf32>
    %c5_255 = arith.constant 5 : index
    %c0_256 = arith.constant 0 : index
    %c0_257 = arith.constant 0 : index
    %662 = vector.load %arg5[%c5_255, %c0_256, %c0_257] : memref<16x3x32xf32, #tpu.memory_space<vmem>>, vector<1x3x32xf32>
    %663 = vector.shape_cast %662 : vector<1x3x32xf32> to vector<3x32xf32>
    %c5_258 = arith.constant 5 : index
    %c0_259 = arith.constant 0 : index
    %c0_260 = arith.constant 0 : index
    %664 = vector.load %arg6[%c5_258, %c0_259, %c0_260] : memref<16x1x32xf32, #tpu.memory_space<vmem>>, vector<1x1x32xf32>
    %665 = vector.shape_cast %664 : vector<1x1x32xf32> to vector<1x32xf32>
    %666 = vector.extract_strided_slice %663 {offsets = [0, 0], sizes = [1, 32], strides = [1, 1]} : vector<3x32xf32> to vector<1x32xf32>
    %667 = vector.broadcast %666 : vector<1x32xf32> to vector<17x32xf32>
    %668 = arith.mulf %667, %630 : vector<17x32xf32>
    %669 = vector.broadcast %665 : vector<1x32xf32> to vector<17x32xf32>
    %670 = arith.addf %669, %668 : vector<17x32xf32>
    %671 = vector.extract_strided_slice %663 {offsets = [1, 0], sizes = [1, 32], strides = [1, 1]} : vector<3x32xf32> to vector<1x32xf32>
    %672 = vector.broadcast %671 : vector<1x32xf32> to vector<17x32xf32>
    %673 = arith.mulf %672, %629 : vector<17x32xf32>
    %674 = arith.addf %670, %673 : vector<17x32xf32>
    %675 = vector.extract_strided_slice %663 {offsets = [2, 0], sizes = [1, 32], strides = [1, 1]} : vector<3x32xf32> to vector<1x32xf32>
    %676 = vector.broadcast %675 : vector<1x32xf32> to vector<17x32xf32>
    %677 = arith.mulf %676, %631 : vector<17x32xf32>
    %678 = arith.addf %674, %677 : vector<17x32xf32>
    %cst_261 = arith.constant 5.000000e-01 : f32
    %679 = vector.broadcast %cst_261 : f32 to vector<17x32xf32>
    %680 = arith.mulf %679, %678 : vector<17x32xf32>
    %cst_262 = arith.constant 0.707106769 : f32
    %681 = vector.broadcast %cst_262 : f32 to vector<17x32xf32>
    %682 = arith.mulf %678, %681 : vector<17x32xf32>
    %683 = math.erf %682 : vector<17x32xf32>
    %cst_263 = arith.constant 1.000000e+00 : f32
    %684 = vector.broadcast %cst_263 : f32 to vector<17x32xf32>
    %685 = arith.addf %684, %683 : vector<17x32xf32>
    %686 = arith.mulf %680, %685 : vector<17x32xf32>
    %c14_264 = arith.constant 14 : index
    %c0_265 = arith.constant 0 : index
    %c0_266 = arith.constant 0 : index
    %687 = vector.load %arg2[%c14_264, %c0_265, %c0_266] : memref<34x32x32xf32, #tpu.memory_space<vmem>>, vector<1x32x32xf32>
    %688 = vector.shape_cast %687 : vector<1x32x32xf32> to vector<32x32xf32>
    %cst_267 = arith.constant dense<0.000000e+00> : vector<17x32xf32>
    %689 = tpu.matmul %686, %688, %cst_267 {dimension_numbers = #tpu.dot_dimension_numbers<[1], [0], [0], [1], [0, 0, 1, 1], [], []>} : vector<17x32xf32>, vector<32x32xf32>, vector<17x32xf32> -> vector<17x32xf32>
    %690 = arith.addf %661, %689 : vector<17x32xf32>
    %c6_268 = arith.constant 6 : index
    %c0_269 = arith.constant 0 : index
    %c0_270 = arith.constant 0 : index
    %691 = vector.load %arg5[%c6_268, %c0_269, %c0_270] : memref<16x3x32xf32, #tpu.memory_space<vmem>>, vector<1x3x32xf32>
    %692 = vector.shape_cast %691 : vector<1x3x32xf32> to vector<3x32xf32>
    %c6_271 = arith.constant 6 : index
    %c0_272 = arith.constant 0 : index
    %c0_273 = arith.constant 0 : index
    %693 = vector.load %arg6[%c6_271, %c0_272, %c0_273] : memref<16x1x32xf32, #tpu.memory_space<vmem>>, vector<1x1x32xf32>
    %694 = vector.shape_cast %693 : vector<1x1x32xf32> to vector<1x32xf32>
    %695 = vector.extract_strided_slice %692 {offsets = [0, 0], sizes = [1, 32], strides = [1, 1]} : vector<3x32xf32> to vector<1x32xf32>
    %696 = vector.broadcast %695 : vector<1x32xf32> to vector<17x32xf32>
    %697 = arith.mulf %696, %630 : vector<17x32xf32>
    %698 = vector.broadcast %694 : vector<1x32xf32> to vector<17x32xf32>
    %699 = arith.addf %698, %697 : vector<17x32xf32>
    %700 = vector.extract_strided_slice %692 {offsets = [1, 0], sizes = [1, 32], strides = [1, 1]} : vector<3x32xf32> to vector<1x32xf32>
    %701 = vector.broadcast %700 : vector<1x32xf32> to vector<17x32xf32>
    %702 = arith.mulf %701, %629 : vector<17x32xf32>
    %703 = arith.addf %699, %702 : vector<17x32xf32>
    %704 = vector.extract_strided_slice %692 {offsets = [2, 0], sizes = [1, 32], strides = [1, 1]} : vector<3x32xf32> to vector<1x32xf32>
    %705 = vector.broadcast %704 : vector<1x32xf32> to vector<17x32xf32>
    %706 = arith.mulf %705, %631 : vector<17x32xf32>
    %707 = arith.addf %703, %706 : vector<17x32xf32>
    %cst_274 = arith.constant 5.000000e-01 : f32
    %708 = vector.broadcast %cst_274 : f32 to vector<17x32xf32>
    %709 = arith.mulf %708, %707 : vector<17x32xf32>
    %cst_275 = arith.constant 0.707106769 : f32
    %710 = vector.broadcast %cst_275 : f32 to vector<17x32xf32>
    %711 = arith.mulf %707, %710 : vector<17x32xf32>
    %712 = math.erf %711 : vector<17x32xf32>
    %cst_276 = arith.constant 1.000000e+00 : f32
    %713 = vector.broadcast %cst_276 : f32 to vector<17x32xf32>
    %714 = arith.addf %713, %712 : vector<17x32xf32>
    %715 = arith.mulf %709, %714 : vector<17x32xf32>
    %c15_277 = arith.constant 15 : index
    %c0_278 = arith.constant 0 : index
    %c0_279 = arith.constant 0 : index
    %716 = vector.load %arg2[%c15_277, %c0_278, %c0_279] : memref<34x32x32xf32, #tpu.memory_space<vmem>>, vector<1x32x32xf32>
    %717 = vector.shape_cast %716 : vector<1x32x32xf32> to vector<32x32xf32>
    %cst_280 = arith.constant dense<0.000000e+00> : vector<17x32xf32>
    %718 = tpu.matmul %715, %717, %cst_280 {dimension_numbers = #tpu.dot_dimension_numbers<[1], [0], [0], [1], [0, 0, 1, 1], [], []>} : vector<17x32xf32>, vector<32x32xf32>, vector<17x32xf32> -> vector<17x32xf32>
    %719 = arith.addf %690, %718 : vector<17x32xf32>
    %c7 = arith.constant 7 : index
    %c0_281 = arith.constant 0 : index
    %c0_282 = arith.constant 0 : index
    %720 = vector.load %arg5[%c7, %c0_281, %c0_282] : memref<16x3x32xf32, #tpu.memory_space<vmem>>, vector<1x3x32xf32>
    %721 = vector.shape_cast %720 : vector<1x3x32xf32> to vector<3x32xf32>
    %c7_283 = arith.constant 7 : index
    %c0_284 = arith.constant 0 : index
    %c0_285 = arith.constant 0 : index
    %722 = vector.load %arg6[%c7_283, %c0_284, %c0_285] : memref<16x1x32xf32, #tpu.memory_space<vmem>>, vector<1x1x32xf32>
    %723 = vector.shape_cast %722 : vector<1x1x32xf32> to vector<1x32xf32>
    %724 = vector.extract_strided_slice %721 {offsets = [0, 0], sizes = [1, 32], strides = [1, 1]} : vector<3x32xf32> to vector<1x32xf32>
    %725 = vector.broadcast %724 : vector<1x32xf32> to vector<17x32xf32>
    %726 = arith.mulf %725, %630 : vector<17x32xf32>
    %727 = vector.broadcast %723 : vector<1x32xf32> to vector<17x32xf32>
    %728 = arith.addf %727, %726 : vector<17x32xf32>
    %729 = vector.extract_strided_slice %721 {offsets = [1, 0], sizes = [1, 32], strides = [1, 1]} : vector<3x32xf32> to vector<1x32xf32>
    %730 = vector.broadcast %729 : vector<1x32xf32> to vector<17x32xf32>
    %731 = arith.mulf %730, %629 : vector<17x32xf32>
    %732 = arith.addf %728, %731 : vector<17x32xf32>
    %733 = vector.extract_strided_slice %721 {offsets = [2, 0], sizes = [1, 32], strides = [1, 1]} : vector<3x32xf32> to vector<1x32xf32>
    %734 = vector.broadcast %733 : vector<1x32xf32> to vector<17x32xf32>
    %735 = arith.mulf %734, %631 : vector<17x32xf32>
    %736 = arith.addf %732, %735 : vector<17x32xf32>
    %cst_286 = arith.constant 5.000000e-01 : f32
    %737 = vector.broadcast %cst_286 : f32 to vector<17x32xf32>
    %738 = arith.mulf %737, %736 : vector<17x32xf32>
    %cst_287 = arith.constant 0.707106769 : f32
    %739 = vector.broadcast %cst_287 : f32 to vector<17x32xf32>
    %740 = arith.mulf %736, %739 : vector<17x32xf32>
    %741 = math.erf %740 : vector<17x32xf32>
    %cst_288 = arith.constant 1.000000e+00 : f32
    %742 = vector.broadcast %cst_288 : f32 to vector<17x32xf32>
    %743 = arith.addf %742, %741 : vector<17x32xf32>
    %744 = arith.mulf %738, %743 : vector<17x32xf32>
    %c16_289 = arith.constant 16 : index
    %c0_290 = arith.constant 0 : index
    %c0_291 = arith.constant 0 : index
    %745 = vector.load %arg2[%c16_289, %c0_290, %c0_291] : memref<34x32x32xf32, #tpu.memory_space<vmem>>, vector<1x32x32xf32>
    %746 = vector.shape_cast %745 : vector<1x32x32xf32> to vector<32x32xf32>
    %cst_292 = arith.constant dense<0.000000e+00> : vector<17x32xf32>
    %747 = tpu.matmul %744, %746, %cst_292 {dimension_numbers = #tpu.dot_dimension_numbers<[1], [0], [0], [1], [0, 0, 1, 1], [], []>} : vector<17x32xf32>, vector<32x32xf32>, vector<17x32xf32> -> vector<17x32xf32>
    %748 = arith.addf %719, %747 : vector<17x32xf32>
    %c21 = arith.constant 21 : index
    %c0_293 = arith.constant 0 : index
    %c0_294 = arith.constant 0 : index
    %749 = vector.load %arg3[%c21, %c0_293, %c0_294] : memref<48x1x32xf32, #tpu.memory_space<vmem>>, vector<1x1x32xf32>
    %750 = vector.shape_cast %749 : vector<1x1x32xf32> to vector<1x32xf32>
    %751 = vector.broadcast %750 : vector<1x32xf32> to vector<17x32xf32>
    %752 = arith.addf %748, %751 : vector<17x32xf32>
    %753 = vector.shape_cast %2 : vector<17x1xi1> to vector<17x1xi1>
    %754 = vector.broadcast %753 : vector<17x1xi1> to vector<17x32xi1>
    %755 = arith.select %754, %618, %752 : vector<17x32xi1>, vector<17x32xf32>
    %756 = arith.addf %755, %592 : vector<17x32xf32>
    %cst_295 = arith.constant dense<0.000000e+00> : vector<17xf32>
    %757 = vector.multi_reduction <add>, %592, %cst_295 [1] : vector<17x32xf32> to vector<17xf32>
    %758 = vector.shape_cast %757 : vector<17xf32> to vector<17x1xf32>
    %cst_296 = arith.constant 3.200000e+01 : f32
    %759 = vector.broadcast %cst_296 : f32 to vector<17x1xf32>
    %760 = arith.divf %758, %759 : vector<17x1xf32>
    %761 = vector.broadcast %760 : vector<17x1xf32> to vector<17x32xf32>
    %762 = arith.subf %592, %761 : vector<17x32xf32>
    %763 = arith.mulf %762, %762 : vector<17x32xf32>
    %cst_297 = arith.constant dense<0.000000e+00> : vector<17xf32>
    %764 = vector.multi_reduction <add>, %763, %cst_297 [1] : vector<17x32xf32> to vector<17xf32>
    %765 = vector.shape_cast %764 : vector<17xf32> to vector<17x1xf32>
    %cst_298 = arith.constant 3.200000e+01 : f32
    %766 = vector.broadcast %cst_298 : f32 to vector<17x1xf32>
    %767 = arith.divf %765, %766 : vector<17x1xf32>
    %768 = vector.broadcast %760 : vector<17x1xf32> to vector<17x32xf32>
    %769 = arith.subf %592, %768 : vector<17x32xf32>
    %cst_299 = arith.constant 9.99999974E-6 : f32
    %770 = vector.broadcast %cst_299 : f32 to vector<17x1xf32>
    %771 = arith.addf %767, %770 : vector<17x1xf32>
    %772 = math.rsqrt %771 : vector<17x1xf32>
    %773 = vector.broadcast %772 : vector<17x1xf32> to vector<17x32xf32>
    %774 = arith.mulf %769, %773 : vector<17x32xf32>
    %c6_300 = arith.constant 6 : index
    %c0_301 = arith.constant 0 : index
    %c0_302 = arith.constant 0 : index
    %775 = vector.load %arg3[%c6_300, %c0_301, %c0_302] : memref<48x1x32xf32, #tpu.memory_space<vmem>>, vector<1x1x32xf32>
    %776 = vector.shape_cast %775 : vector<1x1x32xf32> to vector<1x32xf32>
    %777 = vector.broadcast %776 : vector<1x32xf32> to vector<17x32xf32>
    %778 = arith.mulf %774, %777 : vector<17x32xf32>
    %c7_303 = arith.constant 7 : index
    %c0_304 = arith.constant 0 : index
    %c0_305 = arith.constant 0 : index
    %779 = vector.load %arg3[%c7_303, %c0_304, %c0_305] : memref<48x1x32xf32, #tpu.memory_space<vmem>>, vector<1x1x32xf32>
    %780 = vector.shape_cast %779 : vector<1x1x32xf32> to vector<1x32xf32>
    %781 = vector.broadcast %780 : vector<1x32xf32> to vector<17x32xf32>
    %782 = arith.addf %778, %781 : vector<17x32xf32>
    %c7_306 = arith.constant 7 : index
    %c0_307 = arith.constant 0 : index
    %c0_308 = arith.constant 0 : index
    %783 = vector.load %arg2[%c7_306, %c0_307, %c0_308] : memref<34x32x32xf32, #tpu.memory_space<vmem>>, vector<1x32x32xf32>
    %784 = vector.shape_cast %783 : vector<1x32x32xf32> to vector<32x32xf32>
    %cst_309 = arith.constant dense<0.000000e+00> : vector<17x32xf32>
    %785 = tpu.matmul %782, %784, %cst_309 {dimension_numbers = #tpu.dot_dimension_numbers<[1], [0], [0], [1], [0, 0, 1, 1], [], []>} : vector<17x32xf32>, vector<32x32xf32>, vector<17x32xf32> -> vector<17x32xf32>
    %c22 = arith.constant 22 : index
    %c0_310 = arith.constant 0 : index
    %c0_311 = arith.constant 0 : index
    %786 = vector.load %arg3[%c22, %c0_310, %c0_311] : memref<48x1x32xf32, #tpu.memory_space<vmem>>, vector<1x1x32xf32>
    %787 = vector.shape_cast %786 : vector<1x1x32xf32> to vector<1x32xf32>
    %788 = vector.broadcast %787 : vector<1x32xf32> to vector<17x32xf32>
    %789 = arith.addf %785, %788 : vector<17x32xf32>
    %cst_312 = arith.constant 5.000000e-01 : f32
    %790 = vector.broadcast %cst_312 : f32 to vector<17x32xf32>
    %791 = arith.mulf %790, %789 : vector<17x32xf32>
    %cst_313 = arith.constant 0.707106769 : f32
    %792 = vector.broadcast %cst_313 : f32 to vector<17x32xf32>
    %793 = arith.mulf %789, %792 : vector<17x32xf32>
    %794 = math.erf %793 : vector<17x32xf32>
    %cst_314 = arith.constant 1.000000e+00 : f32
    %795 = vector.broadcast %cst_314 : f32 to vector<17x32xf32>
    %796 = arith.addf %795, %794 : vector<17x32xf32>
    %797 = arith.mulf %791, %796 : vector<17x32xf32>
    %c8_315 = arith.constant 8 : index
    %c0_316 = arith.constant 0 : index
    %c0_317 = arith.constant 0 : index
    %798 = vector.load %arg2[%c8_315, %c0_316, %c0_317] : memref<34x32x32xf32, #tpu.memory_space<vmem>>, vector<1x32x32xf32>
    %799 = vector.shape_cast %798 : vector<1x32x32xf32> to vector<32x32xf32>
    %cst_318 = arith.constant dense<0.000000e+00> : vector<17x32xf32>
    %800 = tpu.matmul %797, %799, %cst_318 {dimension_numbers = #tpu.dot_dimension_numbers<[1], [0], [0], [1], [0, 0, 1, 1], [], []>} : vector<17x32xf32>, vector<32x32xf32>, vector<17x32xf32> -> vector<17x32xf32>
    %c23 = arith.constant 23 : index
    %c0_319 = arith.constant 0 : index
    %c0_320 = arith.constant 0 : index
    %801 = vector.load %arg3[%c23, %c0_319, %c0_320] : memref<48x1x32xf32, #tpu.memory_space<vmem>>, vector<1x1x32xf32>
    %802 = vector.shape_cast %801 : vector<1x1x32xf32> to vector<1x32xf32>
    %803 = vector.broadcast %802 : vector<1x32xf32> to vector<17x32xf32>
    %804 = arith.addf %800, %803 : vector<17x32xf32>
    %805 = arith.addf %804, %756 : vector<17x32xf32>
    %cst_321 = arith.constant dense<0.000000e+00> : vector<17xf32>
    %806 = vector.multi_reduction <add>, %805, %cst_321 [1] : vector<17x32xf32> to vector<17xf32>
    %807 = vector.shape_cast %806 : vector<17xf32> to vector<17x1xf32>
    %cst_322 = arith.constant 3.200000e+01 : f32
    %808 = vector.broadcast %cst_322 : f32 to vector<17x1xf32>
    %809 = arith.divf %807, %808 : vector<17x1xf32>
    %810 = vector.broadcast %809 : vector<17x1xf32> to vector<17x32xf32>
    %811 = arith.subf %805, %810 : vector<17x32xf32>
    %812 = arith.mulf %811, %811 : vector<17x32xf32>
    %cst_323 = arith.constant dense<0.000000e+00> : vector<17xf32>
    %813 = vector.multi_reduction <add>, %812, %cst_323 [1] : vector<17x32xf32> to vector<17xf32>
    %814 = vector.shape_cast %813 : vector<17xf32> to vector<17x1xf32>
    %cst_324 = arith.constant 3.200000e+01 : f32
    %815 = vector.broadcast %cst_324 : f32 to vector<17x1xf32>
    %816 = arith.divf %814, %815 : vector<17x1xf32>
    %817 = vector.broadcast %809 : vector<17x1xf32> to vector<17x32xf32>
    %818 = arith.subf %805, %817 : vector<17x32xf32>
    %cst_325 = arith.constant 9.99999974E-6 : f32
    %819 = vector.broadcast %cst_325 : f32 to vector<17x1xf32>
    %820 = arith.addf %816, %819 : vector<17x1xf32>
    %821 = math.rsqrt %820 : vector<17x1xf32>
    %822 = vector.broadcast %821 : vector<17x1xf32> to vector<17x32xf32>
    %823 = arith.mulf %818, %822 : vector<17x32xf32>
    %c24 = arith.constant 24 : index
    %c0_326 = arith.constant 0 : index
    %c0_327 = arith.constant 0 : index
    %824 = vector.load %arg3[%c24, %c0_326, %c0_327] : memref<48x1x32xf32, #tpu.memory_space<vmem>>, vector<1x1x32xf32>
    %825 = vector.shape_cast %824 : vector<1x1x32xf32> to vector<1x32xf32>
    %826 = vector.broadcast %825 : vector<1x32xf32> to vector<17x32xf32>
    %827 = arith.mulf %823, %826 : vector<17x32xf32>
    %c25 = arith.constant 25 : index
    %c0_328 = arith.constant 0 : index
    %c0_329 = arith.constant 0 : index
    %828 = vector.load %arg3[%c25, %c0_328, %c0_329] : memref<48x1x32xf32, #tpu.memory_space<vmem>>, vector<1x1x32xf32>
    %829 = vector.shape_cast %828 : vector<1x1x32xf32> to vector<1x32xf32>
    %830 = vector.broadcast %829 : vector<1x32xf32> to vector<17x32xf32>
    %831 = arith.addf %827, %830 : vector<17x32xf32>
    %c40 = arith.constant 40 : index
    %c0_330 = arith.constant 0 : index
    %c0_331 = arith.constant 0 : index
    %832 = vector.load %arg3[%c40, %c0_330, %c0_331] : memref<48x1x32xf32, #tpu.memory_space<vmem>>, vector<1x1x32xf32>
    %833 = vector.shape_cast %832 : vector<1x1x32xf32> to vector<1x32xf32>
    %c7_332 = arith.constant 7 : index
    %c0_333 = arith.constant 0 : index
    %c0_334 = arith.constant 0 : index
    %834 = vector.load %arg4[%c7_332, %c0_333, %c0_334] : memref<14x1x32xf32, #tpu.memory_space<vmem>>, vector<1x1x32xf32>
    %835 = vector.shape_cast %834 : vector<1x1x32xf32> to vector<1x32xf32>
    %cst_335 = arith.constant dense<0.000000e+00> : vector<8x32xf32>
    %836 = tpu.matmul %34, %831, %cst_335 {dimension_numbers = #tpu.dot_dimension_numbers<[1], [0], [0], [1], [0, 0, 1, 1], [], []>} : vector<8x17xf32>, vector<17x32xf32>, vector<8x32xf32> -> vector<8x32xf32>
    %837 = vector.broadcast %835 : vector<1x32xf32> to vector<8x32xf32>
    %838 = arith.mulf %837, %836 : vector<8x32xf32>
    %839 = vector.broadcast %833 : vector<1x32xf32> to vector<8x32xf32>
    %840 = arith.addf %839, %838 : vector<8x32xf32>
    %c8_336 = arith.constant 8 : index
    %c0_337 = arith.constant 0 : index
    %c0_338 = arith.constant 0 : index
    %841 = vector.load %arg4[%c8_336, %c0_337, %c0_338] : memref<14x1x32xf32, #tpu.memory_space<vmem>>, vector<1x1x32xf32>
    %842 = vector.shape_cast %841 : vector<1x1x32xf32> to vector<1x32xf32>
    %cst_339 = arith.constant dense<0.000000e+00> : vector<8x32xf32>
    %843 = tpu.matmul %47, %831, %cst_339 {dimension_numbers = #tpu.dot_dimension_numbers<[1], [0], [0], [1], [0, 0, 1, 1], [], []>} : vector<8x17xf32>, vector<17x32xf32>, vector<8x32xf32> -> vector<8x32xf32>
    %844 = vector.broadcast %842 : vector<1x32xf32> to vector<8x32xf32>
    %845 = arith.mulf %844, %843 : vector<8x32xf32>
    %846 = arith.addf %840, %845 : vector<8x32xf32>
    %c9_340 = arith.constant 9 : index
    %c0_341 = arith.constant 0 : index
    %c0_342 = arith.constant 0 : index
    %847 = vector.load %arg4[%c9_340, %c0_341, %c0_342] : memref<14x1x32xf32, #tpu.memory_space<vmem>>, vector<1x1x32xf32>
    %848 = vector.shape_cast %847 : vector<1x1x32xf32> to vector<1x32xf32>
    %cst_343 = arith.constant dense<0.000000e+00> : vector<8x32xf32>
    %849 = tpu.matmul %60, %831, %cst_343 {dimension_numbers = #tpu.dot_dimension_numbers<[1], [0], [0], [1], [0, 0, 1, 1], [], []>} : vector<8x17xf32>, vector<17x32xf32>, vector<8x32xf32> -> vector<8x32xf32>
    %850 = vector.broadcast %848 : vector<1x32xf32> to vector<8x32xf32>
    %851 = arith.mulf %850, %849 : vector<8x32xf32>
    %852 = arith.addf %846, %851 : vector<8x32xf32>
    %c10_344 = arith.constant 10 : index
    %c0_345 = arith.constant 0 : index
    %c0_346 = arith.constant 0 : index
    %853 = vector.load %arg4[%c10_344, %c0_345, %c0_346] : memref<14x1x32xf32, #tpu.memory_space<vmem>>, vector<1x1x32xf32>
    %854 = vector.shape_cast %853 : vector<1x1x32xf32> to vector<1x32xf32>
    %cst_347 = arith.constant dense<0.000000e+00> : vector<8x32xf32>
    %855 = tpu.matmul %73, %831, %cst_347 {dimension_numbers = #tpu.dot_dimension_numbers<[1], [0], [0], [1], [0, 0, 1, 1], [], []>} : vector<8x17xf32>, vector<17x32xf32>, vector<8x32xf32> -> vector<8x32xf32>
    %856 = vector.broadcast %854 : vector<1x32xf32> to vector<8x32xf32>
    %857 = arith.mulf %856, %855 : vector<8x32xf32>
    %858 = arith.addf %852, %857 : vector<8x32xf32>
    %c11_348 = arith.constant 11 : index
    %c0_349 = arith.constant 0 : index
    %c0_350 = arith.constant 0 : index
    %859 = vector.load %arg4[%c11_348, %c0_349, %c0_350] : memref<14x1x32xf32, #tpu.memory_space<vmem>>, vector<1x1x32xf32>
    %860 = vector.shape_cast %859 : vector<1x1x32xf32> to vector<1x32xf32>
    %cst_351 = arith.constant dense<0.000000e+00> : vector<8x32xf32>
    %861 = tpu.matmul %86, %831, %cst_351 {dimension_numbers = #tpu.dot_dimension_numbers<[1], [0], [0], [1], [0, 0, 1, 1], [], []>} : vector<8x17xf32>, vector<17x32xf32>, vector<8x32xf32> -> vector<8x32xf32>
    %862 = vector.broadcast %860 : vector<1x32xf32> to vector<8x32xf32>
    %863 = arith.mulf %862, %861 : vector<8x32xf32>
    %864 = arith.addf %858, %863 : vector<8x32xf32>
    %c12_352 = arith.constant 12 : index
    %c0_353 = arith.constant 0 : index
    %c0_354 = arith.constant 0 : index
    %865 = vector.load %arg4[%c12_352, %c0_353, %c0_354] : memref<14x1x32xf32, #tpu.memory_space<vmem>>, vector<1x1x32xf32>
    %866 = vector.shape_cast %865 : vector<1x1x32xf32> to vector<1x32xf32>
    %cst_355 = arith.constant dense<0.000000e+00> : vector<8x32xf32>
    %867 = tpu.matmul %99, %831, %cst_355 {dimension_numbers = #tpu.dot_dimension_numbers<[1], [0], [0], [1], [0, 0, 1, 1], [], []>} : vector<8x17xf32>, vector<17x32xf32>, vector<8x32xf32> -> vector<8x32xf32>
    %868 = vector.broadcast %866 : vector<1x32xf32> to vector<8x32xf32>
    %869 = arith.mulf %868, %867 : vector<8x32xf32>
    %870 = arith.addf %864, %869 : vector<8x32xf32>
    %c13_356 = arith.constant 13 : index
    %c0_357 = arith.constant 0 : index
    %c0_358 = arith.constant 0 : index
    %871 = vector.load %arg4[%c13_356, %c0_357, %c0_358] : memref<14x1x32xf32, #tpu.memory_space<vmem>>, vector<1x1x32xf32>
    %872 = vector.shape_cast %871 : vector<1x1x32xf32> to vector<1x32xf32>
    %cst_359 = arith.constant dense<0.000000e+00> : vector<8x32xf32>
    %873 = tpu.matmul %112, %831, %cst_359 {dimension_numbers = #tpu.dot_dimension_numbers<[1], [0], [0], [1], [0, 0, 1, 1], [], []>} : vector<8x17xf32>, vector<17x32xf32>, vector<8x32xf32> -> vector<8x32xf32>
    %874 = vector.broadcast %872 : vector<1x32xf32> to vector<8x32xf32>
    %875 = arith.mulf %874, %873 : vector<8x32xf32>
    %876 = arith.addf %870, %875 : vector<8x32xf32>
    %c21_360 = arith.constant 21 : index
    %c0_361 = arith.constant 0 : index
    %c0_362 = arith.constant 0 : index
    %877 = vector.load %arg2[%c21_360, %c0_361, %c0_362] : memref<34x32x32xf32, #tpu.memory_space<vmem>>, vector<1x32x32xf32>
    %878 = vector.shape_cast %877 : vector<1x32x32xf32> to vector<32x32xf32>
    %cst_363 = arith.constant dense<0.000000e+00> : vector<8x32xf32>
    %879 = tpu.matmul %876, %878, %cst_363 {dimension_numbers = #tpu.dot_dimension_numbers<[1], [0], [0], [1], [0, 0, 1, 1], [], []>} : vector<8x32xf32>, vector<32x32xf32>, vector<8x32xf32> -> vector<8x32xf32>
    %c41 = arith.constant 41 : index
    %c0_364 = arith.constant 0 : index
    %c0_365 = arith.constant 0 : index
    %880 = vector.load %arg3[%c41, %c0_364, %c0_365] : memref<48x1x32xf32, #tpu.memory_space<vmem>>, vector<1x1x32xf32>
    %881 = vector.shape_cast %880 : vector<1x1x32xf32> to vector<1x32xf32>
    %882 = vector.broadcast %881 : vector<1x32xf32> to vector<8x32xf32>
    %883 = arith.addf %879, %882 : vector<8x32xf32>
    %cst_366 = arith.constant dense<0.000000e+00> : vector<8xf32>
    %884 = vector.multi_reduction <add>, %883, %cst_366 [1] : vector<8x32xf32> to vector<8xf32>
    %885 = vector.shape_cast %884 : vector<8xf32> to vector<8x1xf32>
    %cst_367 = arith.constant 3.200000e+01 : f32
    %886 = vector.broadcast %cst_367 : f32 to vector<8x1xf32>
    %887 = arith.divf %885, %886 : vector<8x1xf32>
    %888 = vector.broadcast %887 : vector<8x1xf32> to vector<8x32xf32>
    %889 = arith.subf %883, %888 : vector<8x32xf32>
    %890 = arith.mulf %889, %889 : vector<8x32xf32>
    %cst_368 = arith.constant dense<0.000000e+00> : vector<8xf32>
    %891 = vector.multi_reduction <add>, %890, %cst_368 [1] : vector<8x32xf32> to vector<8xf32>
    %892 = vector.shape_cast %891 : vector<8xf32> to vector<8x1xf32>
    %cst_369 = arith.constant 3.200000e+01 : f32
    %893 = vector.broadcast %cst_369 : f32 to vector<8x1xf32>
    %894 = arith.divf %892, %893 : vector<8x1xf32>
    %895 = vector.broadcast %887 : vector<8x1xf32> to vector<8x32xf32>
    %896 = arith.subf %883, %895 : vector<8x32xf32>
    %cst_370 = arith.constant 9.99999974E-6 : f32
    %897 = vector.broadcast %cst_370 : f32 to vector<8x1xf32>
    %898 = arith.addf %894, %897 : vector<8x1xf32>
    %899 = math.rsqrt %898 : vector<8x1xf32>
    %900 = vector.broadcast %899 : vector<8x1xf32> to vector<8x32xf32>
    %901 = arith.mulf %896, %900 : vector<8x32xf32>
    %c38 = arith.constant 38 : index
    %c0_371 = arith.constant 0 : index
    %c0_372 = arith.constant 0 : index
    %902 = vector.load %arg3[%c38, %c0_371, %c0_372] : memref<48x1x32xf32, #tpu.memory_space<vmem>>, vector<1x1x32xf32>
    %903 = vector.shape_cast %902 : vector<1x1x32xf32> to vector<1x32xf32>
    %904 = vector.broadcast %903 : vector<1x32xf32> to vector<8x32xf32>
    %905 = arith.mulf %901, %904 : vector<8x32xf32>
    %c39 = arith.constant 39 : index
    %c0_373 = arith.constant 0 : index
    %c0_374 = arith.constant 0 : index
    %906 = vector.load %arg3[%c39, %c0_373, %c0_374] : memref<48x1x32xf32, #tpu.memory_space<vmem>>, vector<1x1x32xf32>
    %907 = vector.shape_cast %906 : vector<1x1x32xf32> to vector<1x32xf32>
    %908 = vector.broadcast %907 : vector<1x32xf32> to vector<8x32xf32>
    %909 = arith.addf %905, %908 : vector<8x32xf32>
    %c0_i32_375 = arith.constant 0 : i32
    %910 = vector.broadcast %c0_i32_375 : i32 to vector<8x1xi32>
    %911 = arith.cmpi eq, %113, %910 : vector<8x1xi32>
    %912 = vector.extract_strided_slice %831 {offsets = [0, 0], sizes = [1, 32], strides = [1, 1]} : vector<17x32xf32> to vector<1x32xf32>
    %913 = vector.shape_cast %911 : vector<8x1xi1> to vector<8x1xi1>
    %914 = vector.broadcast %913 : vector<8x1xi1> to vector<8x32xi1>
    %915 = vector.shape_cast %912 : vector<1x32xf32> to vector<1x32xf32>
    %916 = vector.broadcast %915 : vector<1x32xf32> to vector<8x32xf32>
    %917 = arith.select %914, %916, %909 : vector<8x32xi1>, vector<8x32xf32>
    %c17_376 = arith.constant 17 : index
    %c0_377 = arith.constant 0 : index
    %c0_378 = arith.constant 0 : index
    %918 = vector.load %arg2[%c17_376, %c0_377, %c0_378] : memref<34x32x32xf32, #tpu.memory_space<vmem>>, vector<1x32x32xf32>
    %919 = vector.shape_cast %918 : vector<1x32x32xf32> to vector<32x32xf32>
    %cst_379 = arith.constant dense<0.000000e+00> : vector<17x32xf32>
    %920 = tpu.matmul %831, %919, %cst_379 {dimension_numbers = #tpu.dot_dimension_numbers<[1], [0], [0], [1], [0, 0, 1, 1], [], []>} : vector<17x32xf32>, vector<32x32xf32>, vector<17x32xf32> -> vector<17x32xf32>
    %cst_380 = arith.constant dense<0.000000e+00> : vector<17xf32>
    %921 = vector.multi_reduction <add>, %920, %cst_380 [1] : vector<17x32xf32> to vector<17xf32>
    %922 = vector.shape_cast %921 : vector<17xf32> to vector<17x1xf32>
    %cst_381 = arith.constant 3.200000e+01 : f32
    %923 = vector.broadcast %cst_381 : f32 to vector<17x1xf32>
    %924 = arith.divf %922, %923 : vector<17x1xf32>
    %925 = vector.broadcast %924 : vector<17x1xf32> to vector<17x32xf32>
    %926 = arith.subf %920, %925 : vector<17x32xf32>
    %927 = arith.mulf %926, %926 : vector<17x32xf32>
    %cst_382 = arith.constant dense<0.000000e+00> : vector<17xf32>
    %928 = vector.multi_reduction <add>, %927, %cst_382 [1] : vector<17x32xf32> to vector<17xf32>
    %929 = vector.shape_cast %928 : vector<17xf32> to vector<17x1xf32>
    %cst_383 = arith.constant 3.200000e+01 : f32
    %930 = vector.broadcast %cst_383 : f32 to vector<17x1xf32>
    %931 = arith.divf %929, %930 : vector<17x1xf32>
    %932 = vector.broadcast %924 : vector<17x1xf32> to vector<17x32xf32>
    %933 = arith.subf %920, %932 : vector<17x32xf32>
    %cst_384 = arith.constant 9.99999974E-6 : f32
    %934 = vector.broadcast %cst_384 : f32 to vector<17x1xf32>
    %935 = arith.addf %931, %934 : vector<17x1xf32>
    %936 = math.rsqrt %935 : vector<17x1xf32>
    %937 = vector.broadcast %936 : vector<17x1xf32> to vector<17x32xf32>
    %938 = arith.mulf %933, %937 : vector<17x32xf32>
    %c32 = arith.constant 32 : index
    %c0_385 = arith.constant 0 : index
    %c0_386 = arith.constant 0 : index
    %939 = vector.load %arg3[%c32, %c0_385, %c0_386] : memref<48x1x32xf32, #tpu.memory_space<vmem>>, vector<1x1x32xf32>
    %940 = vector.shape_cast %939 : vector<1x1x32xf32> to vector<1x32xf32>
    %941 = vector.broadcast %940 : vector<1x32xf32> to vector<17x32xf32>
    %942 = arith.mulf %938, %941 : vector<17x32xf32>
    %c33 = arith.constant 33 : index
    %c0_387 = arith.constant 0 : index
    %c0_388 = arith.constant 0 : index
    %943 = vector.load %arg3[%c33, %c0_387, %c0_388] : memref<48x1x32xf32, #tpu.memory_space<vmem>>, vector<1x1x32xf32>
    %944 = vector.shape_cast %943 : vector<1x1x32xf32> to vector<1x32xf32>
    %945 = vector.broadcast %944 : vector<1x32xf32> to vector<17x32xf32>
    %946 = arith.addf %942, %945 : vector<17x32xf32>
    %cst_389 = arith.constant 0.353553385 : f32
    %947 = vector.broadcast %cst_389 : f32 to vector<17x32xf32>
    %948 = arith.mulf %946, %947 : vector<17x32xf32>
    %c18_390 = arith.constant 18 : index
    %c0_391 = arith.constant 0 : index
    %c0_392 = arith.constant 0 : index
    %949 = vector.load %arg2[%c18_390, %c0_391, %c0_392] : memref<34x32x32xf32, #tpu.memory_space<vmem>>, vector<1x32x32xf32>
    %950 = vector.shape_cast %949 : vector<1x32x32xf32> to vector<32x32xf32>
    %cst_393 = arith.constant dense<0.000000e+00> : vector<8x32xf32>
    %951 = tpu.matmul %917, %950, %cst_393 {dimension_numbers = #tpu.dot_dimension_numbers<[1], [0], [0], [1], [0, 0, 1, 1], [], []>} : vector<8x32xf32>, vector<32x32xf32>, vector<8x32xf32> -> vector<8x32xf32>
    %cst_394 = arith.constant dense<0.000000e+00> : vector<8xf32>
    %952 = vector.multi_reduction <add>, %951, %cst_394 [1] : vector<8x32xf32> to vector<8xf32>
    %953 = vector.shape_cast %952 : vector<8xf32> to vector<8x1xf32>
    %cst_395 = arith.constant 3.200000e+01 : f32
    %954 = vector.broadcast %cst_395 : f32 to vector<8x1xf32>
    %955 = arith.divf %953, %954 : vector<8x1xf32>
    %956 = vector.broadcast %955 : vector<8x1xf32> to vector<8x32xf32>
    %957 = arith.subf %951, %956 : vector<8x32xf32>
    %958 = arith.mulf %957, %957 : vector<8x32xf32>
    %cst_396 = arith.constant dense<0.000000e+00> : vector<8xf32>
    %959 = vector.multi_reduction <add>, %958, %cst_396 [1] : vector<8x32xf32> to vector<8xf32>
    %960 = vector.shape_cast %959 : vector<8xf32> to vector<8x1xf32>
    %cst_397 = arith.constant 3.200000e+01 : f32
    %961 = vector.broadcast %cst_397 : f32 to vector<8x1xf32>
    %962 = arith.divf %960, %961 : vector<8x1xf32>
    %963 = vector.broadcast %955 : vector<8x1xf32> to vector<8x32xf32>
    %964 = arith.subf %951, %963 : vector<8x32xf32>
    %cst_398 = arith.constant 9.99999974E-6 : f32
    %965 = vector.broadcast %cst_398 : f32 to vector<8x1xf32>
    %966 = arith.addf %962, %965 : vector<8x1xf32>
    %967 = math.rsqrt %966 : vector<8x1xf32>
    %968 = vector.broadcast %967 : vector<8x1xf32> to vector<8x32xf32>
    %969 = arith.mulf %964, %968 : vector<8x32xf32>
    %c34 = arith.constant 34 : index
    %c0_399 = arith.constant 0 : index
    %c0_400 = arith.constant 0 : index
    %970 = vector.load %arg3[%c34, %c0_399, %c0_400] : memref<48x1x32xf32, #tpu.memory_space<vmem>>, vector<1x1x32xf32>
    %971 = vector.shape_cast %970 : vector<1x1x32xf32> to vector<1x32xf32>
    %972 = vector.broadcast %971 : vector<1x32xf32> to vector<8x32xf32>
    %973 = arith.mulf %969, %972 : vector<8x32xf32>
    %c35 = arith.constant 35 : index
    %c0_401 = arith.constant 0 : index
    %c0_402 = arith.constant 0 : index
    %974 = vector.load %arg3[%c35, %c0_401, %c0_402] : memref<48x1x32xf32, #tpu.memory_space<vmem>>, vector<1x1x32xf32>
    %975 = vector.shape_cast %974 : vector<1x1x32xf32> to vector<1x32xf32>
    %976 = vector.broadcast %975 : vector<1x32xf32> to vector<8x32xf32>
    %977 = arith.addf %973, %976 : vector<8x32xf32>
    %c19_403 = arith.constant 19 : index
    %c0_404 = arith.constant 0 : index
    %c0_405 = arith.constant 0 : index
    %978 = vector.load %arg2[%c19_403, %c0_404, %c0_405] : memref<34x32x32xf32, #tpu.memory_space<vmem>>, vector<1x32x32xf32>
    %979 = vector.shape_cast %978 : vector<1x32x32xf32> to vector<32x32xf32>
    %cst_406 = arith.constant dense<0.000000e+00> : vector<8x32xf32>
    %980 = tpu.matmul %917, %979, %cst_406 {dimension_numbers = #tpu.dot_dimension_numbers<[1], [0], [0], [1], [0, 0, 1, 1], [], []>} : vector<8x32xf32>, vector<32x32xf32>, vector<8x32xf32> -> vector<8x32xf32>
    %cst_407 = arith.constant dense<0.000000e+00> : vector<8xf32>
    %981 = vector.multi_reduction <add>, %980, %cst_407 [1] : vector<8x32xf32> to vector<8xf32>
    %982 = vector.shape_cast %981 : vector<8xf32> to vector<8x1xf32>
    %cst_408 = arith.constant 3.200000e+01 : f32
    %983 = vector.broadcast %cst_408 : f32 to vector<8x1xf32>
    %984 = arith.divf %982, %983 : vector<8x1xf32>
    %985 = vector.broadcast %984 : vector<8x1xf32> to vector<8x32xf32>
    %986 = arith.subf %980, %985 : vector<8x32xf32>
    %987 = arith.mulf %986, %986 : vector<8x32xf32>
    %cst_409 = arith.constant dense<0.000000e+00> : vector<8xf32>
    %988 = vector.multi_reduction <add>, %987, %cst_409 [1] : vector<8x32xf32> to vector<8xf32>
    %989 = vector.shape_cast %988 : vector<8xf32> to vector<8x1xf32>
    %cst_410 = arith.constant 3.200000e+01 : f32
    %990 = vector.broadcast %cst_410 : f32 to vector<8x1xf32>
    %991 = arith.divf %989, %990 : vector<8x1xf32>
    %992 = vector.broadcast %984 : vector<8x1xf32> to vector<8x32xf32>
    %993 = arith.subf %980, %992 : vector<8x32xf32>
    %cst_411 = arith.constant 9.99999974E-6 : f32
    %994 = vector.broadcast %cst_411 : f32 to vector<8x1xf32>
    %995 = arith.addf %991, %994 : vector<8x1xf32>
    %996 = math.rsqrt %995 : vector<8x1xf32>
    %997 = vector.broadcast %996 : vector<8x1xf32> to vector<8x32xf32>
    %998 = arith.mulf %993, %997 : vector<8x32xf32>
    %c36 = arith.constant 36 : index
    %c0_412 = arith.constant 0 : index
    %c0_413 = arith.constant 0 : index
    %999 = vector.load %arg3[%c36, %c0_412, %c0_413] : memref<48x1x32xf32, #tpu.memory_space<vmem>>, vector<1x1x32xf32>
    %1000 = vector.shape_cast %999 : vector<1x1x32xf32> to vector<1x32xf32>
    %1001 = vector.broadcast %1000 : vector<1x32xf32> to vector<8x32xf32>
    %1002 = arith.mulf %998, %1001 : vector<8x32xf32>
    %c37 = arith.constant 37 : index
    %c0_414 = arith.constant 0 : index
    %c0_415 = arith.constant 0 : index
    %1003 = vector.load %arg3[%c37, %c0_414, %c0_415] : memref<48x1x32xf32, #tpu.memory_space<vmem>>, vector<1x1x32xf32>
    %1004 = vector.shape_cast %1003 : vector<1x1x32xf32> to vector<1x32xf32>
    %1005 = vector.broadcast %1004 : vector<1x32xf32> to vector<8x32xf32>
    %1006 = arith.addf %1002, %1005 : vector<8x32xf32>
    %cst_416 = arith.constant 0.000000e+00 : f32
    %1007 = vector.broadcast %cst_416 : f32 to vector<17x32xf32>
    %1008 = vector.broadcast %127 : vector<1x32xf32> to vector<17x32xf32>
    %1009 = arith.mulf %948, %1008 : vector<17x32xf32>
    %cst_417 = arith.constant dense<0.000000e+00> : vector<17x8xf32>
    %1010 = tpu.matmul %1009, %977, %cst_417 {dimension_numbers = #tpu.dot_dimension_numbers<[1], [1], [0], [0], [0, 0, 1, 0], [], []>} : vector<17x32xf32>, vector<8x32xf32>, vector<17x8xf32> -> vector<17x8xf32>
    %1011 = vector.broadcast %119 : vector<1x8xf32> to vector<17x8xf32>
    %1012 = arith.addf %1010, %1011 : vector<17x8xf32>
    %cst_418 = arith.constant dense<0xFF800000> : vector<17xf32>
    %1013 = vector.multi_reduction <maximumf>, %1012, %cst_418 [1] : vector<17x8xf32> to vector<17xf32>
    %1014 = vector.shape_cast %1013 : vector<17xf32> to vector<17x1xf32>
    %1015 = vector.broadcast %1014 : vector<17x1xf32> to vector<17x8xf32>
    %1016 = arith.subf %1012, %1015 : vector<17x8xf32>
    %1017 = math.exp %1016 : vector<17x8xf32>
    %cst_419 = arith.constant dense<0.000000e+00> : vector<17xf32>
    %1018 = vector.multi_reduction <add>, %1017, %cst_419 [1] : vector<17x8xf32> to vector<17xf32>
    %1019 = vector.shape_cast %1018 : vector<17xf32> to vector<17x1xf32>
    %1020 = vector.broadcast %1019 : vector<17x1xf32> to vector<17x8xf32>
    %1021 = arith.divf %1017, %1020 : vector<17x8xf32>
    %1022 = vector.broadcast %127 : vector<1x32xf32> to vector<8x32xf32>
    %1023 = arith.mulf %1006, %1022 : vector<8x32xf32>
    %cst_420 = arith.constant dense<0.000000e+00> : vector<17x32xf32>
    %1024 = tpu.matmul %1021, %1023, %cst_420 {dimension_numbers = #tpu.dot_dimension_numbers<[1], [0], [0], [1], [0, 0, 1, 1], [], []>} : vector<17x8xf32>, vector<8x32xf32>, vector<17x32xf32> -> vector<17x32xf32>
    %1025 = arith.addf %1007, %1024 : vector<17x32xf32>
    %1026 = vector.broadcast %134 : vector<1x32xf32> to vector<17x32xf32>
    %1027 = arith.mulf %948, %1026 : vector<17x32xf32>
    %cst_421 = arith.constant dense<0.000000e+00> : vector<17x8xf32>
    %1028 = tpu.matmul %1027, %977, %cst_421 {dimension_numbers = #tpu.dot_dimension_numbers<[1], [1], [0], [0], [0, 0, 1, 0], [], []>} : vector<17x32xf32>, vector<8x32xf32>, vector<17x8xf32> -> vector<17x8xf32>
    %1029 = vector.broadcast %119 : vector<1x8xf32> to vector<17x8xf32>
    %1030 = arith.addf %1028, %1029 : vector<17x8xf32>
    %cst_422 = arith.constant dense<0xFF800000> : vector<17xf32>
    %1031 = vector.multi_reduction <maximumf>, %1030, %cst_422 [1] : vector<17x8xf32> to vector<17xf32>
    %1032 = vector.shape_cast %1031 : vector<17xf32> to vector<17x1xf32>
    %1033 = vector.broadcast %1032 : vector<17x1xf32> to vector<17x8xf32>
    %1034 = arith.subf %1030, %1033 : vector<17x8xf32>
    %1035 = math.exp %1034 : vector<17x8xf32>
    %cst_423 = arith.constant dense<0.000000e+00> : vector<17xf32>
    %1036 = vector.multi_reduction <add>, %1035, %cst_423 [1] : vector<17x8xf32> to vector<17xf32>
    %1037 = vector.shape_cast %1036 : vector<17xf32> to vector<17x1xf32>
    %1038 = vector.broadcast %1037 : vector<17x1xf32> to vector<17x8xf32>
    %1039 = arith.divf %1035, %1038 : vector<17x8xf32>
    %1040 = vector.broadcast %134 : vector<1x32xf32> to vector<8x32xf32>
    %1041 = arith.mulf %1006, %1040 : vector<8x32xf32>
    %cst_424 = arith.constant dense<0.000000e+00> : vector<17x32xf32>
    %1042 = tpu.matmul %1039, %1041, %cst_424 {dimension_numbers = #tpu.dot_dimension_numbers<[1], [0], [0], [1], [0, 0, 1, 1], [], []>} : vector<17x8xf32>, vector<8x32xf32>, vector<17x32xf32> -> vector<17x32xf32>
    %1043 = arith.addf %1025, %1042 : vector<17x32xf32>
    %1044 = vector.broadcast %141 : vector<1x32xf32> to vector<17x32xf32>
    %1045 = arith.mulf %948, %1044 : vector<17x32xf32>
    %cst_425 = arith.constant dense<0.000000e+00> : vector<17x8xf32>
    %1046 = tpu.matmul %1045, %977, %cst_425 {dimension_numbers = #tpu.dot_dimension_numbers<[1], [1], [0], [0], [0, 0, 1, 0], [], []>} : vector<17x32xf32>, vector<8x32xf32>, vector<17x8xf32> -> vector<17x8xf32>
    %1047 = vector.broadcast %119 : vector<1x8xf32> to vector<17x8xf32>
    %1048 = arith.addf %1046, %1047 : vector<17x8xf32>
    %cst_426 = arith.constant dense<0xFF800000> : vector<17xf32>
    %1049 = vector.multi_reduction <maximumf>, %1048, %cst_426 [1] : vector<17x8xf32> to vector<17xf32>
    %1050 = vector.shape_cast %1049 : vector<17xf32> to vector<17x1xf32>
    %1051 = vector.broadcast %1050 : vector<17x1xf32> to vector<17x8xf32>
    %1052 = arith.subf %1048, %1051 : vector<17x8xf32>
    %1053 = math.exp %1052 : vector<17x8xf32>
    %cst_427 = arith.constant dense<0.000000e+00> : vector<17xf32>
    %1054 = vector.multi_reduction <add>, %1053, %cst_427 [1] : vector<17x8xf32> to vector<17xf32>
    %1055 = vector.shape_cast %1054 : vector<17xf32> to vector<17x1xf32>
    %1056 = vector.broadcast %1055 : vector<17x1xf32> to vector<17x8xf32>
    %1057 = arith.divf %1053, %1056 : vector<17x8xf32>
    %1058 = vector.broadcast %141 : vector<1x32xf32> to vector<8x32xf32>
    %1059 = arith.mulf %1006, %1058 : vector<8x32xf32>
    %cst_428 = arith.constant dense<0.000000e+00> : vector<17x32xf32>
    %1060 = tpu.matmul %1057, %1059, %cst_428 {dimension_numbers = #tpu.dot_dimension_numbers<[1], [0], [0], [1], [0, 0, 1, 1], [], []>} : vector<17x8xf32>, vector<8x32xf32>, vector<17x32xf32> -> vector<17x32xf32>
    %1061 = arith.addf %1043, %1060 : vector<17x32xf32>
    %1062 = vector.broadcast %148 : vector<1x32xf32> to vector<17x32xf32>
    %1063 = arith.mulf %948, %1062 : vector<17x32xf32>
    %cst_429 = arith.constant dense<0.000000e+00> : vector<17x8xf32>
    %1064 = tpu.matmul %1063, %977, %cst_429 {dimension_numbers = #tpu.dot_dimension_numbers<[1], [1], [0], [0], [0, 0, 1, 0], [], []>} : vector<17x32xf32>, vector<8x32xf32>, vector<17x8xf32> -> vector<17x8xf32>
    %1065 = vector.broadcast %119 : vector<1x8xf32> to vector<17x8xf32>
    %1066 = arith.addf %1064, %1065 : vector<17x8xf32>
    %cst_430 = arith.constant dense<0xFF800000> : vector<17xf32>
    %1067 = vector.multi_reduction <maximumf>, %1066, %cst_430 [1] : vector<17x8xf32> to vector<17xf32>
    %1068 = vector.shape_cast %1067 : vector<17xf32> to vector<17x1xf32>
    %1069 = vector.broadcast %1068 : vector<17x1xf32> to vector<17x8xf32>
    %1070 = arith.subf %1066, %1069 : vector<17x8xf32>
    %1071 = math.exp %1070 : vector<17x8xf32>
    %cst_431 = arith.constant dense<0.000000e+00> : vector<17xf32>
    %1072 = vector.multi_reduction <add>, %1071, %cst_431 [1] : vector<17x8xf32> to vector<17xf32>
    %1073 = vector.shape_cast %1072 : vector<17xf32> to vector<17x1xf32>
    %1074 = vector.broadcast %1073 : vector<17x1xf32> to vector<17x8xf32>
    %1075 = arith.divf %1071, %1074 : vector<17x8xf32>
    %1076 = vector.broadcast %148 : vector<1x32xf32> to vector<8x32xf32>
    %1077 = arith.mulf %1006, %1076 : vector<8x32xf32>
    %cst_432 = arith.constant dense<0.000000e+00> : vector<17x32xf32>
    %1078 = tpu.matmul %1075, %1077, %cst_432 {dimension_numbers = #tpu.dot_dimension_numbers<[1], [0], [0], [1], [0, 0, 1, 1], [], []>} : vector<17x8xf32>, vector<8x32xf32>, vector<17x32xf32> -> vector<17x32xf32>
    %1079 = arith.addf %1061, %1078 : vector<17x32xf32>
    %c20_433 = arith.constant 20 : index
    %c0_434 = arith.constant 0 : index
    %c0_435 = arith.constant 0 : index
    %1080 = vector.load %arg2[%c20_433, %c0_434, %c0_435] : memref<34x32x32xf32, #tpu.memory_space<vmem>>, vector<1x32x32xf32>
    %1081 = vector.shape_cast %1080 : vector<1x32x32xf32> to vector<32x32xf32>
    %cst_436 = arith.constant dense<0.000000e+00> : vector<17x32xf32>
    %1082 = tpu.matmul %1079, %1081, %cst_436 {dimension_numbers = #tpu.dot_dimension_numbers<[1], [0], [0], [1], [0, 0, 1, 1], [], []>} : vector<17x32xf32>, vector<32x32xf32>, vector<17x32xf32> -> vector<17x32xf32>
    %1083 = arith.addf %1082, %805 : vector<17x32xf32>
    %cst_437 = arith.constant dense<0.000000e+00> : vector<17xf32>
    %1084 = vector.multi_reduction <add>, %1083, %cst_437 [1] : vector<17x32xf32> to vector<17xf32>
    %1085 = vector.shape_cast %1084 : vector<17xf32> to vector<17x1xf32>
    %cst_438 = arith.constant 3.200000e+01 : f32
    %1086 = vector.broadcast %cst_438 : f32 to vector<17x1xf32>
    %1087 = arith.divf %1085, %1086 : vector<17x1xf32>
    %1088 = vector.broadcast %1087 : vector<17x1xf32> to vector<17x32xf32>
    %1089 = arith.subf %1083, %1088 : vector<17x32xf32>
    %1090 = arith.mulf %1089, %1089 : vector<17x32xf32>
    %cst_439 = arith.constant dense<0.000000e+00> : vector<17xf32>
    %1091 = vector.multi_reduction <add>, %1090, %cst_439 [1] : vector<17x32xf32> to vector<17xf32>
    %1092 = vector.shape_cast %1091 : vector<17xf32> to vector<17x1xf32>
    %cst_440 = arith.constant 3.200000e+01 : f32
    %1093 = vector.broadcast %cst_440 : f32 to vector<17x1xf32>
    %1094 = arith.divf %1092, %1093 : vector<17x1xf32>
    %1095 = vector.broadcast %1087 : vector<17x1xf32> to vector<17x32xf32>
    %1096 = arith.subf %1083, %1095 : vector<17x32xf32>
    %cst_441 = arith.constant 9.99999974E-6 : f32
    %1097 = vector.broadcast %cst_441 : f32 to vector<17x1xf32>
    %1098 = arith.addf %1094, %1097 : vector<17x1xf32>
    %1099 = math.rsqrt %1098 : vector<17x1xf32>
    %1100 = vector.broadcast %1099 : vector<17x1xf32> to vector<17x32xf32>
    %1101 = arith.mulf %1096, %1100 : vector<17x32xf32>
    %c26 = arith.constant 26 : index
    %c0_442 = arith.constant 0 : index
    %c0_443 = arith.constant 0 : index
    %1102 = vector.load %arg3[%c26, %c0_442, %c0_443] : memref<48x1x32xf32, #tpu.memory_space<vmem>>, vector<1x1x32xf32>
    %1103 = vector.shape_cast %1102 : vector<1x1x32xf32> to vector<1x32xf32>
    %1104 = vector.broadcast %1103 : vector<1x32xf32> to vector<17x32xf32>
    %1105 = arith.mulf %1101, %1104 : vector<17x32xf32>
    %c27 = arith.constant 27 : index
    %c0_444 = arith.constant 0 : index
    %c0_445 = arith.constant 0 : index
    %1106 = vector.load %arg3[%c27, %c0_444, %c0_445] : memref<48x1x32xf32, #tpu.memory_space<vmem>>, vector<1x1x32xf32>
    %1107 = vector.shape_cast %1106 : vector<1x1x32xf32> to vector<1x32xf32>
    %1108 = vector.broadcast %1107 : vector<1x32xf32> to vector<17x32xf32>
    %1109 = arith.addf %1105, %1108 : vector<17x32xf32>
    %c22_446 = arith.constant 22 : index
    %c0_447 = arith.constant 0 : index
    %c0_448 = arith.constant 0 : index
    %1110 = vector.load %arg2[%c22_446, %c0_447, %c0_448] : memref<34x32x32xf32, #tpu.memory_space<vmem>>, vector<1x32x32xf32>
    %1111 = vector.shape_cast %1110 : vector<1x32x32xf32> to vector<32x32xf32>
    %cst_449 = arith.constant dense<0.000000e+00> : vector<17x32xf32>
    %1112 = tpu.matmul %1109, %1111, %cst_449 {dimension_numbers = #tpu.dot_dimension_numbers<[1], [0], [0], [1], [0, 0, 1, 1], [], []>} : vector<17x32xf32>, vector<32x32xf32>, vector<17x32xf32> -> vector<17x32xf32>
    %c42 = arith.constant 42 : index
    %c0_450 = arith.constant 0 : index
    %c0_451 = arith.constant 0 : index
    %1113 = vector.load %arg3[%c42, %c0_450, %c0_451] : memref<48x1x32xf32, #tpu.memory_space<vmem>>, vector<1x1x32xf32>
    %1114 = vector.shape_cast %1113 : vector<1x1x32xf32> to vector<1x32xf32>
    %1115 = vector.broadcast %1114 : vector<1x32xf32> to vector<17x32xf32>
    %1116 = arith.addf %1112, %1115 : vector<17x32xf32>
    %cst_452 = arith.constant 0.000000e+00 : f32
    %1117 = vector.shape_cast %2 : vector<17x1xi1> to vector<17x1xi1>
    %1118 = vector.broadcast %1117 : vector<17x1xi1> to vector<17x32xi1>
    %1119 = vector.broadcast %cst_452 : f32 to vector<17x32xf32>
    %1120 = arith.select %1118, %1119, %1116 : vector<17x32xi1>, vector<17x32xf32>
    %cst_453 = arith.constant dense<0.000000e+00> : vector<17x32xf32>
    %1121 = tpu.matmul %9, %1120, %cst_453 {dimension_numbers = #tpu.dot_dimension_numbers<[1], [0], [0], [1], [0, 0, 1, 1], [], []>} : vector<17x17xf32>, vector<17x32xf32>, vector<17x32xf32> -> vector<17x32xf32>
    %cst_454 = arith.constant dense<0.000000e+00> : vector<17x32xf32>
    %1122 = tpu.matmul %14, %1120, %cst_454 {dimension_numbers = #tpu.dot_dimension_numbers<[1], [0], [0], [1], [0, 0, 1, 1], [], []>} : vector<17x17xf32>, vector<17x32xf32>, vector<17x32xf32> -> vector<17x32xf32>
    %cst_455 = arith.constant 0.000000e+00 : f32
    %1123 = vector.broadcast %cst_455 : f32 to vector<17x32xf32>
    %c8_456 = arith.constant 8 : index
    %c0_457 = arith.constant 0 : index
    %c0_458 = arith.constant 0 : index
    %1124 = vector.load %arg5[%c8_456, %c0_457, %c0_458] : memref<16x3x32xf32, #tpu.memory_space<vmem>>, vector<1x3x32xf32>
    %1125 = vector.shape_cast %1124 : vector<1x3x32xf32> to vector<3x32xf32>
    %c8_459 = arith.constant 8 : index
    %c0_460 = arith.constant 0 : index
    %c0_461 = arith.constant 0 : index
    %1126 = vector.load %arg6[%c8_459, %c0_460, %c0_461] : memref<16x1x32xf32, #tpu.memory_space<vmem>>, vector<1x1x32xf32>
    %1127 = vector.shape_cast %1126 : vector<1x1x32xf32> to vector<1x32xf32>
    %1128 = vector.extract_strided_slice %1125 {offsets = [0, 0], sizes = [1, 32], strides = [1, 1]} : vector<3x32xf32> to vector<1x32xf32>
    %1129 = vector.broadcast %1128 : vector<1x32xf32> to vector<17x32xf32>
    %1130 = arith.mulf %1129, %1121 : vector<17x32xf32>
    %1131 = vector.broadcast %1127 : vector<1x32xf32> to vector<17x32xf32>
    %1132 = arith.addf %1131, %1130 : vector<17x32xf32>
    %1133 = vector.extract_strided_slice %1125 {offsets = [1, 0], sizes = [1, 32], strides = [1, 1]} : vector<3x32xf32> to vector<1x32xf32>
    %1134 = vector.broadcast %1133 : vector<1x32xf32> to vector<17x32xf32>
    %1135 = arith.mulf %1134, %1120 : vector<17x32xf32>
    %1136 = arith.addf %1132, %1135 : vector<17x32xf32>
    %1137 = vector.extract_strided_slice %1125 {offsets = [2, 0], sizes = [1, 32], strides = [1, 1]} : vector<3x32xf32> to vector<1x32xf32>
    %1138 = vector.broadcast %1137 : vector<1x32xf32> to vector<17x32xf32>
    %1139 = arith.mulf %1138, %1122 : vector<17x32xf32>
    %1140 = arith.addf %1136, %1139 : vector<17x32xf32>
    %cst_462 = arith.constant 5.000000e-01 : f32
    %1141 = vector.broadcast %cst_462 : f32 to vector<17x32xf32>
    %1142 = arith.mulf %1141, %1140 : vector<17x32xf32>
    %cst_463 = arith.constant 0.707106769 : f32
    %1143 = vector.broadcast %cst_463 : f32 to vector<17x32xf32>
    %1144 = arith.mulf %1140, %1143 : vector<17x32xf32>
    %1145 = math.erf %1144 : vector<17x32xf32>
    %cst_464 = arith.constant 1.000000e+00 : f32
    %1146 = vector.broadcast %cst_464 : f32 to vector<17x32xf32>
    %1147 = arith.addf %1146, %1145 : vector<17x32xf32>
    %1148 = arith.mulf %1142, %1147 : vector<17x32xf32>
    %c26_465 = arith.constant 26 : index
    %c0_466 = arith.constant 0 : index
    %c0_467 = arith.constant 0 : index
    %1149 = vector.load %arg2[%c26_465, %c0_466, %c0_467] : memref<34x32x32xf32, #tpu.memory_space<vmem>>, vector<1x32x32xf32>
    %1150 = vector.shape_cast %1149 : vector<1x32x32xf32> to vector<32x32xf32>
    %cst_468 = arith.constant dense<0.000000e+00> : vector<17x32xf32>
    %1151 = tpu.matmul %1148, %1150, %cst_468 {dimension_numbers = #tpu.dot_dimension_numbers<[1], [0], [0], [1], [0, 0, 1, 1], [], []>} : vector<17x32xf32>, vector<32x32xf32>, vector<17x32xf32> -> vector<17x32xf32>
    %1152 = arith.addf %1123, %1151 : vector<17x32xf32>
    %c9_469 = arith.constant 9 : index
    %c0_470 = arith.constant 0 : index
    %c0_471 = arith.constant 0 : index
    %1153 = vector.load %arg5[%c9_469, %c0_470, %c0_471] : memref<16x3x32xf32, #tpu.memory_space<vmem>>, vector<1x3x32xf32>
    %1154 = vector.shape_cast %1153 : vector<1x3x32xf32> to vector<3x32xf32>
    %c9_472 = arith.constant 9 : index
    %c0_473 = arith.constant 0 : index
    %c0_474 = arith.constant 0 : index
    %1155 = vector.load %arg6[%c9_472, %c0_473, %c0_474] : memref<16x1x32xf32, #tpu.memory_space<vmem>>, vector<1x1x32xf32>
    %1156 = vector.shape_cast %1155 : vector<1x1x32xf32> to vector<1x32xf32>
    %1157 = vector.extract_strided_slice %1154 {offsets = [0, 0], sizes = [1, 32], strides = [1, 1]} : vector<3x32xf32> to vector<1x32xf32>
    %1158 = vector.broadcast %1157 : vector<1x32xf32> to vector<17x32xf32>
    %1159 = arith.mulf %1158, %1121 : vector<17x32xf32>
    %1160 = vector.broadcast %1156 : vector<1x32xf32> to vector<17x32xf32>
    %1161 = arith.addf %1160, %1159 : vector<17x32xf32>
    %1162 = vector.extract_strided_slice %1154 {offsets = [1, 0], sizes = [1, 32], strides = [1, 1]} : vector<3x32xf32> to vector<1x32xf32>
    %1163 = vector.broadcast %1162 : vector<1x32xf32> to vector<17x32xf32>
    %1164 = arith.mulf %1163, %1120 : vector<17x32xf32>
    %1165 = arith.addf %1161, %1164 : vector<17x32xf32>
    %1166 = vector.extract_strided_slice %1154 {offsets = [2, 0], sizes = [1, 32], strides = [1, 1]} : vector<3x32xf32> to vector<1x32xf32>
    %1167 = vector.broadcast %1166 : vector<1x32xf32> to vector<17x32xf32>
    %1168 = arith.mulf %1167, %1122 : vector<17x32xf32>
    %1169 = arith.addf %1165, %1168 : vector<17x32xf32>
    %cst_475 = arith.constant 5.000000e-01 : f32
    %1170 = vector.broadcast %cst_475 : f32 to vector<17x32xf32>
    %1171 = arith.mulf %1170, %1169 : vector<17x32xf32>
    %cst_476 = arith.constant 0.707106769 : f32
    %1172 = vector.broadcast %cst_476 : f32 to vector<17x32xf32>
    %1173 = arith.mulf %1169, %1172 : vector<17x32xf32>
    %1174 = math.erf %1173 : vector<17x32xf32>
    %cst_477 = arith.constant 1.000000e+00 : f32
    %1175 = vector.broadcast %cst_477 : f32 to vector<17x32xf32>
    %1176 = arith.addf %1175, %1174 : vector<17x32xf32>
    %1177 = arith.mulf %1171, %1176 : vector<17x32xf32>
    %c27_478 = arith.constant 27 : index
    %c0_479 = arith.constant 0 : index
    %c0_480 = arith.constant 0 : index
    %1178 = vector.load %arg2[%c27_478, %c0_479, %c0_480] : memref<34x32x32xf32, #tpu.memory_space<vmem>>, vector<1x32x32xf32>
    %1179 = vector.shape_cast %1178 : vector<1x32x32xf32> to vector<32x32xf32>
    %cst_481 = arith.constant dense<0.000000e+00> : vector<17x32xf32>
    %1180 = tpu.matmul %1177, %1179, %cst_481 {dimension_numbers = #tpu.dot_dimension_numbers<[1], [0], [0], [1], [0, 0, 1, 1], [], []>} : vector<17x32xf32>, vector<32x32xf32>, vector<17x32xf32> -> vector<17x32xf32>
    %1181 = arith.addf %1152, %1180 : vector<17x32xf32>
    %c10_482 = arith.constant 10 : index
    %c0_483 = arith.constant 0 : index
    %c0_484 = arith.constant 0 : index
    %1182 = vector.load %arg5[%c10_482, %c0_483, %c0_484] : memref<16x3x32xf32, #tpu.memory_space<vmem>>, vector<1x3x32xf32>
    %1183 = vector.shape_cast %1182 : vector<1x3x32xf32> to vector<3x32xf32>
    %c10_485 = arith.constant 10 : index
    %c0_486 = arith.constant 0 : index
    %c0_487 = arith.constant 0 : index
    %1184 = vector.load %arg6[%c10_485, %c0_486, %c0_487] : memref<16x1x32xf32, #tpu.memory_space<vmem>>, vector<1x1x32xf32>
    %1185 = vector.shape_cast %1184 : vector<1x1x32xf32> to vector<1x32xf32>
    %1186 = vector.extract_strided_slice %1183 {offsets = [0, 0], sizes = [1, 32], strides = [1, 1]} : vector<3x32xf32> to vector<1x32xf32>
    %1187 = vector.broadcast %1186 : vector<1x32xf32> to vector<17x32xf32>
    %1188 = arith.mulf %1187, %1121 : vector<17x32xf32>
    %1189 = vector.broadcast %1185 : vector<1x32xf32> to vector<17x32xf32>
    %1190 = arith.addf %1189, %1188 : vector<17x32xf32>
    %1191 = vector.extract_strided_slice %1183 {offsets = [1, 0], sizes = [1, 32], strides = [1, 1]} : vector<3x32xf32> to vector<1x32xf32>
    %1192 = vector.broadcast %1191 : vector<1x32xf32> to vector<17x32xf32>
    %1193 = arith.mulf %1192, %1120 : vector<17x32xf32>
    %1194 = arith.addf %1190, %1193 : vector<17x32xf32>
    %1195 = vector.extract_strided_slice %1183 {offsets = [2, 0], sizes = [1, 32], strides = [1, 1]} : vector<3x32xf32> to vector<1x32xf32>
    %1196 = vector.broadcast %1195 : vector<1x32xf32> to vector<17x32xf32>
    %1197 = arith.mulf %1196, %1122 : vector<17x32xf32>
    %1198 = arith.addf %1194, %1197 : vector<17x32xf32>
    %cst_488 = arith.constant 5.000000e-01 : f32
    %1199 = vector.broadcast %cst_488 : f32 to vector<17x32xf32>
    %1200 = arith.mulf %1199, %1198 : vector<17x32xf32>
    %cst_489 = arith.constant 0.707106769 : f32
    %1201 = vector.broadcast %cst_489 : f32 to vector<17x32xf32>
    %1202 = arith.mulf %1198, %1201 : vector<17x32xf32>
    %1203 = math.erf %1202 : vector<17x32xf32>
    %cst_490 = arith.constant 1.000000e+00 : f32
    %1204 = vector.broadcast %cst_490 : f32 to vector<17x32xf32>
    %1205 = arith.addf %1204, %1203 : vector<17x32xf32>
    %1206 = arith.mulf %1200, %1205 : vector<17x32xf32>
    %c28 = arith.constant 28 : index
    %c0_491 = arith.constant 0 : index
    %c0_492 = arith.constant 0 : index
    %1207 = vector.load %arg2[%c28, %c0_491, %c0_492] : memref<34x32x32xf32, #tpu.memory_space<vmem>>, vector<1x32x32xf32>
    %1208 = vector.shape_cast %1207 : vector<1x32x32xf32> to vector<32x32xf32>
    %cst_493 = arith.constant dense<0.000000e+00> : vector<17x32xf32>
    %1209 = tpu.matmul %1206, %1208, %cst_493 {dimension_numbers = #tpu.dot_dimension_numbers<[1], [0], [0], [1], [0, 0, 1, 1], [], []>} : vector<17x32xf32>, vector<32x32xf32>, vector<17x32xf32> -> vector<17x32xf32>
    %1210 = arith.addf %1181, %1209 : vector<17x32xf32>
    %c11_494 = arith.constant 11 : index
    %c0_495 = arith.constant 0 : index
    %c0_496 = arith.constant 0 : index
    %1211 = vector.load %arg5[%c11_494, %c0_495, %c0_496] : memref<16x3x32xf32, #tpu.memory_space<vmem>>, vector<1x3x32xf32>
    %1212 = vector.shape_cast %1211 : vector<1x3x32xf32> to vector<3x32xf32>
    %c11_497 = arith.constant 11 : index
    %c0_498 = arith.constant 0 : index
    %c0_499 = arith.constant 0 : index
    %1213 = vector.load %arg6[%c11_497, %c0_498, %c0_499] : memref<16x1x32xf32, #tpu.memory_space<vmem>>, vector<1x1x32xf32>
    %1214 = vector.shape_cast %1213 : vector<1x1x32xf32> to vector<1x32xf32>
    %1215 = vector.extract_strided_slice %1212 {offsets = [0, 0], sizes = [1, 32], strides = [1, 1]} : vector<3x32xf32> to vector<1x32xf32>
    %1216 = vector.broadcast %1215 : vector<1x32xf32> to vector<17x32xf32>
    %1217 = arith.mulf %1216, %1121 : vector<17x32xf32>
    %1218 = vector.broadcast %1214 : vector<1x32xf32> to vector<17x32xf32>
    %1219 = arith.addf %1218, %1217 : vector<17x32xf32>
    %1220 = vector.extract_strided_slice %1212 {offsets = [1, 0], sizes = [1, 32], strides = [1, 1]} : vector<3x32xf32> to vector<1x32xf32>
    %1221 = vector.broadcast %1220 : vector<1x32xf32> to vector<17x32xf32>
    %1222 = arith.mulf %1221, %1120 : vector<17x32xf32>
    %1223 = arith.addf %1219, %1222 : vector<17x32xf32>
    %1224 = vector.extract_strided_slice %1212 {offsets = [2, 0], sizes = [1, 32], strides = [1, 1]} : vector<3x32xf32> to vector<1x32xf32>
    %1225 = vector.broadcast %1224 : vector<1x32xf32> to vector<17x32xf32>
    %1226 = arith.mulf %1225, %1122 : vector<17x32xf32>
    %1227 = arith.addf %1223, %1226 : vector<17x32xf32>
    %cst_500 = arith.constant 5.000000e-01 : f32
    %1228 = vector.broadcast %cst_500 : f32 to vector<17x32xf32>
    %1229 = arith.mulf %1228, %1227 : vector<17x32xf32>
    %cst_501 = arith.constant 0.707106769 : f32
    %1230 = vector.broadcast %cst_501 : f32 to vector<17x32xf32>
    %1231 = arith.mulf %1227, %1230 : vector<17x32xf32>
    %1232 = math.erf %1231 : vector<17x32xf32>
    %cst_502 = arith.constant 1.000000e+00 : f32
    %1233 = vector.broadcast %cst_502 : f32 to vector<17x32xf32>
    %1234 = arith.addf %1233, %1232 : vector<17x32xf32>
    %1235 = arith.mulf %1229, %1234 : vector<17x32xf32>
    %c29 = arith.constant 29 : index
    %c0_503 = arith.constant 0 : index
    %c0_504 = arith.constant 0 : index
    %1236 = vector.load %arg2[%c29, %c0_503, %c0_504] : memref<34x32x32xf32, #tpu.memory_space<vmem>>, vector<1x32x32xf32>
    %1237 = vector.shape_cast %1236 : vector<1x32x32xf32> to vector<32x32xf32>
    %cst_505 = arith.constant dense<0.000000e+00> : vector<17x32xf32>
    %1238 = tpu.matmul %1235, %1237, %cst_505 {dimension_numbers = #tpu.dot_dimension_numbers<[1], [0], [0], [1], [0, 0, 1, 1], [], []>} : vector<17x32xf32>, vector<32x32xf32>, vector<17x32xf32> -> vector<17x32xf32>
    %1239 = arith.addf %1210, %1238 : vector<17x32xf32>
    %c43 = arith.constant 43 : index
    %c0_506 = arith.constant 0 : index
    %c0_507 = arith.constant 0 : index
    %1240 = vector.load %arg3[%c43, %c0_506, %c0_507] : memref<48x1x32xf32, #tpu.memory_space<vmem>>, vector<1x1x32xf32>
    %1241 = vector.shape_cast %1240 : vector<1x1x32xf32> to vector<1x32xf32>
    %1242 = vector.broadcast %1241 : vector<1x32xf32> to vector<17x32xf32>
    %1243 = arith.addf %1239, %1242 : vector<17x32xf32>
    %1244 = vector.shape_cast %2 : vector<17x1xi1> to vector<17x1xi1>
    %1245 = vector.broadcast %1244 : vector<17x1xi1> to vector<17x32xi1>
    %1246 = arith.select %1245, %1109, %1243 : vector<17x32xi1>, vector<17x32xf32>
    %1247 = arith.addf %1246, %1083 : vector<17x32xf32>
    %cst_508 = arith.constant dense<0.000000e+00> : vector<17xf32>
    %1248 = vector.multi_reduction <add>, %1247, %cst_508 [1] : vector<17x32xf32> to vector<17xf32>
    %1249 = vector.shape_cast %1248 : vector<17xf32> to vector<17x1xf32>
    %cst_509 = arith.constant 3.200000e+01 : f32
    %1250 = vector.broadcast %cst_509 : f32 to vector<17x1xf32>
    %1251 = arith.divf %1249, %1250 : vector<17x1xf32>
    %1252 = vector.broadcast %1251 : vector<17x1xf32> to vector<17x32xf32>
    %1253 = arith.subf %1247, %1252 : vector<17x32xf32>
    %1254 = arith.mulf %1253, %1253 : vector<17x32xf32>
    %cst_510 = arith.constant dense<0.000000e+00> : vector<17xf32>
    %1255 = vector.multi_reduction <add>, %1254, %cst_510 [1] : vector<17x32xf32> to vector<17xf32>
    %1256 = vector.shape_cast %1255 : vector<17xf32> to vector<17x1xf32>
    %cst_511 = arith.constant 3.200000e+01 : f32
    %1257 = vector.broadcast %cst_511 : f32 to vector<17x1xf32>
    %1258 = arith.divf %1256, %1257 : vector<17x1xf32>
    %1259 = vector.broadcast %1251 : vector<17x1xf32> to vector<17x32xf32>
    %1260 = arith.subf %1247, %1259 : vector<17x32xf32>
    %cst_512 = arith.constant 9.99999974E-6 : f32
    %1261 = vector.broadcast %cst_512 : f32 to vector<17x1xf32>
    %1262 = arith.addf %1258, %1261 : vector<17x1xf32>
    %1263 = math.rsqrt %1262 : vector<17x1xf32>
    %1264 = vector.broadcast %1263 : vector<17x1xf32> to vector<17x32xf32>
    %1265 = arith.mulf %1260, %1264 : vector<17x32xf32>
    %c28_513 = arith.constant 28 : index
    %c0_514 = arith.constant 0 : index
    %c0_515 = arith.constant 0 : index
    %1266 = vector.load %arg3[%c28_513, %c0_514, %c0_515] : memref<48x1x32xf32, #tpu.memory_space<vmem>>, vector<1x1x32xf32>
    %1267 = vector.shape_cast %1266 : vector<1x1x32xf32> to vector<1x32xf32>
    %1268 = vector.broadcast %1267 : vector<1x32xf32> to vector<17x32xf32>
    %1269 = arith.mulf %1265, %1268 : vector<17x32xf32>
    %c29_516 = arith.constant 29 : index
    %c0_517 = arith.constant 0 : index
    %c0_518 = arith.constant 0 : index
    %1270 = vector.load %arg3[%c29_516, %c0_517, %c0_518] : memref<48x1x32xf32, #tpu.memory_space<vmem>>, vector<1x1x32xf32>
    %1271 = vector.shape_cast %1270 : vector<1x1x32xf32> to vector<1x32xf32>
    %1272 = vector.broadcast %1271 : vector<1x32xf32> to vector<17x32xf32>
    %1273 = arith.addf %1269, %1272 : vector<17x32xf32>
    %c23_519 = arith.constant 23 : index
    %c0_520 = arith.constant 0 : index
    %c0_521 = arith.constant 0 : index
    %1274 = vector.load %arg2[%c23_519, %c0_520, %c0_521] : memref<34x32x32xf32, #tpu.memory_space<vmem>>, vector<1x32x32xf32>
    %1275 = vector.shape_cast %1274 : vector<1x32x32xf32> to vector<32x32xf32>
    %cst_522 = arith.constant dense<0.000000e+00> : vector<17x32xf32>
    %1276 = tpu.matmul %1273, %1275, %cst_522 {dimension_numbers = #tpu.dot_dimension_numbers<[1], [0], [0], [1], [0, 0, 1, 1], [], []>} : vector<17x32xf32>, vector<32x32xf32>, vector<17x32xf32> -> vector<17x32xf32>
    %c44 = arith.constant 44 : index
    %c0_523 = arith.constant 0 : index
    %c0_524 = arith.constant 0 : index
    %1277 = vector.load %arg3[%c44, %c0_523, %c0_524] : memref<48x1x32xf32, #tpu.memory_space<vmem>>, vector<1x1x32xf32>
    %1278 = vector.shape_cast %1277 : vector<1x1x32xf32> to vector<1x32xf32>
    %1279 = vector.broadcast %1278 : vector<1x32xf32> to vector<17x32xf32>
    %1280 = arith.addf %1276, %1279 : vector<17x32xf32>
    %cst_525 = arith.constant 0.000000e+00 : f32
    %1281 = vector.shape_cast %2 : vector<17x1xi1> to vector<17x1xi1>
    %1282 = vector.broadcast %1281 : vector<17x1xi1> to vector<17x32xi1>
    %1283 = vector.broadcast %cst_525 : f32 to vector<17x32xf32>
    %1284 = arith.select %1282, %1283, %1280 : vector<17x32xi1>, vector<17x32xf32>
    %cst_526 = arith.constant dense<0.000000e+00> : vector<17x32xf32>
    %1285 = tpu.matmul %9, %1284, %cst_526 {dimension_numbers = #tpu.dot_dimension_numbers<[1], [0], [0], [1], [0, 0, 1, 1], [], []>} : vector<17x17xf32>, vector<17x32xf32>, vector<17x32xf32> -> vector<17x32xf32>
    %cst_527 = arith.constant dense<0.000000e+00> : vector<17x32xf32>
    %1286 = tpu.matmul %14, %1284, %cst_527 {dimension_numbers = #tpu.dot_dimension_numbers<[1], [0], [0], [1], [0, 0, 1, 1], [], []>} : vector<17x17xf32>, vector<17x32xf32>, vector<17x32xf32> -> vector<17x32xf32>
    %cst_528 = arith.constant 0.000000e+00 : f32
    %1287 = vector.broadcast %cst_528 : f32 to vector<17x32xf32>
    %c12_529 = arith.constant 12 : index
    %c0_530 = arith.constant 0 : index
    %c0_531 = arith.constant 0 : index
    %1288 = vector.load %arg5[%c12_529, %c0_530, %c0_531] : memref<16x3x32xf32, #tpu.memory_space<vmem>>, vector<1x3x32xf32>
    %1289 = vector.shape_cast %1288 : vector<1x3x32xf32> to vector<3x32xf32>
    %c12_532 = arith.constant 12 : index
    %c0_533 = arith.constant 0 : index
    %c0_534 = arith.constant 0 : index
    %1290 = vector.load %arg6[%c12_532, %c0_533, %c0_534] : memref<16x1x32xf32, #tpu.memory_space<vmem>>, vector<1x1x32xf32>
    %1291 = vector.shape_cast %1290 : vector<1x1x32xf32> to vector<1x32xf32>
    %1292 = vector.extract_strided_slice %1289 {offsets = [0, 0], sizes = [1, 32], strides = [1, 1]} : vector<3x32xf32> to vector<1x32xf32>
    %1293 = vector.broadcast %1292 : vector<1x32xf32> to vector<17x32xf32>
    %1294 = arith.mulf %1293, %1285 : vector<17x32xf32>
    %1295 = vector.broadcast %1291 : vector<1x32xf32> to vector<17x32xf32>
    %1296 = arith.addf %1295, %1294 : vector<17x32xf32>
    %1297 = vector.extract_strided_slice %1289 {offsets = [1, 0], sizes = [1, 32], strides = [1, 1]} : vector<3x32xf32> to vector<1x32xf32>
    %1298 = vector.broadcast %1297 : vector<1x32xf32> to vector<17x32xf32>
    %1299 = arith.mulf %1298, %1284 : vector<17x32xf32>
    %1300 = arith.addf %1296, %1299 : vector<17x32xf32>
    %1301 = vector.extract_strided_slice %1289 {offsets = [2, 0], sizes = [1, 32], strides = [1, 1]} : vector<3x32xf32> to vector<1x32xf32>
    %1302 = vector.broadcast %1301 : vector<1x32xf32> to vector<17x32xf32>
    %1303 = arith.mulf %1302, %1286 : vector<17x32xf32>
    %1304 = arith.addf %1300, %1303 : vector<17x32xf32>
    %cst_535 = arith.constant 5.000000e-01 : f32
    %1305 = vector.broadcast %cst_535 : f32 to vector<17x32xf32>
    %1306 = arith.mulf %1305, %1304 : vector<17x32xf32>
    %cst_536 = arith.constant 0.707106769 : f32
    %1307 = vector.broadcast %cst_536 : f32 to vector<17x32xf32>
    %1308 = arith.mulf %1304, %1307 : vector<17x32xf32>
    %1309 = math.erf %1308 : vector<17x32xf32>
    %cst_537 = arith.constant 1.000000e+00 : f32
    %1310 = vector.broadcast %cst_537 : f32 to vector<17x32xf32>
    %1311 = arith.addf %1310, %1309 : vector<17x32xf32>
    %1312 = arith.mulf %1306, %1311 : vector<17x32xf32>
    %c30 = arith.constant 30 : index
    %c0_538 = arith.constant 0 : index
    %c0_539 = arith.constant 0 : index
    %1313 = vector.load %arg2[%c30, %c0_538, %c0_539] : memref<34x32x32xf32, #tpu.memory_space<vmem>>, vector<1x32x32xf32>
    %1314 = vector.shape_cast %1313 : vector<1x32x32xf32> to vector<32x32xf32>
    %cst_540 = arith.constant dense<0.000000e+00> : vector<17x32xf32>
    %1315 = tpu.matmul %1312, %1314, %cst_540 {dimension_numbers = #tpu.dot_dimension_numbers<[1], [0], [0], [1], [0, 0, 1, 1], [], []>} : vector<17x32xf32>, vector<32x32xf32>, vector<17x32xf32> -> vector<17x32xf32>
    %1316 = arith.addf %1287, %1315 : vector<17x32xf32>
    %c13_541 = arith.constant 13 : index
    %c0_542 = arith.constant 0 : index
    %c0_543 = arith.constant 0 : index
    %1317 = vector.load %arg5[%c13_541, %c0_542, %c0_543] : memref<16x3x32xf32, #tpu.memory_space<vmem>>, vector<1x3x32xf32>
    %1318 = vector.shape_cast %1317 : vector<1x3x32xf32> to vector<3x32xf32>
    %c13_544 = arith.constant 13 : index
    %c0_545 = arith.constant 0 : index
    %c0_546 = arith.constant 0 : index
    %1319 = vector.load %arg6[%c13_544, %c0_545, %c0_546] : memref<16x1x32xf32, #tpu.memory_space<vmem>>, vector<1x1x32xf32>
    %1320 = vector.shape_cast %1319 : vector<1x1x32xf32> to vector<1x32xf32>
    %1321 = vector.extract_strided_slice %1318 {offsets = [0, 0], sizes = [1, 32], strides = [1, 1]} : vector<3x32xf32> to vector<1x32xf32>
    %1322 = vector.broadcast %1321 : vector<1x32xf32> to vector<17x32xf32>
    %1323 = arith.mulf %1322, %1285 : vector<17x32xf32>
    %1324 = vector.broadcast %1320 : vector<1x32xf32> to vector<17x32xf32>
    %1325 = arith.addf %1324, %1323 : vector<17x32xf32>
    %1326 = vector.extract_strided_slice %1318 {offsets = [1, 0], sizes = [1, 32], strides = [1, 1]} : vector<3x32xf32> to vector<1x32xf32>
    %1327 = vector.broadcast %1326 : vector<1x32xf32> to vector<17x32xf32>
    %1328 = arith.mulf %1327, %1284 : vector<17x32xf32>
    %1329 = arith.addf %1325, %1328 : vector<17x32xf32>
    %1330 = vector.extract_strided_slice %1318 {offsets = [2, 0], sizes = [1, 32], strides = [1, 1]} : vector<3x32xf32> to vector<1x32xf32>
    %1331 = vector.broadcast %1330 : vector<1x32xf32> to vector<17x32xf32>
    %1332 = arith.mulf %1331, %1286 : vector<17x32xf32>
    %1333 = arith.addf %1329, %1332 : vector<17x32xf32>
    %cst_547 = arith.constant 5.000000e-01 : f32
    %1334 = vector.broadcast %cst_547 : f32 to vector<17x32xf32>
    %1335 = arith.mulf %1334, %1333 : vector<17x32xf32>
    %cst_548 = arith.constant 0.707106769 : f32
    %1336 = vector.broadcast %cst_548 : f32 to vector<17x32xf32>
    %1337 = arith.mulf %1333, %1336 : vector<17x32xf32>
    %1338 = math.erf %1337 : vector<17x32xf32>
    %cst_549 = arith.constant 1.000000e+00 : f32
    %1339 = vector.broadcast %cst_549 : f32 to vector<17x32xf32>
    %1340 = arith.addf %1339, %1338 : vector<17x32xf32>
    %1341 = arith.mulf %1335, %1340 : vector<17x32xf32>
    %c31 = arith.constant 31 : index
    %c0_550 = arith.constant 0 : index
    %c0_551 = arith.constant 0 : index
    %1342 = vector.load %arg2[%c31, %c0_550, %c0_551] : memref<34x32x32xf32, #tpu.memory_space<vmem>>, vector<1x32x32xf32>
    %1343 = vector.shape_cast %1342 : vector<1x32x32xf32> to vector<32x32xf32>
    %cst_552 = arith.constant dense<0.000000e+00> : vector<17x32xf32>
    %1344 = tpu.matmul %1341, %1343, %cst_552 {dimension_numbers = #tpu.dot_dimension_numbers<[1], [0], [0], [1], [0, 0, 1, 1], [], []>} : vector<17x32xf32>, vector<32x32xf32>, vector<17x32xf32> -> vector<17x32xf32>
    %1345 = arith.addf %1316, %1344 : vector<17x32xf32>
    %c14_553 = arith.constant 14 : index
    %c0_554 = arith.constant 0 : index
    %c0_555 = arith.constant 0 : index
    %1346 = vector.load %arg5[%c14_553, %c0_554, %c0_555] : memref<16x3x32xf32, #tpu.memory_space<vmem>>, vector<1x3x32xf32>
    %1347 = vector.shape_cast %1346 : vector<1x3x32xf32> to vector<3x32xf32>
    %c14_556 = arith.constant 14 : index
    %c0_557 = arith.constant 0 : index
    %c0_558 = arith.constant 0 : index
    %1348 = vector.load %arg6[%c14_556, %c0_557, %c0_558] : memref<16x1x32xf32, #tpu.memory_space<vmem>>, vector<1x1x32xf32>
    %1349 = vector.shape_cast %1348 : vector<1x1x32xf32> to vector<1x32xf32>
    %1350 = vector.extract_strided_slice %1347 {offsets = [0, 0], sizes = [1, 32], strides = [1, 1]} : vector<3x32xf32> to vector<1x32xf32>
    %1351 = vector.broadcast %1350 : vector<1x32xf32> to vector<17x32xf32>
    %1352 = arith.mulf %1351, %1285 : vector<17x32xf32>
    %1353 = vector.broadcast %1349 : vector<1x32xf32> to vector<17x32xf32>
    %1354 = arith.addf %1353, %1352 : vector<17x32xf32>
    %1355 = vector.extract_strided_slice %1347 {offsets = [1, 0], sizes = [1, 32], strides = [1, 1]} : vector<3x32xf32> to vector<1x32xf32>
    %1356 = vector.broadcast %1355 : vector<1x32xf32> to vector<17x32xf32>
    %1357 = arith.mulf %1356, %1284 : vector<17x32xf32>
    %1358 = arith.addf %1354, %1357 : vector<17x32xf32>
    %1359 = vector.extract_strided_slice %1347 {offsets = [2, 0], sizes = [1, 32], strides = [1, 1]} : vector<3x32xf32> to vector<1x32xf32>
    %1360 = vector.broadcast %1359 : vector<1x32xf32> to vector<17x32xf32>
    %1361 = arith.mulf %1360, %1286 : vector<17x32xf32>
    %1362 = arith.addf %1358, %1361 : vector<17x32xf32>
    %cst_559 = arith.constant 5.000000e-01 : f32
    %1363 = vector.broadcast %cst_559 : f32 to vector<17x32xf32>
    %1364 = arith.mulf %1363, %1362 : vector<17x32xf32>
    %cst_560 = arith.constant 0.707106769 : f32
    %1365 = vector.broadcast %cst_560 : f32 to vector<17x32xf32>
    %1366 = arith.mulf %1362, %1365 : vector<17x32xf32>
    %1367 = math.erf %1366 : vector<17x32xf32>
    %cst_561 = arith.constant 1.000000e+00 : f32
    %1368 = vector.broadcast %cst_561 : f32 to vector<17x32xf32>
    %1369 = arith.addf %1368, %1367 : vector<17x32xf32>
    %1370 = arith.mulf %1364, %1369 : vector<17x32xf32>
    %c32_562 = arith.constant 32 : index
    %c0_563 = arith.constant 0 : index
    %c0_564 = arith.constant 0 : index
    %1371 = vector.load %arg2[%c32_562, %c0_563, %c0_564] : memref<34x32x32xf32, #tpu.memory_space<vmem>>, vector<1x32x32xf32>
    %1372 = vector.shape_cast %1371 : vector<1x32x32xf32> to vector<32x32xf32>
    %cst_565 = arith.constant dense<0.000000e+00> : vector<17x32xf32>
    %1373 = tpu.matmul %1370, %1372, %cst_565 {dimension_numbers = #tpu.dot_dimension_numbers<[1], [0], [0], [1], [0, 0, 1, 1], [], []>} : vector<17x32xf32>, vector<32x32xf32>, vector<17x32xf32> -> vector<17x32xf32>
    %1374 = arith.addf %1345, %1373 : vector<17x32xf32>
    %c15_566 = arith.constant 15 : index
    %c0_567 = arith.constant 0 : index
    %c0_568 = arith.constant 0 : index
    %1375 = vector.load %arg5[%c15_566, %c0_567, %c0_568] : memref<16x3x32xf32, #tpu.memory_space<vmem>>, vector<1x3x32xf32>
    %1376 = vector.shape_cast %1375 : vector<1x3x32xf32> to vector<3x32xf32>
    %c15_569 = arith.constant 15 : index
    %c0_570 = arith.constant 0 : index
    %c0_571 = arith.constant 0 : index
    %1377 = vector.load %arg6[%c15_569, %c0_570, %c0_571] : memref<16x1x32xf32, #tpu.memory_space<vmem>>, vector<1x1x32xf32>
    %1378 = vector.shape_cast %1377 : vector<1x1x32xf32> to vector<1x32xf32>
    %1379 = vector.extract_strided_slice %1376 {offsets = [0, 0], sizes = [1, 32], strides = [1, 1]} : vector<3x32xf32> to vector<1x32xf32>
    %1380 = vector.broadcast %1379 : vector<1x32xf32> to vector<17x32xf32>
    %1381 = arith.mulf %1380, %1285 : vector<17x32xf32>
    %1382 = vector.broadcast %1378 : vector<1x32xf32> to vector<17x32xf32>
    %1383 = arith.addf %1382, %1381 : vector<17x32xf32>
    %1384 = vector.extract_strided_slice %1376 {offsets = [1, 0], sizes = [1, 32], strides = [1, 1]} : vector<3x32xf32> to vector<1x32xf32>
    %1385 = vector.broadcast %1384 : vector<1x32xf32> to vector<17x32xf32>
    %1386 = arith.mulf %1385, %1284 : vector<17x32xf32>
    %1387 = arith.addf %1383, %1386 : vector<17x32xf32>
    %1388 = vector.extract_strided_slice %1376 {offsets = [2, 0], sizes = [1, 32], strides = [1, 1]} : vector<3x32xf32> to vector<1x32xf32>
    %1389 = vector.broadcast %1388 : vector<1x32xf32> to vector<17x32xf32>
    %1390 = arith.mulf %1389, %1286 : vector<17x32xf32>
    %1391 = arith.addf %1387, %1390 : vector<17x32xf32>
    %cst_572 = arith.constant 5.000000e-01 : f32
    %1392 = vector.broadcast %cst_572 : f32 to vector<17x32xf32>
    %1393 = arith.mulf %1392, %1391 : vector<17x32xf32>
    %cst_573 = arith.constant 0.707106769 : f32
    %1394 = vector.broadcast %cst_573 : f32 to vector<17x32xf32>
    %1395 = arith.mulf %1391, %1394 : vector<17x32xf32>
    %1396 = math.erf %1395 : vector<17x32xf32>
    %cst_574 = arith.constant 1.000000e+00 : f32
    %1397 = vector.broadcast %cst_574 : f32 to vector<17x32xf32>
    %1398 = arith.addf %1397, %1396 : vector<17x32xf32>
    %1399 = arith.mulf %1393, %1398 : vector<17x32xf32>
    %c33_575 = arith.constant 33 : index
    %c0_576 = arith.constant 0 : index
    %c0_577 = arith.constant 0 : index
    %1400 = vector.load %arg2[%c33_575, %c0_576, %c0_577] : memref<34x32x32xf32, #tpu.memory_space<vmem>>, vector<1x32x32xf32>
    %1401 = vector.shape_cast %1400 : vector<1x32x32xf32> to vector<32x32xf32>
    %cst_578 = arith.constant dense<0.000000e+00> : vector<17x32xf32>
    %1402 = tpu.matmul %1399, %1401, %cst_578 {dimension_numbers = #tpu.dot_dimension_numbers<[1], [0], [0], [1], [0, 0, 1, 1], [], []>} : vector<17x32xf32>, vector<32x32xf32>, vector<17x32xf32> -> vector<17x32xf32>
    %1403 = arith.addf %1374, %1402 : vector<17x32xf32>
    %c45 = arith.constant 45 : index
    %c0_579 = arith.constant 0 : index
    %c0_580 = arith.constant 0 : index
    %1404 = vector.load %arg3[%c45, %c0_579, %c0_580] : memref<48x1x32xf32, #tpu.memory_space<vmem>>, vector<1x1x32xf32>
    %1405 = vector.shape_cast %1404 : vector<1x1x32xf32> to vector<1x32xf32>
    %1406 = vector.broadcast %1405 : vector<1x32xf32> to vector<17x32xf32>
    %1407 = arith.addf %1403, %1406 : vector<17x32xf32>
    %1408 = vector.shape_cast %2 : vector<17x1xi1> to vector<17x1xi1>
    %1409 = vector.broadcast %1408 : vector<17x1xi1> to vector<17x32xi1>
    %1410 = arith.select %1409, %1273, %1407 : vector<17x32xi1>, vector<17x32xf32>
    %1411 = arith.addf %1410, %1247 : vector<17x32xf32>
    %cst_581 = arith.constant dense<0.000000e+00> : vector<17xf32>
    %1412 = vector.multi_reduction <add>, %1247, %cst_581 [1] : vector<17x32xf32> to vector<17xf32>
    %1413 = vector.shape_cast %1412 : vector<17xf32> to vector<17x1xf32>
    %cst_582 = arith.constant 3.200000e+01 : f32
    %1414 = vector.broadcast %cst_582 : f32 to vector<17x1xf32>
    %1415 = arith.divf %1413, %1414 : vector<17x1xf32>
    %1416 = vector.broadcast %1415 : vector<17x1xf32> to vector<17x32xf32>
    %1417 = arith.subf %1247, %1416 : vector<17x32xf32>
    %1418 = arith.mulf %1417, %1417 : vector<17x32xf32>
    %cst_583 = arith.constant dense<0.000000e+00> : vector<17xf32>
    %1419 = vector.multi_reduction <add>, %1418, %cst_583 [1] : vector<17x32xf32> to vector<17xf32>
    %1420 = vector.shape_cast %1419 : vector<17xf32> to vector<17x1xf32>
    %cst_584 = arith.constant 3.200000e+01 : f32
    %1421 = vector.broadcast %cst_584 : f32 to vector<17x1xf32>
    %1422 = arith.divf %1420, %1421 : vector<17x1xf32>
    %1423 = vector.broadcast %1415 : vector<17x1xf32> to vector<17x32xf32>
    %1424 = arith.subf %1247, %1423 : vector<17x32xf32>
    %cst_585 = arith.constant 9.99999974E-6 : f32
    %1425 = vector.broadcast %cst_585 : f32 to vector<17x1xf32>
    %1426 = arith.addf %1422, %1425 : vector<17x1xf32>
    %1427 = math.rsqrt %1426 : vector<17x1xf32>
    %1428 = vector.broadcast %1427 : vector<17x1xf32> to vector<17x32xf32>
    %1429 = arith.mulf %1424, %1428 : vector<17x32xf32>
    %c30_586 = arith.constant 30 : index
    %c0_587 = arith.constant 0 : index
    %c0_588 = arith.constant 0 : index
    %1430 = vector.load %arg3[%c30_586, %c0_587, %c0_588] : memref<48x1x32xf32, #tpu.memory_space<vmem>>, vector<1x1x32xf32>
    %1431 = vector.shape_cast %1430 : vector<1x1x32xf32> to vector<1x32xf32>
    %1432 = vector.broadcast %1431 : vector<1x32xf32> to vector<17x32xf32>
    %1433 = arith.mulf %1429, %1432 : vector<17x32xf32>
    %c31_589 = arith.constant 31 : index
    %c0_590 = arith.constant 0 : index
    %c0_591 = arith.constant 0 : index
    %1434 = vector.load %arg3[%c31_589, %c0_590, %c0_591] : memref<48x1x32xf32, #tpu.memory_space<vmem>>, vector<1x1x32xf32>
    %1435 = vector.shape_cast %1434 : vector<1x1x32xf32> to vector<1x32xf32>
    %1436 = vector.broadcast %1435 : vector<1x32xf32> to vector<17x32xf32>
    %1437 = arith.addf %1433, %1436 : vector<17x32xf32>
    %c24_592 = arith.constant 24 : index
    %c0_593 = arith.constant 0 : index
    %c0_594 = arith.constant 0 : index
    %1438 = vector.load %arg2[%c24_592, %c0_593, %c0_594] : memref<34x32x32xf32, #tpu.memory_space<vmem>>, vector<1x32x32xf32>
    %1439 = vector.shape_cast %1438 : vector<1x32x32xf32> to vector<32x32xf32>
    %cst_595 = arith.constant dense<0.000000e+00> : vector<17x32xf32>
    %1440 = tpu.matmul %1437, %1439, %cst_595 {dimension_numbers = #tpu.dot_dimension_numbers<[1], [0], [0], [1], [0, 0, 1, 1], [], []>} : vector<17x32xf32>, vector<32x32xf32>, vector<17x32xf32> -> vector<17x32xf32>
    %c46 = arith.constant 46 : index
    %c0_596 = arith.constant 0 : index
    %c0_597 = arith.constant 0 : index
    %1441 = vector.load %arg3[%c46, %c0_596, %c0_597] : memref<48x1x32xf32, #tpu.memory_space<vmem>>, vector<1x1x32xf32>
    %1442 = vector.shape_cast %1441 : vector<1x1x32xf32> to vector<1x32xf32>
    %1443 = vector.broadcast %1442 : vector<1x32xf32> to vector<17x32xf32>
    %1444 = arith.addf %1440, %1443 : vector<17x32xf32>
    %cst_598 = arith.constant 5.000000e-01 : f32
    %1445 = vector.broadcast %cst_598 : f32 to vector<17x32xf32>
    %1446 = arith.mulf %1445, %1444 : vector<17x32xf32>
    %cst_599 = arith.constant 0.707106769 : f32
    %1447 = vector.broadcast %cst_599 : f32 to vector<17x32xf32>
    %1448 = arith.mulf %1444, %1447 : vector<17x32xf32>
    %1449 = math.erf %1448 : vector<17x32xf32>
    %cst_600 = arith.constant 1.000000e+00 : f32
    %1450 = vector.broadcast %cst_600 : f32 to vector<17x32xf32>
    %1451 = arith.addf %1450, %1449 : vector<17x32xf32>
    %1452 = arith.mulf %1446, %1451 : vector<17x32xf32>
    %c25_601 = arith.constant 25 : index
    %c0_602 = arith.constant 0 : index
    %c0_603 = arith.constant 0 : index
    %1453 = vector.load %arg2[%c25_601, %c0_602, %c0_603] : memref<34x32x32xf32, #tpu.memory_space<vmem>>, vector<1x32x32xf32>
    %1454 = vector.shape_cast %1453 : vector<1x32x32xf32> to vector<32x32xf32>
    %cst_604 = arith.constant dense<0.000000e+00> : vector<17x32xf32>
    %1455 = tpu.matmul %1452, %1454, %cst_604 {dimension_numbers = #tpu.dot_dimension_numbers<[1], [0], [0], [1], [0, 0, 1, 1], [], []>} : vector<17x32xf32>, vector<32x32xf32>, vector<17x32xf32> -> vector<17x32xf32>
    %c47 = arith.constant 47 : index
    %c0_605 = arith.constant 0 : index
    %c0_606 = arith.constant 0 : index
    %1456 = vector.load %arg3[%c47, %c0_605, %c0_606] : memref<48x1x32xf32, #tpu.memory_space<vmem>>, vector<1x1x32xf32>
    %1457 = vector.shape_cast %1456 : vector<1x1x32xf32> to vector<1x32xf32>
    %1458 = vector.broadcast %1457 : vector<1x32xf32> to vector<17x32xf32>
    %1459 = arith.addf %1455, %1458 : vector<17x32xf32>
    %1460 = arith.addf %1459, %1411 : vector<17x32xf32>
    %c0_607 = arith.constant 0 : index
    %c0_608 = arith.constant 0 : index
    %c0_609 = arith.constant 0 : index
    %1461 = vector.load %arg7[%c0_607, %c0_608, %c0_609] : memref<1x17x32xf32, #tpu.memory_space<vmem>>, vector<1x17x32xf32>
    %1462 = vector.shape_cast %1461 : vector<1x17x32xf32> to vector<17x32xf32>
    %1463 = vector.shape_cast %1460 : vector<17x32xf32> to vector<1x17x32xf32>
    tpu.vector_store %arg7[%c0_607, %c0_608, %c0_609], %1463 {strides = array<i32>} : memref<1x17x32xf32, #tpu.memory_space<vmem>>, vector<1x17x32xf32>,
    return
  }
  func.func @transform_0(%arg0: i32) -> (i32, i32, i32) {
    %c0_i32 = arith.constant 0 : i32
    %c0_i32_0 = arith.constant 0 : i32
    %c0_i32_1 = arith.constant 0 : i32
    return %arg0, %c0_i32, %c0_i32_0 : i32, i32, i32
  }
  func.func @transform_1(%arg0: i32) -> (i32, i32, i32) {
    %c0_i32 = arith.constant 0 : i32
    %c0_i32_0 = arith.constant 0 : i32
    %c0_i32_1 = arith.constant 0 : i32
    %c0_i32_2 = arith.constant 0 : i32
    return %c0_i32, %c0_i32_0, %c0_i32_1 : i32, i32, i32
  }
  func.func @transform_2(%arg0: i32) -> (i32, i32, i32) {
    %c0_i32 = arith.constant 0 : i32
    %c0_i32_0 = arith.constant 0 : i32
    %c0_i32_1 = arith.constant 0 : i32
    %c0_i32_2 = arith.constant 0 : i32
    return %c0_i32, %c0_i32_0, %c0_i32_1 : i32, i32, i32
  }
  func.func @transform_3(%arg0: i32) -> (i32, i32, i32) {
    %c0_i32 = arith.constant 0 : i32
    %c0_i32_0 = arith.constant 0 : i32
    %c0_i32_1 = arith.constant 0 : i32
    %c0_i32_2 = arith.constant 0 : i32
    return %c0_i32, %c0_i32_0, %c0_i32_1 : i32, i32, i32
  }
  func.func @transform_4(%arg0: i32) -> (i32, i32, i32) {
    %c0_i32 = arith.constant 0 : i32
    %c0_i32_0 = arith.constant 0 : i32
    %c0_i32_1 = arith.constant 0 : i32
    %c0_i32_2 = arith.constant 0 : i32
    return %c0_i32, %c0_i32_0, %c0_i32_1 : i32, i32, i32
  }
  func.func @transform_5(%arg0: i32) -> (i32, i32, i32) {
    %c0_i32 = arith.constant 0 : i32
    %c0_i32_0 = arith.constant 0 : i32
    %c0_i32_1 = arith.constant 0 : i32
    %c0_i32_2 = arith.constant 0 : i32
    return %c0_i32, %c0_i32_0, %c0_i32_1 : i32, i32, i32
  }
  func.func @transform_6(%arg0: i32) -> (i32, i32, i32) {
    %c0_i32 = arith.constant 0 : i32
    %c0_i32_0 = arith.constant 0 : i32
    %c0_i32_1 = arith.constant 0 : i32
    return %arg0, %c0_i32, %c0_i32_0 : i32, i32, i32
  }
}

</mosaic_0001>

<llo_original>
// kernel: vit_encoder_forward.1
$region0: #{vit_encoder_forward.1}
  #allocation0 [shape = 'u32[]', space=smem, size = 0x4, offset = 0x4, fixed_abs, tag = 'smem constant byte address 0x4 - core index']
  #allocation1 [shape = 'u32[144,128]{1,0:T(1,128)}', space=vmem, size = 0x12000, scoped, tag = 'internal scratch']
  %s0 = inlined_call_operand.vmem [shape: f32[2,17,32], index: 0, kind: input, shape index: {}]
  %s1 = inlined_call_operand.vmem [shape: f32[34,32,32], index: 1, kind: input, shape index: {}]
  %s2 = inlined_call_operand.vmem [shape: f32[48,1,32], index: 2, kind: input, shape index: {}]
  %s3 = inlined_call_operand.vmem [shape: f32[14,1,32], index: 3, kind: input, shape index: {}]
  %s4 = inlined_call_operand.vmem [shape: f32[16,3,32], index: 4, kind: input, shape index: {}]
  %s5 = inlined_call_operand.vmem [shape: f32[16,1,32], index: 5, kind: input, shape index: {}]
  %s6 = inlined_call_operand.vmem [shape: f32[2,17,32], index: 6, kind: output, shape index: {}]
  %s7 = sld [smem:[#allocation0]]
  $region57: #{vit_encoder_forward.1} parent=0
    _
  %s9 = ssub.s32 1, %s7
  %s10 = scalar_select 0, %s9, %s7
  loop: start=0, step=1, limit=4
  $region2: #{vit_encoder_forward.1} parent=0 // loop_pre_header
    _
  $region3: #{vit_encoder_forward.1} parent=0 // loop_header
    %s12 = sphi 0, %s16
    %p13 = scmp.ge.s32.totalorder %s12, 4
    %s22 = sphi 0, %s24
    %s25 = sphi 0, %s22
    %s26 = sphi 0, %s25
    %s42 = sphi 0, %s26
    %s46 = sphi 0, %s46
    %s48 = sphi 0, %s46
    %s49 = sphi 0, %s48
    %s63 = sphi 0, %s49
    %s67 = sphi 0, %s67
    %s69 = sphi 0, %s67
    %s70 = sphi 0, %s69
    %s84 = sphi 0, %s70
    %s88 = sphi 0, %s88
    %s90 = sphi 0, %s88
    %s91 = sphi 0, %s90
    %s105 = sphi 0, %s91
    %s109 = sphi 0, %s109
    %s111 = sphi 0, %s109
    %s112 = sphi 0, %s111
    %s126 = sphi 0, %s112
    %s130 = sphi 0, %s130
    %s132 = sphi 0, %s130
    %s133 = sphi 0, %s132
    %s147 = sphi 0, %s133
    %s153 = sphi 0, %s155
    %s156 = sphi 0, %s153
    %s157 = sphi 0, %s156
    %s173 = sphi 0, %s157
  $region4: #{vit_encoder_forward.1} parent=0 // loop_header_branch
    %15 = sbr.rel (%p13) target = $region8
  $region5: #{vit_encoder_forward.1} parent=0 // loop_body
    %s17 = ssub.s32 %s12, 1
    %s18 = ssub.s32 %s12, 2
    %s19 = sadd.s32 %s12, 1
    %s20 = ssub.s32 %s12, %s19
    %p21 = scmp.eq.s32.totalorder %s20, 0
    %s23 = sadd.s32 %s22, 1
    %s24 = scalar_select %p21, %s22, %s23
    %p27 = pneg %p21
    %p28 = scmp.eq.s32.totalorder %s12, 1
    %p29 = por %p27, %p28
    %p30 = scmp.ne.s32.totalorder %s22, %s25
    %p31 = scmp.eq.s32.totalorder %s12, 0
    %p32 = por %p30, %p31
    %p33 = scmp.ne.s32.totalorder %s22, %s25
    %p34 = scmp.eq.s32.totalorder %s17, 1
    %p35 = por %p33, %p34
    %p36 = scmp.ne.s32.totalorder %s25, %s26
    %p37 = scmp.eq.s32.totalorder %s17, 0
    %p38 = por %p36, %p37
    %p39 = scmp.ne.s32.totalorder %s25, %s26
    %p40 = scmp.eq.s32.totalorder %s18, 1
    %p41 = por %p39, %p40
    %p43 = scmp.ne.s32.totalorder %s26, %s42
    %p44 = scmp.eq.s32.totalorder %s18, 0
    %p45 = por %p43, %p44
    %s47 = sadd.s32 %s46, 1
    %p50 = scmp.eq.s32.totalorder %s12, 1
    %p51 = scmp.ne.s32.totalorder %s46, %s48
    %p52 = scmp.eq.s32.totalorder %s12, 0
    %p53 = por %p51, %p52
    %p54 = scmp.ne.s32.totalorder %s46, %s48
    %p55 = scmp.eq.s32.totalorder %s17, 1
    %p56 = por %p54, %p55
    %p57 = scmp.ne.s32.totalorder %s48, %s49
    %p58 = scmp.eq.s32.totalorder %s17, 0
    %p59 = por %p57, %p58
    %p60 = scmp.ne.s32.totalorder %s48, %s49
    %p61 = scmp.eq.s32.totalorder %s18, 1
    %p62 = por %p60, %p61
    %p64 = scmp.ne.s32.totalorder %s49, %s63
    %p65 = scmp.eq.s32.totalorder %s18, 0
    %p66 = por %p64, %p65
    %s68 = sadd.s32 %s67, 1
    %p71 = scmp.eq.s32.totalorder %s12, 1
    %p72 = scmp.ne.s32.totalorder %s67, %s69
    %p73 = scmp.eq.s32.totalorder %s12, 0
    %p74 = por %p72, %p73
    %p75 = scmp.ne.s32.totalorder %s67, %s69
    %p76 = scmp.eq.s32.totalorder %s17, 1
    %p77 = por %p75, %p76
    %p78 = scmp.ne.s32.totalorder %s69, %s70
    %p79 = scmp.eq.s32.totalorder %s17, 0
    %p80 = por %p78, %p79
    %p81 = scmp.ne.s32.totalorder %s69, %s70
    %p82 = scmp.eq.s32.totalorder %s18, 1
    %p83 = por %p81, %p82
    %p85 = scmp.ne.s32.totalorder %s70, %s84
    %p86 = scmp.eq.s32.totalorder %s18, 0
    %p87 = por %p85, %p86
    %s89 = sadd.s32 %s88, 1
    %p92 = scmp.eq.s32.totalorder %s12, 1
    %p93 = scmp.ne.s32.totalorder %s88, %s90
    %p94 = scmp.eq.s32.totalorder %s12, 0
    %p95 = por %p93, %p94
    %p96 = scmp.ne.s32.totalorder %s88, %s90
    %p97 = scmp.eq.s32.totalorder %s17, 1
    %p98 = por %p96, %p97
    %p99 = scmp.ne.s32.totalorder %s90, %s91
    %p100 = scmp.eq.s32.totalorder %s17, 0
    %p101 = por %p99, %p100
    %p102 = scmp.ne.s32.totalorder %s90, %s91
    %p103 = scmp.eq.s32.totalorder %s18, 1
    %p104 = por %p102, %p103
    %p106 = scmp.ne.s32.totalorder %s91, %s105
    %p107 = scmp.eq.s32.totalorder %s18, 0
    %p108 = por %p106, %p107
    %s110 = sadd.s32 %s109, 1
    %p113 = scmp.eq.s32.totalorder %s12, 1
    %p114 = scmp.ne.s32.totalorder %s109, %s111
    %p115 = scmp.eq.s32.totalorder %s12, 0
    %p116 = por %p114, %p115
    %p117 = scmp.ne.s32.totalorder %s109, %s111
    %p118 = scmp.eq.s32.totalorder %s17, 1
    %p119 = por %p117, %p118
    %p120 = scmp.ne.s32.totalorder %s111, %s112
    %p121 = scmp.eq.s32.totalorder %s17, 0
    %p122 = por %p120, %p121
    %p123 = scmp.ne.s32.totalorder %s111, %s112
    %p124 = scmp.eq.s32.totalorder %s18, 1
    %p125 = por %p123, %p124
    %p127 = scmp.ne.s32.totalorder %s112, %s126
    %p128 = scmp.eq.s32.totalorder %s18, 0
    %p129 = por %p127, %p128
    %s131 = sadd.s32 %s130, 1
    %p134 = scmp.eq.s32.totalorder %s12, 1
    %p135 = scmp.ne.s32.totalorder %s130, %s132
    %p136 = scmp.eq.s32.totalorder %s12, 0
    %p137 = por %p135, %p136
    %p138 = scmp.ne.s32.totalorder %s130, %s132
    %p139 = scmp.eq.s32.totalorder %s17, 1
    %p140 = por %p138, %p139
    %p141 = scmp.ne.s32.totalorder %s132, %s133
    %p142 = scmp.eq.s32.totalorder %s17, 0
    %p143 = por %p141, %p142
    %p144 = scmp.ne.s32.totalorder %s132, %s133
    %p145 = scmp.eq.s32.totalorder %s18, 1
    %p146 = por %p144, %p145
    %p148 = scmp.ne.s32.totalorder %s133, %s147
    %p149 = scmp.eq.s32.totalorder %s18, 0
    %p150 = por %p148, %p149
    %s151 = ssub.s32 %s12, %s19
    %p152 = scmp.eq.s32.totalorder %s151, 0
    %s154 = sadd.s32 %s153, 1
    %s155 = scalar_select %p152, %s153, %s154
    %p158 = pneg %p152
    %p159 = scmp.eq.s32.totalorder %s12, 1
    %p160 = por %p158, %p159
    %p161 = scmp.ne.s32.totalorder %s153, %s156
    %p162 = scmp.eq.s32.totalorder %s12, 0
    %p163 = por %p161, %p162
    %p164 = scmp.ne.s32.totalorder %s153, %s156
    %p165 = scmp.eq.s32.totalorder %s17, 1
    %p166 = por %p164, %p165
    %p167 = scmp.ne.s32.totalorder %s156, %s157
    %p168 = scmp.eq.s32.totalorder %s17, 0
    %p169 = por %p167, %p168
    %p170 = scmp.ne.s32.totalorder %s156, %s157
    %p171 = scmp.eq.s32.totalorder %s18, 1
    %p172 = por %p170, %p171
    %p174 = scmp.ne.s32.totalorder %s157, %s173
    %p175 = scmp.eq.s32.totalorder %s18, 0
    %p176 = por %p174, %p175
    %p177 = scmp.le.s32.totalorder 1, %s12
    %p178 = scmp.lt.s32.totalorder %s12, 3
    %p179 = pnand %p177, %p178
    %p180 = pneg %p179
    // Predicated region
    $region9: #{vit_encoder_forward.1} parent=5 // pred_check
      _
    $region10: #{vit_encoder_forward.1} parent=5 // pred_check_branch
      %182 = sbr.rel (%p179) target = $region12
    $region11: #{vit_encoder_forward.1} parent=5 // pred_region
      %s183 = ssub.s32 %s12, 1
      // Predicated region
      $region13: #{vit_encoder_forward.1} parent=11 // pred_check
        %p184 = pneg %p59
      $region14: #{vit_encoder_forward.1} parent=11 // pred_check_branch
        %186 = sbr.rel (%p184) target = $region16
      $region15: #{vit_encoder_forward.1} parent=11 // pred_region
        _
      $region16: #{vit_encoder_forward.1} parent=11 // pred_fallthru
        _
      // Predicated region
      $region17: #{vit_encoder_forward.1} parent=11 // pred_check
        %p187 = pneg %p80
      $region18: #{vit_encoder_forward.1} parent=11 // pred_check_branch
        %189 = sbr.rel (%p187) target = $region20
      $region19: #{vit_encoder_forward.1} parent=11 // pred_region
        _
      $region20: #{vit_encoder_forward.1} parent=11 // pred_fallthru
        _
      // Predicated region
      $region21: #{vit_encoder_forward.1} parent=11 // pred_check
        %p190 = pneg %p101
      $region22: #{vit_encoder_forward.1} parent=11 // pred_check_branch
        %192 = sbr.rel (%p190) target = $region24
      $region23: #{vit_encoder_forward.1} parent=11 // pred_region
        _
      $region24: #{vit_encoder_forward.1} parent=11 // pred_fallthru
        _
      // Predicated region
      $region25: #{vit_encoder_forward.1} parent=11 // pred_check
        %p193 = pneg %p122
      $region26: #{vit_encoder_forward.1} parent=11 // pred_check_branch
        %195 = sbr.rel (%p193) target = $region28
      $region27: #{vit_encoder_forward.1} parent=11 // pred_region
        _
      $region28: #{vit_encoder_forward.1} parent=11 // pred_fallthru
        _
      // Predicated region
      $region29: #{vit_encoder_forward.1} parent=11 // pred_check
        %p196 = pneg %p143
      $region30: #{vit_encoder_forward.1} parent=11 // pred_check_branch
        %198 = sbr.rel (%p196) target = $region32
      $region31: #{vit_encoder_forward.1} parent=11 // pred_region
        _
      $region32: #{vit_encoder_forward.1} parent=11 // pred_fallthru
        _
    $region12: #{vit_encoder_forward.1} parent=5 // pred_fallthru
      _
    %p199 = scmp.lt.s32.totalorder %s12, 2
    // Predicated region
    $region33: #{vit_encoder_forward.1} parent=5 // pred_check
      %p200 = pneg %p199
    $region34: #{vit_encoder_forward.1} parent=5 // pred_check_branch
      %202 = sbr.rel (%p200) target = $region36
    $region35: #{vit_encoder_forward.1} parent=5 // pred_region
      // Predicated region
      $region37: #{vit_encoder_forward.1} parent=35 // pred_check
        %p203 = pneg %p32
      $region38: #{vit_encoder_forward.1} parent=35 // pred_check_branch
        %205 = sbr.rel (%p203) target = $region40
      $region39: #{vit_encoder_forward.1} parent=35 // pred_region
        %p206 = scmp.lt.s32.totalorder %s12, 1
        %s207 = scalar_select %p206, %s12, 1
        %s208 = smul.addr %s207, 3
        %s209 = smul.addr %s208, 8
        %s210 = scalar_lea.vmem %s0, %s209
      $region40: #{vit_encoder_forward.1} parent=35 // pred_fallthru
        _
    $region36: #{vit_encoder_forward.1} parent=5 // pred_fallthru
      _
    %p211 = scmp.le.s32.totalorder 1, %s12
    %p212 = scmp.lt.s32.totalorder %s12, 3
    %p213 = pnand %p211, %p212
    %p214 = pneg %p213
    // Predicated region
    $region41: #{vit_encoder_forward.1} parent=5 // pred_check
      _
    $region42: #{vit_encoder_forward.1} parent=5 // pred_check_branch
      %216 = sbr.rel (%p213) target = $region44
    $region43: #{vit_encoder_forward.1} parent=5 // pred_region
      %s217 = ssub.s32 %s12, 1
      %p218 = scmp.lt.s32.totalorder %s17, 1
      %s219 = scalar_select %p218, %s17, 1
      %s220 = smul.addr %s219, 3
      %s221 = smul.addr %s220, 8
      %s222 = scalar_lea.vmem %s0, %s221
      %p223 = pneg %p38
      %p224 = pneg %p35
      %p225 = pneg %p59
      %p226 = pneg %p56
      %p227 = pneg %p80
      %p228 = pneg %p77
      %p229 = pneg %p101
      %p230 = pneg %p98
      %p231 = pneg %p122
      %p232 = pneg %p119
      %p233 = pneg %p143
      %p234 = pneg %p140
      %p235 = pneg %p169
      %p236 = pneg %p166
      %p237 = scmp.lt.s32.totalorder %s17, 1
      %s238 = scalar_select %p237, %s17, 1
      %s239 = smul.addr %s238, 3
      %s240 = smul.addr %s239, 8
      %s241 = scalar_lea.vmem %s6, %s240
      %p242 = scmp.lt.s32.totalorder %s17, 1
      %s243 = scalar_select %p242, %s17, 1
      %s244 = smul.addr %s243, 3
      %s245 = smul.addr %s244, 8
      %s246 = scalar_lea.vmem %s0, %s245
      %p247 = scmp.lt.s32.totalorder %s17, 1
      %s248 = scalar_select %p247, %s17, 1
      %s249 = smul.addr %s248, 3
      %s250 = smul.addr %s249, 8
      %s251 = scalar_lea.vmem %s6, %s250
      %v252 = vlaneseq
      %v253 = vshrl.u32 %v252, 7
      %v254 = vadd.s32 %v253, 8
      %v255 = vadd.s32 %v253, 16
      %vm256 = vcmp.eq.s32.totalorder %v253, 0
      %vm257 = vcmp.eq.s32.totalorder %v254, 0
      %vm258 = vcmp.eq.s32.totalorder %v255, 0
      %v259 = vlaneseq
      %v260 = vand.u32 %v259, 127
      %v261 = vsub.s32 %v253, 1
      %v262 = vsub.s32 %v254, 1
      %v263 = vsub.s32 %v255, 1
      %vm264 = vcmp.eq.s32.totalorder %v260, %v261
      %vm265 = vcmp.eq.s32.totalorder %v260, %v262
      %vm266 = vcmp.eq.s32.totalorder %v260, %v263
      %v267 = vsel %vm264, 1, 0
      %v268 = vsel %vm265, 1, 0
      %v269 = vsel %vm266, 1, 0
      %v270 = vcvt.s32.f32 %v267
      %v271 = vcvt.s32.f32 %v268
      %v272 = vcvt.s32.f32 %v269
      %v273 = vadd.s32 %v253, 1
      %v274 = vadd.s32 %v254, 1
      %v275 = vadd.s32 %v255, 1
      %vm276 = vcmp.eq.s32.totalorder %v260, %v273
      %vm277 = vcmp.eq.s32.totalorder %v260, %v274
      %vm278 = vcmp.eq.s32.totalorder %v260, %v275
      %v279 = vsel %vm276, 1, 0
      %v280 = vsel %vm277, 1, 0
      %v281 = vsel %vm278, 1, 0
      %v282 = vcvt.s32.f32 %v279
      %v283 = vcvt.s32.f32 %v280
      %v284 = vcvt.s32.f32 %v281
      %vm285 = vcmp.ge.s32.totalorder %v253, 1
      %vm286 = vcmp.le.s32.totalorder %v253, 4
      %vm287 = vmand %vm285, %vm286
      %v288 = vmul.u32 %v253, 4
      %v289 = vsub.s32 %v288, 6
      %vm290 = vcmp.eq.s32.totalorder %v260, %v289
      %vm291 = vcmp.ge.s32.totalorder %v260, 1
      %vm292 = vmand %vm290, %vm291
      %vm293 = vmand %vm292, %vm287
      %v294 = vsel %vm293, 1, 0
      %v295 = vcvt.s32.f32 %v294
      %v296 = vadd.s32 %v288, 1
      %v297 = vsub.s32 %v296, 6
      %vm298 = vcmp.eq.s32.totalorder %v260, %v297
      %vm299 = vmand %vm298, %vm291
      %vm300 = vmand %vm299, %vm287
      %v301 = vsel %vm300, 1, 0
      %v302 = vcvt.s32.f32 %v301
      %v303 = vadd.s32 %v288, 2
      %v304 = vsub.s32 %v303, 6
      %vm305 = vcmp.eq.s32.totalorder %v260, %v304
      %vm306 = vmand %vm305, %vm291
      %vm307 = vmand %vm306, %vm287
      %v308 = vsel %vm307, 1, 0
      %v309 = vcvt.s32.f32 %v308
      %v310 = vadd.s32 %v288, 3
      %v311 = vsub.s32 %v310, 6
      %vm312 = vcmp.eq.s32.totalorder %v260, %v311
      %vm313 = vmand %vm312, %vm291
      %vm314 = vmand %vm313, %vm287
      %v315 = vsel %vm314, 1, 0
      %v316 = vcvt.s32.f32 %v315
      %v317 = vadd.s32 %v288, 4
      %v318 = vsub.s32 %v317, 6
      %vm319 = vcmp.eq.s32.totalorder %v260, %v318
      %vm320 = vmand %vm319, %vm291
      %vm321 = vmand %vm320, %vm287
      %v322 = vsel %vm321, 1, 0
      %v323 = vcvt.s32.f32 %v322
      %v324 = vadd.s32 %v288, 5
      %v325 = vsub.s32 %v324, 6
      %vm326 = vcmp.eq.s32.totalorder %v260, %v325
      %vm327 = vmand %vm326, %vm291
      %vm328 = vmand %vm327, %vm287
      %v329 = vsel %vm328, 1, 0
      %v330 = vcvt.s32.f32 %v329
      %vm331 = vcmp.eq.s32.totalorder %v260, %v288
      %vm332 = vmand %vm331, %vm291
      %vm333 = vmand %vm332, %vm287
      %v334 = vsel %vm333, 1, 0
      %v335 = vcvt.s32.f32 %v334
      %vm336 = vcmp.lt.s32.totalorder %v260, 5
      %v337 = vsel %vm336, 0.0, -1e+30
      %vm338 = vcmp.ge.s32.totalorder %v260, 0
      %vm339 = vcmp.lt.s32.totalorder %v260, 8
      %vm340 = vmand %vm338, %vm339
      %v341 = vsel %vm340, 1, 0
      %v342 = vcvt.s32.f32 %v341
      %vm343 = vcmp.ge.s32.totalorder %v260, 8
      %vm344 = vcmp.lt.s32.totalorder %v260, 16
      %vm345 = vmand %vm343, %vm344
      %v346 = vsel %vm345, 1, 0
      %v347 = vcvt.s32.f32 %v346
      %vm348 = vcmp.ge.s32.totalorder %v260, 16
      %vm349 = vcmp.lt.s32.totalorder %v260, 24
      %vm350 = vmand %vm348, %vm349
      %v351 = vsel %vm350, 1, 0
      %v352 = vcvt.s32.f32 %v351
      %vm353 = vcmp.ge.s32.totalorder %v260, 24
      %vm354 = vcmp.lt.s32.totalorder %v260, 32
      %vm355 = vmand %vm353, %vm354
      %v356 = vsel %vm355, 1, 0
      %v357 = vcvt.s32.f32 %v356
      %v358 = vld [vmem:[%s246] sm:$0xff]
      %v359 = vld [vmem:[%s246 + $0x8] sm:$0xff]
      %v360 = vld [vmem:[%s246 + $0x10] sm:$0x1]
      %vm361 = vcmask 261120
      %v362 = vsel %vm361, %v358, 0.0
      %363 = vadd.xlane.f32.xlu0 %v362
      %v364 = vpop.xlane.xlu0 %363
      %v365 = vsel %vm361, %v359, 0.0
      %366 = vadd.xlane.f32.xlu0 %v365
      %v367 = vpop.xlane.xlu0 %366
      %vm368 = vcmask 253952
      %v369 = vsel %vm368, %v360, 0.0
      %370 = vadd.xlane.f32.xlu0 %v369
      %v371 = vpop.xlane.xlu0 %370
      %v372 = vrcp.pop 32.0
      %v373 = vmul.f32 %v364, %v372
      %v374 = vmul.f32 %v367, %v372
      %v375 = vmul.f32 %v371, %v372
      %v376 = vsub.f32 %v358, %v373
      %v377 = vsub.f32 %v359, %v374
      %v378 = vsub.f32 %v360, %v375
      %v379 = vmul.f32 %v376, %v376
      %v380 = vmul.f32 %v377, %v377
      %v381 = vmul.f32 %v378, %v378
      %v382 = vsel %vm361, %v379, 0.0
      %383 = vadd.xlane.f32.xlu0 %v382
      %v384 = vpop.xlane.xlu0 %383
      %v385 = vsel %vm361, %v380, 0.0
      %386 = vadd.xlane.f32.xlu0 %v385
      %v387 = vpop.xlane.xlu0 %386
      %v388 = vsel %vm368, %v381, 0.0
      %389 = vadd.xlane.f32.xlu0 %v388
      %v390 = vpop.xlane.xlu0 %389
      %v391 = vmul.f32 %v384, %v372
      %v392 = vmul.f32 %v387, %v372
      %v393 = vmul.f32 %v390, %v372
      %v394 = vadd.f32 %v391, 1e-05
      %v395 = vadd.f32 %v392, 1e-05
      %v396 = vadd.f32 %v393, 1e-05
      %v397 = vrsqrt.pop %v394
      %v398 = vrsqrt.pop %v395
      %v399 = vrsqrt.pop %v396
      %v400 = vmul.f32 %v376, %v397
      %v401 = vmul.f32 %v377, %v398
      %v402 = vmul.f32 %v378, %v399
      %v403 = vld [vmem:[%s2] sm:$0x1]
      %v405 = vlaneseq
      %v406 = vshrl.u32 %v405, 7
      %v407 = vsub.s32 0, %v406
      %v408 = vrot.slane %v403, %v407
      %v410 = vmul.f32 %v400, %v408
      %v411 = vmul.f32 %v401, %v408
      %v412 = vmul.f32 %v402, %v408
      %s413 = scalar_lea.vmem %s2, 1
      %v414 = vld [vmem:[%s413] sm:$0x1]
      %v416 = vlaneseq
      %v417 = vshrl.u32 %v416, 7
      %v418 = vsub.s32 0, %v417
      %v419 = vrot.slane %v414, %v418
      %v421 = vadd.f32 %v410, %v419
      %v422 = vadd.f32 %v411, %v419
      %v423 = vadd.f32 %v412, %v419
      %s424 = scalar_lea.vmem %s2, 16
      %v425 = vld [vmem:[%s424] sm:$0x1]
      %v426 = vld [vmem:[%s3] sm:$0x1]
      %vm427 = vcmask 138240
      %v429 = vsel %vm427, %v295, 0
      %vm431 = vcmask 1040384
      %v433 = vsel %vm431, %v423, 0
      %435 = vmatprep.subr.mxu0 0.0
      %436 = vmatpush1.msra.mxu0 0.0
      %437 = vmatprep.subr.mxu0 0.0
      %438 = vmatpush1.msra.mxu0 0.0
      %439 = vmatprep.subr.mxu0 0.0
      %440 = vmatpush1.msra.mxu0 0.0
      %441 = vmatprep.subr.mxu0 0.0
      %442 = vmatpush1.msra.mxu0 0.0
      %443 = vmatprep.subr.mxu0 0.0
      %444 = vmatpush1.msra.mxu0 0.0
      %445 = vmatprep.subr.mxu0 0.0
      %446 = vmatpush1.msra.mxu0 0.0
      %447 = vmatprep.subr.mxu0 0.0
      %448 = vmatpush1.msra.mxu0 0.0
      %449 = vmatprep.subr.mxu0 0.0
      %450 = vmatpush1.msra.mxu0 0.0
      %451 = vmatprep.subr.mxu0 0.0
      %452 = vmatpush1.msra.mxu0 0.0
      %453 = vmatprep.subr.mxu0 0.0
      %454 = vmatpush1.msra.mxu0 0.0
      %455 = vmatprep.subr.mxu0 0.0
      %456 = vmatpush1.msra.mxu0 0.0
      %457 = vmatprep.subr.mxu0 0.0
      %458 = vmatpush1.msra.mxu0 0.0
      %459 = vmatprep.subr.mxu0 0.0
      %460 = vmatpush1.msra.mxu0 0.0
      %461 = vmatprep.subr.mxu0 0.0
      %462 = vmatpush1.msra.mxu0 %v433
      %463 = vmatprep.subr.mxu0 0.0
      %464 = vmatpush1.msra.mxu0 %v422
      %465 = vmatprep.subr.mxu0 0.0
      %466 = vmatpush1.msra.mxu0 %v421
      %467 = vmatprep.subr.mxu0 0.0
      %468 = vmatpush2.msra.mxu0 0.0
      %469 = vmatprep.subr.mxu0 0.0
      %470 = vmatpush2.msra.mxu0 0.0
      %471 = vmatprep.subr.mxu0 0.0
      %472 = vmatpush2.msra.mxu0 0.0
      %473 = vmatprep.subr.mxu0 0.0
      %474 = vmatpush2.msra.mxu0 0.0
      %475 = vmatprep.subr.mxu0 0.0
      %476 = vmatpush2.msra.mxu0 0.0
      %477 = vmatprep.subr.mxu0 0.0
      %478 = vmatpush2.msra.mxu0 0.0
      %479 = vmatprep.subr.mxu0 0.0
      %480 = vmatpush2.msra.mxu0 0.0
      %481 = vmatprep.subr.mxu0 0.0
      %482 = vmatpush2.msra.mxu0 0.0
      %483 = vmatprep.subr.mxu0 0.0
      %484 = vmatpush2.msra.mxu0 0.0
      %485 = vmatprep.subr.mxu0 0.0
      %486 = vmatpush2.msra.mxu0 0.0
      %487 = vmatprep.subr.mxu0 0.0
      %488 = vmatpush2.msra.mxu0 0.0
      %489 = vmatprep.subr.mxu0 0.0
      %490 = vmatpush2.msra.mxu0 0.0
      %491 = vmatprep.subr.mxu0 0.0
      %492 = vmatpush2.msra.mxu0 0.0
      %493 = vmatprep.subr.mxu0 0.0
      %494 = vmatpush2.msra.mxu0 0.0
      %495 = vmatprep.subr.mxu0 0.0
      %496 = vmatpush2.msra.mxu0 0.0
      %497 = vmatprep.subr.mxu0 0.0
      %498 = vmatpush2.msra.mxu0 0.0
      %499 = vmatprep.mubr.f32.mxu0 0.0
      %500 = vmatmul.mubr.f32.gmra.mxu0 %v429
      %v501 = vpop.f32.mrf.mxu0
      %v502 = vadd.f32 0.0, %v501
      %v503 = vpop.f32.mrf.mxu0
      %504 = vdwg.mxu0
      %v506 = vlaneseq
      %v507 = vshrl.u32 %v506, 7
      %v508 = vsub.s32 0, %v507
      %v509 = vrot.slane %v426, %v508
      %v511 = vmul.f32 %v509, %v502
      %v513 = vlaneseq
      %v514 = vshrl.u32 %v513, 7
      %v515 = vsub.s32 0, %v514
      %v516 = vrot.slane %v425, %v515
      %v518 = vadd.f32 %v516, %v511
      %s519 = scalar_lea.vmem %s3, 1
      %v520 = vld [vmem:[%s519] sm:$0x1]
      %v522 = vsel %vm427, %v302, 0
      %524 = vmatprep.subr.mxu0 0.0
      %525 = vmatpush1.msra.mxu0 0.0
      %526 = vmatprep.subr.mxu0 0.0
      %527 = vmatpush1.msra.mxu0 0.0
      %528 = vmatprep.subr.mxu0 0.0
      %529 = vmatpush1.msra.mxu0 0.0
      %530 = vmatprep.subr.mxu0 0.0
      %531 = vmatpush1.msra.mxu0 0.0
      %532 = vmatprep.subr.mxu0 0.0
      %533 = vmatpush1.msra.mxu0 0.0
      %534 = vmatprep.subr.mxu0 0.0
      %535 = vmatpush1.msra.mxu0 0.0
      %536 = vmatprep.subr.mxu0 0.0
      %537 = vmatpush1.msra.mxu0 0.0
      %538 = vmatprep.subr.mxu0 0.0
      %539 = vmatpush1.msra.mxu0 0.0
      %540 = vmatprep.subr.mxu0 0.0
      %541 = vmatpush1.msra.mxu0 0.0
      %542 = vmatprep.subr.mxu0 0.0
      %543 = vmatpush1.msra.mxu0 0.0
      %544 = vmatprep.subr.mxu0 0.0
      %545 = vmatpush1.msra.mxu0 0.0
      %546 = vmatprep.subr.mxu0 0.0
      %547 = vmatpush1.msra.mxu0 0.0
      %548 = vmatprep.subr.mxu0 0.0
      %549 = vmatpush1.msra.mxu0 0.0
      %550 = vmatprep.subr.mxu0 0.0
      %551 = vmatpush1.msra.mxu0 %v433
      %552 = vmatprep.subr.mxu0 0.0
      %553 = vmatpush1.msra.mxu0 %v422
      %554 = vmatprep.subr.mxu0 0.0
      %555 = vmatpush1.msra.mxu0 %v421
      %556 = vmatprep.subr.mxu0 0.0
      %557 = vmatpush2.msra.mxu0 0.0
      %558 = vmatprep.subr.mxu0 0.0
      %559 = vmatpush2.msra.mxu0 0.0
      %560 = vmatprep.subr.mxu0 0.0
      %561 = vmatpush2.msra.mxu0 0.0
      %562 = vmatprep.subr.mxu0 0.0
      %563 = vmatpush2.msra.mxu0 0.0
      %564 = vmatprep.subr.mxu0 0.0
      %565 = vmatpush2.msra.mxu0 0.0
      %566 = vmatprep.subr.mxu0 0.0
      %567 = vmatpush2.msra.mxu0 0.0
      %568 = vmatprep.subr.mxu0 0.0
      %569 = vmatpush2.msra.mxu0 0.0
      %570 = vmatprep.subr.mxu0 0.0
      %571 = vmatpush2.msra.mxu0 0.0
      %572 = vmatprep.subr.mxu0 0.0
      %573 = vmatpush2.msra.mxu0 0.0
      %574 = vmatprep.subr.mxu0 0.0
      %575 = vmatpush2.msra.mxu0 0.0
      %576 = vmatprep.subr.mxu0 0.0
      %577 = vmatpush2.msra.mxu0 0.0
      %578 = vmatprep.subr.mxu0 0.0
      %579 = vmatpush2.msra.mxu0 0.0
      %580 = vmatprep.subr.mxu0 0.0
      %581 = vmatpush2.msra.mxu0 0.0
      %582 = vmatprep.subr.mxu0 0.0
      %583 = vmatpush2.msra.mxu0 0.0
      %584 = vmatprep.subr.mxu0 0.0
      %585 = vmatpush2.msra.mxu0 0.0
      %586 = vmatprep.subr.mxu0 0.0
      %587 = vmatpush2.msra.mxu0 0.0
      %588 = vmatprep.mubr.f32.mxu0 0.0
      %589 = vmatmul.mubr.f32.gmra.mxu0 %v522
      %v590 = vpop.f32.mrf.mxu0
      %v591 = vadd.f32 0.0, %v590
      %v592 = vpop.f32.mrf.mxu0
      %593 = vdwg.mxu0
      %v595 = vlaneseq
      %v596 = vshrl.u32 %v595, 7
      %v597 = vsub.s32 0, %v596
      %v598 = vrot.slane %v520, %v597
      %v600 = vmul.f32 %v598, %v591
      %v601 = vadd.f32 %v518, %v600
      %s602 = scalar_lea.vmem %s3, 2
      %v603 = vld [vmem:[%s602] sm:$0x1]
      %v605 = vsel %vm427, %v309, 0
      %607 = vmatprep.subr.mxu0 0.0
      %608 = vmatpush1.msra.mxu0 0.0
      %609 = vmatprep.subr.mxu0 0.0
      %610 = vmatpush1.msra.mxu0 0.0
      %611 = vmatprep.subr.mxu0 0.0
      %612 = vmatpush1.msra.mxu0 0.0
      %613 = vmatprep.subr.mxu0 0.0
      %614 = vmatpush1.msra.mxu0 0.0
      %615 = vmatprep.subr.mxu0 0.0
      %616 = vmatpush1.msra.mxu0 0.0
      %617 = vmatprep.subr.mxu0 0.0
      %618 = vmatpush1.msra.mxu0 0.0
      %619 = vmatprep.subr.mxu0 0.0
      %620 = vmatpush1.msra.mxu0 0.0
      %621 = vmatprep.subr.mxu0 0.0
      %622 = vmatpush1.msra.mxu0 0.0
      %623 = vmatprep.subr.mxu0 0.0
      %624 = vmatpush1.msra.mxu0 0.0
      %625 = vmatprep.subr.mxu0 0.0
      %626 = vmatpush1.msra.mxu0 0.0
      %627 = vmatprep.subr.mxu0 0.0
      %628 = vmatpush1.msra.mxu0 0.0
      %629 = vmatprep.subr.mxu0 0.0
      %630 = vmatpush1.msra.mxu0 0.0
      %631 = vmatprep.subr.mxu0 0.0
      %632 = vmatpush1.msra.mxu0 0.0
      %633 = vmatprep.subr.mxu0 0.0
      %634 = vmatpush1.msra.mxu0 %v433
      %635 = vmatprep.subr.mxu0 0.0
      %636 = vmatpush1.msra.mxu0 %v422
      %637 = vmatprep.subr.mxu0 0.0
      %638 = vmatpush1.msra.mxu0 %v421
      %639 = vmatprep.subr.mxu0 0.0
      %640 = vmatpush2.msra.mxu0 0.0
      %641 = vmatprep.subr.mxu0 0.0
      %642 = vmatpush2.msra.mxu0 0.0
      %643 = vmatprep.subr.mxu0 0.0
      %644 = vmatpush2.msra.mxu0 0.0
      %645 = vmatprep.subr.mxu0 0.0
      %646 = vmatpush2.msra.mxu0 0.0
      %647 = vmatprep.subr.mxu0 0.0
      %648 = vmatpush2.msra.mxu0 0.0
      %649 = vmatprep.subr.mxu0 0.0
      %650 = vmatpush2.msra.mxu0 0.0
      %651 = vmatprep.subr.mxu0 0.0
      %652 = vmatpush2.msra.mxu0 0.0
      %653 = vmatprep.subr.mxu0 0.0
      %654 = vmatpush2.msra.mxu0 0.0
      %655 = vmatprep.subr.mxu0 0.0
      %656 = vmatpush2.msra.mxu0 0.0
      %657 = vmatprep.subr.mxu0 0.0
      %658 = vmatpush2.msra.mxu0 0.0
      %659 = vmatprep.subr.mxu0 0.0
      %660 = vmatpush2.msra.mxu0 0.0
      %661 = vmatprep.subr.mxu0 0.0
      %662 = vmatpush2.msra.mxu0 0.0
      %663 = vmatprep.subr.mxu0 0.0
      %664 = vmatpush2.msra.mxu0 0.0
      %665 = vmatprep.subr.mxu0 0.0
      %666 = vmatpush2.msra.mxu0 0.0
      %667 = vmatprep.subr.mxu0 0.0
      %668 = vmatpush2.msra.mxu0 0.0
      %669 = vmatprep.subr.mxu0 0.0
      %670 = vmatpush2.msra.mxu0 0.0
      %671 = vmatprep.mubr.f32.mxu0 0.0
      %672 = vmatmul.mubr.f32.gmra.mxu0 %v605
      %v673 = vpop.f32.mrf.mxu0
      %v674 = vadd.f32 0.0, %v673
      %v675 = vpop.f32.mrf.mxu0
      %676 = vdwg.mxu0
      %v678 = vlaneseq
      %v679 = vshrl.u32 %v678, 7
      %v680 = vsub.s32 0, %v679
      %v681 = vrot.slane %v603, %v680
      %v683 = vmul.f32 %v681, %v674
      %v684 = vadd.f32 %v601, %v683
      %s685 = scalar_lea.vmem %s3, 3
      %v686 = vld [vmem:[%s685] sm:$0x1]
      %v688 = vsel %vm427, %v316, 0
      %690 = vmatprep.subr.mxu0 0.0
      %691 = vmatpush1.msra.mxu0 0.0
      %692 = vmatprep.subr.mxu0 0.0
      %693 = vmatpush1.msra.mxu0 0.0
      %694 = vmatprep.subr.mxu0 0.0
      %695 = vmatpush1.msra.mxu0 0.0
      %696 = vmatprep.subr.mxu0 0.0
      %697 = vmatpush1.msra.mxu0 0.0
      %698 = vmatprep.subr.mxu0 0.0
      %699 = vmatpush1.msra.mxu0 0.0
      %700 = vmatprep.subr.mxu0 0.0
      %701 = vmatpush1.msra.mxu0 0.0
      %702 = vmatprep.subr.mxu0 0.0
      %703 = vmatpush1.msra.mxu0 0.0
      %704 = vmatprep.subr.mxu0 0.0
      %705 = vmatpush1.msra.mxu0 0.0
      %706 = vmatprep.subr.mxu0 0.0
      %707 = vmatpush1.msra.mxu0 0.0
      %708 = vmatprep.subr.mxu0 0.0
      %709 = vmatpush1.msra.mxu0 0.0
      %710 = vmatprep.subr.mxu0 0.0
      %711 = vmatpush1.msra.mxu0 0.0
      %712 = vmatprep.subr.mxu0 0.0
      %713 = vmatpush1.msra.mxu0 0.0
      %714 = vmatprep.subr.mxu0 0.0
      %715 = vmatpush1.msra.mxu0 0.0
      %716 = vmatprep.subr.mxu0 0.0
      %717 = vmatpush1.msra.mxu0 %v433
      %718 = vmatprep.subr.mxu0 0.0
      %719 = vmatpush1.msra.mxu0 %v422
      %720 = vmatprep.subr.mxu0 0.0
      %721 = vmatpush1.msra.mxu0 %v421
      %722 = vmatprep.subr.mxu0 0.0
      %723 = vmatpush2.msra.mxu0 0.0
      %724 = vmatprep.subr.mxu0 0.0
      %725 = vmatpush2.msra.mxu0 0.0
      %726 = vmatprep.subr.mxu0 0.0
      %727 = vmatpush2.msra.mxu0 0.0
      %728 = vmatprep.subr.mxu0 0.0
      %729 = vmatpush2.msra.mxu0 0.0
      %730 = vmatprep.subr.mxu0 0.0
      %731 = vmatpush2.msra.mxu0 0.0
      %732 = vmatprep.subr.mxu0 0.0
      %733 = vmatpush2.msra.mxu0 0.0
      %734 = vmatprep.subr.mxu0 0.0
      %735 = vmatpush2.msra.mxu0 0.0
      %736 = vmatprep.subr.mxu0 0.0
      %737 = vmatpush2.msra.mxu0 0.0
      %738 = vmatprep.subr.mxu0 0.0
      %739 = vmatpush2.msra.mxu0 0.0
      %740 = vmatprep.subr.mxu0 0.0
      %741 = vmatpush2.msra.mxu0 0.0
      %742 = vmatprep.subr.mxu0 0.0
      %743 = vmatpush2.msra.mxu0 0.0
      %744 = vmatprep.subr.mxu0 0.0
      %745 = vmatpush2.msra.mxu0 0.0
      %746 = vmatprep.subr.mxu0 0.0
      %747 = vmatpush2.msra.mxu0 0.0
      %748 = vmatprep.subr.mxu0 0.0
      %749 = vmatpush2.msra.mxu0 0.0
      %750 = vmatprep.subr.mxu0 0.0
      %751 = vmatpush2.msra.mxu0 0.0
      %752 = vmatprep.subr.mxu0 0.0
      %753 = vmatpush2.msra.mxu0 0.0
      %754 = vmatprep.mubr.f32.mxu0 0.0
      %755 = vmatmul.mubr.f32.gmra.mxu0 %v688
      %v756 = vpop.f32.mrf.mxu0
      %v757 = vadd.f32 0.0, %v756
      %v758 = vpop.f32.mrf.mxu0
      %759 = vdwg.mxu0
      %v761 = vlaneseq
      %v762 = vshrl.u32 %v761, 7
      %v763 = vsub.s32 0, %v762
      %v764 = vrot.slane %v686, %v763
      %v766 = vmul.f32 %v764, %v757
      %v767 = vadd.f32 %v684, %v766
      %s768 = scalar_lea.vmem %s3, 4
      %v769 = vld [vmem:[%s768] sm:$0x1]
      %v771 = vsel %vm427, %v323, 0
      %773 = vmatprep.subr.mxu0 0.0
      %774 = vmatpush1.msra.mxu0 0.0
      %775 = vmatprep.subr.mxu0 0.0
      %776 = vmatpush1.msra.mxu0 0.0
      %777 = vmatprep.subr.mxu0 0.0
      %778 = vmatpush1.msra.mxu0 0.0
      %779 = vmatprep.subr.mxu0 0.0
      %780 = vmatpush1.msra.mxu0 0.0
      %781 = vmatprep.subr.mxu0 0.0
      %782 = vmatpush1.msra.mxu0 0.0
      %783 = vmatprep.subr.mxu0 0.0
      %784 = vmatpush1.msra.mxu0 0.0
      %785 = vmatprep.subr.mxu0 0.0
      %786 = vmatpush1.msra.mxu0 0.0
      %787 = vmatprep.subr.mxu0 0.0
      %788 = vmatpush1.msra.mxu0 0.0
      %789 = vmatprep.subr.mxu0 0.0
      %790 = vmatpush1.msra.mxu0 0.0
      %791 = vmatprep.subr.mxu0 0.0
      %792 = vmatpush1.msra.mxu0 0.0
      %793 = vmatprep.subr.mxu0 0.0
      %794 = vmatpush1.msra.mxu0 0.0
      %795 = vmatprep.subr.mxu0 0.0
      %796 = vmatpush1.msra.mxu0 0.0
      %797 = vmatprep.subr.mxu0 0.0
      %798 = vmatpush1.msra.mxu0 0.0
      %799 = vmatprep.subr.mxu0 0.0
      %800 = vmatpush1.msra.mxu0 %v433
      %801 = vmatprep.subr.mxu0 0.0
      %802 = vmatpush1.msra.mxu0 %v422
      %803 = vmatprep.subr.mxu0 0.0
      %804 = vmatpush1.msra.mxu0 %v421
      %805 = vmatprep.subr.mxu0 0.0
      %806 = vmatpush2.msra.mxu0 0.0
      %807 = vmatprep.subr.mxu0 0.0
      %808 = vmatpush2.msra.mxu0 0.0
      %809 = vmatprep.subr.mxu0 0.0
      %810 = vmatpush2.msra.mxu0 0.0
      %811 = vmatprep.subr.mxu0 0.0
      %812 = vmatpush2.msra.mxu0 0.0
      %813 = vmatprep.subr.mxu0 0.0
      %814 = vmatpush2.msra.mxu0 0.0
      %815 = vmatprep.subr.mxu0 0.0
      %816 = vmatpush2.msra.mxu0 0.0
      %817 = vmatprep.subr.mxu0 0.0
      %818 = vmatpush2.msra.mxu0 0.0
      %819 = vmatprep.subr.mxu0 0.0
      %820 = vmatpush2.msra.mxu0 0.0
      %821 = vmatprep.subr.mxu0 0.0
      %822 = vmatpush2.msra.mxu0 0.0
      %823 = vmatprep.subr.mxu0 0.0
      %824 = vmatpush2.msra.mxu0 0.0
      %825 = vmatprep.subr.mxu0 0.0
      %826 = vmatpush2.msra.mxu0 0.0
      %827 = vmatprep.subr.mxu0 0.0
      %828 = vmatpush2.msra.mxu0 0.0
      %829 = vmatprep.subr.mxu0 0.0
      %830 = vmatpush2.msra.mxu0 0.0
      %831 = vmatprep.subr.mxu0 0.0
      %832 = vmatpush2.msra.mxu0 0.0
      %833 = vmatprep.subr.mxu0 0.0
      %834 = vmatpush2.msra.mxu0 0.0
      %835 = vmatprep.subr.mxu0 0.0
      %836 = vmatpush2.msra.mxu0 0.0
      %837 = vmatprep.mubr.f32.mxu0 0.0
      %838 = vmatmul.mubr.f32.gmra.mxu0 %v771
      %v839 = vpop.f32.mrf.mxu0
      %v840 = vadd.f32 0.0, %v839
      %v841 = vpop.f32.mrf.mxu0
      %842 = vdwg.mxu0
      %v844 = vlaneseq
      %v845 = vshrl.u32 %v844, 7
      %v846 = vsub.s32 0, %v845
      %v847 = vrot.slane %v769, %v846
      %v849 = vmul.f32 %v847, %v840
      %v850 = vadd.f32 %v767, %v849
      %s851 = scalar_lea.vmem %s3, 5
      %v852 = vld [vmem:[%s851] sm:$0x1]
      %v854 = vsel %vm427, %v330, 0
      %856 = vmatprep.subr.mxu0 0.0
      %857 = vmatpush1.msra.mxu0 0.0
      %858 = vmatprep.subr.mxu0 0.0
      %859 = vmatpush1.msra.mxu0 0.0
      %860 = vmatprep.subr.mxu0 0.0
      %861 = vmatpush1.msra.mxu0 0.0
      %862 = vmatprep.subr.mxu0 0.0
      %863 = vmatpush1.msra.mxu0 0.0
      %864 = vmatprep.subr.mxu0 0.0
      %865 = vmatpush1.msra.mxu0 0.0
      %866 = vmatprep.subr.mxu0 0.0
      %867 = vmatpush1.msra.mxu0 0.0
      %868 = vmatprep.subr.mxu0 0.0
      %869 = vmatpush1.msra.mxu0 0.0
      %870 = vmatprep.subr.mxu0 0.0
      %871 = vmatpush1.msra.mxu0 0.0
      %872 = vmatprep.subr.mxu0 0.0
      %873 = vmatpush1.msra.mxu0 0.0
      %874 = vmatprep.subr.mxu0 0.0
      %875 = vmatpush1.msra.mxu0 0.0
      %876 = vmatprep.subr.mxu0 0.0
      %877 = vmatpush1.msra.mxu0 0.0
      %878 = vmatprep.subr.mxu0 0.0
      %879 = vmatpush1.msra.mxu0 0.0
      %880 = vmatprep.subr.mxu0 0.0
      %881 = vmatpush1.msra.mxu0 0.0
      %882 = vmatprep.subr.mxu0 0.0
      %883 = vmatpush1.msra.mxu0 %v433
      %884 = vmatprep.subr.mxu0 0.0
      %885 = vmatpush1.msra.mxu0 %v422
      %886 = vmatprep.subr.mxu0 0.0
      %887 = vmatpush1.msra.mxu0 %v421
      %888 = vmatprep.subr.mxu0 0.0
      %889 = vmatpush2.msra.mxu0 0.0
      %890 = vmatprep.subr.mxu0 0.0
      %891 = vmatpush2.msra.mxu0 0.0
      %892 = vmatprep.subr.mxu0 0.0
      %893 = vmatpush2.msra.mxu0 0.0
      %894 = vmatprep.subr.mxu0 0.0
      %895 = vmatpush2.msra.mxu0 0.0
      %896 = vmatprep.subr.mxu0 0.0
      %897 = vmatpush2.msra.mxu0 0.0
      %898 = vmatprep.subr.mxu0 0.0
      %899 = vmatpush2.msra.mxu0 0.0
      %900 = vmatprep.subr.mxu0 0.0
      %901 = vmatpush2.msra.mxu0 0.0
      %902 = vmatprep.subr.mxu0 0.0
      %903 = vmatpush2.msra.mxu0 0.0
      %904 = vmatprep.subr.mxu0 0.0
      %905 = vmatpush2.msra.mxu0 0.0
      %906 = vmatprep.subr.mxu0 0.0
      %907 = vmatpush2.msra.mxu0 0.0
      %908 = vmatprep.subr.mxu0 0.0
      %909 = vmatpush2.msra.mxu0 0.0
      %910 = vmatprep.subr.mxu0 0.0
      %911 = vmatpush2.msra.mxu0 0.0
      %912 = vmatprep.subr.mxu0 0.0
      %913 = vmatpush2.msra.mxu0 0.0
      %914 = vmatprep.subr.mxu0 0.0
      %915 = vmatpush2.msra.mxu0 0.0
      %916 = vmatprep.subr.mxu0 0.0
      %917 = vmatpush2.msra.mxu0 0.0
      %918 = vmatprep.subr.mxu0 0.0
      %919 = vmatpush2.msra.mxu0 0.0
      %920 = vmatprep.mubr.f32.mxu0 0.0
      %921 = vmatmul.mubr.f32.gmra.mxu0 %v854
      %v922 = vpop.f32.mrf.mxu0
      %v923 = vadd.f32 0.0, %v922
      %v924 = vpop.f32.mrf.mxu0
      %925 = vdwg.mxu0
      %v927 = vlaneseq
      %v928 = vshrl.u32 %v927, 7
      %v929 = vsub.s32 0, %v928
      %v930 = vrot.slane %v852, %v929
      %v932 = vmul.f32 %v930, %v923
      %v933 = vadd.f32 %v850, %v932
      %s934 = scalar_lea.vmem %s3, 6
      %v935 = vld [vmem:[%s934] sm:$0x1]
      %v937 = vsel %vm427, %v335, 0
      %939 = vmatprep.subr.mxu0 0.0
      %940 = vmatpush1.msra.mxu0 0.0
      %941 = vmatprep.subr.mxu0 0.0
      %942 = vmatpush1.msra.mxu0 0.0
      %943 = vmatprep.subr.mxu0 0.0
      %944 = vmatpush1.msra.mxu0 0.0
      %945 = vmatprep.subr.mxu0 0.0
      %946 = vmatpush1.msra.mxu0 0.0
      %947 = vmatprep.subr.mxu0 0.0
      %948 = vmatpush1.msra.mxu0 0.0
      %949 = vmatprep.subr.mxu0 0.0
      %950 = vmatpush1.msra.mxu0 0.0
      %951 = vmatprep.subr.mxu0 0.0
      %952 = vmatpush1.msra.mxu0 0.0
      %953 = vmatprep.subr.mxu0 0.0
      %954 = vmatpush1.msra.mxu0 0.0
      %955 = vmatprep.subr.mxu0 0.0
      %956 = vmatpush1.msra.mxu0 0.0
      %957 = vmatprep.subr.mxu0 0.0
      %958 = vmatpush1.msra.mxu0 0.0
      %959 = vmatprep.subr.mxu0 0.0
      %960 = vmatpush1.msra.mxu0 0.0
      %961 = vmatprep.subr.mxu0 0.0
      %962 = vmatpush1.msra.mxu0 0.0
      %963 = vmatprep.subr.mxu0 0.0
      %964 = vmatpush1.msra.mxu0 0.0
      %965 = vmatprep.subr.mxu0 0.0
      %966 = vmatpush1.msra.mxu0 %v433
      %967 = vmatprep.subr.mxu0 0.0
      %968 = vmatpush1.msra.mxu0 %v422
      %969 = vmatprep.subr.mxu0 0.0
      %970 = vmatpush1.msra.mxu0 %v421
      %971 = vmatprep.subr.mxu0 0.0
      %972 = vmatpush2.msra.mxu0 0.0
      %973 = vmatprep.subr.mxu0 0.0
      %974 = vmatpush2.msra.mxu0 0.0
      %975 = vmatprep.subr.mxu0 0.0
      %976 = vmatpush2.msra.mxu0 0.0
      %977 = vmatprep.subr.mxu0 0.0
      %978 = vmatpush2.msra.mxu0 0.0
      %979 = vmatprep.subr.mxu0 0.0
      %980 = vmatpush2.msra.mxu0 0.0
      %981 = vmatprep.subr.mxu0 0.0
      %982 = vmatpush2.msra.mxu0 0.0
      %983 = vmatprep.subr.mxu0 0.0
      %984 = vmatpush2.msra.mxu0 0.0
      %985 = vmatprep.subr.mxu0 0.0
      %986 = vmatpush2.msra.mxu0 0.0
      %987 = vmatprep.subr.mxu0 0.0
      %988 = vmatpush2.msra.mxu0 0.0
      %989 = vmatprep.subr.mxu0 0.0
      %990 = vmatpush2.msra.mxu0 0.0
      %991 = vmatprep.subr.mxu0 0.0
      %992 = vmatpush2.msra.mxu0 0.0
      %993 = vmatprep.subr.mxu0 0.0
      %994 = vmatpush2.msra.mxu0 0.0
      %995 = vmatprep.subr.mxu0 0.0
      %996 = vmatpush2.msra.mxu0 0.0
      %997 = vmatprep.subr.mxu0 0.0
      %998 = vmatpush2.msra.mxu0 0.0
      %999 = vmatprep.subr.mxu0 0.0
      %1000 = vmatpush2.msra.mxu0 0.0
      %1001 = vmatprep.subr.mxu0 0.0
      %1002 = vmatpush2.msra.mxu0 0.0
      %1003 = vmatprep.mubr.f32.mxu0 0.0
      %1004 = vmatmul.mubr.f32.gmra.mxu0 %v937
      %v1005 = vpop.f32.mrf.mxu0
      %v1006 = vadd.f32 0.0, %v1005
      %v1007 = vpop.f32.mrf.mxu0
      %1008 = vdwg.mxu0
      %v1010 = vlaneseq
      %v1011 = vshrl.u32 %v1010, 7
      %v1012 = vsub.s32 0, %v1011
      %v1013 = vrot.slane %v935, %v1012
      %v1015 = vmul.f32 %v1013, %v1006
      %v1016 = vadd.f32 %v933, %v1015
      %s1017 = scalar_lea.vmem %s1, 128
      %v1018 = vld [vmem:[%s1017] sm:$0xff]
      %v1019 = vld [vmem:[%s1017 + $0x8] sm:$0xff]
      %v1020 = vld [vmem:[%s1017 + $0x10] sm:$0xff]
      %v1021 = vld [vmem:[%s1017 + $0x18] sm:$0xff]
      %s1022 = scalar_lea.vmem %s2, 17
      %v1023 = vld [vmem:[%s1022] sm:$0x1]
      %v1025 = vlaneseq
      %v1026 = vshrl.u32 %v1025, 7
      %v1027 = vsub.s32 0, %v1026
      %v1028 = vrot.slane %v1023, %v1027
      %v1031 = vsel %vm361, %v1016, 0
      %1033 = vmatprep.subr.mxu0 0.0
      %1034 = vmatpush1.msra.mxu0 0.0
      %1035 = vmatprep.subr.mxu0 0.0
      %1036 = vmatpush1.msra.mxu0 0.0
      %1037 = vmatprep.subr.mxu0 0.0
      %1038 = vmatpush1.msra.mxu0 0.0
      %1039 = vmatprep.subr.mxu0 0.0
      %1040 = vmatpush1.msra.mxu0 0.0
      %1041 = vmatprep.subr.mxu0 0.0
      %1042 = vmatpush1.msra.mxu0 0.0
      %1043 = vmatprep.subr.mxu0 0.0
      %1044 = vmatpush1.msra.mxu0 0.0
      %1045 = vmatprep.subr.mxu0 0.0
      %1046 = vmatpush1.msra.mxu0 0.0
      %1047 = vmatprep.subr.mxu0 0.0
      %1048 = vmatpush1.msra.mxu0 0.0
      %1049 = vmatprep.subr.mxu0 0.0
      %1050 = vmatpush1.msra.mxu0 0.0
      %1051 = vmatprep.subr.mxu0 0.0
      %1052 = vmatpush1.msra.mxu0 0.0
      %1053 = vmatprep.subr.mxu0 0.0
      %1054 = vmatpush1.msra.mxu0 0.0
      %1055 = vmatprep.subr.mxu0 0.0
      %1056 = vmatpush1.msra.mxu0 0.0
      %1057 = vmatprep.subr.mxu0 0.0
      %1058 = vmatpush1.msra.mxu0 %v1021
      %1059 = vmatprep.subr.mxu0 0.0
      %1060 = vmatpush1.msra.mxu0 %v1020
      %1061 = vmatprep.subr.mxu0 0.0
      %1062 = vmatpush1.msra.mxu0 %v1019
      %1063 = vmatprep.subr.mxu0 0.0
      %1064 = vmatpush1.msra.mxu0 %v1018
      %1065 = vmatprep.subr.mxu0 0.0
      %1066 = vmatpush2.msra.mxu0 0.0
      %1067 = vmatprep.subr.mxu0 0.0
      %1068 = vmatpush2.msra.mxu0 0.0
      %1069 = vmatprep.subr.mxu0 0.0
      %1070 = vmatpush2.msra.mxu0 0.0
      %1071 = vmatprep.subr.mxu0 0.0
      %1072 = vmatpush2.msra.mxu0 0.0
      %1073 = vmatprep.subr.mxu0 0.0
      %1074 = vmatpush2.msra.mxu0 0.0
      %1075 = vmatprep.subr.mxu0 0.0
      %1076 = vmatpush2.msra.mxu0 0.0
      %1077 = vmatprep.subr.mxu0 0.0
      %1078 = vmatpush2.msra.mxu0 0.0
      %1079 = vmatprep.subr.mxu0 0.0
      %1080 = vmatpush2.msra.mxu0 0.0
      %1081 = vmatprep.subr.mxu0 0.0
      %1082 = vmatpush2.msra.mxu0 0.0
      %1083 = vmatprep.subr.mxu0 0.0
      %1084 = vmatpush2.msra.mxu0 0.0
      %1085 = vmatprep.subr.mxu0 0.0
      %1086 = vmatpush2.msra.mxu0 0.0
      %1087 = vmatprep.subr.mxu0 0.0
      %1088 = vmatpush2.msra.mxu0 0.0
      %1089 = vmatprep.subr.mxu0 0.0
      %1090 = vmatpush2.msra.mxu0 0.0
      %1091 = vmatprep.subr.mxu0 0.0
      %1092 = vmatpush2.msra.mxu0 0.0
      %1093 = vmatprep.subr.mxu0 0.0
      %1094 = vmatpush2.msra.mxu0 0.0
      %1095 = vmatprep.subr.mxu0 0.0
      %1096 = vmatpush2.msra.mxu0 0.0
      %1097 = vmatprep.mubr.f32.mxu0 0.0
      %1098 = vmatmul.mubr.f32.gmra.mxu0 %v1031
      %v1099 = vpop.f32.mrf.mxu0
      %v1100 = vadd.f32 %v1028, %v1099
      %v1101 = vpop.f32.mrf.mxu0
      %1102 = vdwg.mxu0
      %v1103 = vsel %vm361, %v1100, 0.0
      %1104 = vadd.xlane.f32.xlu0 %v1103
      %v1105 = vpop.xlane.xlu0 %1104
      %v1106 = vmul.f32 %v1105, %v372
      %v1107 = vsub.f32 %v1100, %v1106
      %v1108 = vmul.f32 %v1107, %v1107
      %v1109 = vsel %vm361, %v1108, 0.0
      %1110 = vadd.xlane.f32.xlu0 %v1109
      %v1111 = vpop.xlane.xlu0 %1110
      %v1112 = vmul.f32 %v1111, %v372
      %v1113 = vadd.f32 %v1112, 1e-05
      %v1114 = vrsqrt.pop %v1113
      %v1115 = vmul.f32 %v1107, %v1114
      %s1116 = scalar_lea.vmem %s2, 14
      %v1117 = vld [vmem:[%s1116] sm:$0x1]
      %v1119 = vlaneseq
      %v1120 = vshrl.u32 %v1119, 7
      %v1121 = vsub.s32 0, %v1120
      %v1122 = vrot.slane %v1117, %v1121
      %v1124 = vmul.f32 %v1115, %v1122
      %s1125 = scalar_lea.vmem %s2, 15
      %v1126 = vld [vmem:[%s1125] sm:$0x1]
      %v1128 = vlaneseq
      %v1129 = vshrl.u32 %v1128, 7
      %v1130 = vsub.s32 0, %v1129
      %v1131 = vrot.slane %v1126, %v1130
      %v1133 = vadd.f32 %v1124, %v1131
      %v1134 = vsel %vm256, 1, 0
      %vm1135 = vcmp.eq.s32.totalorder %v1134, 1
      %v1136 = vlaneseq
      %v1137 = vshrl.u32 %v1136, 7
      %v1138 = vsub.s32 0, %v1137
      %v1139 = vrot.slane %v421, %v1138
      %v1140 = vsel %vm1135, %v1139, %v1133
      %v1141 = vld [vmem:[%s1] sm:$0xff]
      %v1142 = vld [vmem:[%s1 + $0x8] sm:$0xff]
      %v1143 = vld [vmem:[%s1 + $0x10] sm:$0xff]
      %v1144 = vld [vmem:[%s1 + $0x18] sm:$0xff]
      %v1146 = vsel %vm361, %v421, 0
      %v1149 = vsel %vm361, %v422, 0
      %v1151 = vsel %vm361, %v423, 0
      %1153 = vmatprep.subr.mxu0 0.0
      %1154 = vmatpush1.msra.mxu0 0.0
      %1155 = vmatprep.subr.mxu0 0.0
      %1156 = vmatpush1.msra.mxu0 0.0
      %1157 = vmatprep.subr.mxu0 0.0
      %1158 = vmatpush1.msra.mxu0 0.0
      %1159 = vmatprep.subr.mxu0 0.0
      %1160 = vmatpush1.msra.mxu0 0.0
      %1161 = vmatprep.subr.mxu0 0.0
      %1162 = vmatpush1.msra.mxu0 0.0
      %1163 = vmatprep.subr.mxu0 0.0
      %1164 = vmatpush1.msra.mxu0 0.0
      %1165 = vmatprep.subr.mxu0 0.0
      %1166 = vmatpush1.msra.mxu0 0.0
      %1167 = vmatprep.subr.mxu0 0.0
      %1168 = vmatpush1.msra.mxu0 0.0
      %1169 = vmatprep.subr.mxu0 0.0
      %1170 = vmatpush1.msra.mxu0 0.0
      %1171 = vmatprep.subr.mxu0 0.0
      %1172 = vmatpush1.msra.mxu0 0.0
      %1173 = vmatprep.subr.mxu0 0.0
      %1174 = vmatpush1.msra.mxu0 0.0
      %1175 = vmatprep.subr.mxu0 0.0
      %1176 = vmatpush1.msra.mxu0 0.0
      %1177 = vmatprep.subr.mxu0 0.0
      %1178 = vmatpush1.msra.mxu0 %v1144
      %1179 = vmatprep.subr.mxu0 0.0
      %1180 = vmatpush1.msra.mxu0 %v1143
      %1181 = vmatprep.subr.mxu0 0.0
      %1182 = vmatpush1.msra.mxu0 %v1142
      %1183 = vmatprep.subr.mxu0 0.0
      %1184 = vmatpush1.msra.mxu0 %v1141
      %1185 = vmatprep.subr.mxu0 0.0
      %1186 = vmatpush2.msra.mxu0 0.0
      %1187 = vmatprep.subr.mxu0 0.0
      %1188 = vmatpush2.msra.mxu0 0.0
      %1189 = vmatprep.subr.mxu0 0.0
      %1190 = vmatpush2.msra.mxu0 0.0
      %1191 = vmatprep.subr.mxu0 0.0
      %1192 = vmatpush2.msra.mxu0 0.0
      %1193 = vmatprep.subr.mxu0 0.0
      %1194 = vmatpush2.msra.mxu0 0.0
      %1195 = vmatprep.subr.mxu0 0.0
      %1196 = vmatpush2.msra.mxu0 0.0
      %1197 = vmatprep.subr.mxu0 0.0
      %1198 = vmatpush2.msra.mxu0 0.0
      %1199 = vmatprep.subr.mxu0 0.0
      %1200 = vmatpush2.msra.mxu0 0.0
      %1201 = vmatprep.subr.mxu0 0.0
      %1202 = vmatpush2.msra.mxu0 0.0
      %1203 = vmatprep.subr.mxu0 0.0
      %1204 = vmatpush2.msra.mxu0 0.0
      %1205 = vmatprep.subr.mxu0 0.0
      %1206 = vmatpush2.msra.mxu0 0.0
      %1207 = vmatprep.subr.mxu0 0.0
      %1208 = vmatpush2.msra.mxu0 0.0
      %1209 = vmatprep.subr.mxu0 0.0
      %1210 = vmatpush2.msra.mxu0 0.0
      %1211 = vmatprep.subr.mxu0 0.0
      %1212 = vmatpush2.msra.mxu0 0.0
      %1213 = vmatprep.subr.mxu0 0.0
      %1214 = vmatpush2.msra.mxu0 0.0
      %1215 = vmatprep.subr.mxu0 0.0
      %1216 = vmatpush2.msra.mxu0 0.0
      %1217 = vmatprep.mubr.f32.mxu0 0.0
      %1218 = vmatmul.mubr.f32.gmra.mxu0 %v1146
      %v1219 = vpop.f32.mrf.mxu0
      %v1220 = vadd.f32 0.0, %v1219
      %v1221 = vpop.f32.mrf.mxu0
      %1222 = vmatprep.mubr.f32.mxu0 0.0
      %1223 = vmatmul.mubr.f32.gmra.mxu0 %v1149
      %v1224 = vpop.f32.mrf.mxu0
      %v1225 = vadd.f32 0.0, %v1224
      %v1226 = vpop.f32.mrf.mxu0
      %1227 = vmatprep.mubr.f32.mxu0 0.0
      %1228 = vmatmul.mubr.f32.gmra.mxu0 %v1151
      %v1229 = vpop.f32.mrf.mxu0
      %v1230 = vadd.f32 0.0, %v1229
      %v1231 = vpop.f32.mrf.mxu0
      %1232 = vdwg.mxu0
      %v1233 = vsel %vm361, %v1220, 0.0
      %1234 = vadd.xlane.f32.xlu0 %v1233
      %v1235 = vpop.xlane.xlu0 %1234
      %v1236 = vsel %vm361, %v1225, 0.0
      %1237 = vadd.xlane.f32.xlu0 %v1236
      %v1238 = vpop.xlane.xlu0 %1237
      %v1239 = vsel %vm368, %v1230, 0.0
      %1240 = vadd.xlane.f32.xlu0 %v1239
      %v1241 = vpop.xlane.xlu0 %1240
      %v1242 = vmul.f32 %v1235, %v372
      %v1243 = vmul.f32 %v1238, %v372
      %v1244 = vmul.f32 %v1241, %v372
      %v1245 = vsub.f32 %v1220, %v1242
      %v1246 = vsub.f32 %v1225, %v1243
      %v1247 = vsub.f32 %v1230, %v1244
      %v1248 = vmul.f32 %v1245, %v1245
      %v1249 = vmul.f32 %v1246, %v1246
      %v1250 = vmul.f32 %v1247, %v1247
      %v1251 = vsel %vm361, %v1248, 0.0
      %1252 = vadd.xlane.f32.xlu0 %v1251
      %v1253 = vpop.xlane.xlu0 %1252
      %v1254 = vsel %vm361, %v1249, 0.0
      %1255 = vadd.xlane.f32.xlu0 %v1254
      %v1256 = vpop.xlane.xlu0 %1255
      %v1257 = vsel %vm368, %v1250, 0.0
      %1258 = vadd.xlane.f32.xlu0 %v1257
      %v1259 = vpop.xlane.xlu0 %1258
      %v1260 = vmul.f32 %v1253, %v372
      %v1261 = vmul.f32 %v1256, %v372
      %v1262 = vmul.f32 %v1259, %v372
      %v1263 = vadd.f32 %v1260, 1e-05
      %v1264 = vadd.f32 %v1261, 1e-05
      %v1265 = vadd.f32 %v1262, 1e-05
      %v1266 = vrsqrt.pop %v1263
      %v1267 = vrsqrt.pop %v1264
      %v1268 = vrsqrt.pop %v1265
      %v1269 = vmul.f32 %v1245, %v1266
      %v1270 = vmul.f32 %v1246, %v1267
      %v1271 = vmul.f32 %v1247, %v1268
      %s1272 = scalar_lea.vmem %s2, 8
      %v1273 = vld [vmem:[%s1272] sm:$0x1]
      %v1275 = vlaneseq
      %v1276 = vshrl.u32 %v1275, 7
      %v1277 = vsub.s32 0, %v1276
      %v1278 = vrot.slane %v1273, %v1277
      %v1280 = vmul.f32 %v1269, %v1278
      %v1281 = vmul.f32 %v1270, %v1278
      %v1282 = vmul.f32 %v1271, %v1278
      %s1283 = scalar_lea.vmem %s2, 9
      %v1284 = vld [vmem:[%s1283] sm:$0x1]
      %v1286 = vlaneseq
      %v1287 = vshrl.u32 %v1286, 7
      %v1288 = vsub.s32 0, %v1287
      %v1289 = vrot.slane %v1284, %v1288
      %v1291 = vadd.f32 %v1280, %v1289
      %v1292 = vadd.f32 %v1281, %v1289
      %v1293 = vadd.f32 %v1282, %v1289
      %v1294 = vmul.f32 %v1291, 0.35355338
      %v1295 = vmul.f32 %v1292, 0.35355338
      %v1296 = vmul.f32 %v1293, 0.35355338
      %s1297 = scalar_lea.vmem %s1, 32
      %v1298 = vld [vmem:[%s1297] sm:$0xff]
      %v1299 = vld [vmem:[%s1297 + $0x8] sm:$0xff]
      %v1300 = vld [vmem:[%s1297 + $0x10] sm:$0xff]
      %v1301 = vld [vmem:[%s1297 + $0x18] sm:$0xff]
      %v1303 = vsel %vm361, %v1140, 0
      %1305 = vmatprep.subr.mxu0 0.0
      %1306 = vmatpush1.msra.mxu0 0.0
      %1307 = vmatprep.subr.mxu0 0.0
      %1308 = vmatpush1.msra.mxu0 0.0
      %1309 = vmatprep.subr.mxu0 0.0
      %1310 = vmatpush1.msra.mxu0 0.0
      %1311 = vmatprep.subr.mxu0 0.0
      %1312 = vmatpush1.msra.mxu0 0.0
      %1313 = vmatprep.subr.mxu0 0.0
      %1314 = vmatpush1.msra.mxu0 0.0
      %1315 = vmatprep.subr.mxu0 0.0
      %1316 = vmatpush1.msra.mxu0 0.0
      %1317 = vmatprep.subr.mxu0 0.0
      %1318 = vmatpush1.msra.mxu0 0.0
      %1319 = vmatprep.subr.mxu0 0.0
      %1320 = vmatpush1.msra.mxu0 0.0
      %1321 = vmatprep.subr.mxu0 0.0
      %1322 = vmatpush1.msra.mxu0 0.0
      %1323 = vmatprep.subr.mxu0 0.0
      %1324 = vmatpush1.msra.mxu0 0.0
      %1325 = vmatprep.subr.mxu0 0.0
      %1326 = vmatpush1.msra.mxu0 0.0
      %1327 = vmatprep.subr.mxu0 0.0
      %1328 = vmatpush1.msra.mxu0 0.0
      %1329 = vmatprep.subr.mxu0 0.0
      %1330 = vmatpush1.msra.mxu0 %v1301
      %1331 = vmatprep.subr.mxu0 0.0
      %1332 = vmatpush1.msra.mxu0 %v1300
      %1333 = vmatprep.subr.mxu0 0.0
      %1334 = vmatpush1.msra.mxu0 %v1299
      %1335 = vmatprep.subr.mxu0 0.0
      %1336 = vmatpush1.msra.mxu0 %v1298
      %1337 = vmatprep.subr.mxu0 0.0
      %1338 = vmatpush2.msra.mxu0 0.0
      %1339 = vmatprep.subr.mxu0 0.0
      %1340 = vmatpush2.msra.mxu0 0.0
      %1341 = vmatprep.subr.mxu0 0.0
      %1342 = vmatpush2.msra.mxu0 0.0
      %1343 = vmatprep.subr.mxu0 0.0
      %1344 = vmatpush2.msra.mxu0 0.0
      %1345 = vmatprep.subr.mxu0 0.0
      %1346 = vmatpush2.msra.mxu0 0.0
      %1347 = vmatprep.subr.mxu0 0.0
      %1348 = vmatpush2.msra.mxu0 0.0
      %1349 = vmatprep.subr.mxu0 0.0
      %1350 = vmatpush2.msra.mxu0 0.0
      %1351 = vmatprep.subr.mxu0 0.0
      %1352 = vmatpush2.msra.mxu0 0.0
      %1353 = vmatprep.subr.mxu0 0.0
      %1354 = vmatpush2.msra.mxu0 0.0
      %1355 = vmatprep.subr.mxu0 0.0
      %1356 = vmatpush2.msra.mxu0 0.0
      %1357 = vmatprep.subr.mxu0 0.0
      %1358 = vmatpush2.msra.mxu0 0.0
      %1359 = vmatprep.subr.mxu0 0.0
      %1360 = vmatpush2.msra.mxu0 0.0
      %1361 = vmatprep.subr.mxu0 0.0
      %1362 = vmatpush2.msra.mxu0 0.0
      %1363 = vmatprep.subr.mxu0 0.0
      %1364 = vmatpush2.msra.mxu0 0.0
      %1365 = vmatprep.subr.mxu0 0.0
      %1366 = vmatpush2.msra.mxu0 0.0
      %1367 = vmatprep.subr.mxu0 0.0
      %1368 = vmatpush2.msra.mxu0 0.0
      %1369 = vmatprep.mubr.f32.mxu0 0.0
      %1370 = vmatmul.mubr.f32.gmra.mxu0 %v1303
      %v1371 = vpop.f32.mrf.mxu0
      %v1372 = vadd.f32 0.0, %v1371
      %v1373 = vpop.f32.mrf.mxu0
      %1374 = vdwg.mxu0
      %v1375 = vsel %vm361, %v1372, 0.0
      %1376 = vadd.xlane.f32.xlu0 %v1375
      %v1377 = vpop.xlane.xlu0 %1376
      %v1378 = vmul.f32 %v1377, %v372
      %v1379 = vsub.f32 %v1372, %v1378
      %v1380 = vmul.f32 %v1379, %v1379
      %v1381 = vsel %vm361, %v1380, 0.0
      %1382 = vadd.xlane.f32.xlu0 %v1381
      %v1383 = vpop.xlane.xlu0 %1382
      %v1384 = vmul.f32 %v1383, %v372
      %v1385 = vadd.f32 %v1384, 1e-05
      %v1386 = vrsqrt.pop %v1385
      %v1387 = vmul.f32 %v1379, %v1386
      %s1388 = scalar_lea.vmem %s2, 10
      %v1389 = vld [vmem:[%s1388] sm:$0x1]
      %v1391 = vlaneseq
      %v1392 = vshrl.u32 %v1391, 7
      %v1393 = vsub.s32 0, %v1392
      %v1394 = vrot.slane %v1389, %v1393
      %v1396 = vmul.f32 %v1387, %v1394
      %s1397 = scalar_lea.vmem %s2, 11
      %v1398 = vld [vmem:[%s1397] sm:$0x1]
      %v1400 = vlaneseq
      %v1401 = vshrl.u32 %v1400, 7
      %v1402 = vsub.s32 0, %v1401
      %v1403 = vrot.slane %v1398, %v1402
      %v1405 = vadd.f32 %v1396, %v1403
      %s1406 = scalar_lea.vmem %s1, 64
      %v1407 = vld [vmem:[%s1406] sm:$0xff]
      %v1408 = vld [vmem:[%s1406 + $0x8] sm:$0xff]
      %v1409 = vld [vmem:[%s1406 + $0x10] sm:$0xff]
      %v1410 = vld [vmem:[%s1406 + $0x18] sm:$0xff]
      %1411 = vmatprep.subr.mxu0 0.0
      %1412 = vmatpush1.msra.mxu0 0.0
      %1413 = vmatprep.subr.mxu0 0.0
      %1414 = vmatpush1.msra.mxu0 0.0
      %1415 = vmatprep.subr.mxu0 0.0
      %1416 = vmatpush1.msra.mxu0 0.0
      %1417 = vmatprep.subr.mxu0 0.0
      %1418 = vmatpush1.msra.mxu0 0.0
      %1419 = vmatprep.subr.mxu0 0.0
      %1420 = vmatpush1.msra.mxu0 0.0
      %1421 = vmatprep.subr.mxu0 0.0
      %1422 = vmatpush1.msra.mxu0 0.0
      %1423 = vmatprep.subr.mxu0 0.0
      %1424 = vmatpush1.msra.mxu0 0.0
      %1425 = vmatprep.subr.mxu0 0.0
      %1426 = vmatpush1.msra.mxu0 0.0
      %1427 = vmatprep.subr.mxu0 0.0
      %1428 = vmatpush1.msra.mxu0 0.0
      %1429 = vmatprep.subr.mxu0 0.0
      %1430 = vmatpush1.msra.mxu0 0.0
      %1431 = vmatprep.subr.mxu0 0.0
      %1432 = vmatpush1.msra.mxu0 0.0
      %1433 = vmatprep.subr.mxu0 0.0
      %1434 = vmatpush1.msra.mxu0 0.0
      %1435 = vmatprep.subr.mxu0 0.0
      %1436 = vmatpush1.msra.mxu0 %v1410
      %1437 = vmatprep.subr.mxu0 0.0
      %1438 = vmatpush1.msra.mxu0 %v1409
      %1439 = vmatprep.subr.mxu0 0.0
      %1440 = vmatpush1.msra.mxu0 %v1408
      %1441 = vmatprep.subr.mxu0 0.0
      %1442 = vmatpush1.msra.mxu0 %v1407
      %1443 = vmatprep.subr.mxu0 0.0
      %1444 = vmatpush2.msra.mxu0 0.0
      %1445 = vmatprep.subr.mxu0 0.0
      %1446 = vmatpush2.msra.mxu0 0.0
      %1447 = vmatprep.subr.mxu0 0.0
      %1448 = vmatpush2.msra.mxu0 0.0
      %1449 = vmatprep.subr.mxu0 0.0
      %1450 = vmatpush2.msra.mxu0 0.0
      %1451 = vmatprep.subr.mxu0 0.0
      %1452 = vmatpush2.msra.mxu0 0.0
      %1453 = vmatprep.subr.mxu0 0.0
      %1454 = vmatpush2.msra.mxu0 0.0
      %1455 = vmatprep.subr.mxu0 0.0
      %1456 = vmatpush2.msra.mxu0 0.0
      %1457 = vmatprep.subr.mxu0 0.0
      %1458 = vmatpush2.msra.mxu0 0.0
      %1459 = vmatprep.subr.mxu0 0.0
      %1460 = vmatpush2.msra.mxu0 0.0
      %1461 = vmatprep.subr.mxu0 0.0
      %1462 = vmatpush2.msra.mxu0 0.0
      %1463 = vmatprep.subr.mxu0 0.0
      %1464 = vmatpush2.msra.mxu0 0.0
      %1465 = vmatprep.subr.mxu0 0.0
      %1466 = vmatpush2.msra.mxu0 0.0
      %1467 = vmatprep.subr.mxu0 0.0
      %1468 = vmatpush2.msra.mxu0 0.0
      %1469 = vmatprep.subr.mxu0 0.0
      %1470 = vmatpush2.msra.mxu0 0.0
      %1471 = vmatprep.subr.mxu0 0.0
      %1472 = vmatpush2.msra.mxu0 0.0
      %1473 = vmatprep.subr.mxu0 0.0
      %1474 = vmatpush2.msra.mxu0 0.0
      %1475 = vmatprep.mubr.f32.mxu0 0.0
      %1476 = vmatmul.mubr.f32.gmra.mxu0 %v1303
      %v1477 = vpop.f32.mrf.mxu0
      %v1478 = vadd.f32 0.0, %v1477
      %v1479 = vpop.f32.mrf.mxu0
      %1480 = vdwg.mxu0
      %v1481 = vsel %vm361, %v1478, 0.0
      %1482 = vadd.xlane.f32.xlu0 %v1481
      %v1483 = vpop.xlane.xlu0 %1482
      %v1484 = vmul.f32 %v1483, %v372
      %v1485 = vsub.f32 %v1478, %v1484
      %v1486 = vmul.f32 %v1485, %v1485
      %v1487 = vsel %vm361, %v1486, 0.0
      %1488 = vadd.xlane.f32.xlu0 %v1487
      %v1489 = vpop.xlane.xlu0 %1488
      %v1490 = vmul.f32 %v1489, %v372
      %v1491 = vadd.f32 %v1490, 1e-05
      %v1492 = vrsqrt.pop %v1491
      %v1493 = vmul.f32 %v1485, %v1492
      %s1494 = scalar_lea.vmem %s2, 12
      %v1495 = vld [vmem:[%s1494] sm:$0x1]
      %v1497 = vlaneseq
      %v1498 = vshrl.u32 %v1497, 7
      %v1499 = vsub.s32 0, %v1498
      %v1500 = vrot.slane %v1495, %v1499
      %v1502 = vmul.f32 %v1493, %v1500
      %s1503 = scalar_lea.vmem %s2, 13
      %v1504 = vld [vmem:[%s1503] sm:$0x1]
      %v1506 = vlaneseq
      %v1507 = vshrl.u32 %v1506, 7
      %v1508 = vsub.s32 0, %v1507
      %v1509 = vrot.slane %v1504, %v1508
      %v1511 = vadd.f32 %v1502, %v1509
      %v1512 = vmul.f32 %v1294, %v342
      %v1513 = vmul.f32 %v1295, %v342
      %v1514 = vmul.f32 %v1296, %v342
      %v1516 = vsel %vm361, %v1512, 0
      %v1519 = vsel %vm361, %v1513, 0
      %v1522 = vsel %vm361, %v1514, 0
      %v1525 = vsel %vm361, %v1405, 0
      %1527 = vmatprep.subr.mxu0 0.0
      %1528 = vmatpush1.xpose.msra.mxu0 0.0
      %1529 = vmatprep.subr.mxu0 0.0
      %1530 = vmatpush1.xpose.msra.mxu0 0.0
      %1531 = vmatprep.subr.mxu0 0.0
      %1532 = vmatpush1.xpose.msra.mxu0 0.0
      %1533 = vmatprep.subr.mxu0 0.0
      %1534 = vmatpush1.xpose.msra.mxu0 0.0
      %1535 = vmatprep.subr.mxu0 0.0
      %1536 = vmatpush1.xpose.msra.mxu0 0.0
      %1537 = vmatprep.subr.mxu0 0.0
      %1538 = vmatpush1.xpose.msra.mxu0 0.0
      %1539 = vmatprep.subr.mxu0 0.0
      %1540 = vmatpush1.xpose.msra.mxu0 0.0
      %1541 = vmatprep.subr.mxu0 0.0
      %1542 = vmatpush1.xpose.msra.mxu0 0.0
      %1543 = vmatprep.subr.mxu0 0.0
      %1544 = vmatpush1.xpose.msra.mxu0 0.0
      %1545 = vmatprep.subr.mxu0 0.0
      %1546 = vmatpush1.xpose.msra.mxu0 0.0
      %1547 = vmatprep.subr.mxu0 0.0
      %1548 = vmatpush1.xpose.msra.mxu0 0.0
      %1549 = vmatprep.subr.mxu0 0.0
      %1550 = vmatpush1.xpose.msra.mxu0 0.0
      %1551 = vmatprep.subr.mxu0 0.0
      %1552 = vmatpush1.xpose.msra.mxu0 0.0
      %1553 = vmatprep.subr.mxu0 0.0
      %1554 = vmatpush1.xpose.msra.mxu0 0.0
      %1555 = vmatprep.subr.mxu0 0.0
      %1556 = vmatpush1.xpose.msra.mxu0 0.0
      %1557 = vmatprep.subr.mxu0 0.0
      %1558 = vmatpush1.xpose.msra.mxu0 %v1525
      %1559 = vmatprep.subr.mxu0 0.0
      %1560 = vmatpush2.xpose.msra.mxu0 0.0
      %1561 = vmatprep.subr.mxu0 0.0
      %1562 = vmatpush2.xpose.msra.mxu0 0.0
      %1563 = vmatprep.subr.mxu0 0.0
      %1564 = vmatpush2.xpose.msra.mxu0 0.0
      %1565 = vmatprep.subr.mxu0 0.0
      %1566 = vmatpush2.xpose.msra.mxu0 0.0
      %1567 = vmatprep.subr.mxu0 0.0
      %1568 = vmatpush2.xpose.msra.mxu0 0.0
      %1569 = vmatprep.subr.mxu0 0.0
      %1570 = vmatpush2.xpose.msra.mxu0 0.0
      %1571 = vmatprep.subr.mxu0 0.0
      %1572 = vmatpush2.xpose.msra.mxu0 0.0
      %1573 = vmatprep.subr.mxu0 0.0
      %1574 = vmatpush2.xpose.msra.mxu0 0.0
      %1575 = vmatprep.subr.mxu0 0.0
      %1576 = vmatpush2.xpose.msra.mxu0 0.0
      %1577 = vmatprep.subr.mxu0 0.0
      %1578 = vmatpush2.xpose.msra.mxu0 0.0
      %1579 = vmatprep.subr.mxu0 0.0
      %1580 = vmatpush2.xpose.msra.mxu0 0.0
      %1581 = vmatprep.subr.mxu0 0.0
      %1582 = vmatpush2.xpose.msra.mxu0 0.0
      %1583 = vmatprep.subr.mxu0 0.0
      %1584 = vmatpush2.xpose.msra.mxu0 0.0
      %1585 = vmatprep.subr.mxu0 0.0
      %1586 = vmatpush2.xpose.msra.mxu0 0.0
      %1587 = vmatprep.subr.mxu0 0.0
      %1588 = vmatpush2.xpose.msra.mxu0 0.0
      %1589 = vmatprep.subr.mxu0 0.0
      %1590 = vmatpush2.xpose.msra.mxu0 0.0
      %1591 = vmatprep.mubr.f32.mxu0 0.0
      %1592 = vmatmul.mubr.f32.gmra.mxu0 %v1516
      %v1593 = vpop.f32.mrf.mxu0
      %v1594 = vadd.f32 %v337, %v1593
      %v1595 = vpop.f32.mrf.mxu0
      %1596 = vmatprep.mubr.f32.mxu0 0.0
      %1597 = vmatmul.mubr.f32.gmra.mxu0 %v1519
      %v1598 = vpop.f32.mrf.mxu0
      %v1599 = vadd.f32 %v337, %v1598
      %v1600 = vpop.f32.mrf.mxu0
      %1601 = vmatprep.mubr.f32.mxu0 0.0
      %1602 = vmatmul.mubr.f32.gmra.mxu0 %v1522
      %v1603 = vpop.f32.mrf.mxu0
      %v1604 = vadd.f32 %v337, %v1603
      %v1605 = vpop.f32.mrf.mxu0
      %1606 = vdwg.mxu0
      %vm1607 = vcmask 64512
      %v1608 = vsel %vm1607, %v1594, -inf
      %1609 = vmax.xlane.f32.xlu0 %v1608
      %v1610 = vpop.xlane.xlu0 %1609
      %v1611 = vsel %vm1607, %v1599, -inf
      %1612 = vmax.xlane.f32.xlu0 %v1611
      %v1613 = vpop.xlane.xlu0 %1612
      %vm1614 = vcmask 57344
      %v1615 = vsel %vm1614, %v1604, -inf
      %1616 = vmax.xlane.f32.xlu0 %v1615
      %v1617 = vpop.xlane.xlu0 %1616
      %v1618 = vsub.f32 %v1594, %v1610
      %v1619 = vsub.f32 %v1599, %v1613
      %v1620 = vsub.f32 %v1604, %v1617
      %v1621 = vmul.f32 %v1618, 1.442695
      %v1622 = vpow.pop %v1621
      %v1623 = vmul.f32 %v1619, 1.442695
      %v1624 = vpow.pop %v1623
      %v1625 = vmul.f32 %v1620, 1.442695
      %v1626 = vpow.pop %v1625
      %v1627 = vsel %vm1607, %v1622, 0.0
      %1628 = vadd.xlane.f32.xlu0 %v1627
      %v1629 = vpop.xlane.xlu0 %1628
      %v1630 = vsel %vm1607, %v1624, 0.0
      %1631 = vadd.xlane.f32.xlu0 %v1630
      %v1632 = vpop.xlane.xlu0 %1631
      %v1633 = vsel %vm1614, %v1626, 0.0
      %1634 = vadd.xlane.f32.xlu0 %v1633
      %v1635 = vpop.xlane.xlu0 %1634
      %v1636 = vrcp.pop %v1629
      %v1637 = vmul.f32 %v1622, %v1636
      %v1638 = vrcp.pop %v1632
      %v1639 = vmul.f32 %v1624, %v1638
      %v1640 = vrcp.pop %v1635
      %v1641 = vmul.f32 %v1626, %v1640
      %v1642 = vmul.f32 %v1511, %v342
      %v1643 = vmul.f32 %v1294, %v347
      %v1644 = vmul.f32 %v1295, %v347
      %v1645 = vmul.f32 %v1296, %v347
      %v1647 = vsel %vm361, %v1643, 0
      %v1650 = vsel %vm361, %v1644, 0
      %v1653 = vsel %vm361, %v1645, 0
      %1655 = vmatprep.subr.mxu0 0.0
      %1656 = vmatpush1.xpose.msra.mxu0 0.0
      %1657 = vmatprep.subr.mxu0 0.0
      %1658 = vmatpush1.xpose.msra.mxu0 0.0
      %1659 = vmatprep.subr.mxu0 0.0
      %1660 = vmatpush1.xpose.msra.mxu0 0.0
      %1661 = vmatprep.subr.mxu0 0.0
      %1662 = vmatpush1.xpose.msra.mxu0 0.0
      %1663 = vmatprep.subr.mxu0 0.0
      %1664 = vmatpush1.xpose.msra.mxu0 0.0
      %1665 = vmatprep.subr.mxu0 0.0
      %1666 = vmatpush1.xpose.msra.mxu0 0.0
      %1667 = vmatprep.subr.mxu0 0.0
      %1668 = vmatpush1.xpose.msra.mxu0 0.0
      %1669 = vmatprep.subr.mxu0 0.0
      %1670 = vmatpush1.xpose.msra.mxu0 0.0
      %1671 = vmatprep.subr.mxu0 0.0
      %1672 = vmatpush1.xpose.msra.mxu0 0.0
      %1673 = vmatprep.subr.mxu0 0.0
      %1674 = vmatpush1.xpose.msra.mxu0 0.0
      %1675 = vmatprep.subr.mxu0 0.0
      %1676 = vmatpush1.xpose.msra.mxu0 0.0
      %1677 = vmatprep.subr.mxu0 0.0
      %1678 = vmatpush1.xpose.msra.mxu0 0.0
      %1679 = vmatprep.subr.mxu0 0.0
      %1680 = vmatpush1.xpose.msra.mxu0 0.0
      %1681 = vmatprep.subr.mxu0 0.0
      %1682 = vmatpush1.xpose.msra.mxu0 0.0
      %1683 = vmatprep.subr.mxu0 0.0
      %1684 = vmatpush1.xpose.msra.mxu0 0.0
      %1685 = vmatprep.subr.mxu0 0.0
      %1686 = vmatpush1.xpose.msra.mxu0 %v1525
      %1687 = vmatprep.subr.mxu0 0.0
      %1688 = vmatpush2.xpose.msra.mxu0 0.0
      %1689 = vmatprep.subr.mxu0 0.0
      %1690 = vmatpush2.xpose.msra.mxu0 0.0
      %1691 = vmatprep.subr.mxu0 0.0
      %1692 = vmatpush2.xpose.msra.mxu0 0.0
      %1693 = vmatprep.subr.mxu0 0.0
      %1694 = vmatpush2.xpose.msra.mxu0 0.0
      %1695 = vmatprep.subr.mxu0 0.0
      %1696 = vmatpush2.xpose.msra.mxu0 0.0
      %1697 = vmatprep.subr.mxu0 0.0
      %1698 = vmatpush2.xpose.msra.mxu0 0.0
      %1699 = vmatprep.subr.mxu0 0.0
      %1700 = vmatpush2.xpose.msra.mxu0 0.0
      %1701 = vmatprep.subr.mxu0 0.0
      %1702 = vmatpush2.xpose.msra.mxu0 0.0
      %1703 = vmatprep.subr.mxu0 0.0
      %1704 = vmatpush2.xpose.msra.mxu0 0.0
      %1705 = vmatprep.subr.mxu0 0.0
      %1706 = vmatpush2.xpose.msra.mxu0 0.0
      %1707 = vmatprep.subr.mxu0 0.0
      %1708 = vmatpush2.xpose.msra.mxu0 0.0
      %1709 = vmatprep.subr.mxu0 0.0
      %1710 = vmatpush2.xpose.msra.mxu0 0.0
      %1711 = vmatprep.subr.mxu0 0.0
      %1712 = vmatpush2.xpose.msra.mxu0 0.0
      %1713 = vmatprep.subr.mxu0 0.0
      %1714 = vmatpush2.xpose.msra.mxu0 0.0
      %1715 = vmatprep.subr.mxu0 0.0
      %1716 = vmatpush2.xpose.msra.mxu0 0.0
      %1717 = vmatprep.subr.mxu0 0.0
      %1718 = vmatpush2.xpose.msra.mxu0 0.0
      %1719 = vmatprep.mubr.f32.mxu0 0.0
      %1720 = vmatmul.mubr.f32.gmra.mxu0 %v1647
      %v1721 = vpop.f32.mrf.mxu0
      %v1722 = vadd.f32 %v337, %v1721
      %v1723 = vpop.f32.mrf.mxu0
      %1724 = vmatprep.mubr.f32.mxu0 0.0
      %1725 = vmatmul.mubr.f32.gmra.mxu0 %v1650
      %v1726 = vpop.f32.mrf.mxu0
      %v1727 = vadd.f32 %v337, %v1726
      %v1728 = vpop.f32.mrf.mxu0
      %1729 = vmatprep.mubr.f32.mxu0 0.0
      %1730 = vmatmul.mubr.f32.gmra.mxu0 %v1653
      %v1731 = vpop.f32.mrf.mxu0
      %v1732 = vadd.f32 %v337, %v1731
      %v1733 = vpop.f32.mrf.mxu0
      %1734 = vdwg.mxu0
      %v1735 = vsel %vm1607, %v1722, -inf
      %1736 = vmax.xlane.f32.xlu0 %v1735
      %v1737 = vpop.xlane.xlu0 %1736
      %v1738 = vsel %vm1607, %v1727, -inf
      %1739 = vmax.xlane.f32.xlu0 %v1738
      %v1740 = vpop.xlane.xlu0 %1739
      %v1741 = vsel %vm1614, %v1732, -inf
      %1742 = vmax.xlane.f32.xlu0 %v1741
      %v1743 = vpop.xlane.xlu0 %1742
      %v1744 = vsub.f32 %v1722, %v1737
      %v1745 = vsub.f32 %v1727, %v1740
      %v1746 = vsub.f32 %v1732, %v1743
      %v1747 = vmul.f32 %v1744, 1.442695
      %v1748 = vpow.pop %v1747
      %v1749 = vmul.f32 %v1745, 1.442695
      %v1750 = vpow.pop %v1749
      %v1751 = vmul.f32 %v1746, 1.442695
      %v1752 = vpow.pop %v1751
      %v1753 = vsel %vm1607, %v1748, 0.0
      %1754 = vadd.xlane.f32.xlu0 %v1753
      %v1755 = vpop.xlane.xlu0 %1754
      %v1756 = vsel %vm1607, %v1750, 0.0
      %1757 = vadd.xlane.f32.xlu0 %v1756
      %v1758 = vpop.xlane.xlu0 %1757
      %v1759 = vsel %vm1614, %v1752, 0.0
      %1760 = vadd.xlane.f32.xlu0 %v1759
      %v1761 = vpop.xlane.xlu0 %1760
      %v1762 = vrcp.pop %v1755
      %v1763 = vmul.f32 %v1748, %v1762
      %v1764 = vrcp.pop %v1758
      %v1765 = vmul.f32 %v1750, %v1764
      %v1766 = vrcp.pop %v1761
      %v1767 = vmul.f32 %v1752, %v1766
      %v1768 = vmul.f32 %v1511, %v347
      %v1770 = vsel %vm1607, %v1763, 0
      %v1773 = vsel %vm1607, %v1765, 0
      %v1776 = vsel %vm1607, %v1767, 0
      %1778 = vmatprep.subr.mxu0 0.0
      %1779 = vmatpush1.msra.mxu0 0.0
      %1780 = vmatprep.subr.mxu0 0.0
      %1781 = vmatpush1.msra.mxu0 0.0
      %1782 = vmatprep.subr.mxu0 0.0
      %1783 = vmatpush1.msra.mxu0 0.0
      %1784 = vmatprep.subr.mxu0 0.0
      %1785 = vmatpush1.msra.mxu0 0.0
      %1786 = vmatprep.subr.mxu0 0.0
      %1787 = vmatpush1.msra.mxu0 0.0
      %1788 = vmatprep.subr.mxu0 0.0
      %1789 = vmatpush1.msra.mxu0 0.0
      %1790 = vmatprep.subr.mxu0 0.0
      %1791 = vmatpush1.msra.mxu0 0.0
      %1792 = vmatprep.subr.mxu0 0.0
      %1793 = vmatpush1.msra.mxu0 0.0
      %1794 = vmatprep.subr.mxu0 0.0
      %1795 = vmatpush1.msra.mxu0 0.0
      %1796 = vmatprep.subr.mxu0 0.0
      %1797 = vmatpush1.msra.mxu0 0.0
      %1798 = vmatprep.subr.mxu0 0.0
      %1799 = vmatpush1.msra.mxu0 0.0
      %1800 = vmatprep.subr.mxu0 0.0
      %1801 = vmatpush1.msra.mxu0 0.0
      %1802 = vmatprep.subr.mxu0 0.0
      %1803 = vmatpush1.msra.mxu0 0.0
      %1804 = vmatprep.subr.mxu0 0.0
      %1805 = vmatpush1.msra.mxu0 0.0
      %1806 = vmatprep.subr.mxu0 0.0
      %1807 = vmatpush1.msra.mxu0 0.0
      %1808 = vmatprep.subr.mxu0 0.0
      %1809 = vmatpush1.msra.mxu0 %v1768
      %1810 = vmatprep.subr.mxu0 0.0
      %1811 = vmatpush2.msra.mxu0 0.0
      %1812 = vmatprep.subr.mxu0 0.0
      %1813 = vmatpush2.msra.mxu0 0.0
      %1814 = vmatprep.subr.mxu0 0.0
      %1815 = vmatpush2.msra.mxu0 0.0
      %1816 = vmatprep.subr.mxu0 0.0
      %1817 = vmatpush2.msra.mxu0 0.0
      %1818 = vmatprep.subr.mxu0 0.0
      %1819 = vmatpush2.msra.mxu0 0.0
      %1820 = vmatprep.subr.mxu0 0.0
      %1821 = vmatpush2.msra.mxu0 0.0
      %1822 = vmatprep.subr.mxu0 0.0
      %1823 = vmatpush2.msra.mxu0 0.0
      %1824 = vmatprep.subr.mxu0 0.0
      %1825 = vmatpush2.msra.mxu0 0.0
      %1826 = vmatprep.subr.mxu0 0.0
      %1827 = vmatpush2.msra.mxu0 0.0
      %1828 = vmatprep.subr.mxu0 0.0
      %1829 = vmatpush2.msra.mxu0 0.0
      %1830 = vmatprep.subr.mxu0 0.0
      %1831 = vmatpush2.msra.mxu0 0.0
      %1832 = vmatprep.subr.mxu0 0.0
      %1833 = vmatpush2.msra.mxu0 0.0
      %1834 = vmatprep.subr.mxu0 0.0
      %1835 = vmatpush2.msra.mxu0 0.0
      %1836 = vmatprep.subr.mxu0 0.0
      %1837 = vmatpush2.msra.mxu0 0.0
      %1838 = vmatprep.subr.mxu0 0.0
      %1839 = vmatpush2.msra.mxu0 0.0
      %1840 = vmatprep.subr.mxu0 0.0
      %1841 = vmatpush2.msra.mxu0 0.0
      %1842 = vmatprep.mubr.f32.mxu0 0.0
      %1843 = vmatmul.mubr.f32.gmra.mxu0 %v1770
      %v1844 = vpop.f32.mrf.mxu0
      %v1845 = vadd.f32 0.0, %v1844
      %v1846 = vpop.f32.mrf.mxu0
      %1847 = vmatprep.mubr.f32.mxu0 0.0
      %1848 = vmatmul.mubr.f32.gmra.mxu0 %v1773
      %v1849 = vpop.f32.mrf.mxu0
      %v1850 = vadd.f32 0.0, %v1849
      %v1851 = vpop.f32.mrf.mxu0
      %1852 = vmatprep.mubr.f32.mxu0 0.0
      %1853 = vmatmul.mubr.f32.gmra.mxu0 %v1776
      %v1854 = vpop.f32.mrf.mxu0
      %v1855 = vadd.f32 0.0, %v1854
      %v1856 = vpop.f32.mrf.mxu0
      %1857 = vdwg.mxu0
      %v1859 = vsel %vm1607, %v1637, 0
      %v1862 = vsel %vm1607, %v1639, 0
      %v1865 = vsel %vm1607, %v1641, 0
      %1867 = vmatprep.subr.mxu0 0.0
      %1868 = vmatpush1.msra.mxu0 0.0
      %1869 = vmatprep.subr.mxu0 0.0
      %1870 = vmatpush1.msra.mxu0 0.0
      %1871 = vmatprep.subr.mxu0 0.0
      %1872 = vmatpush1.msra.mxu0 0.0
      %1873 = vmatprep.subr.mxu0 0.0
      %1874 = vmatpush1.msra.mxu0 0.0
      %1875 = vmatprep.subr.mxu0 0.0
      %1876 = vmatpush1.msra.mxu0 0.0
      %1877 = vmatprep.subr.mxu0 0.0
      %1878 = vmatpush1.msra.mxu0 0.0
      %1879 = vmatprep.subr.mxu0 0.0
      %1880 = vmatpush1.msra.mxu0 0.0
      %1881 = vmatprep.subr.mxu0 0.0
      %1882 = vmatpush1.msra.mxu0 0.0
      %1883 = vmatprep.subr.mxu0 0.0
      %1884 = vmatpush1.msra.mxu0 0.0
      %1885 = vmatprep.subr.mxu0 0.0
      %1886 = vmatpush1.msra.mxu0 0.0
      %1887 = vmatprep.subr.mxu0 0.0
      %1888 = vmatpush1.msra.mxu0 0.0
      %1889 = vmatprep.subr.mxu0 0.0
      %1890 = vmatpush1.msra.mxu0 0.0
      %1891 = vmatprep.subr.mxu0 0.0
      %1892 = vmatpush1.msra.mxu0 0.0
      %1893 = vmatprep.subr.mxu0 0.0
      %1894 = vmatpush1.msra.mxu0 0.0
      %1895 = vmatprep.subr.mxu0 0.0
      %1896 = vmatpush1.msra.mxu0 0.0
      %1897 = vmatprep.subr.mxu0 0.0
      %1898 = vmatpush1.msra.mxu0 %v1642
      %1899 = vmatprep.subr.mxu0 0.0
      %1900 = vmatpush2.msra.mxu0 0.0
      %1901 = vmatprep.subr.mxu0 0.0
      %1902 = vmatpush2.msra.mxu0 0.0
      %1903 = vmatprep.subr.mxu0 0.0
      %1904 = vmatpush2.msra.mxu0 0.0
      %1905 = vmatprep.subr.mxu0 0.0
      %1906 = vmatpush2.msra.mxu0 0.0
      %1907 = vmatprep.subr.mxu0 0.0
      %1908 = vmatpush2.msra.mxu0 0.0
      %1909 = vmatprep.subr.mxu0 0.0
      %1910 = vmatpush2.msra.mxu0 0.0
      %1911 = vmatprep.subr.mxu0 0.0
      %1912 = vmatpush2.msra.mxu0 0.0
      %1913 = vmatprep.subr.mxu0 0.0
      %1914 = vmatpush2.msra.mxu0 0.0
      %1915 = vmatprep.subr.mxu0 0.0
      %1916 = vmatpush2.msra.mxu0 0.0
      %1917 = vmatprep.subr.mxu0 0.0
      %1918 = vmatpush2.msra.mxu0 0.0
      %1919 = vmatprep.subr.mxu0 0.0
      %1920 = vmatpush2.msra.mxu0 0.0
      %1921 = vmatprep.subr.mxu0 0.0
      %1922 = vmatpush2.msra.mxu0 0.0
      %1923 = vmatprep.subr.mxu0 0.0
      %1924 = vmatpush2.msra.mxu0 0.0
      %1925 = vmatprep.subr.mxu0 0.0
      %1926 = vmatpush2.msra.mxu0 0.0
      %1927 = vmatprep.subr.mxu0 0.0
      %1928 = vmatpush2.msra.mxu0 0.0
      %1929 = vmatprep.subr.mxu0 0.0
      %1930 = vmatpush2.msra.mxu0 0.0
      %1931 = vmatprep.mubr.f32.mxu0 0.0
      %1932 = vmatmul.mubr.f32.gmra.mxu0 %v1859
      %v1933 = vpop.f32.mrf.mxu0
      %v1934 = vadd.f32 %v1845, %v1933
      %v1935 = vpop.f32.mrf.mxu0
      %1936 = vmatprep.mubr.f32.mxu0 0.0
      %1937 = vmatmul.mubr.f32.gmra.mxu0 %v1862
      %v1938 = vpop.f32.mrf.mxu0
      %v1939 = vadd.f32 %v1850, %v1938
      %v1940 = vpop.f32.mrf.mxu0
      %1941 = vmatprep.mubr.f32.mxu0 0.0
      %1942 = vmatmul.mubr.f32.gmra.mxu0 %v1865
      %v1943 = vpop.f32.mrf.mxu0
      %v1944 = vadd.f32 %v1855, %v1943
      %v1945 = vpop.f32.mrf.mxu0
      %1946 = vdwg.mxu0
      %v1947 = vmul.f32 %v1294, %v352
      %v1948 = vmul.f32 %v1295, %v352
      %v1949 = vmul.f32 %v1296, %v352
      %v1951 = vsel %vm361, %v1947, 0
      %v1954 = vsel %vm361, %v1948, 0
      %v1957 = vsel %vm361, %v1949, 0
      %1959 = vmatprep.subr.mxu0 0.0
      %1960 = vmatpush1.xpose.msra.mxu0 0.0
      %1961 = vmatprep.subr.mxu0 0.0
      %1962 = vmatpush1.xpose.msra.mxu0 0.0
      %1963 = vmatprep.subr.mxu0 0.0
      %1964 = vmatpush1.xpose.msra.mxu0 0.0
      %1965 = vmatprep.subr.mxu0 0.0
      %1966 = vmatpush1.xpose.msra.mxu0 0.0
      %1967 = vmatprep.subr.mxu0 0.0
      %1968 = vmatpush1.xpose.msra.mxu0 0.0
      %1969 = vmatprep.subr.mxu0 0.0
      %1970 = vmatpush1.xpose.msra.mxu0 0.0
      %1971 = vmatprep.subr.mxu0 0.0
      %1972 = vmatpush1.xpose.msra.mxu0 0.0
      %1973 = vmatprep.subr.mxu0 0.0
      %1974 = vmatpush1.xpose.msra.mxu0 0.0
      %1975 = vmatprep.subr.mxu0 0.0
      %1976 = vmatpush1.xpose.msra.mxu0 0.0
      %1977 = vmatprep.subr.mxu0 0.0
      %1978 = vmatpush1.xpose.msra.mxu0 0.0
      %1979 = vmatprep.subr.mxu0 0.0
      %1980 = vmatpush1.xpose.msra.mxu0 0.0
      %1981 = vmatprep.subr.mxu0 0.0
      %1982 = vmatpush1.xpose.msra.mxu0 0.0
      %1983 = vmatprep.subr.mxu0 0.0
      %1984 = vmatpush1.xpose.msra.mxu0 0.0
      %1985 = vmatprep.subr.mxu0 0.0
      %1986 = vmatpush1.xpose.msra.mxu0 0.0
      %1987 = vmatprep.subr.mxu0 0.0
      %1988 = vmatpush1.xpose.msra.mxu0 0.0
      %1989 = vmatprep.subr.mxu0 0.0
      %1990 = vmatpush1.xpose.msra.mxu0 %v1525
      %1991 = vmatprep.subr.mxu0 0.0
      %1992 = vmatpush2.xpose.msra.mxu0 0.0
      %1993 = vmatprep.subr.mxu0 0.0
      %1994 = vmatpush2.xpose.msra.mxu0 0.0
      %1995 = vmatprep.subr.mxu0 0.0
      %1996 = vmatpush2.xpose.msra.mxu0 0.0
      %1997 = vmatprep.subr.mxu0 0.0
      %1998 = vmatpush2.xpose.msra.mxu0 0.0
      %1999 = vmatprep.subr.mxu0 0.0
      %2000 = vmatpush2.xpose.msra.mxu0 0.0
      %2001 = vmatprep.subr.mxu0 0.0
      %2002 = vmatpush2.xpose.msra.mxu0 0.0
      %2003 = vmatprep.subr.mxu0 0.0
      %2004 = vmatpush2.xpose.msra.mxu0 0.0
      %2005 = vmatprep.subr.mxu0 0.0
      %2006 = vmatpush2.xpose.msra.mxu0 0.0
      %2007 = vmatprep.subr.mxu0 0.0
      %2008 = vmatpush2.xpose.msra.mxu0 0.0
      %2009 = vmatprep.subr.mxu0 0.0
      %2010 = vmatpush2.xpose.msra.mxu0 0.0
      %2011 = vmatprep.subr.mxu0 0.0
      %2012 = vmatpush2.xpose.msra.mxu0 0.0
      %2013 = vmatprep.subr.mxu0 0.0
      %2014 = vmatpush2.xpose.msra.mxu0 0.0
      %2015 = vmatprep.subr.mxu0 0.0
      %2016 = vmatpush2.xpose.msra.mxu0 0.0
      %2017 = vmatprep.subr.mxu0 0.0
      %2018 = vmatpush2.xpose.msra.mxu0 0.0
      %2019 = vmatprep.subr.mxu0 0.0
      %2020 = vmatpush2.xpose.msra.mxu0 0.0
      %2021 = vmatprep.subr.mxu0 0.0
      %2022 = vmatpush2.xpose.msra.mxu0 0.0
      %2023 = vmatprep.mubr.f32.mxu0 0.0
      %2024 = vmatmul.mubr.f32.gmra.mxu0 %v1951
      %v2025 = vpop.f32.mrf.mxu0
      %v2026 = vadd.f32 %v337, %v2025
      %v2027 = vpop.f32.mrf.mxu0
      %2028 = vmatprep.mubr.f32.mxu0 0.0
      %2029 = vmatmul.mubr.f32.gmra.mxu0 %v1954
      %v2030 = vpop.f32.mrf.mxu0
      %v2031 = vadd.f32 %v337, %v2030
      %v2032 = vpop.f32.mrf.mxu0
      %2033 = vmatprep.mubr.f32.mxu0 0.0
      %2034 = vmatmul.mubr.f32.gmra.mxu0 %v1957
      %v2035 = vpop.f32.mrf.mxu0
      %v2036 = vadd.f32 %v337, %v2035
      %v2037 = vpop.f32.mrf.mxu0
      %2038 = vdwg.mxu0
      %v2039 = vsel %vm1607, %v2026, -inf
      %2040 = vmax.xlane.f32.xlu0 %v2039
      %v2041 = vpop.xlane.xlu0 %2040
      %v2042 = vsel %vm1607, %v2031, -inf
      %2043 = vmax.xlane.f32.xlu0 %v2042
      %v2044 = vpop.xlane.xlu0 %2043
      %v2045 = vsel %vm1614, %v2036, -inf
      %2046 = vmax.xlane.f32.xlu0 %v2045
      %v2047 = vpop.xlane.xlu0 %2046
      %v2048 = vsub.f32 %v2026, %v2041
      %v2049 = vsub.f32 %v2031, %v2044
      %v2050 = vsub.f32 %v2036, %v2047
      %v2051 = vmul.f32 %v2048, 1.442695
      %v2052 = vpow.pop %v2051
      %v2053 = vmul.f32 %v2049, 1.442695
      %v2054 = vpow.pop %v2053
      %v2055 = vmul.f32 %v2050, 1.442695
      %v2056 = vpow.pop %v2055
      %v2057 = vsel %vm1607, %v2052, 0.0
      %2058 = vadd.xlane.f32.xlu0 %v2057
      %v2059 = vpop.xlane.xlu0 %2058
      %v2060 = vsel %vm1607, %v2054, 0.0
      %2061 = vadd.xlane.f32.xlu0 %v2060
      %v2062 = vpop.xlane.xlu0 %2061
      %v2063 = vsel %vm1614, %v2056, 0.0
      %2064 = vadd.xlane.f32.xlu0 %v2063
      %v2065 = vpop.xlane.xlu0 %2064
      %v2066 = vrcp.pop %v2059
      %v2067 = vmul.f32 %v2052, %v2066
      %v2068 = vrcp.pop %v2062
      %v2069 = vmul.f32 %v2054, %v2068
      %v2070 = vrcp.pop %v2065
      %v2071 = vmul.f32 %v2056, %v2070
      %v2072 = vmul.f32 %v1511, %v352
      %v2074 = vsel %vm1607, %v2067, 0
      %v2077 = vsel %vm1607, %v2069, 0
      %v2080 = vsel %vm1607, %v2071, 0
      %2082 = vmatprep.subr.mxu0 0.0
      %2083 = vmatpush1.msra.mxu0 0.0
      %2084 = vmatprep.subr.mxu0 0.0
      %2085 = vmatpush1.msra.mxu0 0.0
      %2086 = vmatprep.subr.mxu0 0.0
      %2087 = vmatpush1.msra.mxu0 0.0
      %2088 = vmatprep.subr.mxu0 0.0
      %2089 = vmatpush1.msra.mxu0 0.0
      %2090 = vmatprep.subr.mxu0 0.0
      %2091 = vmatpush1.msra.mxu0 0.0
      %2092 = vmatprep.subr.mxu0 0.0
      %2093 = vmatpush1.msra.mxu0 0.0
      %2094 = vmatprep.subr.mxu0 0.0
      %2095 = vmatpush1.msra.mxu0 0.0
      %2096 = vmatprep.subr.mxu0 0.0
      %2097 = vmatpush1.msra.mxu0 0.0
      %2098 = vmatprep.subr.mxu0 0.0
      %2099 = vmatpush1.msra.mxu0 0.0
      %2100 = vmatprep.subr.mxu0 0.0
      %2101 = vmatpush1.msra.mxu0 0.0
      %2102 = vmatprep.subr.mxu0 0.0
      %2103 = vmatpush1.msra.mxu0 0.0
      %2104 = vmatprep.subr.mxu0 0.0
      %2105 = vmatpush1.msra.mxu0 0.0
      %2106 = vmatprep.subr.mxu0 0.0
      %2107 = vmatpush1.msra.mxu0 0.0
      %2108 = vmatprep.subr.mxu0 0.0
      %2109 = vmatpush1.msra.mxu0 0.0
      %2110 = vmatprep.subr.mxu0 0.0
      %2111 = vmatpush1.msra.mxu0 0.0
      %2112 = vmatprep.subr.mxu0 0.0
      %2113 = vmatpush1.msra.mxu0 %v2072
      %2114 = vmatprep.subr.mxu0 0.0
      %2115 = vmatpush2.msra.mxu0 0.0
      %2116 = vmatprep.subr.mxu0 0.0
      %2117 = vmatpush2.msra.mxu0 0.0
      %2118 = vmatprep.subr.mxu0 0.0
      %2119 = vmatpush2.msra.mxu0 0.0
      %2120 = vmatprep.subr.mxu0 0.0
      %2121 = vmatpush2.msra.mxu0 0.0
      %2122 = vmatprep.subr.mxu0 0.0
      %2123 = vmatpush2.msra.mxu0 0.0
      %2124 = vmatprep.subr.mxu0 0.0
      %2125 = vmatpush2.msra.mxu0 0.0
      %2126 = vmatprep.subr.mxu0 0.0
      %2127 = vmatpush2.msra.mxu0 0.0
      %2128 = vmatprep.subr.mxu0 0.0
      %2129 = vmatpush2.msra.mxu0 0.0
      %2130 = vmatprep.subr.mxu0 0.0
      %2131 = vmatpush2.msra.mxu0 0.0
      %2132 = vmatprep.subr.mxu0 0.0
      %2133 = vmatpush2.msra.mxu0 0.0
      %2134 = vmatprep.subr.mxu0 0.0
      %2135 = vmatpush2.msra.mxu0 0.0
      %2136 = vmatprep.subr.mxu0 0.0
      %2137 = vmatpush2.msra.mxu0 0.0
      %2138 = vmatprep.subr.mxu0 0.0
      %2139 = vmatpush2.msra.mxu0 0.0
      %2140 = vmatprep.subr.mxu0 0.0
      %2141 = vmatpush2.msra.mxu0 0.0
      %2142 = vmatprep.subr.mxu0 0.0
      %2143 = vmatpush2.msra.mxu0 0.0
      %2144 = vmatprep.subr.mxu0 0.0
      %2145 = vmatpush2.msra.mxu0 0.0
      %2146 = vmatprep.mubr.f32.mxu0 0.0
      %2147 = vmatmul.mubr.f32.gmra.mxu0 %v2074
      %v2148 = vpop.f32.mrf.mxu0
      %v2149 = vadd.f32 0.0, %v2148
      %v2150 = vpop.f32.mrf.mxu0
      %2151 = vmatprep.mubr.f32.mxu0 0.0
      %2152 = vmatmul.mubr.f32.gmra.mxu0 %v2077
      %v2153 = vpop.f32.mrf.mxu0
      %v2154 = vadd.f32 0.0, %v2153
      %v2155 = vpop.f32.mrf.mxu0
      %2156 = vmatprep.mubr.f32.mxu0 0.0
      %2157 = vmatmul.mubr.f32.gmra.mxu0 %v2080
      %v2158 = vpop.f32.mrf.mxu0
      %v2159 = vadd.f32 0.0, %v2158
      %v2160 = vpop.f32.mrf.mxu0
      %2161 = vdwg.mxu0
      %v2162 = vadd.f32 %v1934, %v2149
      %v2163 = vadd.f32 %v1939, %v2154
      %v2164 = vadd.f32 %v1944, %v2159
      %v2165 = vmul.f32 %v1294, %v357
      %v2166 = vmul.f32 %v1295, %v357
      %v2167 = vmul.f32 %v1296, %v357
      %v2169 = vsel %vm361, %v2165, 0
      %v2172 = vsel %vm361, %v2166, 0
      %v2175 = vsel %vm361, %v2167, 0
      %2177 = vmatprep.subr.mxu0 0.0
      %2178 = vmatpush1.xpose.msra.mxu0 0.0
      %2179 = vmatprep.subr.mxu0 0.0
      %2180 = vmatpush1.xpose.msra.mxu0 0.0
      %2181 = vmatprep.subr.mxu0 0.0
      %2182 = vmatpush1.xpose.msra.mxu0 0.0
      %2183 = vmatprep.subr.mxu0 0.0
      %2184 = vmatpush1.xpose.msra.mxu0 0.0
      %2185 = vmatprep.subr.mxu0 0.0
      %2186 = vmatpush1.xpose.msra.mxu0 0.0
      %2187 = vmatprep.subr.mxu0 0.0
      %2188 = vmatpush1.xpose.msra.mxu0 0.0
      %2189 = vmatprep.subr.mxu0 0.0
      %2190 = vmatpush1.xpose.msra.mxu0 0.0
      %2191 = vmatprep.subr.mxu0 0.0
      %2192 = vmatpush1.xpose.msra.mxu0 0.0
      %2193 = vmatprep.subr.mxu0 0.0
      %2194 = vmatpush1.xpose.msra.mxu0 0.0
      %2195 = vmatprep.subr.mxu0 0.0
      %2196 = vmatpush1.xpose.msra.mxu0 0.0
      %2197 = vmatprep.subr.mxu0 0.0
      %2198 = vmatpush1.xpose.msra.mxu0 0.0
      %2199 = vmatprep.subr.mxu0 0.0
      %2200 = vmatpush1.xpose.msra.mxu0 0.0
      %2201 = vmatprep.subr.mxu0 0.0
      %2202 = vmatpush1.xpose.msra.mxu0 0.0
      %2203 = vmatprep.subr.mxu0 0.0
      %2204 = vmatpush1.xpose.msra.mxu0 0.0
      %2205 = vmatprep.subr.mxu0 0.0
      %2206 = vmatpush1.xpose.msra.mxu0 0.0
      %2207 = vmatprep.subr.mxu0 0.0
      %2208 = vmatpush1.xpose.msra.mxu0 %v1525
      %2209 = vmatprep.subr.mxu0 0.0
      %2210 = vmatpush2.xpose.msra.mxu0 0.0
      %2211 = vmatprep.subr.mxu0 0.0
      %2212 = vmatpush2.xpose.msra.mxu0 0.0
      %2213 = vmatprep.subr.mxu0 0.0
      %2214 = vmatpush2.xpose.msra.mxu0 0.0
      %2215 = vmatprep.subr.mxu0 0.0
      %2216 = vmatpush2.xpose.msra.mxu0 0.0
      %2217 = vmatprep.subr.mxu0 0.0
      %2218 = vmatpush2.xpose.msra.mxu0 0.0
      %2219 = vmatprep.subr.mxu0 0.0
      %2220 = vmatpush2.xpose.msra.mxu0 0.0
      %2221 = vmatprep.subr.mxu0 0.0
      %2222 = vmatpush2.xpose.msra.mxu0 0.0
      %2223 = vmatprep.subr.mxu0 0.0
      %2224 = vmatpush2.xpose.msra.mxu0 0.0
      %2225 = vmatprep.subr.mxu0 0.0
      %2226 = vmatpush2.xpose.msra.mxu0 0.0
      %2227 = vmatprep.subr.mxu0 0.0
      %2228 = vmatpush2.xpose.msra.mxu0 0.0
      %2229 = vmatprep.subr.mxu0 0.0
      %2230 = vmatpush2.xpose.msra.mxu0 0.0
      %2231 = vmatprep.subr.mxu0 0.0
      %2232 = vmatpush2.xpose.msra.mxu0 0.0
      %2233 = vmatprep.subr.mxu0 0.0
      %2234 = vmatpush2.xpose.msra.mxu0 0.0
      %2235 = vmatprep.subr.mxu0 0.0
      %2236 = vmatpush2.xpose.msra.mxu0 0.0
      %2237 = vmatprep.subr.mxu0 0.0
      %2238 = vmatpush2.xpose.msra.mxu0 0.0
      %2239 = vmatprep.subr.mxu0 0.0
      %2240 = vmatpush2.xpose.msra.mxu0 0.0
      %2241 = vmatprep.mubr.f32.mxu0 0.0
      %2242 = vmatmul.mubr.f32.gmra.mxu0 %v2169
      %v2243 = vpop.f32.mrf.mxu0
      %v2244 = vadd.f32 %v337, %v2243
      %v2245 = vpop.f32.mrf.mxu0
      %2246 = vmatprep.mubr.f32.mxu0 0.0
      %2247 = vmatmul.mubr.f32.gmra.mxu0 %v2172
      %v2248 = vpop.f32.mrf.mxu0
      %v2249 = vadd.f32 %v337, %v2248
      %v2250 = vpop.f32.mrf.mxu0
      %2251 = vmatprep.mubr.f32.mxu0 0.0
      %2252 = vmatmul.mubr.f32.gmra.mxu0 %v2175
      %v2253 = vpop.f32.mrf.mxu0
      %v2254 = vadd.f32 %v337, %v2253
      %v2255 = vpop.f32.mrf.mxu0
      %2256 = vdwg.mxu0
      %v2257 = vsel %vm1607, %v2244, -inf
      %2258 = vmax.xlane.f32.xlu0 %v2257
      %v2259 = vpop.xlane.xlu0 %2258
      %v2260 = vsel %vm1607, %v2249, -inf
      %2261 = vmax.xlane.f32.xlu0 %v2260
      %v2262 = vpop.xlane.xlu0 %2261
      %v2263 = vsel %vm1614, %v2254, -inf
      %2264 = vmax.xlane.f32.xlu0 %v2263
      %v2265 = vpop.xlane.xlu0 %2264
      %v2266 = vsub.f32 %v2244, %v2259
      %v2267 = vsub.f32 %v2249, %v2262
      %v2268 = vsub.f32 %v2254, %v2265
      %v2269 = vmul.f32 %v2266, 1.442695
      %v2270 = vpow.pop %v2269
      %v2271 = vmul.f32 %v2267, 1.442695
      %v2272 = vpow.pop %v2271
      %v2273 = vmul.f32 %v2268, 1.442695
      %v2274 = vpow.pop %v2273
      %v2275 = vsel %vm1607, %v2270, 0.0
      %2276 = vadd.xlane.f32.xlu0 %v2275
      %v2277 = vpop.xlane.xlu0 %2276
      %v2278 = vsel %vm1607, %v2272, 0.0
      %2279 = vadd.xlane.f32.xlu0 %v2278
      %v2280 = vpop.xlane.xlu0 %2279
      %v2281 = vsel %vm1614, %v2274, 0.0
      %2282 = vadd.xlane.f32.xlu0 %v2281
      %v2283 = vpop.xlane.xlu0 %2282
      %v2284 = vrcp.pop %v2277
      %v2285 = vmul.f32 %v2270, %v2284
      %v2286 = vrcp.pop %v2280
      %v2287 = vmul.f32 %v2272, %v2286
      %v2288 = vrcp.pop %v2283
      %v2289 = vmul.f32 %v2274, %v2288
      %v2290 = vmul.f32 %v1511, %v357
      %v2292 = vsel %vm1607, %v2285, 0
      %v2295 = vsel %vm1607, %v2287, 0
      %v2298 = vsel %vm1607, %v2289, 0
      %2300 = vmatprep.subr.mxu0 0.0
      %2301 = vmatpush1.msra.mxu0 0.0
      %2302 = vmatprep.subr.mxu0 0.0
      %2303 = vmatpush1.msra.mxu0 0.0
      %2304 = vmatprep.subr.mxu0 0.0
      %2305 = vmatpush1.msra.mxu0 0.0
      %2306 = vmatprep.subr.mxu0 0.0
      %2307 = vmatpush1.msra.mxu0 0.0
      %2308 = vmatprep.subr.mxu0 0.0
      %2309 = vmatpush1.msra.mxu0 0.0
      %2310 = vmatprep.subr.mxu0 0.0
      %2311 = vmatpush1.msra.mxu0 0.0
      %2312 = vmatprep.subr.mxu0 0.0
      %2313 = vmatpush1.msra.mxu0 0.0
      %2314 = vmatprep.subr.mxu0 0.0
      %2315 = vmatpush1.msra.mxu0 0.0
      %2316 = vmatprep.subr.mxu0 0.0
      %2317 = vmatpush1.msra.mxu0 0.0
      %2318 = vmatprep.subr.mxu0 0.0
      %2319 = vmatpush1.msra.mxu0 0.0
      %2320 = vmatprep.subr.mxu0 0.0
      %2321 = vmatpush1.msra.mxu0 0.0
      %2322 = vmatprep.subr.mxu0 0.0
      %2323 = vmatpush1.msra.mxu0 0.0
      %2324 = vmatprep.subr.mxu0 0.0
      %2325 = vmatpush1.msra.mxu0 0.0
      %2326 = vmatprep.subr.mxu0 0.0
      %2327 = vmatpush1.msra.mxu0 0.0
      %2328 = vmatprep.subr.mxu0 0.0
      %2329 = vmatpush1.msra.mxu0 0.0
      %2330 = vmatprep.subr.mxu0 0.0
      %2331 = vmatpush1.msra.mxu0 %v2290
      %2332 = vmatprep.subr.mxu0 0.0
      %2333 = vmatpush2.msra.mxu0 0.0
      %2334 = vmatprep.subr.mxu0 0.0
      %2335 = vmatpush2.msra.mxu0 0.0
      %2336 = vmatprep.subr.mxu0 0.0
      %2337 = vmatpush2.msra.mxu0 0.0
      %2338 = vmatprep.subr.mxu0 0.0
      %2339 = vmatpush2.msra.mxu0 0.0
      %2340 = vmatprep.subr.mxu0 0.0
      %2341 = vmatpush2.msra.mxu0 0.0
      %2342 = vmatprep.subr.mxu0 0.0
      %2343 = vmatpush2.msra.mxu0 0.0
      %2344 = vmatprep.subr.mxu0 0.0
      %2345 = vmatpush2.msra.mxu0 0.0
      %2346 = vmatprep.subr.mxu0 0.0
      %2347 = vmatpush2.msra.mxu0 0.0
      %2348 = vmatprep.subr.mxu0 0.0
      %2349 = vmatpush2.msra.mxu0 0.0
      %2350 = vmatprep.subr.mxu0 0.0
      %2351 = vmatpush2.msra.mxu0 0.0
      %2352 = vmatprep.subr.mxu0 0.0
      %2353 = vmatpush2.msra.mxu0 0.0
      %2354 = vmatprep.subr.mxu0 0.0
      %2355 = vmatpush2.msra.mxu0 0.0
      %2356 = vmatprep.subr.mxu0 0.0
      %2357 = vmatpush2.msra.mxu0 0.0
      %2358 = vmatprep.subr.mxu0 0.0
      %2359 = vmatpush2.msra.mxu0 0.0
      %2360 = vmatprep.subr.mxu0 0.0
      %2361 = vmatpush2.msra.mxu0 0.0
      %2362 = vmatprep.subr.mxu0 0.0
      %2363 = vmatpush2.msra.mxu0 0.0
      %2364 = vmatprep.mubr.f32.mxu0 0.0
      %2365 = vmatmul.mubr.f32.gmra.mxu0 %v2292
      %v2366 = vpop.f32.mrf.mxu0
      %v2367 = vadd.f32 0.0, %v2366
      %v2368 = vpop.f32.mrf.mxu0
      %2369 = vmatprep.mubr.f32.mxu0 0.0
      %2370 = vmatmul.mubr.f32.gmra.mxu0 %v2295
      %v2371 = vpop.f32.mrf.mxu0
      %v2372 = vadd.f32 0.0, %v2371
      %v2373 = vpop.f32.mrf.mxu0
      %2374 = vmatprep.mubr.f32.mxu0 0.0
      %2375 = vmatmul.mubr.f32.gmra.mxu0 %v2298
      %v2376 = vpop.f32.mrf.mxu0
      %v2377 = vadd.f32 0.0, %v2376
      %v2378 = vpop.f32.mrf.mxu0
      %2379 = vdwg.mxu0
      %v2380 = vadd.f32 %v2162, %v2367
      %v2381 = vadd.f32 %v2163, %v2372
      %v2382 = vadd.f32 %v2164, %v2377
      %s2383 = scalar_lea.vmem %s1, 96
      %v2384 = vld [vmem:[%s2383] sm:$0xff]
      %v2385 = vld [vmem:[%s2383 + $0x8] sm:$0xff]
      %v2386 = vld [vmem:[%s2383 + $0x10] sm:$0xff]
      %v2387 = vld [vmem:[%s2383 + $0x18] sm:$0xff]
      %v2389 = vsel %vm361, %v2380, 0
      %v2392 = vsel %vm361, %v2381, 0
      %v2395 = vsel %vm361, %v2382, 0
      %2397 = vmatprep.subr.mxu0 0.0
      %2398 = vmatpush1.msra.mxu0 0.0
      %2399 = vmatprep.subr.mxu0 0.0
      %2400 = vmatpush1.msra.mxu0 0.0
      %2401 = vmatprep.subr.mxu0 0.0
      %2402 = vmatpush1.msra.mxu0 0.0
      %2403 = vmatprep.subr.mxu0 0.0
      %2404 = vmatpush1.msra.mxu0 0.0
      %2405 = vmatprep.subr.mxu0 0.0
      %2406 = vmatpush1.msra.mxu0 0.0
      %2407 = vmatprep.subr.mxu0 0.0
      %2408 = vmatpush1.msra.mxu0 0.0
      %2409 = vmatprep.subr.mxu0 0.0
      %2410 = vmatpush1.msra.mxu0 0.0
      %2411 = vmatprep.subr.mxu0 0.0
      %2412 = vmatpush1.msra.mxu0 0.0
      %2413 = vmatprep.subr.mxu0 0.0
      %2414 = vmatpush1.msra.mxu0 0.0
      %2415 = vmatprep.subr.mxu0 0.0
      %2416 = vmatpush1.msra.mxu0 0.0
      %2417 = vmatprep.subr.mxu0 0.0
      %2418 = vmatpush1.msra.mxu0 0.0
      %2419 = vmatprep.subr.mxu0 0.0
      %2420 = vmatpush1.msra.mxu0 0.0
      %2421 = vmatprep.subr.mxu0 0.0
      %2422 = vmatpush1.msra.mxu0 %v2387
      %2423 = vmatprep.subr.mxu0 0.0
      %2424 = vmatpush1.msra.mxu0 %v2386
      %2425 = vmatprep.subr.mxu0 0.0
      %2426 = vmatpush1.msra.mxu0 %v2385
      %2427 = vmatprep.subr.mxu0 0.0
      %2428 = vmatpush1.msra.mxu0 %v2384
      %2429 = vmatprep.subr.mxu0 0.0
      %2430 = vmatpush2.msra.mxu0 0.0
      %2431 = vmatprep.subr.mxu0 0.0
      %2432 = vmatpush2.msra.mxu0 0.0
      %2433 = vmatprep.subr.mxu0 0.0
      %2434 = vmatpush2.msra.mxu0 0.0
      %2435 = vmatprep.subr.mxu0 0.0
      %2436 = vmatpush2.msra.mxu0 0.0
      %2437 = vmatprep.subr.mxu0 0.0
      %2438 = vmatpush2.msra.mxu0 0.0
      %2439 = vmatprep.subr.mxu0 0.0
      %2440 = vmatpush2.msra.mxu0 0.0
      %2441 = vmatprep.subr.mxu0 0.0
      %2442 = vmatpush2.msra.mxu0 0.0
      %2443 = vmatprep.subr.mxu0 0.0
      %2444 = vmatpush2.msra.mxu0 0.0
      %2445 = vmatprep.subr.mxu0 0.0
      %2446 = vmatpush2.msra.mxu0 0.0
      %2447 = vmatprep.subr.mxu0 0.0
      %2448 = vmatpush2.msra.mxu0 0.0
      %2449 = vmatprep.subr.mxu0 0.0
      %2450 = vmatpush2.msra.mxu0 0.0
      %2451 = vmatprep.subr.mxu0 0.0
      %2452 = vmatpush2.msra.mxu0 0.0
      %2453 = vmatprep.subr.mxu0 0.0
      %2454 = vmatpush2.msra.mxu0 0.0
      %2455 = vmatprep.subr.mxu0 0.0
      %2456 = vmatpush2.msra.mxu0 0.0
      %2457 = vmatprep.subr.mxu0 0.0
      %2458 = vmatpush2.msra.mxu0 0.0
      %2459 = vmatprep.subr.mxu0 0.0
      %2460 = vmatpush2.msra.mxu0 0.0
      %2461 = vmatprep.mubr.f32.mxu0 0.0
      %2462 = vmatmul.mubr.f32.gmra.mxu0 %v2389
      %v2463 = vpop.f32.mrf.mxu0
      %v2464 = vadd.f32 %v358, %v2463
      %v2465 = vpop.f32.mrf.mxu0
      %2466 = vmatprep.mubr.f32.mxu0 0.0
      %2467 = vmatmul.mubr.f32.gmra.mxu0 %v2392
      %v2468 = vpop.f32.mrf.mxu0
      %v2469 = vadd.f32 %v359, %v2468
      %v2470 = vpop.f32.mrf.mxu0
      %2471 = vmatprep.mubr.f32.mxu0 0.0
      %2472 = vmatmul.mubr.f32.gmra.mxu0 %v2395
      %v2473 = vpop.f32.mrf.mxu0
      %v2474 = vadd.f32 %v360, %v2473
      %v2475 = vpop.f32.mrf.mxu0
      %2476 = vdwg.mxu0
      %v2477 = vsel %vm361, %v2464, 0.0
      %2478 = vadd.xlane.f32.xlu0 %v2477
      %v2479 = vpop.xlane.xlu0 %2478
      %v2480 = vsel %vm361, %v2469, 0.0
      %2481 = vadd.xlane.f32.xlu0 %v2480
      %v2482 = vpop.xlane.xlu0 %2481
      %v2483 = vsel %vm368, %v2474, 0.0
      %2484 = vadd.xlane.f32.xlu0 %v2483
      %v2485 = vpop.xlane.xlu0 %2484
      %v2486 = vmul.f32 %v2479, %v372
      %v2487 = vmul.f32 %v2482, %v372
      %v2488 = vmul.f32 %v2485, %v372
      %v2489 = vsub.f32 %v2464, %v2486
      %v2490 = vsub.f32 %v2469, %v2487
      %v2491 = vsub.f32 %v2474, %v2488
      %v2492 = vmul.f32 %v2489, %v2489
      %v2493 = vmul.f32 %v2490, %v2490
      %v2494 = vmul.f32 %v2491, %v2491
      %v2495 = vsel %vm361, %v2492, 0.0
      %2496 = vadd.xlane.f32.xlu0 %v2495
      %v2497 = vpop.xlane.xlu0 %2496
      %v2498 = vsel %vm361, %v2493, 0.0
      %2499 = vadd.xlane.f32.xlu0 %v2498
      %v2500 = vpop.xlane.xlu0 %2499
      %v2501 = vsel %vm368, %v2494, 0.0
      %2502 = vadd.xlane.f32.xlu0 %v2501
      %v2503 = vpop.xlane.xlu0 %2502
      %v2504 = vmul.f32 %v2497, %v372
      %v2505 = vmul.f32 %v2500, %v372
      %v2506 = vmul.f32 %v2503, %v372
      %v2507 = vadd.f32 %v2504, 1e-05
      %v2508 = vadd.f32 %v2505, 1e-05
      %v2509 = vadd.f32 %v2506, 1e-05
      %v2510 = vrsqrt.pop %v2507
      %v2511 = vrsqrt.pop %v2508
      %v2512 = vrsqrt.pop %v2509
      %v2513 = vmul.f32 %v2489, %v2510
      %v2514 = vmul.f32 %v2490, %v2511
      %v2515 = vmul.f32 %v2491, %v2512
      %s2516 = scalar_lea.vmem %s2, 2
      %v2517 = vld [vmem:[%s2516] sm:$0x1]
      %v2519 = vlaneseq
      %v2520 = vshrl.u32 %v2519, 7
      %v2521 = vsub.s32 0, %v2520
      %v2522 = vrot.slane %v2517, %v2521
      %v2524 = vmul.f32 %v2513, %v2522
      %v2525 = vmul.f32 %v2514, %v2522
      %v2526 = vmul.f32 %v2515, %v2522
      %s2527 = scalar_lea.vmem %s2, 3
      %v2528 = vld [vmem:[%s2527] sm:$0x1]
      %v2530 = vlaneseq
      %v2531 = vshrl.u32 %v2530, 7
      %v2532 = vsub.s32 0, %v2531
      %v2533 = vrot.slane %v2528, %v2532
      %v2535 = vadd.f32 %v2524, %v2533
      %v2536 = vadd.f32 %v2525, %v2533
      %v2537 = vadd.f32 %v2526, %v2533
      %s2538 = scalar_lea.vmem %s1, 160
      %v2539 = vld [vmem:[%s2538] sm:$0xff]
      %v2540 = vld [vmem:[%s2538 + $0x8] sm:$0xff]
      %v2541 = vld [vmem:[%s2538 + $0x10] sm:$0xff]
      %v2542 = vld [vmem:[%s2538 + $0x18] sm:$0xff]
      %s2543 = scalar_lea.vmem %s2, 18
      %v2544 = vld [vmem:[%s2543] sm:$0x1]
      %v2546 = vlaneseq
      %v2547 = vshrl.u32 %v2546, 7
      %v2548 = vsub.s32 0, %v2547
      %v2549 = vrot.slane %v2544, %v2548
      %v2552 = vsel %vm361, %v2535, 0
      %v2555 = vsel %vm361, %v2536, 0
      %v2558 = vsel %vm361, %v2537, 0
      %2560 = vmatprep.subr.mxu0 0.0
      %2561 = vmatpush1.msra.mxu0 0.0
      %2562 = vmatprep.subr.mxu0 0.0
      %2563 = vmatpush1.msra.mxu0 0.0
      %2564 = vmatprep.subr.mxu0 0.0
      %2565 = vmatpush1.msra.mxu0 0.0
      %2566 = vmatprep.subr.mxu0 0.0
      %2567 = vmatpush1.msra.mxu0 0.0
      %2568 = vmatprep.subr.mxu0 0.0
      %2569 = vmatpush1.msra.mxu0 0.0
      %2570 = vmatprep.subr.mxu0 0.0
      %2571 = vmatpush1.msra.mxu0 0.0
      %2572 = vmatprep.subr.mxu0 0.0
      %2573 = vmatpush1.msra.mxu0 0.0
      %2574 = vmatprep.subr.mxu0 0.0
      %2575 = vmatpush1.msra.mxu0 0.0
      %2576 = vmatprep.subr.mxu0 0.0
      %2577 = vmatpush1.msra.mxu0 0.0
      %2578 = vmatprep.subr.mxu0 0.0
      %2579 = vmatpush1.msra.mxu0 0.0
      %2580 = vmatprep.subr.mxu0 0.0
      %2581 = vmatpush1.msra.mxu0 0.0
      %2582 = vmatprep.subr.mxu0 0.0
      %2583 = vmatpush1.msra.mxu0 0.0
      %2584 = vmatprep.subr.mxu0 0.0
      %2585 = vmatpush1.msra.mxu0 %v2542
      %2586 = vmatprep.subr.mxu0 0.0
      %2587 = vmatpush1.msra.mxu0 %v2541
      %2588 = vmatprep.subr.mxu0 0.0
      %2589 = vmatpush1.msra.mxu0 %v2540
      %2590 = vmatprep.subr.mxu0 0.0
      %2591 = vmatpush1.msra.mxu0 %v2539
      %2592 = vmatprep.subr.mxu0 0.0
      %2593 = vmatpush2.msra.mxu0 0.0
      %2594 = vmatprep.subr.mxu0 0.0
      %2595 = vmatpush2.msra.mxu0 0.0
      %2596 = vmatprep.subr.mxu0 0.0
      %2597 = vmatpush2.msra.mxu0 0.0
      %2598 = vmatprep.subr.mxu0 0.0
      %2599 = vmatpush2.msra.mxu0 0.0
      %2600 = vmatprep.subr.mxu0 0.0
      %2601 = vmatpush2.msra.mxu0 0.0
      %2602 = vmatprep.subr.mxu0 0.0
      %2603 = vmatpush2.msra.mxu0 0.0
      %2604 = vmatprep.subr.mxu0 0.0
      %2605 = vmatpush2.msra.mxu0 0.0
      %2606 = vmatprep.subr.mxu0 0.0
      %2607 = vmatpush2.msra.mxu0 0.0
      %2608 = vmatprep.subr.mxu0 0.0
      %2609 = vmatpush2.msra.mxu0 0.0
      %2610 = vmatprep.subr.mxu0 0.0
      %2611 = vmatpush2.msra.mxu0 0.0
      %2612 = vmatprep.subr.mxu0 0.0
      %2613 = vmatpush2.msra.mxu0 0.0
      %2614 = vmatprep.subr.mxu0 0.0
      %2615 = vmatpush2.msra.mxu0 0.0
      %2616 = vmatprep.subr.mxu0 0.0
      %2617 = vmatpush2.msra.mxu0 0.0
      %2618 = vmatprep.subr.mxu0 0.0
      %2619 = vmatpush2.msra.mxu0 0.0
      %2620 = vmatprep.subr.mxu0 0.0
      %2621 = vmatpush2.msra.mxu0 0.0
      %2622 = vmatprep.subr.mxu0 0.0
      %2623 = vmatpush2.msra.mxu0 0.0
      %2624 = vmatprep.mubr.f32.mxu0 0.0
      %2625 = vmatmul.mubr.f32.gmra.mxu0 %v2552
      %v2626 = vpop.f32.mrf.mxu0
      %v2627 = vadd.f32 %v2549, %v2626
      %v2628 = vpop.f32.mrf.mxu0
      %2629 = vmatprep.mubr.f32.mxu0 0.0
      %2630 = vmatmul.mubr.f32.gmra.mxu0 %v2555
      %v2631 = vpop.f32.mrf.mxu0
      %v2632 = vadd.f32 %v2549, %v2631
      %v2633 = vpop.f32.mrf.mxu0
      %2634 = vmatprep.mubr.f32.mxu0 0.0
      %2635 = vmatmul.mubr.f32.gmra.mxu0 %v2558
      %v2636 = vpop.f32.mrf.mxu0
      %v2637 = vadd.f32 %v2549, %v2636
      %v2638 = vpop.f32.mrf.mxu0
      %2639 = vdwg.mxu0
      %v2640 = vsel %vm257, 1, 0
      %v2641 = vsel %vm258, 1, 0
      %vm2642 = vcmp.eq.s32.totalorder %v2640, 1
      %vm2643 = vcmp.eq.s32.totalorder %v2641, 1
      %v2644 = vsel %vm1135, 0.0, %v2627
      %v2645 = vsel %vm2642, 0.0, %v2632
      %v2646 = vsel %vm2643, 0.0, %v2637
      %v2648 = vsel %vm427, %v270, 0
      %v2651 = vsel %vm427, %v271, 0
      %v2654 = vsel %vm427, %v272, 0
      %v2657 = vsel %vm431, %v2646, 0
      %2659 = vmatprep.subr.mxu0 0.0
      %2660 = vmatpush1.msra.mxu0 0.0
      %2661 = vmatprep.subr.mxu0 0.0
      %2662 = vmatpush1.msra.mxu0 0.0
      %2663 = vmatprep.subr.mxu0 0.0
      %2664 = vmatpush1.msra.mxu0 0.0
      %2665 = vmatprep.subr.mxu0 0.0
      %2666 = vmatpush1.msra.mxu0 0.0
      %2667 = vmatprep.subr.mxu0 0.0
      %2668 = vmatpush1.msra.mxu0 0.0
      %2669 = vmatprep.subr.mxu0 0.0
      %2670 = vmatpush1.msra.mxu0 0.0
      %2671 = vmatprep.subr.mxu0 0.0
      %2672 = vmatpush1.msra.mxu0 0.0
      %2673 = vmatprep.subr.mxu0 0.0
      %2674 = vmatpush1.msra.mxu0 0.0
      %2675 = vmatprep.subr.mxu0 0.0
      %2676 = vmatpush1.msra.mxu0 0.0
      %2677 = vmatprep.subr.mxu0 0.0
      %2678 = vmatpush1.msra.mxu0 0.0
      %2679 = vmatprep.subr.mxu0 0.0
      %2680 = vmatpush1.msra.mxu0 0.0
      %2681 = vmatprep.subr.mxu0 0.0
      %2682 = vmatpush1.msra.mxu0 0.0
      %2683 = vmatprep.subr.mxu0 0.0
      %2684 = vmatpush1.msra.mxu0 0.0
      %2685 = vmatprep.subr.mxu0 0.0
      %2686 = vmatpush1.msra.mxu0 %v2657
      %2687 = vmatprep.subr.mxu0 0.0
      %2688 = vmatpush1.msra.mxu0 %v2645
      %2689 = vmatprep.subr.mxu0 0.0
      %2690 = vmatpush1.msra.mxu0 %v2644
      %2691 = vmatprep.subr.mxu0 0.0
      %2692 = vmatpush2.msra.mxu0 0.0
      %2693 = vmatprep.subr.mxu0 0.0
      %2694 = vmatpush2.msra.mxu0 0.0
      %2695 = vmatprep.subr.mxu0 0.0
      %2696 = vmatpush2.msra.mxu0 0.0
      %2697 = vmatprep.subr.mxu0 0.0
      %2698 = vmatpush2.msra.mxu0 0.0
      %2699 = vmatprep.subr.mxu0 0.0
      %2700 = vmatpush2.msra.mxu0 0.0
      %2701 = vmatprep.subr.mxu0 0.0
      %2702 = vmatpush2.msra.mxu0 0.0
      %2703 = vmatprep.subr.mxu0 0.0
      %2704 = vmatpush2.msra.mxu0 0.0
      %2705 = vmatprep.subr.mxu0 0.0
      %2706 = vmatpush2.msra.mxu0 0.0
      %2707 = vmatprep.subr.mxu0 0.0
      %2708 = vmatpush2.msra.mxu0 0.0
      %2709 = vmatprep.subr.mxu0 0.0
      %2710 = vmatpush2.msra.mxu0 0.0
      %2711 = vmatprep.subr.mxu0 0.0
      %2712 = vmatpush2.msra.mxu0 0.0
      %2713 = vmatprep.subr.mxu0 0.0
      %2714 = vmatpush2.msra.mxu0 0.0
      %2715 = vmatprep.subr.mxu0 0.0
      %2716 = vmatpush2.msra.mxu0 0.0
      %2717 = vmatprep.subr.mxu0 0.0
      %2718 = vmatpush2.msra.mxu0 0.0
      %2719 = vmatprep.subr.mxu0 0.0
      %2720 = vmatpush2.msra.mxu0 0.0
      %2721 = vmatprep.subr.mxu0 0.0
      %2722 = vmatpush2.msra.mxu0 0.0
      %2723 = vmatprep.mubr.f32.mxu0 0.0
      %2724 = vmatmul.mubr.f32.gmra.mxu0 %v2648
      %v2725 = vpop.f32.mrf.mxu0
      %v2726 = vadd.f32 0.0, %v2725
      %v2727 = vpop.f32.mrf.mxu0
      %2728 = vmatprep.mubr.f32.mxu0 0.0
      %2729 = vmatmul.mubr.f32.gmra.mxu0 %v2651
      %v2730 = vpop.f32.mrf.mxu0
      %v2731 = vadd.f32 0.0, %v2730
      %v2732 = vpop.f32.mrf.mxu0
      %2733 = vmatprep.mubr.f32.mxu0 0.0
      %2734 = vmatmul.mubr.f32.gmra.mxu0 %v2654
      %v2735 = vpop.f32.mrf.mxu0
      %v2736 = vadd.f32 0.0, %v2735
      %v2737 = vpop.f32.mrf.mxu0
      %2738 = vdwg.mxu0
      %v2740 = vsel %vm427, %v282, 0
      %v2743 = vsel %vm427, %v283, 0
      %v2746 = vsel %vm427, %v284, 0
      %2748 = vmatprep.subr.mxu0 0.0
      %2749 = vmatpush1.msra.mxu0 0.0
      %2750 = vmatprep.subr.mxu0 0.0
      %2751 = vmatpush1.msra.mxu0 0.0
      %2752 = vmatprep.subr.mxu0 0.0
      %2753 = vmatpush1.msra.mxu0 0.0
      %2754 = vmatprep.subr.mxu0 0.0
      %2755 = vmatpush1.msra.mxu0 0.0
      %2756 = vmatprep.subr.mxu0 0.0
      %2757 = vmatpush1.msra.mxu0 0.0
      %2758 = vmatprep.subr.mxu0 0.0
      %2759 = vmatpush1.msra.mxu0 0.0
      %2760 = vmatprep.subr.mxu0 0.0
      %2761 = vmatpush1.msra.mxu0 0.0
      %2762 = vmatprep.subr.mxu0 0.0
      %2763 = vmatpush1.msra.mxu0 0.0
      %2764 = vmatprep.subr.mxu0 0.0
      %2765 = vmatpush1.msra.mxu0 0.0
      %2766 = vmatprep.subr.mxu0 0.0
      %2767 = vmatpush1.msra.mxu0 0.0
      %2768 = vmatprep.subr.mxu0 0.0
      %2769 = vmatpush1.msra.mxu0 0.0
      %2770 = vmatprep.subr.mxu0 0.0
      %2771 = vmatpush1.msra.mxu0 0.0
      %2772 = vmatprep.subr.mxu0 0.0
      %2773 = vmatpush1.msra.mxu0 0.0
      %2774 = vmatprep.subr.mxu0 0.0
      %2775 = vmatpush1.msra.mxu0 %v2657
      %2776 = vmatprep.subr.mxu0 0.0
      %2777 = vmatpush1.msra.mxu0 %v2645
      %2778 = vmatprep.subr.mxu0 0.0
      %2779 = vmatpush1.msra.mxu0 %v2644
      %2780 = vmatprep.subr.mxu0 0.0
      %2781 = vmatpush2.msra.mxu0 0.0
      %2782 = vmatprep.subr.mxu0 0.0
      %2783 = vmatpush2.msra.mxu0 0.0
      %2784 = vmatprep.subr.mxu0 0.0
      %2785 = vmatpush2.msra.mxu0 0.0
      %2786 = vmatprep.subr.mxu0 0.0
      %2787 = vmatpush2.msra.mxu0 0.0
      %2788 = vmatprep.subr.mxu0 0.0
      %2789 = vmatpush2.msra.mxu0 0.0
      %2790 = vmatprep.subr.mxu0 0.0
      %2791 = vmatpush2.msra.mxu0 0.0
      %2792 = vmatprep.subr.mxu0 0.0
      %2793 = vmatpush2.msra.mxu0 0.0
      %2794 = vmatprep.subr.mxu0 0.0
      %2795 = vmatpush2.msra.mxu0 0.0
      %2796 = vmatprep.subr.mxu0 0.0
      %2797 = vmatpush2.msra.mxu0 0.0
      %2798 = vmatprep.subr.mxu0 0.0
      %2799 = vmatpush2.msra.mxu0 0.0
      %2800 = vmatprep.subr.mxu0 0.0
      %2801 = vmatpush2.msra.mxu0 0.0
      %2802 = vmatprep.subr.mxu0 0.0
      %2803 = vmatpush2.msra.mxu0 0.0
      %2804 = vmatprep.subr.mxu0 0.0
      %2805 = vmatpush2.msra.mxu0 0.0
      %2806 = vmatprep.subr.mxu0 0.0
      %2807 = vmatpush2.msra.mxu0 0.0
      %2808 = vmatprep.subr.mxu0 0.0
      %2809 = vmatpush2.msra.mxu0 0.0
      %2810 = vmatprep.subr.mxu0 0.0
      %2811 = vmatpush2.msra.mxu0 0.0
      %2812 = vmatprep.mubr.f32.mxu0 0.0
      %2813 = vmatmul.mubr.f32.gmra.mxu0 %v2740
      %v2814 = vpop.f32.mrf.mxu0
      %v2815 = vadd.f32 0.0, %v2814
      %v2816 = vpop.f32.mrf.mxu0
      %2817 = vmatprep.mubr.f32.mxu0 0.0
      %2818 = vmatmul.mubr.f32.gmra.mxu0 %v2743
      %v2819 = vpop.f32.mrf.mxu0
      %v2820 = vadd.f32 0.0, %v2819
      %v2821 = vpop.f32.mrf.mxu0
      %2822 = vmatprep.mubr.f32.mxu0 0.0
      %2823 = vmatmul.mubr.f32.gmra.mxu0 %v2746
      %v2824 = vpop.f32.mrf.mxu0
      %v2825 = vadd.f32 0.0, %v2824
      %v2826 = vpop.f32.mrf.mxu0
      %2827 = vdwg.mxu0
      %v2828 = vld [vmem:[%s4] sm:$0x7]
      %v2829 = vld [vmem:[%s5] sm:$0x1]
      %v2830 = vlaneseq
      %v2831 = vshrl.u32 %v2830, 7
      %v2832 = vsub.s32 0, %v2831
      %v2833 = vrot.slane %v2828, %v2832
      %v2834 = vmul.f32 %v2833, %v2726
      %v2835 = vmul.f32 %v2833, %v2731
      %v2836 = vmul.f32 %v2833, %v2736
      %v2838 = vlaneseq
      %v2839 = vshrl.u32 %v2838, 7
      %v2840 = vsub.s32 0, %v2839
      %v2841 = vrot.slane %v2829, %v2840
      %v2843 = vadd.f32 %v2841, %v2834
      %v2844 = vadd.f32 %v2841, %v2835
      %v2845 = vadd.f32 %v2841, %v2836
      %v2846 = vlaneseq
      %v2847 = vshrl.u32 %v2846, 7
      %v2848 = vsub.s32 1, %v2847
      %v2849 = vrot.slane %v2828, %v2848
      %v2850 = vmul.f32 %v2849, %v2644
      %v2851 = vmul.f32 %v2849, %v2645
      %v2852 = vmul.f32 %v2849, %v2646
      %v2853 = vadd.f32 %v2843, %v2850
      %v2854 = vadd.f32 %v2844, %v2851
      %v2855 = vadd.f32 %v2845, %v2852
      %v2856 = vlaneseq
      %v2857 = vshrl.u32 %v2856, 7
      %v2858 = vsub.s32 2, %v2857
      %v2859 = vrot.slane %v2828, %v2858
      %v2860 = vmul.f32 %v2859, %v2815
      %v2861 = vmul.f32 %v2859, %v2820
      %v2862 = vmul.f32 %v2859, %v2825
      %v2863 = vadd.f32 %v2853, %v2860
      %v2864 = vadd.f32 %v2854, %v2861
      %v2865 = vadd.f32 %v2855, %v2862
      %v2866 = vmul.f32 %v2863, 0.5
      %v2867 = vmul.f32 %v2864, 0.5
      %v2868 = vmul.f32 %v2865, 0.5
      %v2869 = vmul.f32 %v2863, 0.70710677
      %v2870 = vmul.f32 %v2864, 0.70710677
      %v2871 = vmul.f32 %v2865, 0.70710677
      %v2872 = verf.f32.pop %v2869
      %v2873 = verf.f32.pop %v2870
      %v2874 = verf.f32.pop %v2871
      %v2875 = vadd.f32 %v2872, 1.0
      %v2876 = vadd.f32 %v2873, 1.0
      %v2877 = vadd.f32 %v2874, 1.0
      %v2878 = vmul.f32 %v2866, %v2875
      %v2879 = vmul.f32 %v2867, %v2876
      %v2880 = vmul.f32 %v2868, %v2877
      %s2881 = scalar_lea.vmem %s1, 288
      %v2882 = vld [vmem:[%s2881] sm:$0xff]
      %v2883 = vld [vmem:[%s2881 + $0x8] sm:$0xff]
      %v2884 = vld [vmem:[%s2881 + $0x10] sm:$0xff]
      %v2885 = vld [vmem:[%s2881 + $0x18] sm:$0xff]
      %s2886 = scalar_lea.vmem %s4, 4
      %v2887 = vld [vmem:[%s2886] sm:$0x7]
      %s2888 = scalar_lea.vmem %s5, 1
      %v2889 = vld [vmem:[%s2888] sm:$0x1]
      %v2890 = vlaneseq
      %v2891 = vshrl.u32 %v2890, 7
      %v2892 = vsub.s32 0, %v2891
      %v2893 = vrot.slane %v2887, %v2892
      %v2894 = vmul.f32 %v2893, %v2726
      %v2895 = vmul.f32 %v2893, %v2731
      %v2896 = vmul.f32 %v2893, %v2736
      %v2898 = vlaneseq
      %v2899 = vshrl.u32 %v2898, 7
      %v2900 = vsub.s32 0, %v2899
      %v2901 = vrot.slane %v2889, %v2900
      %v2903 = vadd.f32 %v2901, %v2894
      %v2904 = vadd.f32 %v2901, %v2895
      %v2905 = vadd.f32 %v2901, %v2896
      %v2906 = vlaneseq
      %v2907 = vshrl.u32 %v2906, 7
      %v2908 = vsub.s32 1, %v2907
      %v2909 = vrot.slane %v2887, %v2908
      %v2910 = vmul.f32 %v2909, %v2644
      %v2911 = vmul.f32 %v2909, %v2645
      %v2912 = vmul.f32 %v2909, %v2646
      %v2913 = vadd.f32 %v2903, %v2910
      %v2914 = vadd.f32 %v2904, %v2911
      %v2915 = vadd.f32 %v2905, %v2912
      %v2916 = vlaneseq
      %v2917 = vshrl.u32 %v2916, 7
      %v2918 = vsub.s32 2, %v2917
      %v2919 = vrot.slane %v2887, %v2918
      %v2920 = vmul.f32 %v2919, %v2815
      %v2921 = vmul.f32 %v2919, %v2820
      %v2922 = vmul.f32 %v2919, %v2825
      %v2923 = vadd.f32 %v2913, %v2920
      %v2924 = vadd.f32 %v2914, %v2921
      %v2925 = vadd.f32 %v2915, %v2922
      %v2926 = vmul.f32 %v2923, 0.5
      %v2927 = vmul.f32 %v2924, 0.5
      %v2928 = vmul.f32 %v2925, 0.5
      %v2929 = vmul.f32 %v2923, 0.70710677
      %v2930 = vmul.f32 %v2924, 0.70710677
      %v2931 = vmul.f32 %v2925, 0.70710677
      %v2932 = verf.f32.pop %v2929
      %v2933 = verf.f32.pop %v2930
      %v2934 = verf.f32.pop %v2931
      %v2935 = vadd.f32 %v2932, 1.0
      %v2936 = vadd.f32 %v2933, 1.0
      %v2937 = vadd.f32 %v2934, 1.0
      %v2938 = vmul.f32 %v2926, %v2935
      %v2939 = vmul.f32 %v2927, %v2936
      %v2940 = vmul.f32 %v2928, %v2937
      %s2941 = scalar_lea.vmem %s1, 320
      %v2942 = vld [vmem:[%s2941] sm:$0xff]
      %v2943 = vld [vmem:[%s2941 + $0x8] sm:$0xff]
      %v2944 = vld [vmem:[%s2941 + $0x10] sm:$0xff]
      %v2945 = vld [vmem:[%s2941 + $0x18] sm:$0xff]
      %v2947 = vsel %vm361, %v2938, 0
      %v2950 = vsel %vm361, %v2939, 0
      %v2953 = vsel %vm361, %v2940, 0
      %2955 = vmatprep.subr.mxu0 0.0
      %2956 = vmatpush1.msra.mxu0 0.0
      %2957 = vmatprep.subr.mxu0 0.0
      %2958 = vmatpush1.msra.mxu0 0.0
      %2959 = vmatprep.subr.mxu0 0.0
      %2960 = vmatpush1.msra.mxu0 0.0
      %2961 = vmatprep.subr.mxu0 0.0
      %2962 = vmatpush1.msra.mxu0 0.0
      %2963 = vmatprep.subr.mxu0 0.0
      %2964 = vmatpush1.msra.mxu0 0.0
      %2965 = vmatprep.subr.mxu0 0.0
      %2966 = vmatpush1.msra.mxu0 0.0
      %2967 = vmatprep.subr.mxu0 0.0
      %2968 = vmatpush1.msra.mxu0 0.0
      %2969 = vmatprep.subr.mxu0 0.0
      %2970 = vmatpush1.msra.mxu0 0.0
      %2971 = vmatprep.subr.mxu0 0.0
      %2972 = vmatpush1.msra.mxu0 0.0
      %2973 = vmatprep.subr.mxu0 0.0
      %2974 = vmatpush1.msra.mxu0 0.0
      %2975 = vmatprep.subr.mxu0 0.0
      %2976 = vmatpush1.msra.mxu0 0.0
      %2977 = vmatprep.subr.mxu0 0.0
      %2978 = vmatpush1.msra.mxu0 0.0
      %2979 = vmatprep.subr.mxu0 0.0
      %2980 = vmatpush1.msra.mxu0 %v2945
      %2981 = vmatprep.subr.mxu0 0.0
      %2982 = vmatpush1.msra.mxu0 %v2944
      %2983 = vmatprep.subr.mxu0 0.0
      %2984 = vmatpush1.msra.mxu0 %v2943
      %2985 = vmatprep.subr.mxu0 0.0
      %2986 = vmatpush1.msra.mxu0 %v2942
      %2987 = vmatprep.subr.mxu0 0.0
      %2988 = vmatpush2.msra.mxu0 0.0
      %2989 = vmatprep.subr.mxu0 0.0
      %2990 = vmatpush2.msra.mxu0 0.0
      %2991 = vmatprep.subr.mxu0 0.0
      %2992 = vmatpush2.msra.mxu0 0.0
      %2993 = vmatprep.subr.mxu0 0.0
      %2994 = vmatpush2.msra.mxu0 0.0
      %2995 = vmatprep.subr.mxu0 0.0
      %2996 = vmatpush2.msra.mxu0 0.0
      %2997 = vmatprep.subr.mxu0 0.0
      %2998 = vmatpush2.msra.mxu0 0.0
      %2999 = vmatprep.subr.mxu0 0.0
      %3000 = vmatpush2.msra.mxu0 0.0
      %3001 = vmatprep.subr.mxu0 0.0
      %3002 = vmatpush2.msra.mxu0 0.0
      %3003 = vmatprep.subr.mxu0 0.0
      %3004 = vmatpush2.msra.mxu0 0.0
      %3005 = vmatprep.subr.mxu0 0.0
      %3006 = vmatpush2.msra.mxu0 0.0
      %3007 = vmatprep.subr.mxu0 0.0
      %3008 = vmatpush2.msra.mxu0 0.0
      %3009 = vmatprep.subr.mxu0 0.0
      %3010 = vmatpush2.msra.mxu0 0.0
      %3011 = vmatprep.subr.mxu0 0.0
      %3012 = vmatpush2.msra.mxu0 0.0
      %3013 = vmatprep.subr.mxu0 0.0
      %3014 = vmatpush2.msra.mxu0 0.0
      %3015 = vmatprep.subr.mxu0 0.0
      %3016 = vmatpush2.msra.mxu0 0.0
      %3017 = vmatprep.subr.mxu0 0.0
      %3018 = vmatpush2.msra.mxu0 0.0
      %3019 = vmatprep.mubr.f32.mxu0 0.0
      %3020 = vmatmul.mubr.f32.gmra.mxu0 %v2947
      %v3021 = vpop.f32.mrf.mxu0
      %v3022 = vadd.f32 0.0, %v3021
      %v3023 = vpop.f32.mrf.mxu0
      %3024 = vmatprep.mubr.f32.mxu0 0.0
      %3025 = vmatmul.mubr.f32.gmra.mxu0 %v2950
      %v3026 = vpop.f32.mrf.mxu0
      %v3027 = vadd.f32 0.0, %v3026
      %v3028 = vpop.f32.mrf.mxu0
      %3029 = vmatprep.mubr.f32.mxu0 0.0
      %3030 = vmatmul.mubr.f32.gmra.mxu0 %v2953
      %v3031 = vpop.f32.mrf.mxu0
      %v3032 = vadd.f32 0.0, %v3031
      %v3033 = vpop.f32.mrf.mxu0
      %3034 = vdwg.mxu0
      %v3036 = vsel %vm361, %v2878, 0
      %v3039 = vsel %vm361, %v2879, 0
      %v3042 = vsel %vm361, %v2880, 0
      %3044 = vmatprep.subr.mxu0 0.0
      %3045 = vmatpush1.msra.mxu0 0.0
      %3046 = vmatprep.subr.mxu0 0.0
      %3047 = vmatpush1.msra.mxu0 0.0
      %3048 = vmatprep.subr.mxu0 0.0
      %3049 = vmatpush1.msra.mxu0 0.0
      %3050 = vmatprep.subr.mxu0 0.0
      %3051 = vmatpush1.msra.mxu0 0.0
      %3052 = vmatprep.subr.mxu0 0.0
      %3053 = vmatpush1.msra.mxu0 0.0
      %3054 = vmatprep.subr.mxu0 0.0
      %3055 = vmatpush1.msra.mxu0 0.0
      %3056 = vmatprep.subr.mxu0 0.0
      %3057 = vmatpush1.msra.mxu0 0.0
      %3058 = vmatprep.subr.mxu0 0.0
      %3059 = vmatpush1.msra.mxu0 0.0
      %3060 = vmatprep.subr.mxu0 0.0
      %3061 = vmatpush1.msra.mxu0 0.0
      %3062 = vmatprep.subr.mxu0 0.0
      %3063 = vmatpush1.msra.mxu0 0.0
      %3064 = vmatprep.subr.mxu0 0.0
      %3065 = vmatpush1.msra.mxu0 0.0
      %3066 = vmatprep.subr.mxu0 0.0
      %3067 = vmatpush1.msra.mxu0 0.0
      %3068 = vmatprep.subr.mxu0 0.0
      %3069 = vmatpush1.msra.mxu0 %v2885
      %3070 = vmatprep.subr.mxu0 0.0
      %3071 = vmatpush1.msra.mxu0 %v2884
      %3072 = vmatprep.subr.mxu0 0.0
      %3073 = vmatpush1.msra.mxu0 %v2883
      %3074 = vmatprep.subr.mxu0 0.0
      %3075 = vmatpush1.msra.mxu0 %v2882
      %3076 = vmatprep.subr.mxu0 0.0
      %3077 = vmatpush2.msra.mxu0 0.0
      %3078 = vmatprep.subr.mxu0 0.0
      %3079 = vmatpush2.msra.mxu0 0.0
      %3080 = vmatprep.subr.mxu0 0.0
      %3081 = vmatpush2.msra.mxu0 0.0
      %3082 = vmatprep.subr.mxu0 0.0
      %3083 = vmatpush2.msra.mxu0 0.0
      %3084 = vmatprep.subr.mxu0 0.0
      %3085 = vmatpush2.msra.mxu0 0.0
      %3086 = vmatprep.subr.mxu0 0.0
      %3087 = vmatpush2.msra.mxu0 0.0
      %3088 = vmatprep.subr.mxu0 0.0
      %3089 = vmatpush2.msra.mxu0 0.0
      %3090 = vmatprep.subr.mxu0 0.0
      %3091 = vmatpush2.msra.mxu0 0.0
      %3092 = vmatprep.subr.mxu0 0.0
      %3093 = vmatpush2.msra.mxu0 0.0
      %3094 = vmatprep.subr.mxu0 0.0
      %3095 = vmatpush2.msra.mxu0 0.0
      %3096 = vmatprep.subr.mxu0 0.0
      %3097 = vmatpush2.msra.mxu0 0.0
      %3098 = vmatprep.subr.mxu0 0.0
      %3099 = vmatpush2.msra.mxu0 0.0
      %3100 = vmatprep.subr.mxu0 0.0
      %3101 = vmatpush2.msra.mxu0 0.0
      %3102 = vmatprep.subr.mxu0 0.0
      %3103 = vmatpush2.msra.mxu0 0.0
      %3104 = vmatprep.subr.mxu0 0.0
      %3105 = vmatpush2.msra.mxu0 0.0
      %3106 = vmatprep.subr.mxu0 0.0
      %3107 = vmatpush2.msra.mxu0 0.0
      %3108 = vmatprep.mubr.f32.mxu0 0.0
      %3109 = vmatmul.mubr.f32.gmra.mxu0 %v3036
      %v3110 = vpop.f32.mrf.mxu0
      %v3111 = vadd.f32 %v3022, %v3110
      %v3112 = vpop.f32.mrf.mxu0
      %3113 = vmatprep.mubr.f32.mxu0 0.0
      %3114 = vmatmul.mubr.f32.gmra.mxu0 %v3039
      %v3115 = vpop.f32.mrf.mxu0
      %v3116 = vadd.f32 %v3027, %v3115
      %v3117 = vpop.f32.mrf.mxu0
      %3118 = vmatprep.mubr.f32.mxu0 0.0
      %3119 = vmatmul.mubr.f32.gmra.mxu0 %v3042
      %v3120 = vpop.f32.mrf.mxu0
      %v3121 = vadd.f32 %v3032, %v3120
      %v3122 = vpop.f32.mrf.mxu0
      %3123 = vdwg.mxu0
      %s3124 = scalar_lea.vmem %s4, 8
      %v3125 = vld [vmem:[%s3124] sm:$0x7]
      %s3126 = scalar_lea.vmem %s5, 2
      %v3127 = vld [vmem:[%s3126] sm:$0x1]
      %v3128 = vlaneseq
      %v3129 = vshrl.u32 %v3128, 7
      %v3130 = vsub.s32 0, %v3129
      %v3131 = vrot.slane %v3125, %v3130
      %v3132 = vmul.f32 %v3131, %v2726
      %v3133 = vmul.f32 %v3131, %v2731
      %v3134 = vmul.f32 %v3131, %v2736
      %v3136 = vlaneseq
      %v3137 = vshrl.u32 %v3136, 7
      %v3138 = vsub.s32 0, %v3137
      %v3139 = vrot.slane %v3127, %v3138
      %v3141 = vadd.f32 %v3139, %v3132
      %v3142 = vadd.f32 %v3139, %v3133
      %v3143 = vadd.f32 %v3139, %v3134
      %v3144 = vlaneseq
      %v3145 = vshrl.u32 %v3144, 7
      %v3146 = vsub.s32 1, %v3145
      %v3147 = vrot.slane %v3125, %v3146
      %v3148 = vmul.f32 %v3147, %v2644
      %v3149 = vmul.f32 %v3147, %v2645
      %v3150 = vmul.f32 %v3147, %v2646
      %v3151 = vadd.f32 %v3141, %v3148
      %v3152 = vadd.f32 %v3142, %v3149
      %v3153 = vadd.f32 %v3143, %v3150
      %v3154 = vlaneseq
      %v3155 = vshrl.u32 %v3154, 7
      %v3156 = vsub.s32 2, %v3155
      %v3157 = vrot.slane %v3125, %v3156
      %v3158 = vmul.f32 %v3157, %v2815
      %v3159 = vmul.f32 %v3157, %v2820
      %v3160 = vmul.f32 %v3157, %v2825
      %v3161 = vadd.f32 %v3151, %v3158
      %v3162 = vadd.f32 %v3152, %v3159
      %v3163 = vadd.f32 %v3153, %v3160
      %v3164 = vmul.f32 %v3161, 0.5
      %v3165 = vmul.f32 %v3162, 0.5
      %v3166 = vmul.f32 %v3163, 0.5
      %v3167 = vmul.f32 %v3161, 0.70710677
      %v3168 = vmul.f32 %v3162, 0.70710677
      %v3169 = vmul.f32 %v3163, 0.70710677
      %v3170 = verf.f32.pop %v3167
      %v3171 = verf.f32.pop %v3168
      %v3172 = verf.f32.pop %v3169
      %v3173 = vadd.f32 %v3170, 1.0
      %v3174 = vadd.f32 %v3171, 1.0
      %v3175 = vadd.f32 %v3172, 1.0
      %v3176 = vmul.f32 %v3164, %v3173
      %v3177 = vmul.f32 %v3165, %v3174
      %v3178 = vmul.f32 %v3166, %v3175
      %s3179 = scalar_lea.vmem %s1, 352
      %v3180 = vld [vmem:[%s3179] sm:$0xff]
      %v3181 = vld [vmem:[%s3179 + $0x8] sm:$0xff]
      %v3182 = vld [vmem:[%s3179 + $0x10] sm:$0xff]
      %v3183 = vld [vmem:[%s3179 + $0x18] sm:$0xff]
      %v3185 = vsel %vm361, %v3176, 0
      %v3188 = vsel %vm361, %v3177, 0
      %v3191 = vsel %vm361, %v3178, 0
      %3193 = vmatprep.subr.mxu0 0.0
      %3194 = vmatpush1.msra.mxu0 0.0
      %3195 = vmatprep.subr.mxu0 0.0
      %3196 = vmatpush1.msra.mxu0 0.0
      %3197 = vmatprep.subr.mxu0 0.0
      %3198 = vmatpush1.msra.mxu0 0.0
      %3199 = vmatprep.subr.mxu0 0.0
      %3200 = vmatpush1.msra.mxu0 0.0
      %3201 = vmatprep.subr.mxu0 0.0
      %3202 = vmatpush1.msra.mxu0 0.0
      %3203 = vmatprep.subr.mxu0 0.0
      %3204 = vmatpush1.msra.mxu0 0.0
      %3205 = vmatprep.subr.mxu0 0.0
      %3206 = vmatpush1.msra.mxu0 0.0
      %3207 = vmatprep.subr.mxu0 0.0
      %3208 = vmatpush1.msra.mxu0 0.0
      %3209 = vmatprep.subr.mxu0 0.0
      %3210 = vmatpush1.msra.mxu0 0.0
      %3211 = vmatprep.subr.mxu0 0.0
      %3212 = vmatpush1.msra.mxu0 0.0
      %3213 = vmatprep.subr.mxu0 0.0
      %3214 = vmatpush1.msra.mxu0 0.0
      %3215 = vmatprep.subr.mxu0 0.0
      %3216 = vmatpush1.msra.mxu0 0.0
      %3217 = vmatprep.subr.mxu0 0.0
      %3218 = vmatpush1.msra.mxu0 %v3183
      %3219 = vmatprep.subr.mxu0 0.0
      %3220 = vmatpush1.msra.mxu0 %v3182
      %3221 = vmatprep.subr.mxu0 0.0
      %3222 = vmatpush1.msra.mxu0 %v3181
      %3223 = vmatprep.subr.mxu0 0.0
      %3224 = vmatpush1.msra.mxu0 %v3180
      %3225 = vmatprep.subr.mxu0 0.0
      %3226 = vmatpush2.msra.mxu0 0.0
      %3227 = vmatprep.subr.mxu0 0.0
      %3228 = vmatpush2.msra.mxu0 0.0
      %3229 = vmatprep.subr.mxu0 0.0
      %3230 = vmatpush2.msra.mxu0 0.0
      %3231 = vmatprep.subr.mxu0 0.0
      %3232 = vmatpush2.msra.mxu0 0.0
      %3233 = vmatprep.subr.mxu0 0.0
      %3234 = vmatpush2.msra.mxu0 0.0
      %3235 = vmatprep.subr.mxu0 0.0
      %3236 = vmatpush2.msra.mxu0 0.0
      %3237 = vmatprep.subr.mxu0 0.0
      %3238 = vmatpush2.msra.mxu0 0.0
      %3239 = vmatprep.subr.mxu0 0.0
      %3240 = vmatpush2.msra.mxu0 0.0
      %3241 = vmatprep.subr.mxu0 0.0
      %3242 = vmatpush2.msra.mxu0 0.0
      %3243 = vmatprep.subr.mxu0 0.0
      %3244 = vmatpush2.msra.mxu0 0.0
      %3245 = vmatprep.subr.mxu0 0.0
      %3246 = vmatpush2.msra.mxu0 0.0
      %3247 = vmatprep.subr.mxu0 0.0
      %3248 = vmatpush2.msra.mxu0 0.0
      %3249 = vmatprep.subr.mxu0 0.0
      %3250 = vmatpush2.msra.mxu0 0.0
      %3251 = vmatprep.subr.mxu0 0.0
      %3252 = vmatpush2.msra.mxu0 0.0
      %3253 = vmatprep.subr.mxu0 0.0
      %3254 = vmatpush2.msra.mxu0 0.0
      %3255 = vmatprep.subr.mxu0 0.0
      %3256 = vmatpush2.msra.mxu0 0.0
      %3257 = vmatprep.mubr.f32.mxu0 0.0
      %3258 = vmatmul.mubr.f32.gmra.mxu0 %v3185
      %v3259 = vpop.f32.mrf.mxu0
      %v3260 = vadd.f32 0.0, %v3259
      %v3261 = vpop.f32.mrf.mxu0
      %3262 = vmatprep.mubr.f32.mxu0 0.0
      %3263 = vmatmul.mubr.f32.gmra.mxu0 %v3188
      %v3264 = vpop.f32.mrf.mxu0
      %v3265 = vadd.f32 0.0, %v3264
      %v3266 = vpop.f32.mrf.mxu0
      %3267 = vmatprep.mubr.f32.mxu0 0.0
      %3268 = vmatmul.mubr.f32.gmra.mxu0 %v3191
      %v3269 = vpop.f32.mrf.mxu0
      %v3270 = vadd.f32 0.0, %v3269
      %v3271 = vpop.f32.mrf.mxu0
      %3272 = vdwg.mxu0
      %v3273 = vadd.f32 %v3111, %v3260
      %v3274 = vadd.f32 %v3116, %v3265
      %v3275 = vadd.f32 %v3121, %v3270
      %s3276 = scalar_lea.vmem %s4, 12
      %v3277 = vld [vmem:[%s3276] sm:$0x7]
      %s3278 = scalar_lea.vmem %s5, 3
      %v3279 = vld [vmem:[%s3278] sm:$0x1]
      %v3280 = vlaneseq
      %v3281 = vshrl.u32 %v3280, 7
      %v3282 = vsub.s32 0, %v3281
      %v3283 = vrot.slane %v3277, %v3282
      %v3284 = vmul.f32 %v3283, %v2726
      %v3285 = vmul.f32 %v3283, %v2731
      %v3286 = vmul.f32 %v3283, %v2736
      %v3288 = vlaneseq
      %v3289 = vshrl.u32 %v3288, 7
      %v3290 = vsub.s32 0, %v3289
      %v3291 = vrot.slane %v3279, %v3290
      %v3293 = vadd.f32 %v3291, %v3284
      %v3294 = vadd.f32 %v3291, %v3285
      %v3295 = vadd.f32 %v3291, %v3286
      %v3296 = vlaneseq
      %v3297 = vshrl.u32 %v3296, 7
      %v3298 = vsub.s32 1, %v3297
      %v3299 = vrot.slane %v3277, %v3298
      %v3300 = vmul.f32 %v3299, %v2644
      %v3301 = vmul.f32 %v3299, %v2645
      %v3302 = vmul.f32 %v3299, %v2646
      %v3303 = vadd.f32 %v3293, %v3300
      %v3304 = vadd.f32 %v3294, %v3301
      %v3305 = vadd.f32 %v3295, %v3302
      %v3306 = vlaneseq
      %v3307 = vshrl.u32 %v3306, 7
      %v3308 = vsub.s32 2, %v3307
      %v3309 = vrot.slane %v3277, %v3308
      %v3310 = vmul.f32 %v3309, %v2815
      %v3311 = vmul.f32 %v3309, %v2820
      %v3312 = vmul.f32 %v3309, %v2825
      %v3313 = vadd.f32 %v3303, %v3310
      %v3314 = vadd.f32 %v3304, %v3311
      %v3315 = vadd.f32 %v3305, %v3312
      %v3316 = vmul.f32 %v3313, 0.5
      %v3317 = vmul.f32 %v3314, 0.5
      %v3318 = vmul.f32 %v3315, 0.5
      %v3319 = vmul.f32 %v3313, 0.70710677
      %v3320 = vmul.f32 %v3314, 0.70710677
      %v3321 = vmul.f32 %v3315, 0.70710677
      %v3322 = verf.f32.pop %v3319
      %v3323 = verf.f32.pop %v3320
      %v3324 = verf.f32.pop %v3321
      %v3325 = vadd.f32 %v3322, 1.0
      %v3326 = vadd.f32 %v3323, 1.0
      %v3327 = vadd.f32 %v3324, 1.0
      %v3328 = vmul.f32 %v3316, %v3325
      %v3329 = vmul.f32 %v3317, %v3326
      %v3330 = vmul.f32 %v3318, %v3327
      %s3331 = scalar_lea.vmem %s1, 384
      %v3332 = vld [vmem:[%s3331] sm:$0xff]
      %v3333 = vld [vmem:[%s3331 + $0x8] sm:$0xff]
      %v3334 = vld [vmem:[%s3331 + $0x10] sm:$0xff]
      %v3335 = vld [vmem:[%s3331 + $0x18] sm:$0xff]
      %v3337 = vsel %vm361, %v3328, 0
      %v3340 = vsel %vm361, %v3329, 0
      %v3343 = vsel %vm361, %v3330, 0
      %3345 = vmatprep.subr.mxu0 0.0
      %3346 = vmatpush1.msra.mxu0 0.0
      %3347 = vmatprep.subr.mxu0 0.0
      %3348 = vmatpush1.msra.mxu0 0.0
      %3349 = vmatprep.subr.mxu0 0.0
      %3350 = vmatpush1.msra.mxu0 0.0
      %3351 = vmatprep.subr.mxu0 0.0
      %3352 = vmatpush1.msra.mxu0 0.0
      %3353 = vmatprep.subr.mxu0 0.0
      %3354 = vmatpush1.msra.mxu0 0.0
      %3355 = vmatprep.subr.mxu0 0.0
      %3356 = vmatpush1.msra.mxu0 0.0
      %3357 = vmatprep.subr.mxu0 0.0
      %3358 = vmatpush1.msra.mxu0 0.0
      %3359 = vmatprep.subr.mxu0 0.0
      %3360 = vmatpush1.msra.mxu0 0.0
      %3361 = vmatprep.subr.mxu0 0.0
      %3362 = vmatpush1.msra.mxu0 0.0
      %3363 = vmatprep.subr.mxu0 0.0
      %3364 = vmatpush1.msra.mxu0 0.0
      %3365 = vmatprep.subr.mxu0 0.0
      %3366 = vmatpush1.msra.mxu0 0.0
      %3367 = vmatprep.subr.mxu0 0.0
      %3368 = vmatpush1.msra.mxu0 0.0
      %3369 = vmatprep.subr.mxu0 0.0
      %3370 = vmatpush1.msra.mxu0 %v3335
      %3371 = vmatprep.subr.mxu0 0.0
      %3372 = vmatpush1.msra.mxu0 %v3334
      %3373 = vmatprep.subr.mxu0 0.0
      %3374 = vmatpush1.msra.mxu0 %v3333
      %3375 = vmatprep.subr.mxu0 0.0
      %3376 = vmatpush1.msra.mxu0 %v3332
      %3377 = vmatprep.subr.mxu0 0.0
      %3378 = vmatpush2.msra.mxu0 0.0
      %3379 = vmatprep.subr.mxu0 0.0
      %3380 = vmatpush2.msra.mxu0 0.0
      %3381 = vmatprep.subr.mxu0 0.0
      %3382 = vmatpush2.msra.mxu0 0.0
      %3383 = vmatprep.subr.mxu0 0.0
      %3384 = vmatpush2.msra.mxu0 0.0
      %3385 = vmatprep.subr.mxu0 0.0
      %3386 = vmatpush2.msra.mxu0 0.0
      %3387 = vmatprep.subr.mxu0 0.0
      %3388 = vmatpush2.msra.mxu0 0.0
      %3389 = vmatprep.subr.mxu0 0.0
      %3390 = vmatpush2.msra.mxu0 0.0
      %3391 = vmatprep.subr.mxu0 0.0
      %3392 = vmatpush2.msra.mxu0 0.0
      %3393 = vmatprep.subr.mxu0 0.0
      %3394 = vmatpush2.msra.mxu0 0.0
      %3395 = vmatprep.subr.mxu0 0.0
      %3396 = vmatpush2.msra.mxu0 0.0
      %3397 = vmatprep.subr.mxu0 0.0
      %3398 = vmatpush2.msra.mxu0 0.0
      %3399 = vmatprep.subr.mxu0 0.0
      %3400 = vmatpush2.msra.mxu0 0.0
      %3401 = vmatprep.subr.mxu0 0.0
      %3402 = vmatpush2.msra.mxu0 0.0
      %3403 = vmatprep.subr.mxu0 0.0
      %3404 = vmatpush2.msra.mxu0 0.0
      %3405 = vmatprep.subr.mxu0 0.0
      %3406 = vmatpush2.msra.mxu0 0.0
      %3407 = vmatprep.subr.mxu0 0.0
      %3408 = vmatpush2.msra.mxu0 0.0
      %3409 = vmatprep.mubr.f32.mxu0 0.0
      %3410 = vmatmul.mubr.f32.gmra.mxu0 %v3337
      %v3411 = vpop.f32.mrf.mxu0
      %v3412 = vadd.f32 0.0, %v3411
      %v3413 = vpop.f32.mrf.mxu0
      %3414 = vmatprep.mubr.f32.mxu0 0.0
      %3415 = vmatmul.mubr.f32.gmra.mxu0 %v3340
      %v3416 = vpop.f32.mrf.mxu0
      %v3417 = vadd.f32 0.0, %v3416
      %v3418 = vpop.f32.mrf.mxu0
      %3419 = vmatprep.mubr.f32.mxu0 0.0
      %3420 = vmatmul.mubr.f32.gmra.mxu0 %v3343
      %v3421 = vpop.f32.mrf.mxu0
      %v3422 = vadd.f32 0.0, %v3421
      %v3423 = vpop.f32.mrf.mxu0
      %3424 = vdwg.mxu0
      %v3425 = vadd.f32 %v3273, %v3412
      %v3426 = vadd.f32 %v3274, %v3417
      %v3427 = vadd.f32 %v3275, %v3422
      %s3428 = scalar_lea.vmem %s2, 19
      %v3429 = vld [vmem:[%s3428] sm:$0x1]
      %v3431 = vlaneseq
      %v3432 = vshrl.u32 %v3431, 7
      %v3433 = vsub.s32 0, %v3432
      %v3434 = vrot.slane %v3429, %v3433
      %v3436 = vadd.f32 %v3425, %v3434
      %v3437 = vadd.f32 %v3426, %v3434
      %v3438 = vadd.f32 %v3427, %v3434
      %v3439 = vsel %vm1135, %v2535, %v3436
      %v3440 = vsel %vm2642, %v2536, %v3437
      %v3441 = vsel %vm2643, %v2537, %v3438
      %v3442 = vadd.f32 %v3439, %v2464
      %v3443 = vadd.f32 %v3440, %v2469
      %v3444 = vadd.f32 %v3441, %v2474
      %v3445 = vsel %vm361, %v3442, 0.0
      %3446 = vadd.xlane.f32.xlu0 %v3445
      %v3447 = vpop.xlane.xlu0 %3446
      %v3448 = vsel %vm361, %v3443, 0.0
      %3449 = vadd.xlane.f32.xlu0 %v3448
      %v3450 = vpop.xlane.xlu0 %3449
      %v3451 = vsel %vm368, %v3444, 0.0
      %3452 = vadd.xlane.f32.xlu0 %v3451
      %v3453 = vpop.xlane.xlu0 %3452
      %v3454 = vmul.f32 %v3447, %v372
      %v3455 = vmul.f32 %v3450, %v372
      %v3456 = vmul.f32 %v3453, %v372
      %v3457 = vsub.f32 %v3442, %v3454
      %v3458 = vsub.f32 %v3443, %v3455
      %v3459 = vsub.f32 %v3444, %v3456
      %v3460 = vmul.f32 %v3457, %v3457
      %v3461 = vmul.f32 %v3458, %v3458
      %v3462 = vmul.f32 %v3459, %v3459
      %v3463 = vsel %vm361, %v3460, 0.0
      %3464 = vadd.xlane.f32.xlu0 %v3463
      %v3465 = vpop.xlane.xlu0 %3464
      %v3466 = vsel %vm361, %v3461, 0.0
      %3467 = vadd.xlane.f32.xlu0 %v3466
      %v3468 = vpop.xlane.xlu0 %3467
      %v3469 = vsel %vm368, %v3462, 0.0
      %3470 = vadd.xlane.f32.xlu0 %v3469
      %v3471 = vpop.xlane.xlu0 %3470
      %v3472 = vmul.f32 %v3465, %v372
      %v3473 = vmul.f32 %v3468, %v372
      %v3474 = vmul.f32 %v3471, %v372
      %v3475 = vadd.f32 %v3472, 1e-05
      %v3476 = vadd.f32 %v3473, 1e-05
      %v3477 = vadd.f32 %v3474, 1e-05
      %v3478 = vrsqrt.pop %v3475
      %v3479 = vrsqrt.pop %v3476
      %v3480 = vrsqrt.pop %v3477
      %v3481 = vmul.f32 %v3457, %v3478
      %v3482 = vmul.f32 %v3458, %v3479
      %v3483 = vmul.f32 %v3459, %v3480
      %s3484 = scalar_lea.vmem %s2, 4
      %v3485 = vld [vmem:[%s3484] sm:$0x1]
      %v3487 = vlaneseq
      %v3488 = vshrl.u32 %v3487, 7
      %v3489 = vsub.s32 0, %v3488
      %v3490 = vrot.slane %v3485, %v3489
      %v3492 = vmul.f32 %v3481, %v3490
      %v3493 = vmul.f32 %v3482, %v3490
      %v3494 = vmul.f32 %v3483, %v3490
      %s3495 = scalar_lea.vmem %s2, 5
      %v3496 = vld [vmem:[%s3495] sm:$0x1]
      %v3498 = vlaneseq
      %v3499 = vshrl.u32 %v3498, 7
      %v3500 = vsub.s32 0, %v3499
      %v3501 = vrot.slane %v3496, %v3500
      %v3503 = vadd.f32 %v3492, %v3501
      %v3504 = vadd.f32 %v3493, %v3501
      %v3505 = vadd.f32 %v3494, %v3501
      %s3506 = scalar_lea.vmem %s1, 192
      %v3507 = vld [vmem:[%s3506] sm:$0xff]
      %v3508 = vld [vmem:[%s3506 + $0x8] sm:$0xff]
      %v3509 = vld [vmem:[%s3506 + $0x10] sm:$0xff]
      %v3510 = vld [vmem:[%s3506 + $0x18] sm:$0xff]
      %s3511 = scalar_lea.vmem %s2, 20
      %v3512 = vld [vmem:[%s3511] sm:$0x1]
      %v3514 = vlaneseq
      %v3515 = vshrl.u32 %v3514, 7
      %v3516 = vsub.s32 0, %v3515
      %v3517 = vrot.slane %v3512, %v3516
      %v3520 = vsel %vm361, %v3503, 0
      %v3523 = vsel %vm361, %v3504, 0
      %v3526 = vsel %vm361, %v3505, 0
      %3528 = vmatprep.subr.mxu0 0.0
      %3529 = vmatpush1.msra.mxu0 0.0
      %3530 = vmatprep.subr.mxu0 0.0
      %3531 = vmatpush1.msra.mxu0 0.0
      %3532 = vmatprep.subr.mxu0 0.0
      %3533 = vmatpush1.msra.mxu0 0.0
      %3534 = vmatprep.subr.mxu0 0.0
      %3535 = vmatpush1.msra.mxu0 0.0
      %3536 = vmatprep.subr.mxu0 0.0
      %3537 = vmatpush1.msra.mxu0 0.0
      %3538 = vmatprep.subr.mxu0 0.0
      %3539 = vmatpush1.msra.mxu0 0.0
      %3540 = vmatprep.subr.mxu0 0.0
      %3541 = vmatpush1.msra.mxu0 0.0
      %3542 = vmatprep.subr.mxu0 0.0
      %3543 = vmatpush1.msra.mxu0 0.0
      %3544 = vmatprep.subr.mxu0 0.0
      %3545 = vmatpush1.msra.mxu0 0.0
      %3546 = vmatprep.subr.mxu0 0.0
      %3547 = vmatpush1.msra.mxu0 0.0
      %3548 = vmatprep.subr.mxu0 0.0
      %3549 = vmatpush1.msra.mxu0 0.0
      %3550 = vmatprep.subr.mxu0 0.0
      %3551 = vmatpush1.msra.mxu0 0.0
      %3552 = vmatprep.subr.mxu0 0.0
      %3553 = vmatpush1.msra.mxu0 %v3510
      %3554 = vmatprep.subr.mxu0 0.0
      %3555 = vmatpush1.msra.mxu0 %v3509
      %3556 = vmatprep.subr.mxu0 0.0
      %3557 = vmatpush1.msra.mxu0 %v3508
      %3558 = vmatprep.subr.mxu0 0.0
      %3559 = vmatpush1.msra.mxu0 %v3507
      %3560 = vmatprep.subr.mxu0 0.0
      %3561 = vmatpush2.msra.mxu0 0.0
      %3562 = vmatprep.subr.mxu0 0.0
      %3563 = vmatpush2.msra.mxu0 0.0
      %3564 = vmatprep.subr.mxu0 0.0
      %3565 = vmatpush2.msra.mxu0 0.0
      %3566 = vmatprep.subr.mxu0 0.0
      %3567 = vmatpush2.msra.mxu0 0.0
      %3568 = vmatprep.subr.mxu0 0.0
      %3569 = vmatpush2.msra.mxu0 0.0
      %3570 = vmatprep.subr.mxu0 0.0
      %3571 = vmatpush2.msra.mxu0 0.0
      %3572 = vmatprep.subr.mxu0 0.0
      %3573 = vmatpush2.msra.mxu0 0.0
      %3574 = vmatprep.subr.mxu0 0.0
      %3575 = vmatpush2.msra.mxu0 0.0
      %3576 = vmatprep.subr.mxu0 0.0
      %3577 = vmatpush2.msra.mxu0 0.0
      %3578 = vmatprep.subr.mxu0 0.0
      %3579 = vmatpush2.msra.mxu0 0.0
      %3580 = vmatprep.subr.mxu0 0.0
      %3581 = vmatpush2.msra.mxu0 0.0
      %3582 = vmatprep.subr.mxu0 0.0
      %3583 = vmatpush2.msra.mxu0 0.0
      %3584 = vmatprep.subr.mxu0 0.0
      %3585 = vmatpush2.msra.mxu0 0.0
      %3586 = vmatprep.subr.mxu0 0.0
      %3587 = vmatpush2.msra.mxu0 0.0
      %3588 = vmatprep.subr.mxu0 0.0
      %3589 = vmatpush2.msra.mxu0 0.0
      %3590 = vmatprep.subr.mxu0 0.0
      %3591 = vmatpush2.msra.mxu0 0.0
      %3592 = vmatprep.mubr.f32.mxu0 0.0
      %3593 = vmatmul.mubr.f32.gmra.mxu0 %v3520
      %v3594 = vpop.f32.mrf.mxu0
      %v3595 = vadd.f32 %v3517, %v3594
      %v3596 = vpop.f32.mrf.mxu0
      %3597 = vmatprep.mubr.f32.mxu0 0.0
      %3598 = vmatmul.mubr.f32.gmra.mxu0 %v3523
      %v3599 = vpop.f32.mrf.mxu0
      %v3600 = vadd.f32 %v3517, %v3599
      %v3601 = vpop.f32.mrf.mxu0
      %3602 = vmatprep.mubr.f32.mxu0 0.0
      %3603 = vmatmul.mubr.f32.gmra.mxu0 %v3526
      %v3604 = vpop.f32.mrf.mxu0
      %v3605 = vadd.f32 %v3517, %v3604
      %v3606 = vpop.f32.mrf.mxu0
      %3607 = vdwg.mxu0
      %v3608 = vsel %vm1135, 0.0, %v3595
      %v3609 = vsel %vm2642, 0.0, %v3600
      %v3610 = vsel %vm2643, 0.0, %v3605
      %v3612 = vsel %vm431, %v3610, 0
      %3614 = vmatprep.subr.mxu0 0.0
      %3615 = vmatpush1.msra.mxu0 0.0
      %3616 = vmatprep.subr.mxu0 0.0
      %3617 = vmatpush1.msra.mxu0 0.0
      %3618 = vmatprep.subr.mxu0 0.0
      %3619 = vmatpush1.msra.mxu0 0.0
      %3620 = vmatprep.subr.mxu0 0.0
      %3621 = vmatpush1.msra.mxu0 0.0
      %3622 = vmatprep.subr.mxu0 0.0
      %3623 = vmatpush1.msra.mxu0 0.0
      %3624 = vmatprep.subr.mxu0 0.0
      %3625 = vmatpush1.msra.mxu0 0.0
      %3626 = vmatprep.subr.mxu0 0.0
      %3627 = vmatpush1.msra.mxu0 0.0
      %3628 = vmatprep.subr.mxu0 0.0
      %3629 = vmatpush1.msra.mxu0 0.0
      %3630 = vmatprep.subr.mxu0 0.0
      %3631 = vmatpush1.msra.mxu0 0.0
      %3632 = vmatprep.subr.mxu0 0.0
      %3633 = vmatpush1.msra.mxu0 0.0
      %3634 = vmatprep.subr.mxu0 0.0
      %3635 = vmatpush1.msra.mxu0 0.0
      %3636 = vmatprep.subr.mxu0 0.0
      %3637 = vmatpush1.msra.mxu0 0.0
      %3638 = vmatprep.subr.mxu0 0.0
      %3639 = vmatpush1.msra.mxu0 0.0
      %3640 = vmatprep.subr.mxu0 0.0
      %3641 = vmatpush1.msra.mxu0 %v3612
      %3642 = vmatprep.subr.mxu0 0.0
      %3643 = vmatpush1.msra.mxu0 %v3609
      %3644 = vmatprep.subr.mxu0 0.0
      %3645 = vmatpush1.msra.mxu0 %v3608
      %3646 = vmatprep.subr.mxu0 0.0
      %3647 = vmatpush2.msra.mxu0 0.0
      %3648 = vmatprep.subr.mxu0 0.0
      %3649 = vmatpush2.msra.mxu0 0.0
      %3650 = vmatprep.subr.mxu0 0.0
      %3651 = vmatpush2.msra.mxu0 0.0
      %3652 = vmatprep.subr.mxu0 0.0
      %3653 = vmatpush2.msra.mxu0 0.0
      %3654 = vmatprep.subr.mxu0 0.0
      %3655 = vmatpush2.msra.mxu0 0.0
      %3656 = vmatprep.subr.mxu0 0.0
      %3657 = vmatpush2.msra.mxu0 0.0
      %3658 = vmatprep.subr.mxu0 0.0
      %3659 = vmatpush2.msra.mxu0 0.0
      %3660 = vmatprep.subr.mxu0 0.0
      %3661 = vmatpush2.msra.mxu0 0.0
      %3662 = vmatprep.subr.mxu0 0.0
      %3663 = vmatpush2.msra.mxu0 0.0
      %3664 = vmatprep.subr.mxu0 0.0
      %3665 = vmatpush2.msra.mxu0 0.0
      %3666 = vmatprep.subr.mxu0 0.0
      %3667 = vmatpush2.msra.mxu0 0.0
      %3668 = vmatprep.subr.mxu0 0.0
      %3669 = vmatpush2.msra.mxu0 0.0
      %3670 = vmatprep.subr.mxu0 0.0
      %3671 = vmatpush2.msra.mxu0 0.0
      %3672 = vmatprep.subr.mxu0 0.0
      %3673 = vmatpush2.msra.mxu0 0.0
      %3674 = vmatprep.subr.mxu0 0.0
      %3675 = vmatpush2.msra.mxu0 0.0
      %3676 = vmatprep.subr.mxu0 0.0
      %3677 = vmatpush2.msra.mxu0 0.0
      %3678 = vmatprep.mubr.f32.mxu0 0.0
      %3679 = vmatmul.mubr.f32.gmra.mxu0 %v2648
      %v3680 = vpop.f32.mrf.mxu0
      %v3681 = vadd.f32 0.0, %v3680
      %v3682 = vpop.f32.mrf.mxu0
      %3683 = vmatprep.mubr.f32.mxu0 0.0
      %3684 = vmatmul.mubr.f32.gmra.mxu0 %v2651
      %v3685 = vpop.f32.mrf.mxu0
      %v3686 = vadd.f32 0.0, %v3685
      %v3687 = vpop.f32.mrf.mxu0
      %3688 = vmatprep.mubr.f32.mxu0 0.0
      %3689 = vmatmul.mubr.f32.gmra.mxu0 %v2654
      %v3690 = vpop.f32.mrf.mxu0
      %v3691 = vadd.f32 0.0, %v3690
      %v3692 = vpop.f32.mrf.mxu0
      %3693 = vdwg.mxu0
      %3694 = vmatprep.subr.mxu0 0.0
      %3695 = vmatpush1.msra.mxu0 0.0
      %3696 = vmatprep.subr.mxu0 0.0
      %3697 = vmatpush1.msra.mxu0 0.0
      %3698 = vmatprep.subr.mxu0 0.0
      %3699 = vmatpush1.msra.mxu0 0.0
      %3700 = vmatprep.subr.mxu0 0.0
      %3701 = vmatpush1.msra.mxu0 0.0
      %3702 = vmatprep.subr.mxu0 0.0
      %3703 = vmatpush1.msra.mxu0 0.0
      %3704 = vmatprep.subr.mxu0 0.0
      %3705 = vmatpush1.msra.mxu0 0.0
      %3706 = vmatprep.subr.mxu0 0.0
      %3707 = vmatpush1.msra.mxu0 0.0
      %3708 = vmatprep.subr.mxu0 0.0
      %3709 = vmatpush1.msra.mxu0 0.0
      %3710 = vmatprep.subr.mxu0 0.0
      %3711 = vmatpush1.msra.mxu0 0.0
      %3712 = vmatprep.subr.mxu0 0.0
      %3713 = vmatpush1.msra.mxu0 0.0
      %3714 = vmatprep.subr.mxu0 0.0
      %3715 = vmatpush1.msra.mxu0 0.0
      %3716 = vmatprep.subr.mxu0 0.0
      %3717 = vmatpush1.msra.mxu0 0.0
      %3718 = vmatprep.subr.mxu0 0.0
      %3719 = vmatpush1.msra.mxu0 0.0
      %3720 = vmatprep.subr.mxu0 0.0
      %3721 = vmatpush1.msra.mxu0 %v3612
      %3722 = vmatprep.subr.mxu0 0.0
      %3723 = vmatpush1.msra.mxu0 %v3609
      %3724 = vmatprep.subr.mxu0 0.0
      %3725 = vmatpush1.msra.mxu0 %v3608
      %3726 = vmatprep.subr.mxu0 0.0
      %3727 = vmatpush2.msra.mxu0 0.0
      %3728 = vmatprep.subr.mxu0 0.0
      %3729 = vmatpush2.msra.mxu0 0.0
      %3730 = vmatprep.subr.mxu0 0.0
      %3731 = vmatpush2.msra.mxu0 0.0
      %3732 = vmatprep.subr.mxu0 0.0
      %3733 = vmatpush2.msra.mxu0 0.0
      %3734 = vmatprep.subr.mxu0 0.0
      %3735 = vmatpush2.msra.mxu0 0.0
      %3736 = vmatprep.subr.mxu0 0.0
      %3737 = vmatpush2.msra.mxu0 0.0
      %3738 = vmatprep.subr.mxu0 0.0
      %3739 = vmatpush2.msra.mxu0 0.0
      %3740 = vmatprep.subr.mxu0 0.0
      %3741 = vmatpush2.msra.mxu0 0.0
      %3742 = vmatprep.subr.mxu0 0.0
      %3743 = vmatpush2.msra.mxu0 0.0
      %3744 = vmatprep.subr.mxu0 0.0
      %3745 = vmatpush2.msra.mxu0 0.0
      %3746 = vmatprep.subr.mxu0 0.0
      %3747 = vmatpush2.msra.mxu0 0.0
      %3748 = vmatprep.subr.mxu0 0.0
      %3749 = vmatpush2.msra.mxu0 0.0
      %3750 = vmatprep.subr.mxu0 0.0
      %3751 = vmatpush2.msra.mxu0 0.0
      %3752 = vmatprep.subr.mxu0 0.0
      %3753 = vmatpush2.msra.mxu0 0.0
      %3754 = vmatprep.subr.mxu0 0.0
      %3755 = vmatpush2.msra.mxu0 0.0
      %3756 = vmatprep.subr.mxu0 0.0
      %3757 = vmatpush2.msra.mxu0 0.0
      %3758 = vmatprep.mubr.f32.mxu0 0.0
      %3759 = vmatmul.mubr.f32.gmra.mxu0 %v2740
      %v3760 = vpop.f32.mrf.mxu0
      %v3761 = vadd.f32 0.0, %v3760
      %v3762 = vpop.f32.mrf.mxu0
      %3763 = vmatprep.mubr.f32.mxu0 0.0
      %3764 = vmatmul.mubr.f32.gmra.mxu0 %v2743
      %v3765 = vpop.f32.mrf.mxu0
      %v3766 = vadd.f32 0.0, %v3765
      %v3767 = vpop.f32.mrf.mxu0
      %3768 = vmatprep.mubr.f32.mxu0 0.0
      %3769 = vmatmul.mubr.f32.gmra.mxu0 %v2746
      %v3770 = vpop.f32.mrf.mxu0
      %v3771 = vadd.f32 0.0, %v3770
      %v3772 = vpop.f32.mrf.mxu0
      %3773 = vdwg.mxu0
      %s3774 = scalar_lea.vmem %s4, 16
      %v3775 = vld [vmem:[%s3774] sm:$0x7]
      %s3776 = scalar_lea.vmem %s5, 4
      %v3777 = vld [vmem:[%s3776] sm:$0x1]
      %v3778 = vlaneseq
      %v3779 = vshrl.u32 %v3778, 7
      %v3780 = vsub.s32 0, %v3779
      %v3781 = vrot.slane %v3775, %v3780
      %v3782 = vmul.f32 %v3781, %v3681
      %v3783 = vmul.f32 %v3781, %v3686
      %v3784 = vmul.f32 %v3781, %v3691
      %v3786 = vlaneseq
      %v3787 = vshrl.u32 %v3786, 7
      %v3788 = vsub.s32 0, %v3787
      %v3789 = vrot.slane %v3777, %v3788
      %v3791 = vadd.f32 %v3789, %v3782
      %v3792 = vadd.f32 %v3789, %v3783
      %v3793 = vadd.f32 %v3789, %v3784
      %v3794 = vlaneseq
      %v3795 = vshrl.u32 %v3794, 7
      %v3796 = vsub.s32 1, %v3795
      %v3797 = vrot.slane %v3775, %v3796
      %v3798 = vmul.f32 %v3797, %v3608
      %v3799 = vmul.f32 %v3797, %v3609
      %v3800 = vmul.f32 %v3797, %v3610
      %v3801 = vadd.f32 %v3791, %v3798
      %v3802 = vadd.f32 %v3792, %v3799
      %v3803 = vadd.f32 %v3793, %v3800
      %v3804 = vlaneseq
      %v3805 = vshrl.u32 %v3804, 7
      %v3806 = vsub.s32 2, %v3805
      %v3807 = vrot.slane %v3775, %v3806
      %v3808 = vmul.f32 %v3807, %v3761
      %v3809 = vmul.f32 %v3807, %v3766
      %v3810 = vmul.f32 %v3807, %v3771
      %v3811 = vadd.f32 %v3801, %v3808
      %v3812 = vadd.f32 %v3802, %v3809
      %v3813 = vadd.f32 %v3803, %v3810
      %v3814 = vmul.f32 %v3811, 0.5
      %v3815 = vmul.f32 %v3812, 0.5
      %v3816 = vmul.f32 %v3813, 0.5
      %v3817 = vmul.f32 %v3811, 0.70710677
      %v3818 = vmul.f32 %v3812, 0.70710677
      %v3819 = vmul.f32 %v3813, 0.70710677
      %v3820 = verf.f32.pop %v3817
      %v3821 = verf.f32.pop %v3818
      %v3822 = verf.f32.pop %v3819
      %v3823 = vadd.f32 %v3820, 1.0
      %v3824 = vadd.f32 %v3821, 1.0
      %v3825 = vadd.f32 %v3822, 1.0
      %v3826 = vmul.f32 %v3814, %v3823
      %v3827 = vmul.f32 %v3815, %v3824
      %v3828 = vmul.f32 %v3816, %v3825
      %s3829 = scalar_lea.vmem %s1, 416
      %v3830 = vld [vmem:[%s3829] sm:$0xff]
      %v3831 = vld [vmem:[%s3829 + $0x8] sm:$0xff]
      %v3832 = vld [vmem:[%s3829 + $0x10] sm:$0xff]
      %v3833 = vld [vmem:[%s3829 + $0x18] sm:$0xff]
      %s3834 = scalar_lea.vmem %s4, 20
      %v3835 = vld [vmem:[%s3834] sm:$0x7]
      %s3836 = scalar_lea.vmem %s5, 5
      %v3837 = vld [vmem:[%s3836] sm:$0x1]
      %v3838 = vlaneseq
      %v3839 = vshrl.u32 %v3838, 7
      %v3840 = vsub.s32 0, %v3839
      %v3841 = vrot.slane %v3835, %v3840
      %v3842 = vmul.f32 %v3841, %v3681
      %v3843 = vmul.f32 %v3841, %v3686
      %v3844 = vmul.f32 %v3841, %v3691
      %v3846 = vlaneseq
      %v3847 = vshrl.u32 %v3846, 7
      %v3848 = vsub.s32 0, %v3847
      %v3849 = vrot.slane %v3837, %v3848
      %v3851 = vadd.f32 %v3849, %v3842
      %v3852 = vadd.f32 %v3849, %v3843
      %v3853 = vadd.f32 %v3849, %v3844
      %v3854 = vlaneseq
      %v3855 = vshrl.u32 %v3854, 7
      %v3856 = vsub.s32 1, %v3855
      %v3857 = vrot.slane %v3835, %v3856
      %v3858 = vmul.f32 %v3857, %v3608
      %v3859 = vmul.f32 %v3857, %v3609
      %v3860 = vmul.f32 %v3857, %v3610
      %v3861 = vadd.f32 %v3851, %v3858
      %v3862 = vadd.f32 %v3852, %v3859
      %v3863 = vadd.f32 %v3853, %v3860
      %v3864 = vlaneseq
      %v3865 = vshrl.u32 %v3864, 7
      %v3866 = vsub.s32 2, %v3865
      %v3867 = vrot.slane %v3835, %v3866
      %v3868 = vmul.f32 %v3867, %v3761
      %v3869 = vmul.f32 %v3867, %v3766
      %v3870 = vmul.f32 %v3867, %v3771
      %v3871 = vadd.f32 %v3861, %v3868
      %v3872 = vadd.f32 %v3862, %v3869
      %v3873 = vadd.f32 %v3863, %v3870
      %v3874 = vmul.f32 %v3871, 0.5
      %v3875 = vmul.f32 %v3872, 0.5
      %v3876 = vmul.f32 %v3873, 0.5
      %v3877 = vmul.f32 %v3871, 0.70710677
      %v3878 = vmul.f32 %v3872, 0.70710677
      %v3879 = vmul.f32 %v3873, 0.70710677
      %v3880 = verf.f32.pop %v3877
      %v3881 = verf.f32.pop %v3878
      %v3882 = verf.f32.pop %v3879
      %v3883 = vadd.f32 %v3880, 1.0
      %v3884 = vadd.f32 %v3881, 1.0
      %v3885 = vadd.f32 %v3882, 1.0
      %v3886 = vmul.f32 %v3874, %v3883
      %v3887 = vmul.f32 %v3875, %v3884
      %v3888 = vmul.f32 %v3876, %v3885
      %s3889 = scalar_lea.vmem %s1, 448
      %v3890 = vld [vmem:[%s3889] sm:$0xff]
      %v3891 = vld [vmem:[%s3889 + $0x8] sm:$0xff]
      %v3892 = vld [vmem:[%s3889 + $0x10] sm:$0xff]
      %v3893 = vld [vmem:[%s3889 + $0x18] sm:$0xff]
      %v3895 = vsel %vm361, %v3886, 0
      %v3898 = vsel %vm361, %v3887, 0
      %v3901 = vsel %vm361, %v3888, 0
      %3903 = vmatprep.subr.mxu0 0.0
      %3904 = vmatpush1.msra.mxu0 0.0
      %3905 = vmatprep.subr.mxu0 0.0
      %3906 = vmatpush1.msra.mxu0 0.0
      %3907 = vmatprep.subr.mxu0 0.0
      %3908 = vmatpush1.msra.mxu0 0.0
      %3909 = vmatprep.subr.mxu0 0.0
      %3910 = vmatpush1.msra.mxu0 0.0
      %3911 = vmatprep.subr.mxu0 0.0
      %3912 = vmatpush1.msra.mxu0 0.0
      %3913 = vmatprep.subr.mxu0 0.0
      %3914 = vmatpush1.msra.mxu0 0.0
      %3915 = vmatprep.subr.mxu0 0.0
      %3916 = vmatpush1.msra.mxu0 0.0
      %3917 = vmatprep.subr.mxu0 0.0
      %3918 = vmatpush1.msra.mxu0 0.0
      %3919 = vmatprep.subr.mxu0 0.0
      %3920 = vmatpush1.msra.mxu0 0.0
      %3921 = vmatprep.subr.mxu0 0.0
      %3922 = vmatpush1.msra.mxu0 0.0
      %3923 = vmatprep.subr.mxu0 0.0
      %3924 = vmatpush1.msra.mxu0 0.0
      %3925 = vmatprep.subr.mxu0 0.0
      %3926 = vmatpush1.msra.mxu0 0.0
      %3927 = vmatprep.subr.mxu0 0.0
      %3928 = vmatpush1.msra.mxu0 %v3893
      %3929 = vmatprep.subr.mxu0 0.0
      %3930 = vmatpush1.msra.mxu0 %v3892
      %3931 = vmatprep.subr.mxu0 0.0
      %3932 = vmatpush1.msra.mxu0 %v3891
      %3933 = vmatprep.subr.mxu0 0.0
      %3934 = vmatpush1.msra.mxu0 %v3890
      %3935 = vmatprep.subr.mxu0 0.0
      %3936 = vmatpush2.msra.mxu0 0.0
      %3937 = vmatprep.subr.mxu0 0.0
      %3938 = vmatpush2.msra.mxu0 0.0
      %3939 = vmatprep.subr.mxu0 0.0
      %3940 = vmatpush2.msra.mxu0 0.0
      %3941 = vmatprep.subr.mxu0 0.0
      %3942 = vmatpush2.msra.mxu0 0.0
      %3943 = vmatprep.subr.mxu0 0.0
      %3944 = vmatpush2.msra.mxu0 0.0
      %3945 = vmatprep.subr.mxu0 0.0
      %3946 = vmatpush2.msra.mxu0 0.0
      %3947 = vmatprep.subr.mxu0 0.0
      %3948 = vmatpush2.msra.mxu0 0.0
      %3949 = vmatprep.subr.mxu0 0.0
      %3950 = vmatpush2.msra.mxu0 0.0
      %3951 = vmatprep.subr.mxu0 0.0
      %3952 = vmatpush2.msra.mxu0 0.0
      %3953 = vmatprep.subr.mxu0 0.0
      %3954 = vmatpush2.msra.mxu0 0.0
      %3955 = vmatprep.subr.mxu0 0.0
      %3956 = vmatpush2.msra.mxu0 0.0
      %3957 = vmatprep.subr.mxu0 0.0
      %3958 = vmatpush2.msra.mxu0 0.0
      %3959 = vmatprep.subr.mxu0 0.0
      %3960 = vmatpush2.msra.mxu0 0.0
      %3961 = vmatprep.subr.mxu0 0.0
      %3962 = vmatpush2.msra.mxu0 0.0
      %3963 = vmatprep.subr.mxu0 0.0
      %3964 = vmatpush2.msra.mxu0 0.0
      %3965 = vmatprep.subr.mxu0 0.0
      %3966 = vmatpush2.msra.mxu0 0.0
      %3967 = vmatprep.mubr.f32.mxu0 0.0
      %3968 = vmatmul.mubr.f32.gmra.mxu0 %v3895
      %v3969 = vpop.f32.mrf.mxu0
      %v3970 = vadd.f32 0.0, %v3969
      %v3971 = vpop.f32.mrf.mxu0
      %3972 = vmatprep.mubr.f32.mxu0 0.0
      %3973 = vmatmul.mubr.f32.gmra.mxu0 %v3898
      %v3974 = vpop.f32.mrf.mxu0
      %v3975 = vadd.f32 0.0, %v3974
      %v3976 = vpop.f32.mrf.mxu0
      %3977 = vmatprep.mubr.f32.mxu0 0.0
      %3978 = vmatmul.mubr.f32.gmra.mxu0 %v3901
      %v3979 = vpop.f32.mrf.mxu0
      %v3980 = vadd.f32 0.0, %v3979
      %v3981 = vpop.f32.mrf.mxu0
      %3982 = vdwg.mxu0
      %v3984 = vsel %vm361, %v3826, 0
      %v3987 = vsel %vm361, %v3827, 0
      %v3990 = vsel %vm361, %v3828, 0
      %3992 = vmatprep.subr.mxu0 0.0
      %3993 = vmatpush1.msra.mxu0 0.0
      %3994 = vmatprep.subr.mxu0 0.0
      %3995 = vmatpush1.msra.mxu0 0.0
      %3996 = vmatprep.subr.mxu0 0.0
      %3997 = vmatpush1.msra.mxu0 0.0
      %3998 = vmatprep.subr.mxu0 0.0
      %3999 = vmatpush1.msra.mxu0 0.0
      %4000 = vmatprep.subr.mxu0 0.0
      %4001 = vmatpush1.msra.mxu0 0.0
      %4002 = vmatprep.subr.mxu0 0.0
      %4003 = vmatpush1.msra.mxu0 0.0
      %4004 = vmatprep.subr.mxu0 0.0
      %4005 = vmatpush1.msra.mxu0 0.0
      %4006 = vmatprep.subr.mxu0 0.0
      %4007 = vmatpush1.msra.mxu0 0.0
      %4008 = vmatprep.subr.mxu0 0.0
      %4009 = vmatpush1.msra.mxu0 0.0
      %4010 = vmatprep.subr.mxu0 0.0
      %4011 = vmatpush1.msra.mxu0 0.0
      %4012 = vmatprep.subr.mxu0 0.0
      %4013 = vmatpush1.msra.mxu0 0.0
      %4014 = vmatprep.subr.mxu0 0.0
      %4015 = vmatpush1.msra.mxu0 0.0
      %4016 = vmatprep.subr.mxu0 0.0
      %4017 = vmatpush1.msra.mxu0 %v3833
      %4018 = vmatprep.subr.mxu0 0.0
      %4019 = vmatpush1.msra.mxu0 %v3832
      %4020 = vmatprep.subr.mxu0 0.0
      %4021 = vmatpush1.msra.mxu0 %v3831
      %4022 = vmatprep.subr.mxu0 0.0
      %4023 = vmatpush1.msra.mxu0 %v3830
      %4024 = vmatprep.subr.mxu0 0.0
      %4025 = vmatpush2.msra.mxu0 0.0
      %4026 = vmatprep.subr.mxu0 0.0
      %4027 = vmatpush2.msra.mxu0 0.0
      %4028 = vmatprep.subr.mxu0 0.0
      %4029 = vmatpush2.msra.mxu0 0.0
      %4030 = vmatprep.subr.mxu0 0.0
      %4031 = vmatpush2.msra.mxu0 0.0
      %4032 = vmatprep.subr.mxu0 0.0
      %4033 = vmatpush2.msra.mxu0 0.0
      %4034 = vmatprep.subr.mxu0 0.0
      %4035 = vmatpush2.msra.mxu0 0.0
      %4036 = vmatprep.subr.mxu0 0.0
      %4037 = vmatpush2.msra.mxu0 0.0
      %4038 = vmatprep.subr.mxu0 0.0
      %4039 = vmatpush2.msra.mxu0 0.0
      %4040 = vmatprep.subr.mxu0 0.0
      %4041 = vmatpush2.msra.mxu0 0.0
      %4042 = vmatprep.subr.mxu0 0.0
      %4043 = vmatpush2.msra.mxu0 0.0
      %4044 = vmatprep.subr.mxu0 0.0
      %4045 = vmatpush2.msra.mxu0 0.0
      %4046 = vmatprep.subr.mxu0 0.0
      %4047 = vmatpush2.msra.mxu0 0.0
      %4048 = vmatprep.subr.mxu0 0.0
      %4049 = vmatpush2.msra.mxu0 0.0
      %4050 = vmatprep.subr.mxu0 0.0
      %4051 = vmatpush2.msra.mxu0 0.0
      %4052 = vmatprep.subr.mxu0 0.0
      %4053 = vmatpush2.msra.mxu0 0.0
      %4054 = vmatprep.subr.mxu0 0.0
      %4055 = vmatpush2.msra.mxu0 0.0
      %4056 = vmatprep.mubr.f32.mxu0 0.0
      %4057 = vmatmul.mubr.f32.gmra.mxu0 %v3984
      %v4058 = vpop.f32.mrf.mxu0
      %v4059 = vadd.f32 %v3970, %v4058
      %v4060 = vpop.f32.mrf.mxu0
      %4061 = vmatprep.mubr.f32.mxu0 0.0
      %4062 = vmatmul.mubr.f32.gmra.mxu0 %v3987
      %v4063 = vpop.f32.mrf.mxu0
      %v4064 = vadd.f32 %v3975, %v4063
      %v4065 = vpop.f32.mrf.mxu0
      %4066 = vmatprep.mubr.f32.mxu0 0.0
      %4067 = vmatmul.mubr.f32.gmra.mxu0 %v3990
      %v4068 = vpop.f32.mrf.mxu0
      %v4069 = vadd.f32 %v3980, %v4068
      %v4070 = vpop.f32.mrf.mxu0
      %4071 = vdwg.mxu0
      %s4072 = scalar_lea.vmem %s4, 24
      %v4073 = vld [vmem:[%s4072] sm:$0x7]
      %s4074 = scalar_lea.vmem %s5, 6
      %v4075 = vld [vmem:[%s4074] sm:$0x1]
      %v4076 = vlaneseq
      %v4077 = vshrl.u32 %v4076, 7
      %v4078 = vsub.s32 0, %v4077
      %v4079 = vrot.slane %v4073, %v4078
      %v4080 = vmul.f32 %v4079, %v3681
      %v4081 = vmul.f32 %v4079, %v3686
      %v4082 = vmul.f32 %v4079, %v3691
      %v4084 = vlaneseq
      %v4085 = vshrl.u32 %v4084, 7
      %v4086 = vsub.s32 0, %v4085
      %v4087 = vrot.slane %v4075, %v4086
      %v4089 = vadd.f32 %v4087, %v4080
      %v4090 = vadd.f32 %v4087, %v4081
      %v4091 = vadd.f32 %v4087, %v4082
      %v4092 = vlaneseq
      %v4093 = vshrl.u32 %v4092, 7
      %v4094 = vsub.s32 1, %v4093
      %v4095 = vrot.slane %v4073, %v4094
      %v4096 = vmul.f32 %v4095, %v3608
      %v4097 = vmul.f32 %v4095, %v3609
      %v4098 = vmul.f32 %v4095, %v3610
      %v4099 = vadd.f32 %v4089, %v4096
      %v4100 = vadd.f32 %v4090, %v4097
      %v4101 = vadd.f32 %v4091, %v4098
      %v4102 = vlaneseq
      %v4103 = vshrl.u32 %v4102, 7
      %v4104 = vsub.s32 2, %v4103
      %v4105 = vrot.slane %v4073, %v4104
      %v4106 = vmul.f32 %v4105, %v3761
      %v4107 = vmul.f32 %v4105, %v3766
      %v4108 = vmul.f32 %v4105, %v3771
      %v4109 = vadd.f32 %v4099, %v4106
      %v4110 = vadd.f32 %v4100, %v4107
      %v4111 = vadd.f32 %v4101, %v4108
      %v4112 = vmul.f32 %v4109, 0.5
      %v4113 = vmul.f32 %v4110, 0.5
      %v4114 = vmul.f32 %v4111, 0.5
      %v4115 = vmul.f32 %v4109, 0.70710677
      %v4116 = vmul.f32 %v4110, 0.70710677
      %v4117 = vmul.f32 %v4111, 0.70710677
      %v4118 = verf.f32.pop %v4115
      %v4119 = verf.f32.pop %v4116
      %v4120 = verf.f32.pop %v4117
      %v4121 = vadd.f32 %v4118, 1.0
      %v4122 = vadd.f32 %v4119, 1.0
      %v4123 = vadd.f32 %v4120, 1.0
      %v4124 = vmul.f32 %v4112, %v4121
      %v4125 = vmul.f32 %v4113, %v4122
      %v4126 = vmul.f32 %v4114, %v4123
      %s4127 = scalar_lea.vmem %s1, 480
      %v4128 = vld [vmem:[%s4127] sm:$0xff]
      %v4129 = vld [vmem:[%s4127 + $0x8] sm:$0xff]
      %v4130 = vld [vmem:[%s4127 + $0x10] sm:$0xff]
      %v4131 = vld [vmem:[%s4127 + $0x18] sm:$0xff]
      %v4133 = vsel %vm361, %v4124, 0
      %v4136 = vsel %vm361, %v4125, 0
      %v4139 = vsel %vm361, %v4126, 0
      %4141 = vmatprep.subr.mxu0 0.0
      %4142 = vmatpush1.msra.mxu0 0.0
      %4143 = vmatprep.subr.mxu0 0.0
      %4144 = vmatpush1.msra.mxu0 0.0
      %4145 = vmatprep.subr.mxu0 0.0
      %4146 = vmatpush1.msra.mxu0 0.0
      %4147 = vmatprep.subr.mxu0 0.0
      %4148 = vmatpush1.msra.mxu0 0.0
      %4149 = vmatprep.subr.mxu0 0.0
      %4150 = vmatpush1.msra.mxu0 0.0
      %4151 = vmatprep.subr.mxu0 0.0
      %4152 = vmatpush1.msra.mxu0 0.0
      %4153 = vmatprep.subr.mxu0 0.0
      %4154 = vmatpush1.msra.mxu0 0.0
      %4155 = vmatprep.subr.mxu0 0.0
      %4156 = vmatpush1.msra.mxu0 0.0
      %4157 = vmatprep.subr.mxu0 0.0
      %4158 = vmatpush1.msra.mxu0 0.0
      %4159 = vmatprep.subr.mxu0 0.0
      %4160 = vmatpush1.msra.mxu0 0.0
      %4161 = vmatprep.subr.mxu0 0.0
      %4162 = vmatpush1.msra.mxu0 0.0
      %4163 = vmatprep.subr.mxu0 0.0
      %4164 = vmatpush1.msra.mxu0 0.0
      %4165 = vmatprep.subr.mxu0 0.0
      %4166 = vmatpush1.msra.mxu0 %v4131
      %4167 = vmatprep.subr.mxu0 0.0
      %4168 = vmatpush1.msra.mxu0 %v4130
      %4169 = vmatprep.subr.mxu0 0.0
      %4170 = vmatpush1.msra.mxu0 %v4129
      %4171 = vmatprep.subr.mxu0 0.0
      %4172 = vmatpush1.msra.mxu0 %v4128
      %4173 = vmatprep.subr.mxu0 0.0
      %4174 = vmatpush2.msra.mxu0 0.0
      %4175 = vmatprep.subr.mxu0 0.0
      %4176 = vmatpush2.msra.mxu0 0.0
      %4177 = vmatprep.subr.mxu0 0.0
      %4178 = vmatpush2.msra.mxu0 0.0
      %4179 = vmatprep.subr.mxu0 0.0
      %4180 = vmatpush2.msra.mxu0 0.0
      %4181 = vmatprep.subr.mxu0 0.0
      %4182 = vmatpush2.msra.mxu0 0.0
      %4183 = vmatprep.subr.mxu0 0.0
      %4184 = vmatpush2.msra.mxu0 0.0
      %4185 = vmatprep.subr.mxu0 0.0
      %4186 = vmatpush2.msra.mxu0 0.0
      %4187 = vmatprep.subr.mxu0 0.0
      %4188 = vmatpush2.msra.mxu0 0.0
      %4189 = vmatprep.subr.mxu0 0.0
      %4190 = vmatpush2.msra.mxu0 0.0
      %4191 = vmatprep.subr.mxu0 0.0
      %4192 = vmatpush2.msra.mxu0 0.0
      %4193 = vmatprep.subr.mxu0 0.0
      %4194 = vmatpush2.msra.mxu0 0.0
      %4195 = vmatprep.subr.mxu0 0.0
      %4196 = vmatpush2.msra.mxu0 0.0
      %4197 = vmatprep.subr.mxu0 0.0
      %4198 = vmatpush2.msra.mxu0 0.0
      %4199 = vmatprep.subr.mxu0 0.0
      %4200 = vmatpush2.msra.mxu0 0.0
      %4201 = vmatprep.subr.mxu0 0.0
      %4202 = vmatpush2.msra.mxu0 0.0
      %4203 = vmatprep.subr.mxu0 0.0
      %4204 = vmatpush2.msra.mxu0 0.0
      %4205 = vmatprep.mubr.f32.mxu0 0.0
      %4206 = vmatmul.mubr.f32.gmra.mxu0 %v4133
      %v4207 = vpop.f32.mrf.mxu0
      %v4208 = vadd.f32 0.0, %v4207
      %v4209 = vpop.f32.mrf.mxu0
      %4210 = vmatprep.mubr.f32.mxu0 0.0
      %4211 = vmatmul.mubr.f32.gmra.mxu0 %v4136
      %v4212 = vpop.f32.mrf.mxu0
      %v4213 = vadd.f32 0.0, %v4212
      %v4214 = vpop.f32.mrf.mxu0
      %4215 = vmatprep.mubr.f32.mxu0 0.0
      %4216 = vmatmul.mubr.f32.gmra.mxu0 %v4139
      %v4217 = vpop.f32.mrf.mxu0
      %v4218 = vadd.f32 0.0, %v4217
      %v4219 = vpop.f32.mrf.mxu0
      %4220 = vdwg.mxu0
      %v4221 = vadd.f32 %v4059, %v4208
      %v4222 = vadd.f32 %v4064, %v4213
      %v4223 = vadd.f32 %v4069, %v4218
      %s4224 = scalar_lea.vmem %s4, 28
      %v4225 = vld [vmem:[%s4224] sm:$0x7]
      %s4226 = scalar_lea.vmem %s5, 7
      %v4227 = vld [vmem:[%s4226] sm:$0x1]
      %v4228 = vlaneseq
      %v4229 = vshrl.u32 %v4228, 7
      %v4230 = vsub.s32 0, %v4229
      %v4231 = vrot.slane %v4225, %v4230
      %v4232 = vmul.f32 %v4231, %v3681
      %v4233 = vmul.f32 %v4231, %v3686
      %v4234 = vmul.f32 %v4231, %v3691
      %v4236 = vlaneseq
      %v4237 = vshrl.u32 %v4236, 7
      %v4238 = vsub.s32 0, %v4237
      %v4239 = vrot.slane %v4227, %v4238
      %v4241 = vadd.f32 %v4239, %v4232
      %v4242 = vadd.f32 %v4239, %v4233
      %v4243 = vadd.f32 %v4239, %v4234
      %v4244 = vlaneseq
      %v4245 = vshrl.u32 %v4244, 7
      %v4246 = vsub.s32 1, %v4245
      %v4247 = vrot.slane %v4225, %v4246
      %v4248 = vmul.f32 %v4247, %v3608
      %v4249 = vmul.f32 %v4247, %v3609
      %v4250 = vmul.f32 %v4247, %v3610
      %v4251 = vadd.f32 %v4241, %v4248
      %v4252 = vadd.f32 %v4242, %v4249
      %v4253 = vadd.f32 %v4243, %v4250
      %v4254 = vlaneseq
      %v4255 = vshrl.u32 %v4254, 7
      %v4256 = vsub.s32 2, %v4255
      %v4257 = vrot.slane %v4225, %v4256
      %v4258 = vmul.f32 %v4257, %v3761
      %v4259 = vmul.f32 %v4257, %v3766
      %v4260 = vmul.f32 %v4257, %v3771
      %v4261 = vadd.f32 %v4251, %v4258
      %v4262 = vadd.f32 %v4252, %v4259
      %v4263 = vadd.f32 %v4253, %v4260
      %v4264 = vmul.f32 %v4261, 0.5
      %v4265 = vmul.f32 %v4262, 0.5
      %v4266 = vmul.f32 %v4263, 0.5
      %v4267 = vmul.f32 %v4261, 0.70710677
      %v4268 = vmul.f32 %v4262, 0.70710677
      %v4269 = vmul.f32 %v4263, 0.70710677
      %v4270 = verf.f32.pop %v4267
      %v4271 = verf.f32.pop %v4268
      %v4272 = verf.f32.pop %v4269
      %v4273 = vadd.f32 %v4270, 1.0
      %v4274 = vadd.f32 %v4271, 1.0
      %v4275 = vadd.f32 %v4272, 1.0
      %v4276 = vmul.f32 %v4264, %v4273
      %v4277 = vmul.f32 %v4265, %v4274
      %v4278 = vmul.f32 %v4266, %v4275
      %s4279 = scalar_lea.vmem %s1, 512
      %v4280 = vld [vmem:[%s4279] sm:$0xff]
      %v4281 = vld [vmem:[%s4279 + $0x8] sm:$0xff]
      %v4282 = vld [vmem:[%s4279 + $0x10] sm:$0xff]
      %v4283 = vld [vmem:[%s4279 + $0x18] sm:$0xff]
      %v4285 = vsel %vm361, %v4276, 0
      %v4288 = vsel %vm361, %v4277, 0
      %v4291 = vsel %vm361, %v4278, 0
      %4293 = vmatprep.subr.mxu0 0.0
      %4294 = vmatpush1.msra.mxu0 0.0
      %4295 = vmatprep.subr.mxu0 0.0
      %4296 = vmatpush1.msra.mxu0 0.0
      %4297 = vmatprep.subr.mxu0 0.0
      %4298 = vmatpush1.msra.mxu0 0.0
      %4299 = vmatprep.subr.mxu0 0.0
      %4300 = vmatpush1.msra.mxu0 0.0
      %4301 = vmatprep.subr.mxu0 0.0
      %4302 = vmatpush1.msra.mxu0 0.0
      %4303 = vmatprep.subr.mxu0 0.0
      %4304 = vmatpush1.msra.mxu0 0.0
      %4305 = vmatprep.subr.mxu0 0.0
      %4306 = vmatpush1.msra.mxu0 0.0
      %4307 = vmatprep.subr.mxu0 0.0
      %4308 = vmatpush1.msra.mxu0 0.0
      %4309 = vmatprep.subr.mxu0 0.0
      %4310 = vmatpush1.msra.mxu0 0.0
      %4311 = vmatprep.subr.mxu0 0.0
      %4312 = vmatpush1.msra.mxu0 0.0
      %4313 = vmatprep.subr.mxu0 0.0
      %4314 = vmatpush1.msra.mxu0 0.0
      %4315 = vmatprep.subr.mxu0 0.0
      %4316 = vmatpush1.msra.mxu0 0.0
      %4317 = vmatprep.subr.mxu0 0.0
      %4318 = vmatpush1.msra.mxu0 %v4283
      %4319 = vmatprep.subr.mxu0 0.0
      %4320 = vmatpush1.msra.mxu0 %v4282
      %4321 = vmatprep.subr.mxu0 0.0
      %4322 = vmatpush1.msra.mxu0 %v4281
      %4323 = vmatprep.subr.mxu0 0.0
      %4324 = vmatpush1.msra.mxu0 %v4280
      %4325 = vmatprep.subr.mxu0 0.0
      %4326 = vmatpush2.msra.mxu0 0.0
      %4327 = vmatprep.subr.mxu0 0.0
      %4328 = vmatpush2.msra.mxu0 0.0
      %4329 = vmatprep.subr.mxu0 0.0
      %4330 = vmatpush2.msra.mxu0 0.0
      %4331 = vmatprep.subr.mxu0 0.0
      %4332 = vmatpush2.msra.mxu0 0.0
      %4333 = vmatprep.subr.mxu0 0.0
      %4334 = vmatpush2.msra.mxu0 0.0
      %4335 = vmatprep.subr.mxu0 0.0
      %4336 = vmatpush2.msra.mxu0 0.0
      %4337 = vmatprep.subr.mxu0 0.0
      %4338 = vmatpush2.msra.mxu0 0.0
      %4339 = vmatprep.subr.mxu0 0.0
      %4340 = vmatpush2.msra.mxu0 0.0
      %4341 = vmatprep.subr.mxu0 0.0
      %4342 = vmatpush2.msra.mxu0 0.0
      %4343 = vmatprep.subr.mxu0 0.0
      %4344 = vmatpush2.msra.mxu0 0.0
      %4345 = vmatprep.subr.mxu0 0.0
      %4346 = vmatpush2.msra.mxu0 0.0
      %4347 = vmatprep.subr.mxu0 0.0
      %4348 = vmatpush2.msra.mxu0 0.0
      %4349 = vmatprep.subr.mxu0 0.0
      %4350 = vmatpush2.msra.mxu0 0.0
      %4351 = vmatprep.subr.mxu0 0.0
      %4352 = vmatpush2.msra.mxu0 0.0
      %4353 = vmatprep.subr.mxu0 0.0
      %4354 = vmatpush2.msra.mxu0 0.0
      %4355 = vmatprep.subr.mxu0 0.0
      %4356 = vmatpush2.msra.mxu0 0.0
      %4357 = vmatprep.mubr.f32.mxu0 0.0
      %4358 = vmatmul.mubr.f32.gmra.mxu0 %v4285
      %v4359 = vpop.f32.mrf.mxu0
      %v4360 = vadd.f32 0.0, %v4359
      %v4361 = vpop.f32.mrf.mxu0
      %4362 = vmatprep.mubr.f32.mxu0 0.0
      %4363 = vmatmul.mubr.f32.gmra.mxu0 %v4288
      %v4364 = vpop.f32.mrf.mxu0
      %v4365 = vadd.f32 0.0, %v4364
      %v4366 = vpop.f32.mrf.mxu0
      %4367 = vmatprep.mubr.f32.mxu0 0.0
      %4368 = vmatmul.mubr.f32.gmra.mxu0 %v4291
      %v4369 = vpop.f32.mrf.mxu0
      %v4370 = vadd.f32 0.0, %v4369
      %v4371 = vpop.f32.mrf.mxu0
      %4372 = vdwg.mxu0
      %v4373 = vadd.f32 %v4221, %v4360
      %v4374 = vadd.f32 %v4222, %v4365
      %v4375 = vadd.f32 %v4223, %v4370
      %s4376 = scalar_lea.vmem %s2, 21
      %v4377 = vld [vmem:[%s4376] sm:$0x1]
      %v4379 = vlaneseq
      %v4380 = vshrl.u32 %v4379, 7
      %v4381 = vsub.s32 0, %v4380
      %v4382 = vrot.slane %v4377, %v4381
      %v4384 = vadd.f32 %v4373, %v4382
      %v4385 = vadd.f32 %v4374, %v4382
      %v4386 = vadd.f32 %v4375, %v4382
      %v4387 = vsel %vm1135, %v3503, %v4384
      %v4388 = vsel %vm2642, %v3504, %v4385
      %v4389 = vsel %vm2643, %v3505, %v4386
      %v4390 = vadd.f32 %v4387, %v3442
      %v4391 = vadd.f32 %v4388, %v3443
      %v4392 = vadd.f32 %v4389, %v3444
      %s4393 = scalar_lea.vmem %s2, 6
      %v4394 = vld [vmem:[%s4393] sm:$0x1]
      %v4396 = vlaneseq
      %v4397 = vshrl.u32 %v4396, 7
      %v4398 = vsub.s32 0, %v4397
      %v4399 = vrot.slane %v4394, %v4398
      %v4401 = vmul.f32 %v3481, %v4399
      %v4402 = vmul.f32 %v3482, %v4399
      %v4403 = vmul.f32 %v3483, %v4399
      %s4404 = scalar_lea.vmem %s2, 7
      %v4405 = vld [vmem:[%s4404] sm:$0x1]
      %v4407 = vlaneseq
      %v4408 = vshrl.u32 %v4407, 7
      %v4409 = vsub.s32 0, %v4408
      %v4410 = vrot.slane %v4405, %v4409
      %v4412 = vadd.f32 %v4401, %v4410
      %v4413 = vadd.f32 %v4402, %v4410
      %v4414 = vadd.f32 %v4403, %v4410
      %s4415 = scalar_lea.vmem %s1, 224
      %v4416 = vld [vmem:[%s4415] sm:$0xff]
      %v4417 = vld [vmem:[%s4415 + $0x8] sm:$0xff]
      %v4418 = vld [vmem:[%s4415 + $0x10] sm:$0xff]
      %v4419 = vld [vmem:[%s4415 + $0x18] sm:$0xff]
      %s4420 = scalar_lea.vmem %s2, 22
      %v4421 = vld [vmem:[%s4420] sm:$0x1]
      %v4423 = vlaneseq
      %v4424 = vshrl.u32 %v4423, 7
      %v4425 = vsub.s32 0, %v4424
      %v4426 = vrot.slane %v4421, %v4425
      %v4429 = vsel %vm361, %v4412, 0
      %v4432 = vsel %vm361, %v4413, 0
      %v4435 = vsel %vm361, %v4414, 0
      %4437 = vmatprep.subr.mxu0 0.0
      %4438 = vmatpush1.msra.mxu0 0.0
      %4439 = vmatprep.subr.mxu0 0.0
      %4440 = vmatpush1.msra.mxu0 0.0
      %4441 = vmatprep.subr.mxu0 0.0
      %4442 = vmatpush1.msra.mxu0 0.0
      %4443 = vmatprep.subr.mxu0 0.0
      %4444 = vmatpush1.msra.mxu0 0.0
      %4445 = vmatprep.subr.mxu0 0.0
      %4446 = vmatpush1.msra.mxu0 0.0
      %4447 = vmatprep.subr.mxu0 0.0
      %4448 = vmatpush1.msra.mxu0 0.0
      %4449 = vmatprep.subr.mxu0 0.0
      %4450 = vmatpush1.msra.mxu0 0.0
      %4451 = vmatprep.subr.mxu0 0.0
      %4452 = vmatpush1.msra.mxu0 0.0
      %4453 = vmatprep.subr.mxu0 0.0
      %4454 = vmatpush1.msra.mxu0 0.0
      %4455 = vmatprep.subr.mxu0 0.0
      %4456 = vmatpush1.msra.mxu0 0.0
      %4457 = vmatprep.subr.mxu0 0.0
      %4458 = vmatpush1.msra.mxu0 0.0
      %4459 = vmatprep.subr.mxu0 0.0
      %4460 = vmatpush1.msra.mxu0 0.0
      %4461 = vmatprep.subr.mxu0 0.0
      %4462 = vmatpush1.msra.mxu0 %v4419
      %4463 = vmatprep.subr.mxu0 0.0
      %4464 = vmatpush1.msra.mxu0 %v4418
      %4465 = vmatprep.subr.mxu0 0.0
      %4466 = vmatpush1.msra.mxu0 %v4417
      %4467 = vmatprep.subr.mxu0 0.0
      %4468 = vmatpush1.msra.mxu0 %v4416
      %4469 = vmatprep.subr.mxu0 0.0
      %4470 = vmatpush2.msra.mxu0 0.0
      %4471 = vmatprep.subr.mxu0 0.0
      %4472 = vmatpush2.msra.mxu0 0.0
      %4473 = vmatprep.subr.mxu0 0.0
      %4474 = vmatpush2.msra.mxu0 0.0
      %4475 = vmatprep.subr.mxu0 0.0
      %4476 = vmatpush2.msra.mxu0 0.0
      %4477 = vmatprep.subr.mxu0 0.0
      %4478 = vmatpush2.msra.mxu0 0.0
      %4479 = vmatprep.subr.mxu0 0.0
      %4480 = vmatpush2.msra.mxu0 0.0
      %4481 = vmatprep.subr.mxu0 0.0
      %4482 = vmatpush2.msra.mxu0 0.0
      %4483 = vmatprep.subr.mxu0 0.0
      %4484 = vmatpush2.msra.mxu0 0.0
      %4485 = vmatprep.subr.mxu0 0.0
      %4486 = vmatpush2.msra.mxu0 0.0
      %4487 = vmatprep.subr.mxu0 0.0
      %4488 = vmatpush2.msra.mxu0 0.0
      %4489 = vmatprep.subr.mxu0 0.0
      %4490 = vmatpush2.msra.mxu0 0.0
      %4491 = vmatprep.subr.mxu0 0.0
      %4492 = vmatpush2.msra.mxu0 0.0
      %4493 = vmatprep.subr.mxu0 0.0
      %4494 = vmatpush2.msra.mxu0 0.0
      %4495 = vmatprep.subr.mxu0 0.0
      %4496 = vmatpush2.msra.mxu0 0.0
      %4497 = vmatprep.subr.mxu0 0.0
      %4498 = vmatpush2.msra.mxu0 0.0
      %4499 = vmatprep.subr.mxu0 0.0
      %4500 = vmatpush2.msra.mxu0 0.0
      %4501 = vmatprep.mubr.f32.mxu0 0.0
      %4502 = vmatmul.mubr.f32.gmra.mxu0 %v4429
      %v4503 = vpop.f32.mrf.mxu0
      %v4504 = vadd.f32 %v4426, %v4503
      %v4505 = vpop.f32.mrf.mxu0
      %4506 = vmatprep.mubr.f32.mxu0 0.0
      %4507 = vmatmul.mubr.f32.gmra.mxu0 %v4432
      %v4508 = vpop.f32.mrf.mxu0
      %v4509 = vadd.f32 %v4426, %v4508
      %v4510 = vpop.f32.mrf.mxu0
      %4511 = vmatprep.mubr.f32.mxu0 0.0
      %4512 = vmatmul.mubr.f32.gmra.mxu0 %v4435
      %v4513 = vpop.f32.mrf.mxu0
      %v4514 = vadd.f32 %v4426, %v4513
      %v4515 = vpop.f32.mrf.mxu0
      %4516 = vdwg.mxu0
      %v4517 = vmul.f32 %v4504, 0.5
      %v4518 = vmul.f32 %v4509, 0.5
      %v4519 = vmul.f32 %v4514, 0.5
      %v4520 = vmul.f32 %v4504, 0.70710677
      %v4521 = vmul.f32 %v4509, 0.70710677
      %v4522 = vmul.f32 %v4514, 0.70710677
      %v4523 = verf.f32.pop %v4520
      %v4524 = verf.f32.pop %v4521
      %v4525 = verf.f32.pop %v4522
      %v4526 = vadd.f32 %v4523, 1.0
      %v4527 = vadd.f32 %v4524, 1.0
      %v4528 = vadd.f32 %v4525, 1.0
      %v4529 = vmul.f32 %v4517, %v4526
      %v4530 = vmul.f32 %v4518, %v4527
      %v4531 = vmul.f32 %v4519, %v4528
      %s4532 = scalar_lea.vmem %s1, 256
      %v4533 = vld [vmem:[%s4532] sm:$0xff]
      %v4534 = vld [vmem:[%s4532 + $0x8] sm:$0xff]
      %v4535 = vld [vmem:[%s4532 + $0x10] sm:$0xff]
      %v4536 = vld [vmem:[%s4532 + $0x18] sm:$0xff]
      %s4537 = scalar_lea.vmem %s2, 23
      %v4538 = vld [vmem:[%s4537] sm:$0x1]
      %v4540 = vlaneseq
      %v4541 = vshrl.u32 %v4540, 7
      %v4542 = vsub.s32 0, %v4541
      %v4543 = vrot.slane %v4538, %v4542
      %v4546 = vsel %vm361, %v4529, 0
      %v4549 = vsel %vm361, %v4530, 0
      %v4552 = vsel %vm361, %v4531, 0
      %4554 = vmatprep.subr.mxu0 0.0
      %4555 = vmatpush1.msra.mxu0 0.0
      %4556 = vmatprep.subr.mxu0 0.0
      %4557 = vmatpush1.msra.mxu0 0.0
      %4558 = vmatprep.subr.mxu0 0.0
      %4559 = vmatpush1.msra.mxu0 0.0
      %4560 = vmatprep.subr.mxu0 0.0
      %4561 = vmatpush1.msra.mxu0 0.0
      %4562 = vmatprep.subr.mxu0 0.0
      %4563 = vmatpush1.msra.mxu0 0.0
      %4564 = vmatprep.subr.mxu0 0.0
      %4565 = vmatpush1.msra.mxu0 0.0
      %4566 = vmatprep.subr.mxu0 0.0
      %4567 = vmatpush1.msra.mxu0 0.0
      %4568 = vmatprep.subr.mxu0 0.0
      %4569 = vmatpush1.msra.mxu0 0.0
      %4570 = vmatprep.subr.mxu0 0.0
      %4571 = vmatpush1.msra.mxu0 0.0
      %4572 = vmatprep.subr.mxu0 0.0
      %4573 = vmatpush1.msra.mxu0 0.0
      %4574 = vmatprep.subr.mxu0 0.0
      %4575 = vmatpush1.msra.mxu0 0.0
      %4576 = vmatprep.subr.mxu0 0.0
      %4577 = vmatpush1.msra.mxu0 0.0
      %4578 = vmatprep.subr.mxu0 0.0
      %4579 = vmatpush1.msra.mxu0 %v4536
      %4580 = vmatprep.subr.mxu0 0.0
      %4581 = vmatpush1.msra.mxu0 %v4535
      %4582 = vmatprep.subr.mxu0 0.0
      %4583 = vmatpush1.msra.mxu0 %v4534
      %4584 = vmatprep.subr.mxu0 0.0
      %4585 = vmatpush1.msra.mxu0 %v4533
      %4586 = vmatprep.subr.mxu0 0.0
      %4587 = vmatpush2.msra.mxu0 0.0
      %4588 = vmatprep.subr.mxu0 0.0
      %4589 = vmatpush2.msra.mxu0 0.0
      %4590 = vmatprep.subr.mxu0 0.0
      %4591 = vmatpush2.msra.mxu0 0.0
      %4592 = vmatprep.subr.mxu0 0.0
      %4593 = vmatpush2.msra.mxu0 0.0
      %4594 = vmatprep.subr.mxu0 0.0
      %4595 = vmatpush2.msra.mxu0 0.0
      %4596 = vmatprep.subr.mxu0 0.0
      %4597 = vmatpush2.msra.mxu0 0.0
      %4598 = vmatprep.subr.mxu0 0.0
      %4599 = vmatpush2.msra.mxu0 0.0
      %4600 = vmatprep.subr.mxu0 0.0
      %4601 = vmatpush2.msra.mxu0 0.0
      %4602 = vmatprep.subr.mxu0 0.0
      %4603 = vmatpush2.msra.mxu0 0.0
      %4604 = vmatprep.subr.mxu0 0.0
      %4605 = vmatpush2.msra.mxu0 0.0
      %4606 = vmatprep.subr.mxu0 0.0
      %4607 = vmatpush2.msra.mxu0 0.0
      %4608 = vmatprep.subr.mxu0 0.0
      %4609 = vmatpush2.msra.mxu0 0.0
      %4610 = vmatprep.subr.mxu0 0.0
      %4611 = vmatpush2.msra.mxu0 0.0
      %4612 = vmatprep.subr.mxu0 0.0
      %4613 = vmatpush2.msra.mxu0 0.0
      %4614 = vmatprep.subr.mxu0 0.0
      %4615 = vmatpush2.msra.mxu0 0.0
      %4616 = vmatprep.subr.mxu0 0.0
      %4617 = vmatpush2.msra.mxu0 0.0
      %4618 = vmatprep.mubr.f32.mxu0 0.0
      %4619 = vmatmul.mubr.f32.gmra.mxu0 %v4546
      %v4620 = vpop.f32.mrf.mxu0
      %v4621 = vadd.f32 %v4543, %v4620
      %v4622 = vpop.f32.mrf.mxu0
      %4623 = vmatprep.mubr.f32.mxu0 0.0
      %4624 = vmatmul.mubr.f32.gmra.mxu0 %v4549
      %v4625 = vpop.f32.mrf.mxu0
      %v4626 = vadd.f32 %v4543, %v4625
      %v4627 = vpop.f32.mrf.mxu0
      %4628 = vmatprep.mubr.f32.mxu0 0.0
      %4629 = vmatmul.mubr.f32.gmra.mxu0 %v4552
      %v4630 = vpop.f32.mrf.mxu0
      %v4631 = vadd.f32 %v4543, %v4630
      %v4632 = vpop.f32.mrf.mxu0
      %4633 = vdwg.mxu0
      %v4634 = vadd.f32 %v4621, %v4390
      %v4635 = vadd.f32 %v4626, %v4391
      %v4636 = vadd.f32 %v4631, %v4392
      %v4637 = vsel %vm361, %v4634, 0.0
      %4638 = vadd.xlane.f32.xlu0 %v4637
      %v4639 = vpop.xlane.xlu0 %4638
      %v4640 = vsel %vm361, %v4635, 0.0
      %4641 = vadd.xlane.f32.xlu0 %v4640
      %v4642 = vpop.xlane.xlu0 %4641
      %v4643 = vsel %vm368, %v4636, 0.0
      %4644 = vadd.xlane.f32.xlu0 %v4643
      %v4645 = vpop.xlane.xlu0 %4644
      %v4646 = vmul.f32 %v4639, %v372
      %v4647 = vmul.f32 %v4642, %v372
      %v4648 = vmul.f32 %v4645, %v372
      %v4649 = vsub.f32 %v4634, %v4646
      %v4650 = vsub.f32 %v4635, %v4647
      %v4651 = vsub.f32 %v4636, %v4648
      %v4652 = vmul.f32 %v4649, %v4649
      %v4653 = vmul.f32 %v4650, %v4650
      %v4654 = vmul.f32 %v4651, %v4651
      %v4655 = vsel %vm361, %v4652, 0.0
      %4656 = vadd.xlane.f32.xlu0 %v4655
      %v4657 = vpop.xlane.xlu0 %4656
      %v4658 = vsel %vm361, %v4653, 0.0
      %4659 = vadd.xlane.f32.xlu0 %v4658
      %v4660 = vpop.xlane.xlu0 %4659
      %v4661 = vsel %vm368, %v4654, 0.0
      %4662 = vadd.xlane.f32.xlu0 %v4661
      %v4663 = vpop.xlane.xlu0 %4662
      %v4664 = vmul.f32 %v4657, %v372
      %v4665 = vmul.f32 %v4660, %v372
      %v4666 = vmul.f32 %v4663, %v372
      %v4667 = vadd.f32 %v4664, 1e-05
      %v4668 = vadd.f32 %v4665, 1e-05
      %v4669 = vadd.f32 %v4666, 1e-05
      %v4670 = vrsqrt.pop %v4667
      %v4671 = vrsqrt.pop %v4668
      %v4672 = vrsqrt.pop %v4669
      %v4673 = vmul.f32 %v4649, %v4670
      %v4674 = vmul.f32 %v4650, %v4671
      %v4675 = vmul.f32 %v4651, %v4672
      %s4676 = scalar_lea.vmem %s2, 24
      %v4677 = vld [vmem:[%s4676] sm:$0x1]
      %v4679 = vlaneseq
      %v4680 = vshrl.u32 %v4679, 7
      %v4681 = vsub.s32 0, %v4680
      %v4682 = vrot.slane %v4677, %v4681
      %v4684 = vmul.f32 %v4673, %v4682
      %v4685 = vmul.f32 %v4674, %v4682
      %v4686 = vmul.f32 %v4675, %v4682
      %s4687 = scalar_lea.vmem %s2, 25
      %v4688 = vld [vmem:[%s4687] sm:$0x1]
      %v4690 = vlaneseq
      %v4691 = vshrl.u32 %v4690, 7
      %v4692 = vsub.s32 0, %v4691
      %v4693 = vrot.slane %v4688, %v4692
      %v4695 = vadd.f32 %v4684, %v4693
      %v4696 = vadd.f32 %v4685, %v4693
      %v4697 = vadd.f32 %v4686, %v4693
      %s4698 = scalar_lea.vmem %s2, 40
      %v4699 = vld [vmem:[%s4698] sm:$0x1]
      %s4700 = scalar_lea.vmem %s3, 7
      %v4701 = vld [vmem:[%s4700] sm:$0x1]
      %v4703 = vsel %vm431, %v4697, 0
      %4705 = vmatprep.subr.mxu0 0.0
      %4706 = vmatpush1.msra.mxu0 0.0
      %4707 = vmatprep.subr.mxu0 0.0
      %4708 = vmatpush1.msra.mxu0 0.0
      %4709 = vmatprep.subr.mxu0 0.0
      %4710 = vmatpush1.msra.mxu0 0.0
      %4711 = vmatprep.subr.mxu0 0.0
      %4712 = vmatpush1.msra.mxu0 0.0
      %4713 = vmatprep.subr.mxu0 0.0
      %4714 = vmatpush1.msra.mxu0 0.0
      %4715 = vmatprep.subr.mxu0 0.0
      %4716 = vmatpush1.msra.mxu0 0.0
      %4717 = vmatprep.subr.mxu0 0.0
      %4718 = vmatpush1.msra.mxu0 0.0
      %4719 = vmatprep.subr.mxu0 0.0
      %4720 = vmatpush1.msra.mxu0 0.0
      %4721 = vmatprep.subr.mxu0 0.0
      %4722 = vmatpush1.msra.mxu0 0.0
      %4723 = vmatprep.subr.mxu0 0.0
      %4724 = vmatpush1.msra.mxu0 0.0
      %4725 = vmatprep.subr.mxu0 0.0
      %4726 = vmatpush1.msra.mxu0 0.0
      %4727 = vmatprep.subr.mxu0 0.0
      %4728 = vmatpush1.msra.mxu0 0.0
      %4729 = vmatprep.subr.mxu0 0.0
      %4730 = vmatpush1.msra.mxu0 0.0
      %4731 = vmatprep.subr.mxu0 0.0
      %4732 = vmatpush1.msra.mxu0 %v4703
      %4733 = vmatprep.subr.mxu0 0.0
      %4734 = vmatpush1.msra.mxu0 %v4696
      %4735 = vmatprep.subr.mxu0 0.0
      %4736 = vmatpush1.msra.mxu0 %v4695
      %4737 = vmatprep.subr.mxu0 0.0
      %4738 = vmatpush2.msra.mxu0 0.0
      %4739 = vmatprep.subr.mxu0 0.0
      %4740 = vmatpush2.msra.mxu0 0.0
      %4741 = vmatprep.subr.mxu0 0.0
      %4742 = vmatpush2.msra.mxu0 0.0
      %4743 = vmatprep.subr.mxu0 0.0
      %4744 = vmatpush2.msra.mxu0 0.0
      %4745 = vmatprep.subr.mxu0 0.0
      %4746 = vmatpush2.msra.mxu0 0.0
      %4747 = vmatprep.subr.mxu0 0.0
      %4748 = vmatpush2.msra.mxu0 0.0
      %4749 = vmatprep.subr.mxu0 0.0
      %4750 = vmatpush2.msra.mxu0 0.0
      %4751 = vmatprep.subr.mxu0 0.0
      %4752 = vmatpush2.msra.mxu0 0.0
      %4753 = vmatprep.subr.mxu0 0.0
      %4754 = vmatpush2.msra.mxu0 0.0
      %4755 = vmatprep.subr.mxu0 0.0
      %4756 = vmatpush2.msra.mxu0 0.0
      %4757 = vmatprep.subr.mxu0 0.0
      %4758 = vmatpush2.msra.mxu0 0.0
      %4759 = vmatprep.subr.mxu0 0.0
      %4760 = vmatpush2.msra.mxu0 0.0
      %4761 = vmatprep.subr.mxu0 0.0
      %4762 = vmatpush2.msra.mxu0 0.0
      %4763 = vmatprep.subr.mxu0 0.0
      %4764 = vmatpush2.msra.mxu0 0.0
      %4765 = vmatprep.subr.mxu0 0.0
      %4766 = vmatpush2.msra.mxu0 0.0
      %4767 = vmatprep.subr.mxu0 0.0
      %4768 = vmatpush2.msra.mxu0 0.0
      %4769 = vmatprep.mubr.f32.mxu0 0.0
      %4770 = vmatmul.mubr.f32.gmra.mxu0 %v429
      %v4771 = vpop.f32.mrf.mxu0
      %v4772 = vadd.f32 0.0, %v4771
      %v4773 = vpop.f32.mrf.mxu0
      %4774 = vdwg.mxu0
      %v4776 = vlaneseq
      %v4777 = vshrl.u32 %v4776, 7
      %v4778 = vsub.s32 0, %v4777
      %v4779 = vrot.slane %v4701, %v4778
      %v4781 = vmul.f32 %v4779, %v4772
      %v4783 = vlaneseq
      %v4784 = vshrl.u32 %v4783, 7
      %v4785 = vsub.s32 0, %v4784
      %v4786 = vrot.slane %v4699, %v4785
      %v4788 = vadd.f32 %v4786, %v4781
      %s4789 = scalar_lea.vmem %s3, 8
      %v4790 = vld [vmem:[%s4789] sm:$0x1]
      %4791 = vmatprep.subr.mxu0 0.0
      %4792 = vmatpush1.msra.mxu0 0.0
      %4793 = vmatprep.subr.mxu0 0.0
      %4794 = vmatpush1.msra.mxu0 0.0
      %4795 = vmatprep.subr.mxu0 0.0
      %4796 = vmatpush1.msra.mxu0 0.0
      %4797 = vmatprep.subr.mxu0 0.0
      %4798 = vmatpush1.msra.mxu0 0.0
      %4799 = vmatprep.subr.mxu0 0.0
      %4800 = vmatpush1.msra.mxu0 0.0
      %4801 = vmatprep.subr.mxu0 0.0
      %4802 = vmatpush1.msra.mxu0 0.0
      %4803 = vmatprep.subr.mxu0 0.0
      %4804 = vmatpush1.msra.mxu0 0.0
      %4805 = vmatprep.subr.mxu0 0.0
      %4806 = vmatpush1.msra.mxu0 0.0
      %4807 = vmatprep.subr.mxu0 0.0
      %4808 = vmatpush1.msra.mxu0 0.0
      %4809 = vmatprep.subr.mxu0 0.0
      %4810 = vmatpush1.msra.mxu0 0.0
      %4811 = vmatprep.subr.mxu0 0.0
      %4812 = vmatpush1.msra.mxu0 0.0
      %4813 = vmatprep.subr.mxu0 0.0
      %4814 = vmatpush1.msra.mxu0 0.0
      %4815 = vmatprep.subr.mxu0 0.0
      %4816 = vmatpush1.msra.mxu0 0.0
      %4817 = vmatprep.subr.mxu0 0.0
      %4818 = vmatpush1.msra.mxu0 %v4703
      %4819 = vmatprep.subr.mxu0 0.0
      %4820 = vmatpush1.msra.mxu0 %v4696
      %4821 = vmatprep.subr.mxu0 0.0
      %4822 = vmatpush1.msra.mxu0 %v4695
      %4823 = vmatprep.subr.mxu0 0.0
      %4824 = vmatpush2.msra.mxu0 0.0
      %4825 = vmatprep.subr.mxu0 0.0
      %4826 = vmatpush2.msra.mxu0 0.0
      %4827 = vmatprep.subr.mxu0 0.0
      %4828 = vmatpush2.msra.mxu0 0.0
      %4829 = vmatprep.subr.mxu0 0.0
      %4830 = vmatpush2.msra.mxu0 0.0
      %4831 = vmatprep.subr.mxu0 0.0
      %4832 = vmatpush2.msra.mxu0 0.0
      %4833 = vmatprep.subr.mxu0 0.0
      %4834 = vmatpush2.msra.mxu0 0.0
      %4835 = vmatprep.subr.mxu0 0.0
      %4836 = vmatpush2.msra.mxu0 0.0
      %4837 = vmatprep.subr.mxu0 0.0
      %4838 = vmatpush2.msra.mxu0 0.0
      %4839 = vmatprep.subr.mxu0 0.0
      %4840 = vmatpush2.msra.mxu0 0.0
      %4841 = vmatprep.subr.mxu0 0.0
      %4842 = vmatpush2.msra.mxu0 0.0
      %4843 = vmatprep.subr.mxu0 0.0
      %4844 = vmatpush2.msra.mxu0 0.0
      %4845 = vmatprep.subr.mxu0 0.0
      %4846 = vmatpush2.msra.mxu0 0.0
      %4847 = vmatprep.subr.mxu0 0.0
      %4848 = vmatpush2.msra.mxu0 0.0
      %4849 = vmatprep.subr.mxu0 0.0
      %4850 = vmatpush2.msra.mxu0 0.0
      %4851 = vmatprep.subr.mxu0 0.0
      %4852 = vmatpush2.msra.mxu0 0.0
      %4853 = vmatprep.subr.mxu0 0.0
      %4854 = vmatpush2.msra.mxu0 0.0
      %4855 = vmatprep.mubr.f32.mxu0 0.0
      %4856 = vmatmul.mubr.f32.gmra.mxu0 %v522
      %v4857 = vpop.f32.mrf.mxu0
      %v4858 = vadd.f32 0.0, %v4857
      %v4859 = vpop.f32.mrf.mxu0
      %4860 = vdwg.mxu0
      %v4862 = vlaneseq
      %v4863 = vshrl.u32 %v4862, 7
      %v4864 = vsub.s32 0, %v4863
      %v4865 = vrot.slane %v4790, %v4864
      %v4867 = vmul.f32 %v4865, %v4858
      %v4868 = vadd.f32 %v4788, %v4867
      %s4869 = scalar_lea.vmem %s3, 9
      %v4870 = vld [vmem:[%s4869] sm:$0x1]
      %4871 = vmatprep.subr.mxu0 0.0
      %4872 = vmatpush1.msra.mxu0 0.0
      %4873 = vmatprep.subr.mxu0 0.0
      %4874 = vmatpush1.msra.mxu0 0.0
      %4875 = vmatprep.subr.mxu0 0.0
      %4876 = vmatpush1.msra.mxu0 0.0
      %4877 = vmatprep.subr.mxu0 0.0
      %4878 = vmatpush1.msra.mxu0 0.0
      %4879 = vmatprep.subr.mxu0 0.0
      %4880 = vmatpush1.msra.mxu0 0.0
      %4881 = vmatprep.subr.mxu0 0.0
      %4882 = vmatpush1.msra.mxu0 0.0
      %4883 = vmatprep.subr.mxu0 0.0
      %4884 = vmatpush1.msra.mxu0 0.0
      %4885 = vmatprep.subr.mxu0 0.0
      %4886 = vmatpush1.msra.mxu0 0.0
      %4887 = vmatprep.subr.mxu0 0.0
      %4888 = vmatpush1.msra.mxu0 0.0
      %4889 = vmatprep.subr.mxu0 0.0
      %4890 = vmatpush1.msra.mxu0 0.0
      %4891 = vmatprep.subr.mxu0 0.0
      %4892 = vmatpush1.msra.mxu0 0.0
      %4893 = vmatprep.subr.mxu0 0.0
      %4894 = vmatpush1.msra.mxu0 0.0
      %4895 = vmatprep.subr.mxu0 0.0
      %4896 = vmatpush1.msra.mxu0 0.0
      %4897 = vmatprep.subr.mxu0 0.0
      %4898 = vmatpush1.msra.mxu0 %v4703
      %4899 = vmatprep.subr.mxu0 0.0
      %4900 = vmatpush1.msra.mxu0 %v4696
      %4901 = vmatprep.subr.mxu0 0.0
      %4902 = vmatpush1.msra.mxu0 %v4695
      %4903 = vmatprep.subr.mxu0 0.0
      %4904 = vmatpush2.msra.mxu0 0.0
      %4905 = vmatprep.subr.mxu0 0.0
      %4906 = vmatpush2.msra.mxu0 0.0
      %4907 = vmatprep.subr.mxu0 0.0
      %4908 = vmatpush2.msra.mxu0 0.0
      %4909 = vmatprep.subr.mxu0 0.0
      %4910 = vmatpush2.msra.mxu0 0.0
      %4911 = vmatprep.subr.mxu0 0.0
      %4912 = vmatpush2.msra.mxu0 0.0
      %4913 = vmatprep.subr.mxu0 0.0
      %4914 = vmatpush2.msra.mxu0 0.0
      %4915 = vmatprep.subr.mxu0 0.0
      %4916 = vmatpush2.msra.mxu0 0.0
      %4917 = vmatprep.subr.mxu0 0.0
      %4918 = vmatpush2.msra.mxu0 0.0
      %4919 = vmatprep.subr.mxu0 0.0
      %4920 = vmatpush2.msra.mxu0 0.0
      %4921 = vmatprep.subr.mxu0 0.0
      %4922 = vmatpush2.msra.mxu0 0.0
      %4923 = vmatprep.subr.mxu0 0.0
      %4924 = vmatpush2.msra.mxu0 0.0
      %4925 = vmatprep.subr.mxu0 0.0
      %4926 = vmatpush2.msra.mxu0 0.0
      %4927 = vmatprep.subr.mxu0 0.0
      %4928 = vmatpush2.msra.mxu0 0.0
      %4929 = vmatprep.subr.mxu0 0.0
      %4930 = vmatpush2.msra.mxu0 0.0
      %4931 = vmatprep.subr.mxu0 0.0
      %4932 = vmatpush2.msra.mxu0 0.0
      %4933 = vmatprep.subr.mxu0 0.0
      %4934 = vmatpush2.msra.mxu0 0.0
      %4935 = vmatprep.mubr.f32.mxu0 0.0
      %4936 = vmatmul.mubr.f32.gmra.mxu0 %v605
      %v4937 = vpop.f32.mrf.mxu0
      %v4938 = vadd.f32 0.0, %v4937
      %v4939 = vpop.f32.mrf.mxu0
      %4940 = vdwg.mxu0
      %v4942 = vlaneseq
      %v4943 = vshrl.u32 %v4942, 7
      %v4944 = vsub.s32 0, %v4943
      %v4945 = vrot.slane %v4870, %v4944
      %v4947 = vmul.f32 %v4945, %v4938
      %v4948 = vadd.f32 %v4868, %v4947
      %s4949 = scalar_lea.vmem %s3, 10
      %v4950 = vld [vmem:[%s4949] sm:$0x1]
      %4951 = vmatprep.subr.mxu0 0.0
      %4952 = vmatpush1.msra.mxu0 0.0
      %4953 = vmatprep.subr.mxu0 0.0
      %4954 = vmatpush1.msra.mxu0 0.0
      %4955 = vmatprep.subr.mxu0 0.0
      %4956 = vmatpush1.msra.mxu0 0.0
      %4957 = vmatprep.subr.mxu0 0.0
      %4958 = vmatpush1.msra.mxu0 0.0
      %4959 = vmatprep.subr.mxu0 0.0
      %4960 = vmatpush1.msra.mxu0 0.0
      %4961 = vmatprep.subr.mxu0 0.0
      %4962 = vmatpush1.msra.mxu0 0.0
      %4963 = vmatprep.subr.mxu0 0.0
      %4964 = vmatpush1.msra.mxu0 0.0
      %4965 = vmatprep.subr.mxu0 0.0
      %4966 = vmatpush1.msra.mxu0 0.0
      %4967 = vmatprep.subr.mxu0 0.0
      %4968 = vmatpush1.msra.mxu0 0.0
      %4969 = vmatprep.subr.mxu0 0.0
      %4970 = vmatpush1.msra.mxu0 0.0
      %4971 = vmatprep.subr.mxu0 0.0
      %4972 = vmatpush1.msra.mxu0 0.0
      %4973 = vmatprep.subr.mxu0 0.0
      %4974 = vmatpush1.msra.mxu0 0.0
      %4975 = vmatprep.subr.mxu0 0.0
      %4976 = vmatpush1.msra.mxu0 0.0
      %4977 = vmatprep.subr.mxu0 0.0
      %4978 = vmatpush1.msra.mxu0 %v4703
      %4979 = vmatprep.subr.mxu0 0.0
      %4980 = vmatpush1.msra.mxu0 %v4696
      %4981 = vmatprep.subr.mxu0 0.0
      %4982 = vmatpush1.msra.mxu0 %v4695
      %4983 = vmatprep.subr.mxu0 0.0
      %4984 = vmatpush2.msra.mxu0 0.0
      %4985 = vmatprep.subr.mxu0 0.0
      %4986 = vmatpush2.msra.mxu0 0.0
      %4987 = vmatprep.subr.mxu0 0.0
      %4988 = vmatpush2.msra.mxu0 0.0
      %4989 = vmatprep.subr.mxu0 0.0
      %4990 = vmatpush2.msra.mxu0 0.0
      %4991 = vmatprep.subr.mxu0 0.0
      %4992 = vmatpush2.msra.mxu0 0.0
      %4993 = vmatprep.subr.mxu0 0.0
      %4994 = vmatpush2.msra.mxu0 0.0
      %4995 = vmatprep.subr.mxu0 0.0
      %4996 = vmatpush2.msra.mxu0 0.0
      %4997 = vmatprep.subr.mxu0 0.0
      %4998 = vmatpush2.msra.mxu0 0.0
      %4999 = vmatprep.subr.mxu0 0.0
      %5000 = vmatpush2.msra.mxu0 0.0
      %5001 = vmatprep.subr.mxu0 0.0
      %5002 = vmatpush2.msra.mxu0 0.0
      %5003 = vmatprep.subr.mxu0 0.0
      %5004 = vmatpush2.msra.mxu0 0.0
      %5005 = vmatprep.subr.mxu0 0.0
      %5006 = vmatpush2.msra.mxu0 0.0
      %5007 = vmatprep.subr.mxu0 0.0
      %5008 = vmatpush2.msra.mxu0 0.0
      %5009 = vmatprep.subr.mxu0 0.0
      %5010 = vmatpush2.msra.mxu0 0.0
      %5011 = vmatprep.subr.mxu0 0.0
      %5012 = vmatpush2.msra.mxu0 0.0
      %5013 = vmatprep.subr.mxu0 0.0
      %5014 = vmatpush2.msra.mxu0 0.0
      %5015 = vmatprep.mubr.f32.mxu0 0.0
      %5016 = vmatmul.mubr.f32.gmra.mxu0 %v688
      %v5017 = vpop.f32.mrf.mxu0
      %v5018 = vadd.f32 0.0, %v5017
      %v5019 = vpop.f32.mrf.mxu0
      %5020 = vdwg.mxu0
      %v5022 = vlaneseq
      %v5023 = vshrl.u32 %v5022, 7
      %v5024 = vsub.s32 0, %v5023
      %v5025 = vrot.slane %v4950, %v5024
      %v5027 = vmul.f32 %v5025, %v5018
      %v5028 = vadd.f32 %v4948, %v5027
      %s5029 = scalar_lea.vmem %s3, 11
      %v5030 = vld [vmem:[%s5029] sm:$0x1]
      %5031 = vmatprep.subr.mxu0 0.0
      %5032 = vmatpush1.msra.mxu0 0.0
      %5033 = vmatprep.subr.mxu0 0.0
      %5034 = vmatpush1.msra.mxu0 0.0
      %5035 = vmatprep.subr.mxu0 0.0
      %5036 = vmatpush1.msra.mxu0 0.0
      %5037 = vmatprep.subr.mxu0 0.0
      %5038 = vmatpush1.msra.mxu0 0.0
      %5039 = vmatprep.subr.mxu0 0.0
      %5040 = vmatpush1.msra.mxu0 0.0
      %5041 = vmatprep.subr.mxu0 0.0
      %5042 = vmatpush1.msra.mxu0 0.0
      %5043 = vmatprep.subr.mxu0 0.0
      %5044 = vmatpush1.msra.mxu0 0.0
      %5045 = vmatprep.subr.mxu0 0.0
      %5046 = vmatpush1.msra.mxu0 0.0
      %5047 = vmatprep.subr.mxu0 0.0
      %5048 = vmatpush1.msra.mxu0 0.0
      %5049 = vmatprep.subr.mxu0 0.0
      %5050 = vmatpush1.msra.mxu0 0.0
      %5051 = vmatprep.subr.mxu0 0.0
      %5052 = vmatpush1.msra.mxu0 0.0
      %5053 = vmatprep.subr.mxu0 0.0
      %5054 = vmatpush1.msra.mxu0 0.0
      %5055 = vmatprep.subr.mxu0 0.0
      %5056 = vmatpush1.msra.mxu0 0.0
      %5057 = vmatprep.subr.mxu0 0.0
      %5058 = vmatpush1.msra.mxu0 %v4703
      %5059 = vmatprep.subr.mxu0 0.0
      %5060 = vmatpush1.msra.mxu0 %v4696
      %5061 = vmatprep.subr.mxu0 0.0
      %5062 = vmatpush1.msra.mxu0 %v4695
      %5063 = vmatprep.subr.mxu0 0.0
      %5064 = vmatpush2.msra.mxu0 0.0
      %5065 = vmatprep.subr.mxu0 0.0
      %5066 = vmatpush2.msra.mxu0 0.0
      %5067 = vmatprep.subr.mxu0 0.0
      %5068 = vmatpush2.msra.mxu0 0.0
      %5069 = vmatprep.subr.mxu0 0.0
      %5070 = vmatpush2.msra.mxu0 0.0
      %5071 = vmatprep.subr.mxu0 0.0
      %5072 = vmatpush2.msra.mxu0 0.0
      %5073 = vmatprep.subr.mxu0 0.0
      %5074 = vmatpush2.msra.mxu0 0.0
      %5075 = vmatprep.subr.mxu0 0.0
      %5076 = vmatpush2.msra.mxu0 0.0
      %5077 = vmatprep.subr.mxu0 0.0
      %5078 = vmatpush2.msra.mxu0 0.0
      %5079 = vmatprep.subr.mxu0 0.0
      %5080 = vmatpush2.msra.mxu0 0.0
      %5081 = vmatprep.subr.mxu0 0.0
      %5082 = vmatpush2.msra.mxu0 0.0
      %5083 = vmatprep.subr.mxu0 0.0
      %5084 = vmatpush2.msra.mxu0 0.0
      %5085 = vmatprep.subr.mxu0 0.0
      %5086 = vmatpush2.msra.mxu0 0.0
      %5087 = vmatprep.subr.mxu0 0.0
      %5088 = vmatpush2.msra.mxu0 0.0
      %5089 = vmatprep.subr.mxu0 0.0
      %5090 = vmatpush2.msra.mxu0 0.0
      %5091 = vmatprep.subr.mxu0 0.0
      %5092 = vmatpush2.msra.mxu0 0.0
      %5093 = vmatprep.subr.mxu0 0.0
      %5094 = vmatpush2.msra.mxu0 0.0
      %5095 = vmatprep.mubr.f32.mxu0 0.0
      %5096 = vmatmul.mubr.f32.gmra.mxu0 %v771
      %v5097 = vpop.f32.mrf.mxu0
      %v5098 = vadd.f32 0.0, %v5097
      %v5099 = vpop.f32.mrf.mxu0
      %5100 = vdwg.mxu0
      %v5102 = vlaneseq
      %v5103 = vshrl.u32 %v5102, 7
      %v5104 = vsub.s32 0, %v5103
      %v5105 = vrot.slane %v5030, %v5104
      %v5107 = vmul.f32 %v5105, %v5098
      %v5108 = vadd.f32 %v5028, %v5107
      %s5109 = scalar_lea.vmem %s3, 12
      %v5110 = vld [vmem:[%s5109] sm:$0x1]
      %5111 = vmatprep.subr.mxu0 0.0
      %5112 = vmatpush1.msra.mxu0 0.0
      %5113 = vmatprep.subr.mxu0 0.0
      %5114 = vmatpush1.msra.mxu0 0.0
      %5115 = vmatprep.subr.mxu0 0.0
      %5116 = vmatpush1.msra.mxu0 0.0
      %5117 = vmatprep.subr.mxu0 0.0
      %5118 = vmatpush1.msra.mxu0 0.0
      %5119 = vmatprep.subr.mxu0 0.0
      %5120 = vmatpush1.msra.mxu0 0.0
      %5121 = vmatprep.subr.mxu0 0.0
      %5122 = vmatpush1.msra.mxu0 0.0
      %5123 = vmatprep.subr.mxu0 0.0
      %5124 = vmatpush1.msra.mxu0 0.0
      %5125 = vmatprep.subr.mxu0 0.0
      %5126 = vmatpush1.msra.mxu0 0.0
      %5127 = vmatprep.subr.mxu0 0.0
      %5128 = vmatpush1.msra.mxu0 0.0
      %5129 = vmatprep.subr.mxu0 0.0
      %5130 = vmatpush1.msra.mxu0 0.0
      %5131 = vmatprep.subr.mxu0 0.0
      %5132 = vmatpush1.msra.mxu0 0.0
      %5133 = vmatprep.subr.mxu0 0.0
      %5134 = vmatpush1.msra.mxu0 0.0
      %5135 = vmatprep.subr.mxu0 0.0
      %5136 = vmatpush1.msra.mxu0 0.0
      %5137 = vmatprep.subr.mxu0 0.0
      %5138 = vmatpush1.msra.mxu0 %v4703
      %5139 = vmatprep.subr.mxu0 0.0
      %5140 = vmatpush1.msra.mxu0 %v4696
      %5141 = vmatprep.subr.mxu0 0.0
      %5142 = vmatpush1.msra.mxu0 %v4695
      %5143 = vmatprep.subr.mxu0 0.0
      %5144 = vmatpush2.msra.mxu0 0.0
      %5145 = vmatprep.subr.mxu0 0.0
      %5146 = vmatpush2.msra.mxu0 0.0
      %5147 = vmatprep.subr.mxu0 0.0
      %5148 = vmatpush2.msra.mxu0 0.0
      %5149 = vmatprep.subr.mxu0 0.0
      %5150 = vmatpush2.msra.mxu0 0.0
      %5151 = vmatprep.subr.mxu0 0.0
      %5152 = vmatpush2.msra.mxu0 0.0
      %5153 = vmatprep.subr.mxu0 0.0
      %5154 = vmatpush2.msra.mxu0 0.0
      %5155 = vmatprep.subr.mxu0 0.0
      %5156 = vmatpush2.msra.mxu0 0.0
      %5157 = vmatprep.subr.mxu0 0.0
      %5158 = vmatpush2.msra.mxu0 0.0
      %5159 = vmatprep.subr.mxu0 0.0
      %5160 = vmatpush2.msra.mxu0 0.0
      %5161 = vmatprep.subr.mxu0 0.0
      %5162 = vmatpush2.msra.mxu0 0.0
      %5163 = vmatprep.subr.mxu0 0.0
      %5164 = vmatpush2.msra.mxu0 0.0
      %5165 = vmatprep.subr.mxu0 0.0
      %5166 = vmatpush2.msra.mxu0 0.0
      %5167 = vmatprep.subr.mxu0 0.0
      %5168 = vmatpush2.msra.mxu0 0.0
      %5169 = vmatprep.subr.mxu0 0.0
      %5170 = vmatpush2.msra.mxu0 0.0
      %5171 = vmatprep.subr.mxu0 0.0
      %5172 = vmatpush2.msra.mxu0 0.0
      %5173 = vmatprep.subr.mxu0 0.0
      %5174 = vmatpush2.msra.mxu0 0.0
      %5175 = vmatprep.mubr.f32.mxu0 0.0
      %5176 = vmatmul.mubr.f32.gmra.mxu0 %v854
      %v5177 = vpop.f32.mrf.mxu0
      %v5178 = vadd.f32 0.0, %v5177
      %v5179 = vpop.f32.mrf.mxu0
      %5180 = vdwg.mxu0
      %v5182 = vlaneseq
      %v5183 = vshrl.u32 %v5182, 7
      %v5184 = vsub.s32 0, %v5183
      %v5185 = vrot.slane %v5110, %v5184
      %v5187 = vmul.f32 %v5185, %v5178
      %v5188 = vadd.f32 %v5108, %v5187
      %s5189 = scalar_lea.vmem %s3, 13
      %v5190 = vld [vmem:[%s5189] sm:$0x1]
      %5191 = vmatprep.subr.mxu0 0.0
      %5192 = vmatpush1.msra.mxu0 0.0
      %5193 = vmatprep.subr.mxu0 0.0
      %5194 = vmatpush1.msra.mxu0 0.0
      %5195 = vmatprep.subr.mxu0 0.0
      %5196 = vmatpush1.msra.mxu0 0.0
      %5197 = vmatprep.subr.mxu0 0.0
      %5198 = vmatpush1.msra.mxu0 0.0
      %5199 = vmatprep.subr.mxu0 0.0
      %5200 = vmatpush1.msra.mxu0 0.0
      %5201 = vmatprep.subr.mxu0 0.0
      %5202 = vmatpush1.msra.mxu0 0.0
      %5203 = vmatprep.subr.mxu0 0.0
      %5204 = vmatpush1.msra.mxu0 0.0
      %5205 = vmatprep.subr.mxu0 0.0
      %5206 = vmatpush1.msra.mxu0 0.0
      %5207 = vmatprep.subr.mxu0 0.0
      %5208 = vmatpush1.msra.mxu0 0.0
      %5209 = vmatprep.subr.mxu0 0.0
      %5210 = vmatpush1.msra.mxu0 0.0
      %5211 = vmatprep.subr.mxu0 0.0
      %5212 = vmatpush1.msra.mxu0 0.0
      %5213 = vmatprep.subr.mxu0 0.0
      %5214 = vmatpush1.msra.mxu0 0.0
      %5215 = vmatprep.subr.mxu0 0.0
      %5216 = vmatpush1.msra.mxu0 0.0
      %5217 = vmatprep.subr.mxu0 0.0
      %5218 = vmatpush1.msra.mxu0 %v4703
      %5219 = vmatprep.subr.mxu0 0.0
      %5220 = vmatpush1.msra.mxu0 %v4696
      %5221 = vmatprep.subr.mxu0 0.0
      %5222 = vmatpush1.msra.mxu0 %v4695
      %5223 = vmatprep.subr.mxu0 0.0
      %5224 = vmatpush2.msra.mxu0 0.0
      %5225 = vmatprep.subr.mxu0 0.0
      %5226 = vmatpush2.msra.mxu0 0.0
      %5227 = vmatprep.subr.mxu0 0.0
      %5228 = vmatpush2.msra.mxu0 0.0
      %5229 = vmatprep.subr.mxu0 0.0
      %5230 = vmatpush2.msra.mxu0 0.0
      %5231 = vmatprep.subr.mxu0 0.0
      %5232 = vmatpush2.msra.mxu0 0.0
      %5233 = vmatprep.subr.mxu0 0.0
      %5234 = vmatpush2.msra.mxu0 0.0
      %5235 = vmatprep.subr.mxu0 0.0
      %5236 = vmatpush2.msra.mxu0 0.0
      %5237 = vmatprep.subr.mxu0 0.0
      %5238 = vmatpush2.msra.mxu0 0.0
      %5239 = vmatprep.subr.mxu0 0.0
      %5240 = vmatpush2.msra.mxu0 0.0
      %5241 = vmatprep.subr.mxu0 0.0
      %5242 = vmatpush2.msra.mxu0 0.0
      %5243 = vmatprep.subr.mxu0 0.0
      %5244 = vmatpush2.msra.mxu0 0.0
      %5245 = vmatprep.subr.mxu0 0.0
      %5246 = vmatpush2.msra.mxu0 0.0
      %5247 = vmatprep.subr.mxu0 0.0
      %5248 = vmatpush2.msra.mxu0 0.0
      %5249 = vmatprep.subr.mxu0 0.0
      %5250 = vmatpush2.msra.mxu0 0.0
      %5251 = vmatprep.subr.mxu0 0.0
      %5252 = vmatpush2.msra.mxu0 0.0
      %5253 = vmatprep.subr.mxu0 0.0
      %5254 = vmatpush2.msra.mxu0 0.0
      %5255 = vmatprep.mubr.f32.mxu0 0.0
      %5256 = vmatmul.mubr.f32.gmra.mxu0 %v937
      %v5257 = vpop.f32.mrf.mxu0
      %v5258 = vadd.f32 0.0, %v5257
      %v5259 = vpop.f32.mrf.mxu0
      %5260 = vdwg.mxu0
      %v5262 = vlaneseq
      %v5263 = vshrl.u32 %v5262, 7
      %v5264 = vsub.s32 0, %v5263
      %v5265 = vrot.slane %v5190, %v5264
      %v5267 = vmul.f32 %v5265, %v5258
      %v5268 = vadd.f32 %v5188, %v5267
      %s5269 = scalar_lea.vmem %s1, 672
      %v5270 = vld [vmem:[%s5269] sm:$0xff]
      %v5271 = vld [vmem:[%s5269 + $0x8] sm:$0xff]
      %v5272 = vld [vmem:[%s5269 + $0x10] sm:$0xff]
      %v5273 = vld [vmem:[%s5269 + $0x18] sm:$0xff]
      %s5274 = scalar_lea.vmem %s2, 41
      %v5275 = vld [vmem:[%s5274] sm:$0x1]
      %v5277 = vlaneseq
      %v5278 = vshrl.u32 %v5277, 7
      %v5279 = vsub.s32 0, %v5278
      %v5280 = vrot.slane %v5275, %v5279
      %v5283 = vsel %vm361, %v5268, 0
      %5285 = vmatprep.subr.mxu0 0.0
      %5286 = vmatpush1.msra.mxu0 0.0
      %5287 = vmatprep.subr.mxu0 0.0
      %5288 = vmatpush1.msra.mxu0 0.0
      %5289 = vmatprep.subr.mxu0 0.0
      %5290 = vmatpush1.msra.mxu0 0.0
      %5291 = vmatprep.subr.mxu0 0.0
      %5292 = vmatpush1.msra.mxu0 0.0
      %5293 = vmatprep.subr.mxu0 0.0
      %5294 = vmatpush1.msra.mxu0 0.0
      %5295 = vmatprep.subr.mxu0 0.0
      %5296 = vmatpush1.msra.mxu0 0.0
      %5297 = vmatprep.subr.mxu0 0.0
      %5298 = vmatpush1.msra.mxu0 0.0
      %5299 = vmatprep.subr.mxu0 0.0
      %5300 = vmatpush1.msra.mxu0 0.0
      %5301 = vmatprep.subr.mxu0 0.0
      %5302 = vmatpush1.msra.mxu0 0.0
      %5303 = vmatprep.subr.mxu0 0.0
      %5304 = vmatpush1.msra.mxu0 0.0
      %5305 = vmatprep.subr.mxu0 0.0
      %5306 = vmatpush1.msra.mxu0 0.0
      %5307 = vmatprep.subr.mxu0 0.0
      %5308 = vmatpush1.msra.mxu0 0.0
      %5309 = vmatprep.subr.mxu0 0.0
      %5310 = vmatpush1.msra.mxu0 %v5273
      %5311 = vmatprep.subr.mxu0 0.0
      %5312 = vmatpush1.msra.mxu0 %v5272
      %5313 = vmatprep.subr.mxu0 0.0
      %5314 = vmatpush1.msra.mxu0 %v5271
      %5315 = vmatprep.subr.mxu0 0.0
      %5316 = vmatpush1.msra.mxu0 %v5270
      %5317 = vmatprep.subr.mxu0 0.0
      %5318 = vmatpush2.msra.mxu0 0.0
      %5319 = vmatprep.subr.mxu0 0.0
      %5320 = vmatpush2.msra.mxu0 0.0
      %5321 = vmatprep.subr.mxu0 0.0
      %5322 = vmatpush2.msra.mxu0 0.0
      %5323 = vmatprep.subr.mxu0 0.0
      %5324 = vmatpush2.msra.mxu0 0.0
      %5325 = vmatprep.subr.mxu0 0.0
      %5326 = vmatpush2.msra.mxu0 0.0
      %5327 = vmatprep.subr.mxu0 0.0
      %5328 = vmatpush2.msra.mxu0 0.0
      %5329 = vmatprep.subr.mxu0 0.0
      %5330 = vmatpush2.msra.mxu0 0.0
      %5331 = vmatprep.subr.mxu0 0.0
      %5332 = vmatpush2.msra.mxu0 0.0
      %5333 = vmatprep.subr.mxu0 0.0
      %5334 = vmatpush2.msra.mxu0 0.0
      %5335 = vmatprep.subr.mxu0 0.0
      %5336 = vmatpush2.msra.mxu0 0.0
      %5337 = vmatprep.subr.mxu0 0.0
      %5338 = vmatpush2.msra.mxu0 0.0
      %5339 = vmatprep.subr.mxu0 0.0
      %5340 = vmatpush2.msra.mxu0 0.0
      %5341 = vmatprep.subr.mxu0 0.0
      %5342 = vmatpush2.msra.mxu0 0.0
      %5343 = vmatprep.subr.mxu0 0.0
      %5344 = vmatpush2.msra.mxu0 0.0
      %5345 = vmatprep.subr.mxu0 0.0
      %5346 = vmatpush2.msra.mxu0 0.0
      %5347 = vmatprep.subr.mxu0 0.0
      %5348 = vmatpush2.msra.mxu0 0.0
      %5349 = vmatprep.mubr.f32.mxu0 0.0
      %5350 = vmatmul.mubr.f32.gmra.mxu0 %v5283
      %v5351 = vpop.f32.mrf.mxu0
      %v5352 = vadd.f32 %v5280, %v5351
      %v5353 = vpop.f32.mrf.mxu0
      %5354 = vdwg.mxu0
      %v5355 = vsel %vm361, %v5352, 0.0
      %5356 = vadd.xlane.f32.xlu0 %v5355
      %v5357 = vpop.xlane.xlu0 %5356
      %v5358 = vmul.f32 %v5357, %v372
      %v5359 = vsub.f32 %v5352, %v5358
      %v5360 = vmul.f32 %v5359, %v5359
      %v5361 = vsel %vm361, %v5360, 0.0
      %5362 = vadd.xlane.f32.xlu0 %v5361
      %v5363 = vpop.xlane.xlu0 %5362
      %v5364 = vmul.f32 %v5363, %v372
      %v5365 = vadd.f32 %v5364, 1e-05
      %v5366 = vrsqrt.pop %v5365
      %v5367 = vmul.f32 %v5359, %v5366
      %s5368 = scalar_lea.vmem %s2, 38
      %v5369 = vld [vmem:[%s5368] sm:$0x1]
      %v5371 = vlaneseq
      %v5372 = vshrl.u32 %v5371, 7
      %v5373 = vsub.s32 0, %v5372
      %v5374 = vrot.slane %v5369, %v5373
      %v5376 = vmul.f32 %v5367, %v5374
      %s5377 = scalar_lea.vmem %s2, 39
      %v5378 = vld [vmem:[%s5377] sm:$0x1]
      %v5380 = vlaneseq
      %v5381 = vshrl.u32 %v5380, 7
      %v5382 = vsub.s32 0, %v5381
      %v5383 = vrot.slane %v5378, %v5382
      %v5385 = vadd.f32 %v5376, %v5383
      %v5386 = vlaneseq
      %v5387 = vshrl.u32 %v5386, 7
      %v5388 = vsub.s32 0, %v5387
      %v5389 = vrot.slane %v4695, %v5388
      %v5390 = vsel %vm1135, %v5389, %v5385
      %s5391 = scalar_lea.vmem %s1, 544
      %v5392 = vld [vmem:[%s5391] sm:$0xff]
      %v5393 = vld [vmem:[%s5391 + $0x8] sm:$0xff]
      %v5394 = vld [vmem:[%s5391 + $0x10] sm:$0xff]
      %v5395 = vld [vmem:[%s5391 + $0x18] sm:$0xff]
      %v5397 = vsel %vm361, %v4695, 0
      %v5400 = vsel %vm361, %v4696, 0
      %v5402 = vsel %vm361, %v4697, 0
      %5404 = vmatprep.subr.mxu0 0.0
      %5405 = vmatpush1.msra.mxu0 0.0
      %5406 = vmatprep.subr.mxu0 0.0
      %5407 = vmatpush1.msra.mxu0 0.0
      %5408 = vmatprep.subr.mxu0 0.0
      %5409 = vmatpush1.msra.mxu0 0.0
      %5410 = vmatprep.subr.mxu0 0.0
      %5411 = vmatpush1.msra.mxu0 0.0
      %5412 = vmatprep.subr.mxu0 0.0
      %5413 = vmatpush1.msra.mxu0 0.0
      %5414 = vmatprep.subr.mxu0 0.0
      %5415 = vmatpush1.msra.mxu0 0.0
      %5416 = vmatprep.subr.mxu0 0.0
      %5417 = vmatpush1.msra.mxu0 0.0
      %5418 = vmatprep.subr.mxu0 0.0
      %5419 = vmatpush1.msra.mxu0 0.0
      %5420 = vmatprep.subr.mxu0 0.0
      %5421 = vmatpush1.msra.mxu0 0.0
      %5422 = vmatprep.subr.mxu0 0.0
      %5423 = vmatpush1.msra.mxu0 0.0
      %5424 = vmatprep.subr.mxu0 0.0
      %5425 = vmatpush1.msra.mxu0 0.0
      %5426 = vmatprep.subr.mxu0 0.0
      %5427 = vmatpush1.msra.mxu0 0.0
      %5428 = vmatprep.subr.mxu0 0.0
      %5429 = vmatpush1.msra.mxu0 %v5395
      %5430 = vmatprep.subr.mxu0 0.0
      %5431 = vmatpush1.msra.mxu0 %v5394
      %5432 = vmatprep.subr.mxu0 0.0
      %5433 = vmatpush1.msra.mxu0 %v5393
      %5434 = vmatprep.subr.mxu0 0.0
      %5435 = vmatpush1.msra.mxu0 %v5392
      %5436 = vmatprep.subr.mxu0 0.0
      %5437 = vmatpush2.msra.mxu0 0.0
      %5438 = vmatprep.subr.mxu0 0.0
      %5439 = vmatpush2.msra.mxu0 0.0
      %5440 = vmatprep.subr.mxu0 0.0
      %5441 = vmatpush2.msra.mxu0 0.0
      %5442 = vmatprep.subr.mxu0 0.0
      %5443 = vmatpush2.msra.mxu0 0.0
      %5444 = vmatprep.subr.mxu0 0.0
      %5445 = vmatpush2.msra.mxu0 0.0
      %5446 = vmatprep.subr.mxu0 0.0
      %5447 = vmatpush2.msra.mxu0 0.0
      %5448 = vmatprep.subr.mxu0 0.0
      %5449 = vmatpush2.msra.mxu0 0.0
      %5450 = vmatprep.subr.mxu0 0.0
      %5451 = vmatpush2.msra.mxu0 0.0
      %5452 = vmatprep.subr.mxu0 0.0
      %5453 = vmatpush2.msra.mxu0 0.0
      %5454 = vmatprep.subr.mxu0 0.0
      %5455 = vmatpush2.msra.mxu0 0.0
      %5456 = vmatprep.subr.mxu0 0.0
      %5457 = vmatpush2.msra.mxu0 0.0
      %5458 = vmatprep.subr.mxu0 0.0
      %5459 = vmatpush2.msra.mxu0 0.0
      %5460 = vmatprep.subr.mxu0 0.0
      %5461 = vmatpush2.msra.mxu0 0.0
      %5462 = vmatprep.subr.mxu0 0.0
      %5463 = vmatpush2.msra.mxu0 0.0
      %5464 = vmatprep.subr.mxu0 0.0
      %5465 = vmatpush2.msra.mxu0 0.0
      %5466 = vmatprep.subr.mxu0 0.0
      %5467 = vmatpush2.msra.mxu0 0.0
      %5468 = vmatprep.mubr.f32.mxu0 0.0
      %5469 = vmatmul.mubr.f32.gmra.mxu0 %v5397
      %v5470 = vpop.f32.mrf.mxu0
      %v5471 = vadd.f32 0.0, %v5470
      %v5472 = vpop.f32.mrf.mxu0
      %5473 = vmatprep.mubr.f32.mxu0 0.0
      %5474 = vmatmul.mubr.f32.gmra.mxu0 %v5400
      %v5475 = vpop.f32.mrf.mxu0
      %v5476 = vadd.f32 0.0, %v5475
      %v5477 = vpop.f32.mrf.mxu0
      %5478 = vmatprep.mubr.f32.mxu0 0.0
      %5479 = vmatmul.mubr.f32.gmra.mxu0 %v5402
      %v5480 = vpop.f32.mrf.mxu0
      %v5481 = vadd.f32 0.0, %v5480
      %v5482 = vpop.f32.mrf.mxu0
      %5483 = vdwg.mxu0
      %v5484 = vsel %vm361, %v5471, 0.0
      %5485 = vadd.xlane.f32.xlu0 %v5484
      %v5486 = vpop.xlane.xlu0 %5485
      %v5487 = vsel %vm361, %v5476, 0.0
      %5488 = vadd.xlane.f32.xlu0 %v5487
      %v5489 = vpop.xlane.xlu0 %5488
      %v5490 = vsel %vm368, %v5481, 0.0
      %5491 = vadd.xlane.f32.xlu0 %v5490
      %v5492 = vpop.xlane.xlu0 %5491
      %v5493 = vmul.f32 %v5486, %v372
      %v5494 = vmul.f32 %v5489, %v372
      %v5495 = vmul.f32 %v5492, %v372
      %v5496 = vsub.f32 %v5471, %v5493
      %v5497 = vsub.f32 %v5476, %v5494
      %v5498 = vsub.f32 %v5481, %v5495
      %v5499 = vmul.f32 %v5496, %v5496
      %v5500 = vmul.f32 %v5497, %v5497
      %v5501 = vmul.f32 %v5498, %v5498
      %v5502 = vsel %vm361, %v5499, 0.0
      %5503 = vadd.xlane.f32.xlu0 %v5502
      %v5504 = vpop.xlane.xlu0 %5503
      %v5505 = vsel %vm361, %v5500, 0.0
      %5506 = vadd.xlane.f32.xlu0 %v5505
      %v5507 = vpop.xlane.xlu0 %5506
      %v5508 = vsel %vm368, %v5501, 0.0
      %5509 = vadd.xlane.f32.xlu0 %v5508
      %v5510 = vpop.xlane.xlu0 %5509
      %v5511 = vmul.f32 %v5504, %v372
      %v5512 = vmul.f32 %v5507, %v372
      %v5513 = vmul.f32 %v5510, %v372
      %v5514 = vadd.f32 %v5511, 1e-05
      %v5515 = vadd.f32 %v5512, 1e-05
      %v5516 = vadd.f32 %v5513, 1e-05
      %v5517 = vrsqrt.pop %v5514
      %v5518 = vrsqrt.pop %v5515
      %v5519 = vrsqrt.pop %v5516
      %v5520 = vmul.f32 %v5496, %v5517
      %v5521 = vmul.f32 %v5497, %v5518
      %v5522 = vmul.f32 %v5498, %v5519
      %s5523 = scalar_lea.vmem %s2, 32
      %v5524 = vld [vmem:[%s5523] sm:$0x1]
      %v5526 = vlaneseq
      %v5527 = vshrl.u32 %v5526, 7
      %v5528 = vsub.s32 0, %v5527
      %v5529 = vrot.slane %v5524, %v5528
      %v5531 = vmul.f32 %v5520, %v5529
      %v5532 = vmul.f32 %v5521, %v5529
      %v5533 = vmul.f32 %v5522, %v5529
      %s5534 = scalar_lea.vmem %s2, 33
      %v5535 = vld [vmem:[%s5534] sm:$0x1]
      %v5537 = vlaneseq
      %v5538 = vshrl.u32 %v5537, 7
      %v5539 = vsub.s32 0, %v5538
      %v5540 = vrot.slane %v5535, %v5539
      %v5542 = vadd.f32 %v5531, %v5540
      %v5543 = vadd.f32 %v5532, %v5540
      %v5544 = vadd.f32 %v5533, %v5540
      %v5545 = vmul.f32 %v5542, 0.35355338
      %v5546 = vmul.f32 %v5543, 0.35355338
      %v5547 = vmul.f32 %v5544, 0.35355338
      %s5548 = scalar_lea.vmem %s1, 576
      %v5549 = vld [vmem:[%s5548] sm:$0xff]
      %v5550 = vld [vmem:[%s5548 + $0x8] sm:$0xff]
      %v5551 = vld [vmem:[%s5548 + $0x10] sm:$0xff]
      %v5552 = vld [vmem:[%s5548 + $0x18] sm:$0xff]
      %v5554 = vsel %vm361, %v5390, 0
      %5556 = vmatprep.subr.mxu0 0.0
      %5557 = vmatpush1.msra.mxu0 0.0
      %5558 = vmatprep.subr.mxu0 0.0
      %5559 = vmatpush1.msra.mxu0 0.0
      %5560 = vmatprep.subr.mxu0 0.0
      %5561 = vmatpush1.msra.mxu0 0.0
      %5562 = vmatprep.subr.mxu0 0.0
      %5563 = vmatpush1.msra.mxu0 0.0
      %5564 = vmatprep.subr.mxu0 0.0
      %5565 = vmatpush1.msra.mxu0 0.0
      %5566 = vmatprep.subr.mxu0 0.0
      %5567 = vmatpush1.msra.mxu0 0.0
      %5568 = vmatprep.subr.mxu0 0.0
      %5569 = vmatpush1.msra.mxu0 0.0
      %5570 = vmatprep.subr.mxu0 0.0
      %5571 = vmatpush1.msra.mxu0 0.0
      %5572 = vmatprep.subr.mxu0 0.0
      %5573 = vmatpush1.msra.mxu0 0.0
      %5574 = vmatprep.subr.mxu0 0.0
      %5575 = vmatpush1.msra.mxu0 0.0
      %5576 = vmatprep.subr.mxu0 0.0
      %5577 = vmatpush1.msra.mxu0 0.0
      %5578 = vmatprep.subr.mxu0 0.0
      %5579 = vmatpush1.msra.mxu0 0.0
      %5580 = vmatprep.subr.mxu0 0.0
      %5581 = vmatpush1.msra.mxu0 %v5552
      %5582 = vmatprep.subr.mxu0 0.0
      %5583 = vmatpush1.msra.mxu0 %v5551
      %5584 = vmatprep.subr.mxu0 0.0
      %5585 = vmatpush1.msra.mxu0 %v5550
      %5586 = vmatprep.subr.mxu0 0.0
      %5587 = vmatpush1.msra.mxu0 %v5549
      %5588 = vmatprep.subr.mxu0 0.0
      %5589 = vmatpush2.msra.mxu0 0.0
      %5590 = vmatprep.subr.mxu0 0.0
      %5591 = vmatpush2.msra.mxu0 0.0
      %5592 = vmatprep.subr.mxu0 0.0
      %5593 = vmatpush2.msra.mxu0 0.0
      %5594 = vmatprep.subr.mxu0 0.0
      %5595 = vmatpush2.msra.mxu0 0.0
      %5596 = vmatprep.subr.mxu0 0.0
      %5597 = vmatpush2.msra.mxu0 0.0
      %5598 = vmatprep.subr.mxu0 0.0
      %5599 = vmatpush2.msra.mxu0 0.0
      %5600 = vmatprep.subr.mxu0 0.0
      %5601 = vmatpush2.msra.mxu0 0.0
      %5602 = vmatprep.subr.mxu0 0.0
      %5603 = vmatpush2.msra.mxu0 0.0
      %5604 = vmatprep.subr.mxu0 0.0
      %5605 = vmatpush2.msra.mxu0 0.0
      %5606 = vmatprep.subr.mxu0 0.0
      %5607 = vmatpush2.msra.mxu0 0.0
      %5608 = vmatprep.subr.mxu0 0.0
      %5609 = vmatpush2.msra.mxu0 0.0
      %5610 = vmatprep.subr.mxu0 0.0
      %5611 = vmatpush2.msra.mxu0 0.0
      %5612 = vmatprep.subr.mxu0 0.0
      %5613 = vmatpush2.msra.mxu0 0.0
      %5614 = vmatprep.subr.mxu0 0.0
      %5615 = vmatpush2.msra.mxu0 0.0
      %5616 = vmatprep.subr.mxu0 0.0
      %5617 = vmatpush2.msra.mxu0 0.0
      %5618 = vmatprep.subr.mxu0 0.0
      %5619 = vmatpush2.msra.mxu0 0.0
      %5620 = vmatprep.mubr.f32.mxu0 0.0
      %5621 = vmatmul.mubr.f32.gmra.mxu0 %v5554
      %v5622 = vpop.f32.mrf.mxu0
      %v5623 = vadd.f32 0.0, %v5622
      %v5624 = vpop.f32.mrf.mxu0
      %5625 = vdwg.mxu0
      %v5626 = vsel %vm361, %v5623, 0.0
      %5627 = vadd.xlane.f32.xlu0 %v5626
      %v5628 = vpop.xlane.xlu0 %5627
      %v5629 = vmul.f32 %v5628, %v372
      %v5630 = vsub.f32 %v5623, %v5629
      %v5631 = vmul.f32 %v5630, %v5630
      %v5632 = vsel %vm361, %v5631, 0.0
      %5633 = vadd.xlane.f32.xlu0 %v5632
      %v5634 = vpop.xlane.xlu0 %5633
      %v5635 = vmul.f32 %v5634, %v372
      %v5636 = vadd.f32 %v5635, 1e-05
      %v5637 = vrsqrt.pop %v5636
      %v5638 = vmul.f32 %v5630, %v5637
      %s5639 = scalar_lea.vmem %s2, 34
      %v5640 = vld [vmem:[%s5639] sm:$0x1]
      %v5642 = vlaneseq
      %v5643 = vshrl.u32 %v5642, 7
      %v5644 = vsub.s32 0, %v5643
      %v5645 = vrot.slane %v5640, %v5644
      %v5647 = vmul.f32 %v5638, %v5645
      %s5648 = scalar_lea.vmem %s2, 35
      %v5649 = vld [vmem:[%s5648] sm:$0x1]
      %v5651 = vlaneseq
      %v5652 = vshrl.u32 %v5651, 7
      %v5653 = vsub.s32 0, %v5652
      %v5654 = vrot.slane %v5649, %v5653
      %v5656 = vadd.f32 %v5647, %v5654
      %s5657 = scalar_lea.vmem %s1, 608
      %v5658 = vld [vmem:[%s5657] sm:$0xff]
      %v5659 = vld [vmem:[%s5657 + $0x8] sm:$0xff]
      %v5660 = vld [vmem:[%s5657 + $0x10] sm:$0xff]
      %v5661 = vld [vmem:[%s5657 + $0x18] sm:$0xff]
      %5662 = vmatprep.subr.mxu0 0.0
      %5663 = vmatpush1.msra.mxu0 0.0
      %5664 = vmatprep.subr.mxu0 0.0
      %5665 = vmatpush1.msra.mxu0 0.0
      %5666 = vmatprep.subr.mxu0 0.0
      %5667 = vmatpush1.msra.mxu0 0.0
      %5668 = vmatprep.subr.mxu0 0.0
      %5669 = vmatpush1.msra.mxu0 0.0
      %5670 = vmatprep.subr.mxu0 0.0
      %5671 = vmatpush1.msra.mxu0 0.0
      %5672 = vmatprep.subr.mxu0 0.0
      %5673 = vmatpush1.msra.mxu0 0.0
      %5674 = vmatprep.subr.mxu0 0.0
      %5675 = vmatpush1.msra.mxu0 0.0
      %5676 = vmatprep.subr.mxu0 0.0
      %5677 = vmatpush1.msra.mxu0 0.0
      %5678 = vmatprep.subr.mxu0 0.0
      %5679 = vmatpush1.msra.mxu0 0.0
      %5680 = vmatprep.subr.mxu0 0.0
      %5681 = vmatpush1.msra.mxu0 0.0
      %5682 = vmatprep.subr.mxu0 0.0
      %5683 = vmatpush1.msra.mxu0 0.0
      %5684 = vmatprep.subr.mxu0 0.0
      %5685 = vmatpush1.msra.mxu0 0.0
      %5686 = vmatprep.subr.mxu0 0.0
      %5687 = vmatpush1.msra.mxu0 %v5661
      %5688 = vmatprep.subr.mxu0 0.0
      %5689 = vmatpush1.msra.mxu0 %v5660
      %5690 = vmatprep.subr.mxu0 0.0
      %5691 = vmatpush1.msra.mxu0 %v5659
      %5692 = vmatprep.subr.mxu0 0.0
      %5693 = vmatpush1.msra.mxu0 %v5658
      %5694 = vmatprep.subr.mxu0 0.0
      %5695 = vmatpush2.msra.mxu0 0.0
      %5696 = vmatprep.subr.mxu0 0.0
      %5697 = vmatpush2.msra.mxu0 0.0
      %5698 = vmatprep.subr.mxu0 0.0
      %5699 = vmatpush2.msra.mxu0 0.0
      %5700 = vmatprep.subr.mxu0 0.0
      %5701 = vmatpush2.msra.mxu0 0.0
      %5702 = vmatprep.subr.mxu0 0.0
      %5703 = vmatpush2.msra.mxu0 0.0
      %5704 = vmatprep.subr.mxu0 0.0
      %5705 = vmatpush2.msra.mxu0 0.0
      %5706 = vmatprep.subr.mxu0 0.0
      %5707 = vmatpush2.msra.mxu0 0.0
      %5708 = vmatprep.subr.mxu0 0.0
      %5709 = vmatpush2.msra.mxu0 0.0
      %5710 = vmatprep.subr.mxu0 0.0
      %5711 = vmatpush2.msra.mxu0 0.0
      %5712 = vmatprep.subr.mxu0 0.0
      %5713 = vmatpush2.msra.mxu0 0.0
      %5714 = vmatprep.subr.mxu0 0.0
      %5715 = vmatpush2.msra.mxu0 0.0
      %5716 = vmatprep.subr.mxu0 0.0
      %5717 = vmatpush2.msra.mxu0 0.0
      %5718 = vmatprep.subr.mxu0 0.0
      %5719 = vmatpush2.msra.mxu0 0.0
      %5720 = vmatprep.subr.mxu0 0.0
      %5721 = vmatpush2.msra.mxu0 0.0
      %5722 = vmatprep.subr.mxu0 0.0
      %5723 = vmatpush2.msra.mxu0 0.0
      %5724 = vmatprep.subr.mxu0 0.0
      %5725 = vmatpush2.msra.mxu0 0.0
      %5726 = vmatprep.mubr.f32.mxu0 0.0
      %5727 = vmatmul.mubr.f32.gmra.mxu0 %v5554
      %v5728 = vpop.f32.mrf.mxu0
      %v5729 = vadd.f32 0.0, %v5728
      %v5730 = vpop.f32.mrf.mxu0
      %5731 = vdwg.mxu0
      %v5732 = vsel %vm361, %v5729, 0.0
      %5733 = vadd.xlane.f32.xlu0 %v5732
      %v5734 = vpop.xlane.xlu0 %5733
      %v5735 = vmul.f32 %v5734, %v372
      %v5736 = vsub.f32 %v5729, %v5735
      %v5737 = vmul.f32 %v5736, %v5736
      %v5738 = vsel %vm361, %v5737, 0.0
      %5739 = vadd.xlane.f32.xlu0 %v5738
      %v5740 = vpop.xlane.xlu0 %5739
      %v5741 = vmul.f32 %v5740, %v372
      %v5742 = vadd.f32 %v5741, 1e-05
      %v5743 = vrsqrt.pop %v5742
      %v5744 = vmul.f32 %v5736, %v5743
      %s5745 = scalar_lea.vmem %s2, 36
      %v5746 = vld [vmem:[%s5745] sm:$0x1]
      %v5748 = vlaneseq
      %v5749 = vshrl.u32 %v5748, 7
      %v5750 = vsub.s32 0, %v5749
      %v5751 = vrot.slane %v5746, %v5750
      %v5753 = vmul.f32 %v5744, %v5751
      %s5754 = scalar_lea.vmem %s2, 37
      %v5755 = vld [vmem:[%s5754] sm:$0x1]
      %v5757 = vlaneseq
      %v5758 = vshrl.u32 %v5757, 7
      %v5759 = vsub.s32 0, %v5758
      %v5760 = vrot.slane %v5755, %v5759
      %v5762 = vadd.f32 %v5753, %v5760
      %v5763 = vmul.f32 %v5545, %v342
      %v5764 = vmul.f32 %v5546, %v342
      %v5765 = vmul.f32 %v5547, %v342
      %v5767 = vsel %vm361, %v5763, 0
      %v5770 = vsel %vm361, %v5764, 0
      %v5773 = vsel %vm361, %v5765, 0
      %v5776 = vsel %vm361, %v5656, 0
      %5778 = vmatprep.subr.mxu0 0.0
      %5779 = vmatpush1.xpose.msra.mxu0 0.0
      %5780 = vmatprep.subr.mxu0 0.0
      %5781 = vmatpush1.xpose.msra.mxu0 0.0
      %5782 = vmatprep.subr.mxu0 0.0
      %5783 = vmatpush1.xpose.msra.mxu0 0.0
      %5784 = vmatprep.subr.mxu0 0.0
      %5785 = vmatpush1.xpose.msra.mxu0 0.0
      %5786 = vmatprep.subr.mxu0 0.0
      %5787 = vmatpush1.xpose.msra.mxu0 0.0
      %5788 = vmatprep.subr.mxu0 0.0
      %5789 = vmatpush1.xpose.msra.mxu0 0.0
      %5790 = vmatprep.subr.mxu0 0.0
      %5791 = vmatpush1.xpose.msra.mxu0 0.0
      %5792 = vmatprep.subr.mxu0 0.0
      %5793 = vmatpush1.xpose.msra.mxu0 0.0
      %5794 = vmatprep.subr.mxu0 0.0
      %5795 = vmatpush1.xpose.msra.mxu0 0.0
      %5796 = vmatprep.subr.mxu0 0.0
      %5797 = vmatpush1.xpose.msra.mxu0 0.0
      %5798 = vmatprep.subr.mxu0 0.0
      %5799 = vmatpush1.xpose.msra.mxu0 0.0
      %5800 = vmatprep.subr.mxu0 0.0
      %5801 = vmatpush1.xpose.msra.mxu0 0.0
      %5802 = vmatprep.subr.mxu0 0.0
      %5803 = vmatpush1.xpose.msra.mxu0 0.0
      %5804 = vmatprep.subr.mxu0 0.0
      %5805 = vmatpush1.xpose.msra.mxu0 0.0
      %5806 = vmatprep.subr.mxu0 0.0
      %5807 = vmatpush1.xpose.msra.mxu0 0.0
      %5808 = vmatprep.subr.mxu0 0.0
      %5809 = vmatpush1.xpose.msra.mxu0 %v5776
      %5810 = vmatprep.subr.mxu0 0.0
      %5811 = vmatpush2.xpose.msra.mxu0 0.0
      %5812 = vmatprep.subr.mxu0 0.0
      %5813 = vmatpush2.xpose.msra.mxu0 0.0
      %5814 = vmatprep.subr.mxu0 0.0
      %5815 = vmatpush2.xpose.msra.mxu0 0.0
      %5816 = vmatprep.subr.mxu0 0.0
      %5817 = vmatpush2.xpose.msra.mxu0 0.0
      %5818 = vmatprep.subr.mxu0 0.0
      %5819 = vmatpush2.xpose.msra.mxu0 0.0
      %5820 = vmatprep.subr.mxu0 0.0
      %5821 = vmatpush2.xpose.msra.mxu0 0.0
      %5822 = vmatprep.subr.mxu0 0.0
      %5823 = vmatpush2.xpose.msra.mxu0 0.0
      %5824 = vmatprep.subr.mxu0 0.0
      %5825 = vmatpush2.xpose.msra.mxu0 0.0
      %5826 = vmatprep.subr.mxu0 0.0
      %5827 = vmatpush2.xpose.msra.mxu0 0.0
      %5828 = vmatprep.subr.mxu0 0.0
      %5829 = vmatpush2.xpose.msra.mxu0 0.0
      %5830 = vmatprep.subr.mxu0 0.0
      %5831 = vmatpush2.xpose.msra.mxu0 0.0
      %5832 = vmatprep.subr.mxu0 0.0
      %5833 = vmatpush2.xpose.msra.mxu0 0.0
      %5834 = vmatprep.subr.mxu0 0.0
      %5835 = vmatpush2.xpose.msra.mxu0 0.0
      %5836 = vmatprep.subr.mxu0 0.0
      %5837 = vmatpush2.xpose.msra.mxu0 0.0
      %5838 = vmatprep.subr.mxu0 0.0
      %5839 = vmatpush2.xpose.msra.mxu0 0.0
      %5840 = vmatprep.subr.mxu0 0.0
      %5841 = vmatpush2.xpose.msra.mxu0 0.0
      %5842 = vmatprep.mubr.f32.mxu0 0.0
      %5843 = vmatmul.mubr.f32.gmra.mxu0 %v5767
      %v5844 = vpop.f32.mrf.mxu0
      %v5845 = vadd.f32 %v337, %v5844
      %v5846 = vpop.f32.mrf.mxu0
      %5847 = vmatprep.mubr.f32.mxu0 0.0
      %5848 = vmatmul.mubr.f32.gmra.mxu0 %v5770
      %v5849 = vpop.f32.mrf.mxu0
      %v5850 = vadd.f32 %v337, %v5849
      %v5851 = vpop.f32.mrf.mxu0
      %5852 = vmatprep.mubr.f32.mxu0 0.0
      %5853 = vmatmul.mubr.f32.gmra.mxu0 %v5773
      %v5854 = vpop.f32.mrf.mxu0
      %v5855 = vadd.f32 %v337, %v5854
      %v5856 = vpop.f32.mrf.mxu0
      %5857 = vdwg.mxu0
      %v5858 = vsel %vm1607, %v5845, -inf
      %5859 = vmax.xlane.f32.xlu0 %v5858
      %v5860 = vpop.xlane.xlu0 %5859
      %v5861 = vsel %vm1607, %v5850, -inf
      %5862 = vmax.xlane.f32.xlu0 %v5861
      %v5863 = vpop.xlane.xlu0 %5862
      %v5864 = vsel %vm1614, %v5855, -inf
      %5865 = vmax.xlane.f32.xlu0 %v5864
      %v5866 = vpop.xlane.xlu0 %5865
      %v5867 = vsub.f32 %v5845, %v5860
      %v5868 = vsub.f32 %v5850, %v5863
      %v5869 = vsub.f32 %v5855, %v5866
      %v5870 = vmul.f32 %v5867, 1.442695
      %v5871 = vpow.pop %v5870
      %v5872 = vmul.f32 %v5868, 1.442695
      %v5873 = vpow.pop %v5872
      %v5874 = vmul.f32 %v5869, 1.442695
      %v5875 = vpow.pop %v5874
      %v5876 = vsel %vm1607, %v5871, 0.0
      %5877 = vadd.xlane.f32.xlu0 %v5876
      %v5878 = vpop.xlane.xlu0 %5877
      %v5879 = vsel %vm1607, %v5873, 0.0
      %5880 = vadd.xlane.f32.xlu0 %v5879
      %v5881 = vpop.xlane.xlu0 %5880
      %v5882 = vsel %vm1614, %v5875, 0.0
      %5883 = vadd.xlane.f32.xlu0 %v5882
      %v5884 = vpop.xlane.xlu0 %5883
      %v5885 = vrcp.pop %v5878
      %v5886 = vmul.f32 %v5871, %v5885
      %v5887 = vrcp.pop %v5881
      %v5888 = vmul.f32 %v5873, %v5887
      %v5889 = vrcp.pop %v5884
      %v5890 = vmul.f32 %v5875, %v5889
      %v5891 = vmul.f32 %v5762, %v342
      %v5892 = vmul.f32 %v5545, %v347
      %v5893 = vmul.f32 %v5546, %v347
      %v5894 = vmul.f32 %v5547, %v347
      %v5896 = vsel %vm361, %v5892, 0
      %v5899 = vsel %vm361, %v5893, 0
      %v5902 = vsel %vm361, %v5894, 0
      %5904 = vmatprep.subr.mxu0 0.0
      %5905 = vmatpush1.xpose.msra.mxu0 0.0
      %5906 = vmatprep.subr.mxu0 0.0
      %5907 = vmatpush1.xpose.msra.mxu0 0.0
      %5908 = vmatprep.subr.mxu0 0.0
      %5909 = vmatpush1.xpose.msra.mxu0 0.0
      %5910 = vmatprep.subr.mxu0 0.0
      %5911 = vmatpush1.xpose.msra.mxu0 0.0
      %5912 = vmatprep.subr.mxu0 0.0
      %5913 = vmatpush1.xpose.msra.mxu0 0.0
      %5914 = vmatprep.subr.mxu0 0.0
      %5915 = vmatpush1.xpose.msra.mxu0 0.0
      %5916 = vmatprep.subr.mxu0 0.0
      %5917 = vmatpush1.xpose.msra.mxu0 0.0
      %5918 = vmatprep.subr.mxu0 0.0
      %5919 = vmatpush1.xpose.msra.mxu0 0.0
      %5920 = vmatprep.subr.mxu0 0.0
      %5921 = vmatpush1.xpose.msra.mxu0 0.0
      %5922 = vmatprep.subr.mxu0 0.0
      %5923 = vmatpush1.xpose.msra.mxu0 0.0
      %5924 = vmatprep.subr.mxu0 0.0
      %5925 = vmatpush1.xpose.msra.mxu0 0.0
      %5926 = vmatprep.subr.mxu0 0.0
      %5927 = vmatpush1.xpose.msra.mxu0 0.0
      %5928 = vmatprep.subr.mxu0 0.0
      %5929 = vmatpush1.xpose.msra.mxu0 0.0
      %5930 = vmatprep.subr.mxu0 0.0
      %5931 = vmatpush1.xpose.msra.mxu0 0.0
      %5932 = vmatprep.subr.mxu0 0.0
      %5933 = vmatpush1.xpose.msra.mxu0 0.0
      %5934 = vmatprep.subr.mxu0 0.0
      %5935 = vmatpush1.xpose.msra.mxu0 %v5776
      %5936 = vmatprep.subr.mxu0 0.0
      %5937 = vmatpush2.xpose.msra.mxu0 0.0
      %5938 = vmatprep.subr.mxu0 0.0
      %5939 = vmatpush2.xpose.msra.mxu0 0.0
      %5940 = vmatprep.subr.mxu0 0.0
      %5941 = vmatpush2.xpose.msra.mxu0 0.0
      %5942 = vmatprep.subr.mxu0 0.0
      %5943 = vmatpush2.xpose.msra.mxu0 0.0
      %5944 = vmatprep.subr.mxu0 0.0
      %5945 = vmatpush2.xpose.msra.mxu0 0.0
      %5946 = vmatprep.subr.mxu0 0.0
      %5947 = vmatpush2.xpose.msra.mxu0 0.0
      %5948 = vmatprep.subr.mxu0 0.0
      %5949 = vmatpush2.xpose.msra.mxu0 0.0
      %5950 = vmatprep.subr.mxu0 0.0
      %5951 = vmatpush2.xpose.msra.mxu0 0.0
      %5952 = vmatprep.subr.mxu0 0.0
      %5953 = vmatpush2.xpose.msra.mxu0 0.0
      %5954 = vmatprep.subr.mxu0 0.0
      %5955 = vmatpush2.xpose.msra.mxu0 0.0
      %5956 = vmatprep.subr.mxu0 0.0
      %5957 = vmatpush2.xpose.msra.mxu0 0.0
      %5958 = vmatprep.subr.mxu0 0.0
      %5959 = vmatpush2.xpose.msra.mxu0 0.0
      %5960 = vmatprep.subr.mxu0 0.0
      %5961 = vmatpush2.xpose.msra.mxu0 0.0
      %5962 = vmatprep.subr.mxu0 0.0
      %5963 = vmatpush2.xpose.msra.mxu0 0.0
      %5964 = vmatprep.subr.mxu0 0.0
      %5965 = vmatpush2.xpose.msra.mxu0 0.0
      %5966 = vmatprep.subr.mxu0 0.0
      %5967 = vmatpush2.xpose.msra.mxu0 0.0
      %5968 = vmatprep.mubr.f32.mxu0 0.0
      %5969 = vmatmul.mubr.f32.gmra.mxu0 %v5896
      %v5970 = vpop.f32.mrf.mxu0
      %v5971 = vadd.f32 %v337, %v5970
      %v5972 = vpop.f32.mrf.mxu0
      %5973 = vmatprep.mubr.f32.mxu0 0.0
      %5974 = vmatmul.mubr.f32.gmra.mxu0 %v5899
      %v5975 = vpop.f32.mrf.mxu0
      %v5976 = vadd.f32 %v337, %v5975
      %v5977 = vpop.f32.mrf.mxu0
      %5978 = vmatprep.mubr.f32.mxu0 0.0
      %5979 = vmatmul.mubr.f32.gmra.mxu0 %v5902
      %v5980 = vpop.f32.mrf.mxu0
      %v5981 = vadd.f32 %v337, %v5980
      %v5982 = vpop.f32.mrf.mxu0
      %5983 = vdwg.mxu0
      %v5984 = vsel %vm1607, %v5971, -inf
      %5985 = vmax.xlane.f32.xlu0 %v5984
      %v5986 = vpop.xlane.xlu0 %5985
      %v5987 = vsel %vm1607, %v5976, -inf
      %5988 = vmax.xlane.f32.xlu0 %v5987
      %v5989 = vpop.xlane.xlu0 %5988
      %v5990 = vsel %vm1614, %v5981, -inf
      %5991 = vmax.xlane.f32.xlu0 %v5990
      %v5992 = vpop.xlane.xlu0 %5991
      %v5993 = vsub.f32 %v5971, %v5986
      %v5994 = vsub.f32 %v5976, %v5989
      %v5995 = vsub.f32 %v5981, %v5992
      %v5996 = vmul.f32 %v5993, 1.442695
      %v5997 = vpow.pop %v5996
      %v5998 = vmul.f32 %v5994, 1.442695
      %v5999 = vpow.pop %v5998
      %v6000 = vmul.f32 %v5995, 1.442695
      %v6001 = vpow.pop %v6000
      %v6002 = vsel %vm1607, %v5997, 0.0
      %6003 = vadd.xlane.f32.xlu0 %v6002
      %v6004 = vpop.xlane.xlu0 %6003
      %v6005 = vsel %vm1607, %v5999, 0.0
      %6006 = vadd.xlane.f32.xlu0 %v6005
      %v6007 = vpop.xlane.xlu0 %6006
      %v6008 = vsel %vm1614, %v6001, 0.0
      %6009 = vadd.xlane.f32.xlu0 %v6008
      %v6010 = vpop.xlane.xlu0 %6009
      %v6011 = vrcp.pop %v6004
      %v6012 = vmul.f32 %v5997, %v6011
      %v6013 = vrcp.pop %v6007
      %v6014 = vmul.f32 %v5999, %v6013
      %v6015 = vrcp.pop %v6010
      %v6016 = vmul.f32 %v6001, %v6015
      %v6017 = vmul.f32 %v5762, %v347
      %v6019 = vsel %vm1607, %v6012, 0
      %v6022 = vsel %vm1607, %v6014, 0
      %v6025 = vsel %vm1607, %v6016, 0
      %6027 = vmatprep.subr.mxu0 0.0
      %6028 = vmatpush1.msra.mxu0 0.0
      %6029 = vmatprep.subr.mxu0 0.0
      %6030 = vmatpush1.msra.mxu0 0.0
      %6031 = vmatprep.subr.mxu0 0.0
      %6032 = vmatpush1.msra.mxu0 0.0
      %6033 = vmatprep.subr.mxu0 0.0
      %6034 = vmatpush1.msra.mxu0 0.0
      %6035 = vmatprep.subr.mxu0 0.0
      %6036 = vmatpush1.msra.mxu0 0.0
      %6037 = vmatprep.subr.mxu0 0.0
      %6038 = vmatpush1.msra.mxu0 0.0
      %6039 = vmatprep.subr.mxu0 0.0
      %6040 = vmatpush1.msra.mxu0 0.0
      %6041 = vmatprep.subr.mxu0 0.0
      %6042 = vmatpush1.msra.mxu0 0.0
      %6043 = vmatprep.subr.mxu0 0.0
      %6044 = vmatpush1.msra.mxu0 0.0
      %6045 = vmatprep.subr.mxu0 0.0
      %6046 = vmatpush1.msra.mxu0 0.0
      %6047 = vmatprep.subr.mxu0 0.0
      %6048 = vmatpush1.msra.mxu0 0.0
      %6049 = vmatprep.subr.mxu0 0.0
      %6050 = vmatpush1.msra.mxu0 0.0
      %6051 = vmatprep.subr.mxu0 0.0
      %6052 = vmatpush1.msra.mxu0 0.0
      %6053 = vmatprep.subr.mxu0 0.0
      %6054 = vmatpush1.msra.mxu0 0.0
      %6055 = vmatprep.subr.mxu0 0.0
      %6056 = vmatpush1.msra.mxu0 0.0
      %6057 = vmatprep.subr.mxu0 0.0
      %6058 = vmatpush1.msra.mxu0 %v6017
      %6059 = vmatprep.subr.mxu0 0.0
      %6060 = vmatpush2.msra.mxu0 0.0
      %6061 = vmatprep.subr.mxu0 0.0
      %6062 = vmatpush2.msra.mxu0 0.0
      %6063 = vmatprep.subr.mxu0 0.0
      %6064 = vmatpush2.msra.mxu0 0.0
      %6065 = vmatprep.subr.mxu0 0.0
      %6066 = vmatpush2.msra.mxu0 0.0
      %6067 = vmatprep.subr.mxu0 0.0
      %6068 = vmatpush2.msra.mxu0 0.0
      %6069 = vmatprep.subr.mxu0 0.0
      %6070 = vmatpush2.msra.mxu0 0.0
      %6071 = vmatprep.subr.mxu0 0.0
      %6072 = vmatpush2.msra.mxu0 0.0
      %6073 = vmatprep.subr.mxu0 0.0
      %6074 = vmatpush2.msra.mxu0 0.0
      %6075 = vmatprep.subr.mxu0 0.0
      %6076 = vmatpush2.msra.mxu0 0.0
      %6077 = vmatprep.subr.mxu0 0.0
      %6078 = vmatpush2.msra.mxu0 0.0
      %6079 = vmatprep.subr.mxu0 0.0
      %6080 = vmatpush2.msra.mxu0 0.0
      %6081 = vmatprep.subr.mxu0 0.0
      %6082 = vmatpush2.msra.mxu0 0.0
      %6083 = vmatprep.subr.mxu0 0.0
      %6084 = vmatpush2.msra.mxu0 0.0
      %6085 = vmatprep.subr.mxu0 0.0
      %6086 = vmatpush2.msra.mxu0 0.0
      %6087 = vmatprep.subr.mxu0 0.0
      %6088 = vmatpush2.msra.mxu0 0.0
      %6089 = vmatprep.subr.mxu0 0.0
      %6090 = vmatpush2.msra.mxu0 0.0
      %6091 = vmatprep.mubr.f32.mxu0 0.0
      %6092 = vmatmul.mubr.f32.gmra.mxu0 %v6019
      %v6093 = vpop.f32.mrf.mxu0
      %v6094 = vadd.f32 0.0, %v6093
      %v6095 = vpop.f32.mrf.mxu0
      %6096 = vmatprep.mubr.f32.mxu0 0.0
      %6097 = vmatmul.mubr.f32.gmra.mxu0 %v6022
      %v6098 = vpop.f32.mrf.mxu0
      %v6099 = vadd.f32 0.0, %v6098
      %v6100 = vpop.f32.mrf.mxu0
      %6101 = vmatprep.mubr.f32.mxu0 0.0
      %6102 = vmatmul.mubr.f32.gmra.mxu0 %v6025
      %v6103 = vpop.f32.mrf.mxu0
      %v6104 = vadd.f32 0.0, %v6103
      %v6105 = vpop.f32.mrf.mxu0
      %6106 = vdwg.mxu0
      %v6108 = vsel %vm1607, %v5886, 0
      %v6111 = vsel %vm1607, %v5888, 0
      %v6114 = vsel %vm1607, %v5890, 0
      %6116 = vmatprep.subr.mxu0 0.0
      %6117 = vmatpush1.msra.mxu0 0.0
      %6118 = vmatprep.subr.mxu0 0.0
      %6119 = vmatpush1.msra.mxu0 0.0
      %6120 = vmatprep.subr.mxu0 0.0
      %6121 = vmatpush1.msra.mxu0 0.0
      %6122 = vmatprep.subr.mxu0 0.0
      %6123 = vmatpush1.msra.mxu0 0.0
      %6124 = vmatprep.subr.mxu0 0.0
      %6125 = vmatpush1.msra.mxu0 0.0
      %6126 = vmatprep.subr.mxu0 0.0
      %6127 = vmatpush1.msra.mxu0 0.0
      %6128 = vmatprep.subr.mxu0 0.0
      %6129 = vmatpush1.msra.mxu0 0.0
      %6130 = vmatprep.subr.mxu0 0.0
      %6131 = vmatpush1.msra.mxu0 0.0
      %6132 = vmatprep.subr.mxu0 0.0
      %6133 = vmatpush1.msra.mxu0 0.0
      %6134 = vmatprep.subr.mxu0 0.0
      %6135 = vmatpush1.msra.mxu0 0.0
      %6136 = vmatprep.subr.mxu0 0.0
      %6137 = vmatpush1.msra.mxu0 0.0
      %6138 = vmatprep.subr.mxu0 0.0
      %6139 = vmatpush1.msra.mxu0 0.0
      %6140 = vmatprep.subr.mxu0 0.0
      %6141 = vmatpush1.msra.mxu0 0.0
      %6142 = vmatprep.subr.mxu0 0.0
      %6143 = vmatpush1.msra.mxu0 0.0
      %6144 = vmatprep.subr.mxu0 0.0
      %6145 = vmatpush1.msra.mxu0 0.0
      %6146 = vmatprep.subr.mxu0 0.0
      %6147 = vmatpush1.msra.mxu0 %v5891
      %6148 = vmatprep.subr.mxu0 0.0
      %6149 = vmatpush2.msra.mxu0 0.0
      %6150 = vmatprep.subr.mxu0 0.0
      %6151 = vmatpush2.msra.mxu0 0.0
      %6152 = vmatprep.subr.mxu0 0.0
      %6153 = vmatpush2.msra.mxu0 0.0
      %6154 = vmatprep.subr.mxu0 0.0
      %6155 = vmatpush2.msra.mxu0 0.0
      %6156 = vmatprep.subr.mxu0 0.0
      %6157 = vmatpush2.msra.mxu0 0.0
      %6158 = vmatprep.subr.mxu0 0.0
      %6159 = vmatpush2.msra.mxu0 0.0
      %6160 = vmatprep.subr.mxu0 0.0
      %6161 = vmatpush2.msra.mxu0 0.0
      %6162 = vmatprep.subr.mxu0 0.0
      %6163 = vmatpush2.msra.mxu0 0.0
      %6164 = vmatprep.subr.mxu0 0.0
      %6165 = vmatpush2.msra.mxu0 0.0
      %6166 = vmatprep.subr.mxu0 0.0
      %6167 = vmatpush2.msra.mxu0 0.0
      %6168 = vmatprep.subr.mxu0 0.0
      %6169 = vmatpush2.msra.mxu0 0.0
      %6170 = vmatprep.subr.mxu0 0.0
      %6171 = vmatpush2.msra.mxu0 0.0
      %6172 = vmatprep.subr.mxu0 0.0
      %6173 = vmatpush2.msra.mxu0 0.0
      %6174 = vmatprep.subr.mxu0 0.0
      %6175 = vmatpush2.msra.mxu0 0.0
      %6176 = vmatprep.subr.mxu0 0.0
      %6177 = vmatpush2.msra.mxu0 0.0
      %6178 = vmatprep.subr.mxu0 0.0
      %6179 = vmatpush2.msra.mxu0 0.0
      %6180 = vmatprep.mubr.f32.mxu0 0.0
      %6181 = vmatmul.mubr.f32.gmra.mxu0 %v6108
      %v6182 = vpop.f32.mrf.mxu0
      %v6183 = vadd.f32 %v6094, %v6182
      %v6184 = vpop.f32.mrf.mxu0
      %6185 = vmatprep.mubr.f32.mxu0 0.0
      %6186 = vmatmul.mubr.f32.gmra.mxu0 %v6111
      %v6187 = vpop.f32.mrf.mxu0
      %v6188 = vadd.f32 %v6099, %v6187
      %v6189 = vpop.f32.mrf.mxu0
      %6190 = vmatprep.mubr.f32.mxu0 0.0
      %6191 = vmatmul.mubr.f32.gmra.mxu0 %v6114
      %v6192 = vpop.f32.mrf.mxu0
      %v6193 = vadd.f32 %v6104, %v6192
      %v6194 = vpop.f32.mrf.mxu0
      %6195 = vdwg.mxu0
      %v6196 = vmul.f32 %v5545, %v352
      %v6197 = vmul.f32 %v5546, %v352
      %v6198 = vmul.f32 %v5547, %v352
      %v6200 = vsel %vm361, %v6196, 0
      %v6203 = vsel %vm361, %v6197, 0
      %v6206 = vsel %vm361, %v6198, 0
      %6208 = vmatprep.subr.mxu0 0.0
      %6209 = vmatpush1.xpose.msra.mxu0 0.0
      %6210 = vmatprep.subr.mxu0 0.0
      %6211 = vmatpush1.xpose.msra.mxu0 0.0
      %6212 = vmatprep.subr.mxu0 0.0
      %6213 = vmatpush1.xpose.msra.mxu0 0.0
      %6214 = vmatprep.subr.mxu0 0.0
      %6215 = vmatpush1.xpose.msra.mxu0 0.0
      %6216 = vmatprep.subr.mxu0 0.0
      %6217 = vmatpush1.xpose.msra.mxu0 0.0
      %6218 = vmatprep.subr.mxu0 0.0
      %6219 = vmatpush1.xpose.msra.mxu0 0.0
      %6220 = vmatprep.subr.mxu0 0.0
      %6221 = vmatpush1.xpose.msra.mxu0 0.0
      %6222 = vmatprep.subr.mxu0 0.0
      %6223 = vmatpush1.xpose.msra.mxu0 0.0
      %6224 = vmatprep.subr.mxu0 0.0
      %6225 = vmatpush1.xpose.msra.mxu0 0.0
      %6226 = vmatprep.subr.mxu0 0.0
      %6227 = vmatpush1.xpose.msra.mxu0 0.0
      %6228 = vmatprep.subr.mxu0 0.0
      %6229 = vmatpush1.xpose.msra.mxu0 0.0
      %6230 = vmatprep.subr.mxu0 0.0
      %6231 = vmatpush1.xpose.msra.mxu0 0.0
      %6232 = vmatprep.subr.mxu0 0.0
      %6233 = vmatpush1.xpose.msra.mxu0 0.0
      %6234 = vmatprep.subr.mxu0 0.0
      %6235 = vmatpush1.xpose.msra.mxu0 0.0
      %6236 = vmatprep.subr.mxu0 0.0
      %6237 = vmatpush1.xpose.msra.mxu0 0.0
      %6238 = vmatprep.subr.mxu0 0.0
      %6239 = vmatpush1.xpose.msra.mxu0 %v5776
      %6240 = vmatprep.subr.mxu0 0.0
      %6241 = vmatpush2.xpose.msra.mxu0 0.0
      %6242 = vmatprep.subr.mxu0 0.0
      %6243 = vmatpush2.xpose.msra.mxu0 0.0
      %6244 = vmatprep.subr.mxu0 0.0
      %6245 = vmatpush2.xpose.msra.mxu0 0.0
      %6246 = vmatprep.subr.mxu0 0.0
      %6247 = vmatpush2.xpose.msra.mxu0 0.0
      %6248 = vmatprep.subr.mxu0 0.0
      %6249 = vmatpush2.xpose.msra.mxu0 0.0
      %6250 = vmatprep.subr.mxu0 0.0
      %6251 = vmatpush2.xpose.msra.mxu0 0.0
      %6252 = vmatprep.subr.mxu0 0.0
      %6253 = vmatpush2.xpose.msra.mxu0 0.0
      %6254 = vmatprep.subr.mxu0 0.0
      %6255 = vmatpush2.xpose.msra.mxu0 0.0
      %6256 = vmatprep.subr.mxu0 0.0
      %6257 = vmatpush2.xpose.msra.mxu0 0.0
      %6258 = vmatprep.subr.mxu0 0.0
      %6259 = vmatpush2.xpose.msra.mxu0 0.0
      %6260 = vmatprep.subr.mxu0 0.0
      %6261 = vmatpush2.xpose.msra.mxu0 0.0
      %6262 = vmatprep.subr.mxu0 0.0
      %6263 = vmatpush2.xpose.msra.mxu0 0.0
      %6264 = vmatprep.subr.mxu0 0.0
      %6265 = vmatpush2.xpose.msra.mxu0 0.0
      %6266 = vmatprep.subr.mxu0 0.0
      %6267 = vmatpush2.xpose.msra.mxu0 0.0
      %6268 = vmatprep.subr.mxu0 0.0
      %6269 = vmatpush2.xpose.msra.mxu0 0.0
      %6270 = vmatprep.subr.mxu0 0.0
      %6271 = vmatpush2.xpose.msra.mxu0 0.0
      %6272 = vmatprep.mubr.f32.mxu0 0.0
      %6273 = vmatmul.mubr.f32.gmra.mxu0 %v6200
      %v6274 = vpop.f32.mrf.mxu0
      %v6275 = vadd.f32 %v337, %v6274
      %v6276 = vpop.f32.mrf.mxu0
      %6277 = vmatprep.mubr.f32.mxu0 0.0
      %6278 = vmatmul.mubr.f32.gmra.mxu0 %v6203
      %v6279 = vpop.f32.mrf.mxu0
      %v6280 = vadd.f32 %v337, %v6279
      %v6281 = vpop.f32.mrf.mxu0
      %6282 = vmatprep.mubr.f32.mxu0 0.0
      %6283 = vmatmul.mubr.f32.gmra.mxu0 %v6206
      %v6284 = vpop.f32.mrf.mxu0
      %v6285 = vadd.f32 %v337, %v6284
      %v6286 = vpop.f32.mrf.mxu0
      %6287 = vdwg.mxu0
      %v6288 = vsel %vm1607, %v6275, -inf
      %6289 = vmax.xlane.f32.xlu0 %v6288
      %v6290 = vpop.xlane.xlu0 %6289
      %v6291 = vsel %vm1607, %v6280, -inf
      %6292 = vmax.xlane.f32.xlu0 %v6291
      %v6293 = vpop.xlane.xlu0 %6292
      %v6294 = vsel %vm1614, %v6285, -inf
      %6295 = vmax.xlane.f32.xlu0 %v6294
      %v6296 = vpop.xlane.xlu0 %6295
      %v6297 = vsub.f32 %v6275, %v6290
      %v6298 = vsub.f32 %v6280, %v6293
      %v6299 = vsub.f32 %v6285, %v6296
      %v6300 = vmul.f32 %v6297, 1.442695
      %v6301 = vpow.pop %v6300
      %v6302 = vmul.f32 %v6298, 1.442695
      %v6303 = vpow.pop %v6302
      %v6304 = vmul.f32 %v6299, 1.442695
      %v6305 = vpow.pop %v6304
      %v6306 = vsel %vm1607, %v6301, 0.0
      %6307 = vadd.xlane.f32.xlu0 %v6306
      %v6308 = vpop.xlane.xlu0 %6307
      %v6309 = vsel %vm1607, %v6303, 0.0
      %6310 = vadd.xlane.f32.xlu0 %v6309
      %v6311 = vpop.xlane.xlu0 %6310
      %v6312 = vsel %vm1614, %v6305, 0.0
      %6313 = vadd.xlane.f32.xlu0 %v6312
      %v6314 = vpop.xlane.xlu0 %6313
      %v6315 = vrcp.pop %v6308
      %v6316 = vmul.f32 %v6301, %v6315
      %v6317 = vrcp.pop %v6311
      %v6318 = vmul.f32 %v6303, %v6317
      %v6319 = vrcp.pop %v6314
      %v6320 = vmul.f32 %v6305, %v6319
      %v6321 = vmul.f32 %v5762, %v352
      %v6323 = vsel %vm1607, %v6316, 0
      %v6326 = vsel %vm1607, %v6318, 0
      %v6329 = vsel %vm1607, %v6320, 0
      %6331 = vmatprep.subr.mxu0 0.0
      %6332 = vmatpush1.msra.mxu0 0.0
      %6333 = vmatprep.subr.mxu0 0.0
      %6334 = vmatpush1.msra.mxu0 0.0
      %6335 = vmatprep.subr.mxu0 0.0
      %6336 = vmatpush1.msra.mxu0 0.0
      %6337 = vmatprep.subr.mxu0 0.0
      %6338 = vmatpush1.msra.mxu0 0.0
      %6339 = vmatprep.subr.mxu0 0.0
      %6340 = vmatpush1.msra.mxu0 0.0
      %6341 = vmatprep.subr.mxu0 0.0
      %6342 = vmatpush1.msra.mxu0 0.0
      %6343 = vmatprep.subr.mxu0 0.0
      %6344 = vmatpush1.msra.mxu0 0.0
      %6345 = vmatprep.subr.mxu0 0.0
      %6346 = vmatpush1.msra.mxu0 0.0
      %6347 = vmatprep.subr.mxu0 0.0
      %6348 = vmatpush1.msra.mxu0 0.0
      %6349 = vmatprep.subr.mxu0 0.0
      %6350 = vmatpush1.msra.mxu0 0.0
      %6351 = vmatprep.subr.mxu0 0.0
      %6352 = vmatpush1.msra.mxu0 0.0
      %6353 = vmatprep.subr.mxu0 0.0
      %6354 = vmatpush1.msra.mxu0 0.0
      %6355 = vmatprep.subr.mxu0 0.0
      %6356 = vmatpush1.msra.mxu0 0.0
      %6357 = vmatprep.subr.mxu0 0.0
      %6358 = vmatpush1.msra.mxu0 0.0
      %6359 = vmatprep.subr.mxu0 0.0
      %6360 = vmatpush1.msra.mxu0 0.0
      %6361 = vmatprep.subr.mxu0 0.0
      %6362 = vmatpush1.msra.mxu0 %v6321
      %6363 = vmatprep.subr.mxu0 0.0
      %6364 = vmatpush2.msra.mxu0 0.0
      %6365 = vmatprep.subr.mxu0 0.0
      %6366 = vmatpush2.msra.mxu0 0.0
      %6367 = vmatprep.subr.mxu0 0.0
      %6368 = vmatpush2.msra.mxu0 0.0
      %6369 = vmatprep.subr.mxu0 0.0
      %6370 = vmatpush2.msra.mxu0 0.0
      %6371 = vmatprep.subr.mxu0 0.0
      %6372 = vmatpush2.msra.mxu0 0.0
      %6373 = vmatprep.subr.mxu0 0.0
      %6374 = vmatpush2.msra.mxu0 0.0
      %6375 = vmatprep.subr.mxu0 0.0
      %6376 = vmatpush2.msra.mxu0 0.0
      %6377 = vmatprep.subr.mxu0 0.0
      %6378 = vmatpush2.msra.mxu0 0.0
      %6379 = vmatprep.subr.mxu0 0.0
      %6380 = vmatpush2.msra.mxu0 0.0
      %6381 = vmatprep.subr.mxu0 0.0
      %6382 = vmatpush2.msra.mxu0 0.0
      %6383 = vmatprep.subr.mxu0 0.0
      %6384 = vmatpush2.msra.mxu0 0.0
      %6385 = vmatprep.subr.mxu0 0.0
      %6386 = vmatpush2.msra.mxu0 0.0
      %6387 = vmatprep.subr.mxu0 0.0
      %6388 = vmatpush2.msra.mxu0 0.0
      %6389 = vmatprep.subr.mxu0 0.0
      %6390 = vmatpush2.msra.mxu0 0.0
      %6391 = vmatprep.subr.mxu0 0.0
      %6392 = vmatpush2.msra.mxu0 0.0
      %6393 = vmatprep.subr.mxu0 0.0
      %6394 = vmatpush2.msra.mxu0 0.0
      %6395 = vmatprep.mubr.f32.mxu0 0.0
      %6396 = vmatmul.mubr.f32.gmra.mxu0 %v6323
      %v6397 = vpop.f32.mrf.mxu0
      %v6398 = vadd.f32 0.0, %v6397
      %v6399 = vpop.f32.mrf.mxu0
      %6400 = vmatprep.mubr.f32.mxu0 0.0
      %6401 = vmatmul.mubr.f32.gmra.mxu0 %v6326
      %v6402 = vpop.f32.mrf.mxu0
      %v6403 = vadd.f32 0.0, %v6402
      %v6404 = vpop.f32.mrf.mxu0
      %6405 = vmatprep.mubr.f32.mxu0 0.0
      %6406 = vmatmul.mubr.f32.gmra.mxu0 %v6329
      %v6407 = vpop.f32.mrf.mxu0
      %v6408 = vadd.f32 0.0, %v6407
      %v6409 = vpop.f32.mrf.mxu0
      %6410 = vdwg.mxu0
      %v6411 = vadd.f32 %v6183, %v6398
      %v6412 = vadd.f32 %v6188, %v6403
      %v6413 = vadd.f32 %v6193, %v6408
      %v6414 = vmul.f32 %v5545, %v357
      %v6415 = vmul.f32 %v5546, %v357
      %v6416 = vmul.f32 %v5547, %v357
      %v6418 = vsel %vm361, %v6414, 0
      %v6421 = vsel %vm361, %v6415, 0
      %v6424 = vsel %vm361, %v6416, 0
      %6426 = vmatprep.subr.mxu0 0.0
      %6427 = vmatpush1.xpose.msra.mxu0 0.0
      %6428 = vmatprep.subr.mxu0 0.0
      %6429 = vmatpush1.xpose.msra.mxu0 0.0
      %6430 = vmatprep.subr.mxu0 0.0
      %6431 = vmatpush1.xpose.msra.mxu0 0.0
      %6432 = vmatprep.subr.mxu0 0.0
      %6433 = vmatpush1.xpose.msra.mxu0 0.0
      %6434 = vmatprep.subr.mxu0 0.0
      %6435 = vmatpush1.xpose.msra.mxu0 0.0
      %6436 = vmatprep.subr.mxu0 0.0
      %6437 = vmatpush1.xpose.msra.mxu0 0.0
      %6438 = vmatprep.subr.mxu0 0.0
      %6439 = vmatpush1.xpose.msra.mxu0 0.0
      %6440 = vmatprep.subr.mxu0 0.0
      %6441 = vmatpush1.xpose.msra.mxu0 0.0
      %6442 = vmatprep.subr.mxu0 0.0
      %6443 = vmatpush1.xpose.msra.mxu0 0.0
      %6444 = vmatprep.subr.mxu0 0.0
      %6445 = vmatpush1.xpose.msra.mxu0 0.0
      %6446 = vmatprep.subr.mxu0 0.0
      %6447 = vmatpush1.xpose.msra.mxu0 0.0
      %6448 = vmatprep.subr.mxu0 0.0
      %6449 = vmatpush1.xpose.msra.mxu0 0.0
      %6450 = vmatprep.subr.mxu0 0.0
      %6451 = vmatpush1.xpose.msra.mxu0 0.0
      %6452 = vmatprep.subr.mxu0 0.0
      %6453 = vmatpush1.xpose.msra.mxu0 0.0
      %6454 = vmatprep.subr.mxu0 0.0
      %6455 = vmatpush1.xpose.msra.mxu0 0.0
      %6456 = vmatprep.subr.mxu0 0.0
      %6457 = vmatpush1.xpose.msra.mxu0 %v5776
      %6458 = vmatprep.subr.mxu0 0.0
      %6459 = vmatpush2.xpose.msra.mxu0 0.0
      %6460 = vmatprep.subr.mxu0 0.0
      %6461 = vmatpush2.xpose.msra.mxu0 0.0
      %6462 = vmatprep.subr.mxu0 0.0
      %6463 = vmatpush2.xpose.msra.mxu0 0.0
      %6464 = vmatprep.subr.mxu0 0.0
      %6465 = vmatpush2.xpose.msra.mxu0 0.0
      %6466 = vmatprep.subr.mxu0 0.0
      %6467 = vmatpush2.xpose.msra.mxu0 0.0
      %6468 = vmatprep.subr.mxu0 0.0
      %6469 = vmatpush2.xpose.msra.mxu0 0.0
      %6470 = vmatprep.subr.mxu0 0.0
      %6471 = vmatpush2.xpose.msra.mxu0 0.0
      %6472 = vmatprep.subr.mxu0 0.0
      %6473 = vmatpush2.xpose.msra.mxu0 0.0
      %6474 = vmatprep.subr.mxu0 0.0
      %6475 = vmatpush2.xpose.msra.mxu0 0.0
      %6476 = vmatprep.subr.mxu0 0.0
      %6477 = vmatpush2.xpose.msra.mxu0 0.0
      %6478 = vmatprep.subr.mxu0 0.0
      %6479 = vmatpush2.xpose.msra.mxu0 0.0
      %6480 = vmatprep.subr.mxu0 0.0
      %6481 = vmatpush2.xpose.msra.mxu0 0.0
      %6482 = vmatprep.subr.mxu0 0.0
      %6483 = vmatpush2.xpose.msra.mxu0 0.0
      %6484 = vmatprep.subr.mxu0 0.0
      %6485 = vmatpush2.xpose.msra.mxu0 0.0
      %6486 = vmatprep.subr.mxu0 0.0
      %6487 = vmatpush2.xpose.msra.mxu0 0.0
      %6488 = vmatprep.subr.mxu0 0.0
      %6489 = vmatpush2.xpose.msra.mxu0 0.0
      %6490 = vmatprep.mubr.f32.mxu0 0.0
      %6491 = vmatmul.mubr.f32.gmra.mxu0 %v6418
      %v6492 = vpop.f32.mrf.mxu0
      %v6493 = vadd.f32 %v337, %v6492
      %v6494 = vpop.f32.mrf.mxu0
      %6495 = vmatprep.mubr.f32.mxu0 0.0
      %6496 = vmatmul.mubr.f32.gmra.mxu0 %v6421
      %v6497 = vpop.f32.mrf.mxu0
      %v6498 = vadd.f32 %v337, %v6497
      %v6499 = vpop.f32.mrf.mxu0
      %6500 = vmatprep.mubr.f32.mxu0 0.0
      %6501 = vmatmul.mubr.f32.gmra.mxu0 %v6424
      %v6502 = vpop.f32.mrf.mxu0
      %v6503 = vadd.f32 %v337, %v6502
      %v6504 = vpop.f32.mrf.mxu0
      %6505 = vdwg.mxu0
      %v6506 = vsel %vm1607, %v6493, -inf
      %6507 = vmax.xlane.f32.xlu0 %v6506
      %v6508 = vpop.xlane.xlu0 %6507
      %v6509 = vsel %vm1607, %v6498, -inf
      %6510 = vmax.xlane.f32.xlu0 %v6509
      %v6511 = vpop.xlane.xlu0 %6510
      %v6512 = vsel %vm1614, %v6503, -inf
      %6513 = vmax.xlane.f32.xlu0 %v6512
      %v6514 = vpop.xlane.xlu0 %6513
      %v6515 = vsub.f32 %v6493, %v6508
      %v6516 = vsub.f32 %v6498, %v6511
      %v6517 = vsub.f32 %v6503, %v6514
      %v6518 = vmul.f32 %v6515, 1.442695
      %v6519 = vpow.pop %v6518
      %v6520 = vmul.f32 %v6516, 1.442695
      %v6521 = vpow.pop %v6520
      %v6522 = vmul.f32 %v6517, 1.442695
      %v6523 = vpow.pop %v6522
      %v6524 = vsel %vm1607, %v6519, 0.0
      %6525 = vadd.xlane.f32.xlu0 %v6524
      %v6526 = vpop.xlane.xlu0 %6525
      %v6527 = vsel %vm1607, %v6521, 0.0
      %6528 = vadd.xlane.f32.xlu0 %v6527
      %v6529 = vpop.xlane.xlu0 %6528
      %v6530 = vsel %vm1614, %v6523, 0.0
      %6531 = vadd.xlane.f32.xlu0 %v6530
      %v6532 = vpop.xlane.xlu0 %6531
      %v6533 = vrcp.pop %v6526
      %v6534 = vmul.f32 %v6519, %v6533
      %v6535 = vrcp.pop %v6529
      %v6536 = vmul.f32 %v6521, %v6535
      %v6537 = vrcp.pop %v6532
      %v6538 = vmul.f32 %v6523, %v6537
      %v6539 = vmul.f32 %v5762, %v357
      %v6541 = vsel %vm1607, %v6534, 0
      %v6544 = vsel %vm1607, %v6536, 0
      %v6547 = vsel %vm1607, %v6538, 0
      %6549 = vmatprep.subr.mxu0 0.0
      %6550 = vmatpush1.msra.mxu0 0.0
      %6551 = vmatprep.subr.mxu0 0.0
      %6552 = vmatpush1.msra.mxu0 0.0
      %6553 = vmatprep.subr.mxu0 0.0
      %6554 = vmatpush1.msra.mxu0 0.0
      %6555 = vmatprep.subr.mxu0 0.0
      %6556 = vmatpush1.msra.mxu0 0.0
      %6557 = vmatprep.subr.mxu0 0.0
      %6558 = vmatpush1.msra.mxu0 0.0
      %6559 = vmatprep.subr.mxu0 0.0
      %6560 = vmatpush1.msra.mxu0 0.0
      %6561 = vmatprep.subr.mxu0 0.0
      %6562 = vmatpush1.msra.mxu0 0.0
      %6563 = vmatprep.subr.mxu0 0.0
      %6564 = vmatpush1.msra.mxu0 0.0
      %6565 = vmatprep.subr.mxu0 0.0
      %6566 = vmatpush1.msra.mxu0 0.0
      %6567 = vmatprep.subr.mxu0 0.0
      %6568 = vmatpush1.msra.mxu0 0.0
      %6569 = vmatprep.subr.mxu0 0.0
      %6570 = vmatpush1.msra.mxu0 0.0
      %6571 = vmatprep.subr.mxu0 0.0
      %6572 = vmatpush1.msra.mxu0 0.0
      %6573 = vmatprep.subr.mxu0 0.0
      %6574 = vmatpush1.msra.mxu0 0.0
      %6575 = vmatprep.subr.mxu0 0.0
      %6576 = vmatpush1.msra.mxu0 0.0
      %6577 = vmatprep.subr.mxu0 0.0
      %6578 = vmatpush1.msra.mxu0 0.0
      %6579 = vmatprep.subr.mxu0 0.0
      %6580 = vmatpush1.msra.mxu0 %v6539
      %6581 = vmatprep.subr.mxu0 0.0
      %6582 = vmatpush2.msra.mxu0 0.0
      %6583 = vmatprep.subr.mxu0 0.0
      %6584 = vmatpush2.msra.mxu0 0.0
      %6585 = vmatprep.subr.mxu0 0.0
      %6586 = vmatpush2.msra.mxu0 0.0
      %6587 = vmatprep.subr.mxu0 0.0
      %6588 = vmatpush2.msra.mxu0 0.0
      %6589 = vmatprep.subr.mxu0 0.0
      %6590 = vmatpush2.msra.mxu0 0.0
      %6591 = vmatprep.subr.mxu0 0.0
      %6592 = vmatpush2.msra.mxu0 0.0
      %6593 = vmatprep.subr.mxu0 0.0
      %6594 = vmatpush2.msra.mxu0 0.0
      %6595 = vmatprep.subr.mxu0 0.0
      %6596 = vmatpush2.msra.mxu0 0.0
      %6597 = vmatprep.subr.mxu0 0.0
      %6598 = vmatpush2.msra.mxu0 0.0
      %6599 = vmatprep.subr.mxu0 0.0
      %6600 = vmatpush2.msra.mxu0 0.0
      %6601 = vmatprep.subr.mxu0 0.0
      %6602 = vmatpush2.msra.mxu0 0.0
      %6603 = vmatprep.subr.mxu0 0.0
      %6604 = vmatpush2.msra.mxu0 0.0
      %6605 = vmatprep.subr.mxu0 0.0
      %6606 = vmatpush2.msra.mxu0 0.0
      %6607 = vmatprep.subr.mxu0 0.0
      %6608 = vmatpush2.msra.mxu0 0.0
      %6609 = vmatprep.subr.mxu0 0.0
      %6610 = vmatpush2.msra.mxu0 0.0
      %6611 = vmatprep.subr.mxu0 0.0
      %6612 = vmatpush2.msra.mxu0 0.0
      %6613 = vmatprep.mubr.f32.mxu0 0.0
      %6614 = vmatmul.mubr.f32.gmra.mxu0 %v6541
      %v6615 = vpop.f32.mrf.mxu0
      %v6616 = vadd.f32 0.0, %v6615
      %v6617 = vpop.f32.mrf.mxu0
      %6618 = vmatprep.mubr.f32.mxu0 0.0
      %6619 = vmatmul.mubr.f32.gmra.mxu0 %v6544
      %v6620 = vpop.f32.mrf.mxu0
      %v6621 = vadd.f32 0.0, %v6620
      %v6622 = vpop.f32.mrf.mxu0
      %6623 = vmatprep.mubr.f32.mxu0 0.0
      %6624 = vmatmul.mubr.f32.gmra.mxu0 %v6547
      %v6625 = vpop.f32.mrf.mxu0
      %v6626 = vadd.f32 0.0, %v6625
      %v6627 = vpop.f32.mrf.mxu0
      %6628 = vdwg.mxu0
      %v6629 = vadd.f32 %v6411, %v6616
      %v6630 = vadd.f32 %v6412, %v6621
      %v6631 = vadd.f32 %v6413, %v6626
      %s6632 = scalar_lea.vmem %s1, 640
      %v6633 = vld [vmem:[%s6632] sm:$0xff]
      %v6634 = vld [vmem:[%s6632 + $0x8] sm:$0xff]
      %v6635 = vld [vmem:[%s6632 + $0x10] sm:$0xff]
      %v6636 = vld [vmem:[%s6632 + $0x18] sm:$0xff]
      %v6638 = vsel %vm361, %v6629, 0
      %v6641 = vsel %vm361, %v6630, 0
      %v6644 = vsel %vm361, %v6631, 0
      %6646 = vmatprep.subr.mxu0 0.0
      %6647 = vmatpush1.msra.mxu0 0.0
      %6648 = vmatprep.subr.mxu0 0.0
      %6649 = vmatpush1.msra.mxu0 0.0
      %6650 = vmatprep.subr.mxu0 0.0
      %6651 = vmatpush1.msra.mxu0 0.0
      %6652 = vmatprep.subr.mxu0 0.0
      %6653 = vmatpush1.msra.mxu0 0.0
      %6654 = vmatprep.subr.mxu0 0.0
      %6655 = vmatpush1.msra.mxu0 0.0
      %6656 = vmatprep.subr.mxu0 0.0
      %6657 = vmatpush1.msra.mxu0 0.0
      %6658 = vmatprep.subr.mxu0 0.0
      %6659 = vmatpush1.msra.mxu0 0.0
      %6660 = vmatprep.subr.mxu0 0.0
      %6661 = vmatpush1.msra.mxu0 0.0
      %6662 = vmatprep.subr.mxu0 0.0
      %6663 = vmatpush1.msra.mxu0 0.0
      %6664 = vmatprep.subr.mxu0 0.0
      %6665 = vmatpush1.msra.mxu0 0.0
      %6666 = vmatprep.subr.mxu0 0.0
      %6667 = vmatpush1.msra.mxu0 0.0
      %6668 = vmatprep.subr.mxu0 0.0
      %6669 = vmatpush1.msra.mxu0 0.0
      %6670 = vmatprep.subr.mxu0 0.0
      %6671 = vmatpush1.msra.mxu0 %v6636
      %6672 = vmatprep.subr.mxu0 0.0
      %6673 = vmatpush1.msra.mxu0 %v6635
      %6674 = vmatprep.subr.mxu0 0.0
      %6675 = vmatpush1.msra.mxu0 %v6634
      %6676 = vmatprep.subr.mxu0 0.0
      %6677 = vmatpush1.msra.mxu0 %v6633
      %6678 = vmatprep.subr.mxu0 0.0
      %6679 = vmatpush2.msra.mxu0 0.0
      %6680 = vmatprep.subr.mxu0 0.0
      %6681 = vmatpush2.msra.mxu0 0.0
      %6682 = vmatprep.subr.mxu0 0.0
      %6683 = vmatpush2.msra.mxu0 0.0
      %6684 = vmatprep.subr.mxu0 0.0
      %6685 = vmatpush2.msra.mxu0 0.0
      %6686 = vmatprep.subr.mxu0 0.0
      %6687 = vmatpush2.msra.mxu0 0.0
      %6688 = vmatprep.subr.mxu0 0.0
      %6689 = vmatpush2.msra.mxu0 0.0
      %6690 = vmatprep.subr.mxu0 0.0
      %6691 = vmatpush2.msra.mxu0 0.0
      %6692 = vmatprep.subr.mxu0 0.0
      %6693 = vmatpush2.msra.mxu0 0.0
      %6694 = vmatprep.subr.mxu0 0.0
      %6695 = vmatpush2.msra.mxu0 0.0
      %6696 = vmatprep.subr.mxu0 0.0
      %6697 = vmatpush2.msra.mxu0 0.0
      %6698 = vmatprep.subr.mxu0 0.0
      %6699 = vmatpush2.msra.mxu0 0.0
      %6700 = vmatprep.subr.mxu0 0.0
      %6701 = vmatpush2.msra.mxu0 0.0
      %6702 = vmatprep.subr.mxu0 0.0
      %6703 = vmatpush2.msra.mxu0 0.0
      %6704 = vmatprep.subr.mxu0 0.0
      %6705 = vmatpush2.msra.mxu0 0.0
      %6706 = vmatprep.subr.mxu0 0.0
      %6707 = vmatpush2.msra.mxu0 0.0
      %6708 = vmatprep.subr.mxu0 0.0
      %6709 = vmatpush2.msra.mxu0 0.0
      %6710 = vmatprep.mubr.f32.mxu0 0.0
      %6711 = vmatmul.mubr.f32.gmra.mxu0 %v6638
      %v6712 = vpop.f32.mrf.mxu0
      %v6713 = vadd.f32 %v4634, %v6712
      %v6714 = vpop.f32.mrf.mxu0
      %6715 = vmatprep.mubr.f32.mxu0 0.0
      %6716 = vmatmul.mubr.f32.gmra.mxu0 %v6641
      %v6717 = vpop.f32.mrf.mxu0
      %v6718 = vadd.f32 %v4635, %v6717
      %v6719 = vpop.f32.mrf.mxu0
      %6720 = vmatprep.mubr.f32.mxu0 0.0
      %6721 = vmatmul.mubr.f32.gmra.mxu0 %v6644
      %v6722 = vpop.f32.mrf.mxu0
      %v6723 = vadd.f32 %v4636, %v6722
      %v6724 = vpop.f32.mrf.mxu0
      %6725 = vdwg.mxu0
      %v6726 = vsel %vm361, %v6713, 0.0
      %6727 = vadd.xlane.f32.xlu0 %v6726
      %v6728 = vpop.xlane.xlu0 %6727
      %v6729 = vsel %vm361, %v6718, 0.0
      %6730 = vadd.xlane.f32.xlu0 %v6729
      %v6731 = vpop.xlane.xlu0 %6730
      %v6732 = vsel %vm368, %v6723, 0.0
      %6733 = vadd.xlane.f32.xlu0 %v6732
      %v6734 = vpop.xlane.xlu0 %6733
      %v6735 = vmul.f32 %v6728, %v372
      %v6736 = vmul.f32 %v6731, %v372
      %v6737 = vmul.f32 %v6734, %v372
      %v6738 = vsub.f32 %v6713, %v6735
      %v6739 = vsub.f32 %v6718, %v6736
      %v6740 = vsub.f32 %v6723, %v6737
      %v6741 = vmul.f32 %v6738, %v6738
      %v6742 = vmul.f32 %v6739, %v6739
      %v6743 = vmul.f32 %v6740, %v6740
      %v6744 = vsel %vm361, %v6741, 0.0
      %6745 = vadd.xlane.f32.xlu0 %v6744
      %v6746 = vpop.xlane.xlu0 %6745
      %v6747 = vsel %vm361, %v6742, 0.0
      %6748 = vadd.xlane.f32.xlu0 %v6747
      %v6749 = vpop.xlane.xlu0 %6748
      %v6750 = vsel %vm368, %v6743, 0.0
      %6751 = vadd.xlane.f32.xlu0 %v6750
      %v6752 = vpop.xlane.xlu0 %6751
      %v6753 = vmul.f32 %v6746, %v372
      %v6754 = vmul.f32 %v6749, %v372
      %v6755 = vmul.f32 %v6752, %v372
      %v6756 = vadd.f32 %v6753, 1e-05
      %v6757 = vadd.f32 %v6754, 1e-05
      %v6758 = vadd.f32 %v6755, 1e-05
      %v6759 = vrsqrt.pop %v6756
      %v6760 = vrsqrt.pop %v6757
      %v6761 = vrsqrt.pop %v6758
      %v6762 = vmul.f32 %v6738, %v6759
      %v6763 = vmul.f32 %v6739, %v6760
      %v6764 = vmul.f32 %v6740, %v6761
      %s6765 = scalar_lea.vmem %s2, 26
      %v6766 = vld [vmem:[%s6765] sm:$0x1]
      %v6768 = vlaneseq
      %v6769 = vshrl.u32 %v6768, 7
      %v6770 = vsub.s32 0, %v6769
      %v6771 = vrot.slane %v6766, %v6770
      %v6773 = vmul.f32 %v6762, %v6771
      %v6774 = vmul.f32 %v6763, %v6771
      %v6775 = vmul.f32 %v6764, %v6771
      %s6776 = scalar_lea.vmem %s2, 27
      %v6777 = vld [vmem:[%s6776] sm:$0x1]
      %v6779 = vlaneseq
      %v6780 = vshrl.u32 %v6779, 7
      %v6781 = vsub.s32 0, %v6780
      %v6782 = vrot.slane %v6777, %v6781
      %v6784 = vadd.f32 %v6773, %v6782
      %v6785 = vadd.f32 %v6774, %v6782
      %v6786 = vadd.f32 %v6775, %v6782
      %s6787 = scalar_lea.vmem %s1, 704
      %v6788 = vld [vmem:[%s6787] sm:$0xff]
      %v6789 = vld [vmem:[%s6787 + $0x8] sm:$0xff]
      %v6790 = vld [vmem:[%s6787 + $0x10] sm:$0xff]
      %v6791 = vld [vmem:[%s6787 + $0x18] sm:$0xff]
      %s6792 = scalar_lea.vmem %s2, 42
      %v6793 = vld [vmem:[%s6792] sm:$0x1]
      %v6795 = vlaneseq
      %v6796 = vshrl.u32 %v6795, 7
      %v6797 = vsub.s32 0, %v6796
      %v6798 = vrot.slane %v6793, %v6797
      %v6801 = vsel %vm361, %v6784, 0
      %v6804 = vsel %vm361, %v6785, 0
      %v6807 = vsel %vm361, %v6786, 0
      %6809 = vmatprep.subr.mxu0 0.0
      %6810 = vmatpush1.msra.mxu0 0.0
      %6811 = vmatprep.subr.mxu0 0.0
      %6812 = vmatpush1.msra.mxu0 0.0
      %6813 = vmatprep.subr.mxu0 0.0
      %6814 = vmatpush1.msra.mxu0 0.0
      %6815 = vmatprep.subr.mxu0 0.0
      %6816 = vmatpush1.msra.mxu0 0.0
      %6817 = vmatprep.subr.mxu0 0.0
      %6818 = vmatpush1.msra.mxu0 0.0
      %6819 = vmatprep.subr.mxu0 0.0
      %6820 = vmatpush1.msra.mxu0 0.0
      %6821 = vmatprep.subr.mxu0 0.0
      %6822 = vmatpush1.msra.mxu0 0.0
      %6823 = vmatprep.subr.mxu0 0.0
      %6824 = vmatpush1.msra.mxu0 0.0
      %6825 = vmatprep.subr.mxu0 0.0
      %6826 = vmatpush1.msra.mxu0 0.0
      %6827 = vmatprep.subr.mxu0 0.0
      %6828 = vmatpush1.msra.mxu0 0.0
      %6829 = vmatprep.subr.mxu0 0.0
      %6830 = vmatpush1.msra.mxu0 0.0
      %6831 = vmatprep.subr.mxu0 0.0
      %6832 = vmatpush1.msra.mxu0 0.0
      %6833 = vmatprep.subr.mxu0 0.0
      %6834 = vmatpush1.msra.mxu0 %v6791
      %6835 = vmatprep.subr.mxu0 0.0
      %6836 = vmatpush1.msra.mxu0 %v6790
      %6837 = vmatprep.subr.mxu0 0.0
      %6838 = vmatpush1.msra.mxu0 %v6789
      %6839 = vmatprep.subr.mxu0 0.0
      %6840 = vmatpush1.msra.mxu0 %v6788
      %6841 = vmatprep.subr.mxu0 0.0
      %6842 = vmatpush2.msra.mxu0 0.0
      %6843 = vmatprep.subr.mxu0 0.0
      %6844 = vmatpush2.msra.mxu0 0.0
      %6845 = vmatprep.subr.mxu0 0.0
      %6846 = vmatpush2.msra.mxu0 0.0
      %6847 = vmatprep.subr.mxu0 0.0
      %6848 = vmatpush2.msra.mxu0 0.0
      %6849 = vmatprep.subr.mxu0 0.0
      %6850 = vmatpush2.msra.mxu0 0.0
      %6851 = vmatprep.subr.mxu0 0.0
      %6852 = vmatpush2.msra.mxu0 0.0
      %6853 = vmatprep.subr.mxu0 0.0
      %6854 = vmatpush2.msra.mxu0 0.0
      %6855 = vmatprep.subr.mxu0 0.0
      %6856 = vmatpush2.msra.mxu0 0.0
      %6857 = vmatprep.subr.mxu0 0.0
      %6858 = vmatpush2.msra.mxu0 0.0
      %6859 = vmatprep.subr.mxu0 0.0
      %6860 = vmatpush2.msra.mxu0 0.0
      %6861 = vmatprep.subr.mxu0 0.0
      %6862 = vmatpush2.msra.mxu0 0.0
      %6863 = vmatprep.subr.mxu0 0.0
      %6864 = vmatpush2.msra.mxu0 0.0
      %6865 = vmatprep.subr.mxu0 0.0
      %6866 = vmatpush2.msra.mxu0 0.0
      %6867 = vmatprep.subr.mxu0 0.0
      %6868 = vmatpush2.msra.mxu0 0.0
      %6869 = vmatprep.subr.mxu0 0.0
      %6870 = vmatpush2.msra.mxu0 0.0
      %6871 = vmatprep.subr.mxu0 0.0
      %6872 = vmatpush2.msra.mxu0 0.0
      %6873 = vmatprep.mubr.f32.mxu0 0.0
      %6874 = vmatmul.mubr.f32.gmra.mxu0 %v6801
      %v6875 = vpop.f32.mrf.mxu0
      %v6876 = vadd.f32 %v6798, %v6875
      %v6877 = vpop.f32.mrf.mxu0
      %6878 = vmatprep.mubr.f32.mxu0 0.0
      %6879 = vmatmul.mubr.f32.gmra.mxu0 %v6804
      %v6880 = vpop.f32.mrf.mxu0
      %v6881 = vadd.f32 %v6798, %v6880
      %v6882 = vpop.f32.mrf.mxu0
      %6883 = vmatprep.mubr.f32.mxu0 0.0
      %6884 = vmatmul.mubr.f32.gmra.mxu0 %v6807
      %v6885 = vpop.f32.mrf.mxu0
      %v6886 = vadd.f32 %v6798, %v6885
      %v6887 = vpop.f32.mrf.mxu0
      %6888 = vdwg.mxu0
      %v6889 = vsel %vm1135, 0.0, %v6876
      %v6890 = vsel %vm2642, 0.0, %v6881
      %v6891 = vsel %vm2643, 0.0, %v6886
      %v6893 = vsel %vm431, %v6891, 0
      %6895 = vmatprep.subr.mxu0 0.0
      %6896 = vmatpush1.msra.mxu0 0.0
      %6897 = vmatprep.subr.mxu0 0.0
      %6898 = vmatpush1.msra.mxu0 0.0
      %6899 = vmatprep.subr.mxu0 0.0
      %6900 = vmatpush1.msra.mxu0 0.0
      %6901 = vmatprep.subr.mxu0 0.0
      %6902 = vmatpush1.msra.mxu0 0.0
      %6903 = vmatprep.subr.mxu0 0.0
      %6904 = vmatpush1.msra.mxu0 0.0
      %6905 = vmatprep.subr.mxu0 0.0
      %6906 = vmatpush1.msra.mxu0 0.0
      %6907 = vmatprep.subr.mxu0 0.0
      %6908 = vmatpush1.msra.mxu0 0.0
      %6909 = vmatprep.subr.mxu0 0.0
      %6910 = vmatpush1.msra.mxu0 0.0
      %6911 = vmatprep.subr.mxu0 0.0
      %6912 = vmatpush1.msra.mxu0 0.0
      %6913 = vmatprep.subr.mxu0 0.0
      %6914 = vmatpush1.msra.mxu0 0.0
      %6915 = vmatprep.subr.mxu0 0.0
      %6916 = vmatpush1.msra.mxu0 0.0
      %6917 = vmatprep.subr.mxu0 0.0
      %6918 = vmatpush1.msra.mxu0 0.0
      %6919 = vmatprep.subr.mxu0 0.0
      %6920 = vmatpush1.msra.mxu0 0.0
      %6921 = vmatprep.subr.mxu0 0.0
      %6922 = vmatpush1.msra.mxu0 %v6893
      %6923 = vmatprep.subr.mxu0 0.0
      %6924 = vmatpush1.msra.mxu0 %v6890
      %6925 = vmatprep.subr.mxu0 0.0
      %6926 = vmatpush1.msra.mxu0 %v6889
      %6927 = vmatprep.subr.mxu0 0.0
      %6928 = vmatpush2.msra.mxu0 0.0
      %6929 = vmatprep.subr.mxu0 0.0
      %6930 = vmatpush2.msra.mxu0 0.0
      %6931 = vmatprep.subr.mxu0 0.0
      %6932 = vmatpush2.msra.mxu0 0.0
      %6933 = vmatprep.subr.mxu0 0.0
      %6934 = vmatpush2.msra.mxu0 0.0
      %6935 = vmatprep.subr.mxu0 0.0
      %6936 = vmatpush2.msra.mxu0 0.0
      %6937 = vmatprep.subr.mxu0 0.0
      %6938 = vmatpush2.msra.mxu0 0.0
      %6939 = vmatprep.subr.mxu0 0.0
      %6940 = vmatpush2.msra.mxu0 0.0
      %6941 = vmatprep.subr.mxu0 0.0
      %6942 = vmatpush2.msra.mxu0 0.0
      %6943 = vmatprep.subr.mxu0 0.0
      %6944 = vmatpush2.msra.mxu0 0.0
      %6945 = vmatprep.subr.mxu0 0.0
      %6946 = vmatpush2.msra.mxu0 0.0
      %6947 = vmatprep.subr.mxu0 0.0
      %6948 = vmatpush2.msra.mxu0 0.0
      %6949 = vmatprep.subr.mxu0 0.0
      %6950 = vmatpush2.msra.mxu0 0.0
      %6951 = vmatprep.subr.mxu0 0.0
      %6952 = vmatpush2.msra.mxu0 0.0
      %6953 = vmatprep.subr.mxu0 0.0
      %6954 = vmatpush2.msra.mxu0 0.0
      %6955 = vmatprep.subr.mxu0 0.0
      %6956 = vmatpush2.msra.mxu0 0.0
      %6957 = vmatprep.subr.mxu0 0.0
      %6958 = vmatpush2.msra.mxu0 0.0
      %6959 = vmatprep.mubr.f32.mxu0 0.0
      %6960 = vmatmul.mubr.f32.gmra.mxu0 %v2648
      %v6961 = vpop.f32.mrf.mxu0
      %v6962 = vadd.f32 0.0, %v6961
      %v6963 = vpop.f32.mrf.mxu0
      %6964 = vmatprep.mubr.f32.mxu0 0.0
      %6965 = vmatmul.mubr.f32.gmra.mxu0 %v2651
      %v6966 = vpop.f32.mrf.mxu0
      %v6967 = vadd.f32 0.0, %v6966
      %v6968 = vpop.f32.mrf.mxu0
      %6969 = vmatprep.mubr.f32.mxu0 0.0
      %6970 = vmatmul.mubr.f32.gmra.mxu0 %v2654
      %v6971 = vpop.f32.mrf.mxu0
      %v6972 = vadd.f32 0.0, %v6971
      %v6973 = vpop.f32.mrf.mxu0
      %6974 = vdwg.mxu0
      %6975 = vmatprep.subr.mxu0 0.0
      %6976 = vmatpush1.msra.mxu0 0.0
      %6977 = vmatprep.subr.mxu0 0.0
      %6978 = vmatpush1.msra.mxu0 0.0
      %6979 = vmatprep.subr.mxu0 0.0
      %6980 = vmatpush1.msra.mxu0 0.0
      %6981 = vmatprep.subr.mxu0 0.0
      %6982 = vmatpush1.msra.mxu0 0.0
      %6983 = vmatprep.subr.mxu0 0.0
      %6984 = vmatpush1.msra.mxu0 0.0
      %6985 = vmatprep.subr.mxu0 0.0
      %6986 = vmatpush1.msra.mxu0 0.0
      %6987 = vmatprep.subr.mxu0 0.0
      %6988 = vmatpush1.msra.mxu0 0.0
      %6989 = vmatprep.subr.mxu0 0.0
      %6990 = vmatpush1.msra.mxu0 0.0
      %6991 = vmatprep.subr.mxu0 0.0
      %6992 = vmatpush1.msra.mxu0 0.0
      %6993 = vmatprep.subr.mxu0 0.0
      %6994 = vmatpush1.msra.mxu0 0.0
      %6995 = vmatprep.subr.mxu0 0.0
      %6996 = vmatpush1.msra.mxu0 0.0
      %6997 = vmatprep.subr.mxu0 0.0
      %6998 = vmatpush1.msra.mxu0 0.0
      %6999 = vmatprep.subr.mxu0 0.0
      %7000 = vmatpush1.msra.mxu0 0.0
      %7001 = vmatprep.subr.mxu0 0.0
      %7002 = vmatpush1.msra.mxu0 %v6893
      %7003 = vmatprep.subr.mxu0 0.0
      %7004 = vmatpush1.msra.mxu0 %v6890
      %7005 = vmatprep.subr.mxu0 0.0
      %7006 = vmatpush1.msra.mxu0 %v6889
      %7007 = vmatprep.subr.mxu0 0.0
      %7008 = vmatpush2.msra.mxu0 0.0
      %7009 = vmatprep.subr.mxu0 0.0
      %7010 = vmatpush2.msra.mxu0 0.0
      %7011 = vmatprep.subr.mxu0 0.0
      %7012 = vmatpush2.msra.mxu0 0.0
      %7013 = vmatprep.subr.mxu0 0.0
      %7014 = vmatpush2.msra.mxu0 0.0
      %7015 = vmatprep.subr.mxu0 0.0
      %7016 = vmatpush2.msra.mxu0 0.0
      %7017 = vmatprep.subr.mxu0 0.0
      %7018 = vmatpush2.msra.mxu0 0.0
      %7019 = vmatprep.subr.mxu0 0.0
      %7020 = vmatpush2.msra.mxu0 0.0
      %7021 = vmatprep.subr.mxu0 0.0
      %7022 = vmatpush2.msra.mxu0 0.0
      %7023 = vmatprep.subr.mxu0 0.0
      %7024 = vmatpush2.msra.mxu0 0.0
      %7025 = vmatprep.subr.mxu0 0.0
      %7026 = vmatpush2.msra.mxu0 0.0
      %7027 = vmatprep.subr.mxu0 0.0
      %7028 = vmatpush2.msra.mxu0 0.0
      %7029 = vmatprep.subr.mxu0 0.0
      %7030 = vmatpush2.msra.mxu0 0.0
      %7031 = vmatprep.subr.mxu0 0.0
      %7032 = vmatpush2.msra.mxu0 0.0
      %7033 = vmatprep.subr.mxu0 0.0
      %7034 = vmatpush2.msra.mxu0 0.0
      %7035 = vmatprep.subr.mxu0 0.0
      %7036 = vmatpush2.msra.mxu0 0.0
      %7037 = vmatprep.subr.mxu0 0.0
      %7038 = vmatpush2.msra.mxu0 0.0
      %7039 = vmatprep.mubr.f32.mxu0 0.0
      %7040 = vmatmul.mubr.f32.gmra.mxu0 %v2740
      %v7041 = vpop.f32.mrf.mxu0
      %v7042 = vadd.f32 0.0, %v7041
      %v7043 = vpop.f32.mrf.mxu0
      %7044 = vmatprep.mubr.f32.mxu0 0.0
      %7045 = vmatmul.mubr.f32.gmra.mxu0 %v2743
      %v7046 = vpop.f32.mrf.mxu0
      %v7047 = vadd.f32 0.0, %v7046
      %v7048 = vpop.f32.mrf.mxu0
      %7049 = vmatprep.mubr.f32.mxu0 0.0
      %7050 = vmatmul.mubr.f32.gmra.mxu0 %v2746
      %v7051 = vpop.f32.mrf.mxu0
      %v7052 = vadd.f32 0.0, %v7051
      %v7053 = vpop.f32.mrf.mxu0
      %7054 = vdwg.mxu0
      %s7055 = scalar_lea.vmem %s4, 32
      %v7056 = vld [vmem:[%s7055] sm:$0x7]
      %s7057 = scalar_lea.vmem %s5, 8
      %v7058 = vld [vmem:[%s7057] sm:$0x1]
      %v7059 = vlaneseq
      %v7060 = vshrl.u32 %v7059, 7
      %v7061 = vsub.s32 0, %v7060
      %v7062 = vrot.slane %v7056, %v7061
      %v7063 = vmul.f32 %v7062, %v6962
      %v7064 = vmul.f32 %v7062, %v6967
      %v7065 = vmul.f32 %v7062, %v6972
      %v7067 = vlaneseq
      %v7068 = vshrl.u32 %v7067, 7
      %v7069 = vsub.s32 0, %v7068
      %v7070 = vrot.slane %v7058, %v7069
      %v7072 = vadd.f32 %v7070, %v7063
      %v7073 = vadd.f32 %v7070, %v7064
      %v7074 = vadd.f32 %v7070, %v7065
      %v7075 = vlaneseq
      %v7076 = vshrl.u32 %v7075, 7
      %v7077 = vsub.s32 1, %v7076
      %v7078 = vrot.slane %v7056, %v7077
      %v7079 = vmul.f32 %v7078, %v6889
      %v7080 = vmul.f32 %v7078, %v6890
      %v7081 = vmul.f32 %v7078, %v6891
      %v7082 = vadd.f32 %v7072, %v7079
      %v7083 = vadd.f32 %v7073, %v7080
      %v7084 = vadd.f32 %v7074, %v7081
      %v7085 = vlaneseq
      %v7086 = vshrl.u32 %v7085, 7
      %v7087 = vsub.s32 2, %v7086
      %v7088 = vrot.slane %v7056, %v7087
      %v7089 = vmul.f32 %v7088, %v7042
      %v7090 = vmul.f32 %v7088, %v7047
      %v7091 = vmul.f32 %v7088, %v7052
      %v7092 = vadd.f32 %v7082, %v7089
      %v7093 = vadd.f32 %v7083, %v7090
      %v7094 = vadd.f32 %v7084, %v7091
      %v7095 = vmul.f32 %v7092, 0.5
      %v7096 = vmul.f32 %v7093, 0.5
      %v7097 = vmul.f32 %v7094, 0.5
      %v7098 = vmul.f32 %v7092, 0.70710677
      %v7099 = vmul.f32 %v7093, 0.70710677
      %v7100 = vmul.f32 %v7094, 0.70710677
      %v7101 = verf.f32.pop %v7098
      %v7102 = verf.f32.pop %v7099
      %v7103 = verf.f32.pop %v7100
      %v7104 = vadd.f32 %v7101, 1.0
      %v7105 = vadd.f32 %v7102, 1.0
      %v7106 = vadd.f32 %v7103, 1.0
      %v7107 = vmul.f32 %v7095, %v7104
      %v7108 = vmul.f32 %v7096, %v7105
      %v7109 = vmul.f32 %v7097, %v7106
      %s7110 = scalar_lea.vmem %s1, 832
      %v7111 = vld [vmem:[%s7110] sm:$0xff]
      %v7112 = vld [vmem:[%s7110 + $0x8] sm:$0xff]
      %v7113 = vld [vmem:[%s7110 + $0x10] sm:$0xff]
      %v7114 = vld [vmem:[%s7110 + $0x18] sm:$0xff]
      %s7115 = scalar_lea.vmem %s4, 36
      %v7116 = vld [vmem:[%s7115] sm:$0x7]
      %s7117 = scalar_lea.vmem %s5, 9
      %v7118 = vld [vmem:[%s7117] sm:$0x1]
      %v7119 = vlaneseq
      %v7120 = vshrl.u32 %v7119, 7
      %v7121 = vsub.s32 0, %v7120
      %v7122 = vrot.slane %v7116, %v7121
      %v7123 = vmul.f32 %v7122, %v6962
      %v7124 = vmul.f32 %v7122, %v6967
      %v7125 = vmul.f32 %v7122, %v6972
      %v7127 = vlaneseq
      %v7128 = vshrl.u32 %v7127, 7
      %v7129 = vsub.s32 0, %v7128
      %v7130 = vrot.slane %v7118, %v7129
      %v7132 = vadd.f32 %v7130, %v7123
      %v7133 = vadd.f32 %v7130, %v7124
      %v7134 = vadd.f32 %v7130, %v7125
      %v7135 = vlaneseq
      %v7136 = vshrl.u32 %v7135, 7
      %v7137 = vsub.s32 1, %v7136
      %v7138 = vrot.slane %v7116, %v7137
      %v7139 = vmul.f32 %v7138, %v6889
      %v7140 = vmul.f32 %v7138, %v6890
      %v7141 = vmul.f32 %v7138, %v6891
      %v7142 = vadd.f32 %v7132, %v7139
      %v7143 = vadd.f32 %v7133, %v7140
      %v7144 = vadd.f32 %v7134, %v7141
      %v7145 = vlaneseq
      %v7146 = vshrl.u32 %v7145, 7
      %v7147 = vsub.s32 2, %v7146
      %v7148 = vrot.slane %v7116, %v7147
      %v7149 = vmul.f32 %v7148, %v7042
      %v7150 = vmul.f32 %v7148, %v7047
      %v7151 = vmul.f32 %v7148, %v7052
      %v7152 = vadd.f32 %v7142, %v7149
      %v7153 = vadd.f32 %v7143, %v7150
      %v7154 = vadd.f32 %v7144, %v7151
      %v7155 = vmul.f32 %v7152, 0.5
      %v7156 = vmul.f32 %v7153, 0.5
      %v7157 = vmul.f32 %v7154, 0.5
      %v7158 = vmul.f32 %v7152, 0.70710677
      %v7159 = vmul.f32 %v7153, 0.70710677
      %v7160 = vmul.f32 %v7154, 0.70710677
      %v7161 = verf.f32.pop %v7158
      %v7162 = verf.f32.pop %v7159
      %v7163 = verf.f32.pop %v7160
      %v7164 = vadd.f32 %v7161, 1.0
      %v7165 = vadd.f32 %v7162, 1.0
      %v7166 = vadd.f32 %v7163, 1.0
      %v7167 = vmul.f32 %v7155, %v7164
      %v7168 = vmul.f32 %v7156, %v7165
      %v7169 = vmul.f32 %v7157, %v7166
      %s7170 = scalar_lea.vmem %s1, 864
      %v7171 = vld [vmem:[%s7170] sm:$0xff]
      %v7172 = vld [vmem:[%s7170 + $0x8] sm:$0xff]
      %v7173 = vld [vmem:[%s7170 + $0x10] sm:$0xff]
      %v7174 = vld [vmem:[%s7170 + $0x18] sm:$0xff]
      %v7176 = vsel %vm361, %v7167, 0
      %v7179 = vsel %vm361, %v7168, 0
      %v7182 = vsel %vm361, %v7169, 0
      %7184 = vmatprep.subr.mxu0 0.0
      %7185 = vmatpush1.msra.mxu0 0.0
      %7186 = vmatprep.subr.mxu0 0.0
      %7187 = vmatpush1.msra.mxu0 0.0
      %7188 = vmatprep.subr.mxu0 0.0
      %7189 = vmatpush1.msra.mxu0 0.0
      %7190 = vmatprep.subr.mxu0 0.0
      %7191 = vmatpush1.msra.mxu0 0.0
      %7192 = vmatprep.subr.mxu0 0.0
      %7193 = vmatpush1.msra.mxu0 0.0
      %7194 = vmatprep.subr.mxu0 0.0
      %7195 = vmatpush1.msra.mxu0 0.0
      %7196 = vmatprep.subr.mxu0 0.0
      %7197 = vmatpush1.msra.mxu0 0.0
      %7198 = vmatprep.subr.mxu0 0.0
      %7199 = vmatpush1.msra.mxu0 0.0
      %7200 = vmatprep.subr.mxu0 0.0
      %7201 = vmatpush1.msra.mxu0 0.0
      %7202 = vmatprep.subr.mxu0 0.0
      %7203 = vmatpush1.msra.mxu0 0.0
      %7204 = vmatprep.subr.mxu0 0.0
      %7205 = vmatpush1.msra.mxu0 0.0
      %7206 = vmatprep.subr.mxu0 0.0
      %7207 = vmatpush1.msra.mxu0 0.0
      %7208 = vmatprep.subr.mxu0 0.0
      %7209 = vmatpush1.msra.mxu0 %v7174
      %7210 = vmatprep.subr.mxu0 0.0
      %7211 = vmatpush1.msra.mxu0 %v7173
      %7212 = vmatprep.subr.mxu0 0.0
      %7213 = vmatpush1.msra.mxu0 %v7172
      %7214 = vmatprep.subr.mxu0 0.0
      %7215 = vmatpush1.msra.mxu0 %v7171
      %7216 = vmatprep.subr.mxu0 0.0
      %7217 = vmatpush2.msra.mxu0 0.0
      %7218 = vmatprep.subr.mxu0 0.0
      %7219 = vmatpush2.msra.mxu0 0.0
      %7220 = vmatprep.subr.mxu0 0.0
      %7221 = vmatpush2.msra.mxu0 0.0
      %7222 = vmatprep.subr.mxu0 0.0
      %7223 = vmatpush2.msra.mxu0 0.0
      %7224 = vmatprep.subr.mxu0 0.0
      %7225 = vmatpush2.msra.mxu0 0.0
      %7226 = vmatprep.subr.mxu0 0.0
      %7227 = vmatpush2.msra.mxu0 0.0
      %7228 = vmatprep.subr.mxu0 0.0
      %7229 = vmatpush2.msra.mxu0 0.0
      %7230 = vmatprep.subr.mxu0 0.0
      %7231 = vmatpush2.msra.mxu0 0.0
      %7232 = vmatprep.subr.mxu0 0.0
      %7233 = vmatpush2.msra.mxu0 0.0
      %7234 = vmatprep.subr.mxu0 0.0
      %7235 = vmatpush2.msra.mxu0 0.0
      %7236 = vmatprep.subr.mxu0 0.0
      %7237 = vmatpush2.msra.mxu0 0.0
      %7238 = vmatprep.subr.mxu0 0.0
      %7239 = vmatpush2.msra.mxu0 0.0
      %7240 = vmatprep.subr.mxu0 0.0
      %7241 = vmatpush2.msra.mxu0 0.0
      %7242 = vmatprep.subr.mxu0 0.0
      %7243 = vmatpush2.msra.mxu0 0.0
      %7244 = vmatprep.subr.mxu0 0.0
      %7245 = vmatpush2.msra.mxu0 0.0
      %7246 = vmatprep.subr.mxu0 0.0
      %7247 = vmatpush2.msra.mxu0 0.0
      %7248 = vmatprep.mubr.f32.mxu0 0.0
      %7249 = vmatmul.mubr.f32.gmra.mxu0 %v7176
      %v7250 = vpop.f32.mrf.mxu0
      %v7251 = vadd.f32 0.0, %v7250
      %v7252 = vpop.f32.mrf.mxu0
      %7253 = vmatprep.mubr.f32.mxu0 0.0
      %7254 = vmatmul.mubr.f32.gmra.mxu0 %v7179
      %v7255 = vpop.f32.mrf.mxu0
      %v7256 = vadd.f32 0.0, %v7255
      %v7257 = vpop.f32.mrf.mxu0
      %7258 = vmatprep.mubr.f32.mxu0 0.0
      %7259 = vmatmul.mubr.f32.gmra.mxu0 %v7182
      %v7260 = vpop.f32.mrf.mxu0
      %v7261 = vadd.f32 0.0, %v7260
      %v7262 = vpop.f32.mrf.mxu0
      %7263 = vdwg.mxu0
      %v7265 = vsel %vm361, %v7107, 0
      %v7268 = vsel %vm361, %v7108, 0
      %v7271 = vsel %vm361, %v7109, 0
      %7273 = vmatprep.subr.mxu0 0.0
      %7274 = vmatpush1.msra.mxu0 0.0
      %7275 = vmatprep.subr.mxu0 0.0
      %7276 = vmatpush1.msra.mxu0 0.0
      %7277 = vmatprep.subr.mxu0 0.0
      %7278 = vmatpush1.msra.mxu0 0.0
      %7279 = vmatprep.subr.mxu0 0.0
      %7280 = vmatpush1.msra.mxu0 0.0
      %7281 = vmatprep.subr.mxu0 0.0
      %7282 = vmatpush1.msra.mxu0 0.0
      %7283 = vmatprep.subr.mxu0 0.0
      %7284 = vmatpush1.msra.mxu0 0.0
      %7285 = vmatprep.subr.mxu0 0.0
      %7286 = vmatpush1.msra.mxu0 0.0
      %7287 = vmatprep.subr.mxu0 0.0
      %7288 = vmatpush1.msra.mxu0 0.0
      %7289 = vmatprep.subr.mxu0 0.0
      %7290 = vmatpush1.msra.mxu0 0.0
      %7291 = vmatprep.subr.mxu0 0.0
      %7292 = vmatpush1.msra.mxu0 0.0
      %7293 = vmatprep.subr.mxu0 0.0
      %7294 = vmatpush1.msra.mxu0 0.0
      %7295 = vmatprep.subr.mxu0 0.0
      %7296 = vmatpush1.msra.mxu0 0.0
      %7297 = vmatprep.subr.mxu0 0.0
      %7298 = vmatpush1.msra.mxu0 %v7114
      %7299 = vmatprep.subr.mxu0 0.0
      %7300 = vmatpush1.msra.mxu0 %v7113
      %7301 = vmatprep.subr.mxu0 0.0
      %7302 = vmatpush1.msra.mxu0 %v7112
      %7303 = vmatprep.subr.mxu0 0.0
      %7304 = vmatpush1.msra.mxu0 %v7111
      %7305 = vmatprep.subr.mxu0 0.0
      %7306 = vmatpush2.msra.mxu0 0.0
      %7307 = vmatprep.subr.mxu0 0.0
      %7308 = vmatpush2.msra.mxu0 0.0
      %7309 = vmatprep.subr.mxu0 0.0
      %7310 = vmatpush2.msra.mxu0 0.0
      %7311 = vmatprep.subr.mxu0 0.0
      %7312 = vmatpush2.msra.mxu0 0.0
      %7313 = vmatprep.subr.mxu0 0.0
      %7314 = vmatpush2.msra.mxu0 0.0
      %7315 = vmatprep.subr.mxu0 0.0
      %7316 = vmatpush2.msra.mxu0 0.0
      %7317 = vmatprep.subr.mxu0 0.0
      %7318 = vmatpush2.msra.mxu0 0.0
      %7319 = vmatprep.subr.mxu0 0.0
      %7320 = vmatpush2.msra.mxu0 0.0
      %7321 = vmatprep.subr.mxu0 0.0
      %7322 = vmatpush2.msra.mxu0 0.0
      %7323 = vmatprep.subr.mxu0 0.0
      %7324 = vmatpush2.msra.mxu0 0.0
      %7325 = vmatprep.subr.mxu0 0.0
      %7326 = vmatpush2.msra.mxu0 0.0
      %7327 = vmatprep.subr.mxu0 0.0
      %7328 = vmatpush2.msra.mxu0 0.0
      %7329 = vmatprep.subr.mxu0 0.0
      %7330 = vmatpush2.msra.mxu0 0.0
      %7331 = vmatprep.subr.mxu0 0.0
      %7332 = vmatpush2.msra.mxu0 0.0
      %7333 = vmatprep.subr.mxu0 0.0
      %7334 = vmatpush2.msra.mxu0 0.0
      %7335 = vmatprep.subr.mxu0 0.0
      %7336 = vmatpush2.msra.mxu0 0.0
      %7337 = vmatprep.mubr.f32.mxu0 0.0
      %7338 = vmatmul.mubr.f32.gmra.mxu0 %v7265
      %v7339 = vpop.f32.mrf.mxu0
      %v7340 = vadd.f32 %v7251, %v7339
      %v7341 = vpop.f32.mrf.mxu0
      %7342 = vmatprep.mubr.f32.mxu0 0.0
      %7343 = vmatmul.mubr.f32.gmra.mxu0 %v7268
      %v7344 = vpop.f32.mrf.mxu0
      %v7345 = vadd.f32 %v7256, %v7344
      %v7346 = vpop.f32.mrf.mxu0
      %7347 = vmatprep.mubr.f32.mxu0 0.0
      %7348 = vmatmul.mubr.f32.gmra.mxu0 %v7271
      %v7349 = vpop.f32.mrf.mxu0
      %v7350 = vadd.f32 %v7261, %v7349
      %v7351 = vpop.f32.mrf.mxu0
      %7352 = vdwg.mxu0
      %s7353 = scalar_lea.vmem %s4, 40
      %v7354 = vld [vmem:[%s7353] sm:$0x7]
      %s7355 = scalar_lea.vmem %s5, 10
      %v7356 = vld [vmem:[%s7355] sm:$0x1]
      %v7357 = vlaneseq
      %v7358 = vshrl.u32 %v7357, 7
      %v7359 = vsub.s32 0, %v7358
      %v7360 = vrot.slane %v7354, %v7359
      %v7361 = vmul.f32 %v7360, %v6962
      %v7362 = vmul.f32 %v7360, %v6967
      %v7363 = vmul.f32 %v7360, %v6972
      %v7365 = vlaneseq
      %v7366 = vshrl.u32 %v7365, 7
      %v7367 = vsub.s32 0, %v7366
      %v7368 = vrot.slane %v7356, %v7367
      %v7370 = vadd.f32 %v7368, %v7361
      %v7371 = vadd.f32 %v7368, %v7362
      %v7372 = vadd.f32 %v7368, %v7363
      %v7373 = vlaneseq
      %v7374 = vshrl.u32 %v7373, 7
      %v7375 = vsub.s32 1, %v7374
      %v7376 = vrot.slane %v7354, %v7375
      %v7377 = vmul.f32 %v7376, %v6889
      %v7378 = vmul.f32 %v7376, %v6890
      %v7379 = vmul.f32 %v7376, %v6891
      %v7380 = vadd.f32 %v7370, %v7377
      %v7381 = vadd.f32 %v7371, %v7378
      %v7382 = vadd.f32 %v7372, %v7379
      %v7383 = vlaneseq
      %v7384 = vshrl.u32 %v7383, 7
      %v7385 = vsub.s32 2, %v7384
      %v7386 = vrot.slane %v7354, %v7385
      %v7387 = vmul.f32 %v7386, %v7042
      %v7388 = vmul.f32 %v7386, %v7047
      %v7389 = vmul.f32 %v7386, %v7052
      %v7390 = vadd.f32 %v7380, %v7387
      %v7391 = vadd.f32 %v7381, %v7388
      %v7392 = vadd.f32 %v7382, %v7389
      %v7393 = vmul.f32 %v7390, 0.5
      %v7394 = vmul.f32 %v7391, 0.5
      %v7395 = vmul.f32 %v7392, 0.5
      %v7396 = vmul.f32 %v7390, 0.70710677
      %v7397 = vmul.f32 %v7391, 0.70710677
      %v7398 = vmul.f32 %v7392, 0.70710677
      %v7399 = verf.f32.pop %v7396
      %v7400 = verf.f32.pop %v7397
      %v7401 = verf.f32.pop %v7398
      %v7402 = vadd.f32 %v7399, 1.0
      %v7403 = vadd.f32 %v7400, 1.0
      %v7404 = vadd.f32 %v7401, 1.0
      %v7405 = vmul.f32 %v7393, %v7402
      %v7406 = vmul.f32 %v7394, %v7403
      %v7407 = vmul.f32 %v7395, %v7404
      %s7408 = scalar_lea.vmem %s1, 896
      %v7409 = vld [vmem:[%s7408] sm:$0xff]
      %v7410 = vld [vmem:[%s7408 + $0x8] sm:$0xff]
      %v7411 = vld [vmem:[%s7408 + $0x10] sm:$0xff]
      %v7412 = vld [vmem:[%s7408 + $0x18] sm:$0xff]
      %v7414 = vsel %vm361, %v7405, 0
      %v7417 = vsel %vm361, %v7406, 0
      %v7420 = vsel %vm361, %v7407, 0
      %7422 = vmatprep.subr.mxu0 0.0
      %7423 = vmatpush1.msra.mxu0 0.0
      %7424 = vmatprep.subr.mxu0 0.0
      %7425 = vmatpush1.msra.mxu0 0.0
      %7426 = vmatprep.subr.mxu0 0.0
      %7427 = vmatpush1.msra.mxu0 0.0
      %7428 = vmatprep.subr.mxu0 0.0
      %7429 = vmatpush1.msra.mxu0 0.0
      %7430 = vmatprep.subr.mxu0 0.0
      %7431 = vmatpush1.msra.mxu0 0.0
      %7432 = vmatprep.subr.mxu0 0.0
      %7433 = vmatpush1.msra.mxu0 0.0
      %7434 = vmatprep.subr.mxu0 0.0
      %7435 = vmatpush1.msra.mxu0 0.0
      %7436 = vmatprep.subr.mxu0 0.0
      %7437 = vmatpush1.msra.mxu0 0.0
      %7438 = vmatprep.subr.mxu0 0.0
      %7439 = vmatpush1.msra.mxu0 0.0
      %7440 = vmatprep.subr.mxu0 0.0
      %7441 = vmatpush1.msra.mxu0 0.0
      %7442 = vmatprep.subr.mxu0 0.0
      %7443 = vmatpush1.msra.mxu0 0.0
      %7444 = vmatprep.subr.mxu0 0.0
      %7445 = vmatpush1.msra.mxu0 0.0
      %7446 = vmatprep.subr.mxu0 0.0
      %7447 = vmatpush1.msra.mxu0 %v7412
      %7448 = vmatprep.subr.mxu0 0.0
      %7449 = vmatpush1.msra.mxu0 %v7411
      %7450 = vmatprep.subr.mxu0 0.0
      %7451 = vmatpush1.msra.mxu0 %v7410
      %7452 = vmatprep.subr.mxu0 0.0
      %7453 = vmatpush1.msra.mxu0 %v7409
      %7454 = vmatprep.subr.mxu0 0.0
      %7455 = vmatpush2.msra.mxu0 0.0
      %7456 = vmatprep.subr.mxu0 0.0
      %7457 = vmatpush2.msra.mxu0 0.0
      %7458 = vmatprep.subr.mxu0 0.0
      %7459 = vmatpush2.msra.mxu0 0.0
      %7460 = vmatprep.subr.mxu0 0.0
      %7461 = vmatpush2.msra.mxu0 0.0
      %7462 = vmatprep.subr.mxu0 0.0
      %7463 = vmatpush2.msra.mxu0 0.0
      %7464 = vmatprep.subr.mxu0 0.0
      %7465 = vmatpush2.msra.mxu0 0.0
      %7466 = vmatprep.subr.mxu0 0.0
      %7467 = vmatpush2.msra.mxu0 0.0
      %7468 = vmatprep.subr.mxu0 0.0
      %7469 = vmatpush2.msra.mxu0 0.0
      %7470 = vmatprep.subr.mxu0 0.0
      %7471 = vmatpush2.msra.mxu0 0.0
      %7472 = vmatprep.subr.mxu0 0.0
      %7473 = vmatpush2.msra.mxu0 0.0
      %7474 = vmatprep.subr.mxu0 0.0
      %7475 = vmatpush2.msra.mxu0 0.0
      %7476 = vmatprep.subr.mxu0 0.0
      %7477 = vmatpush2.msra.mxu0 0.0
      %7478 = vmatprep.subr.mxu0 0.0
      %7479 = vmatpush2.msra.mxu0 0.0
      %7480 = vmatprep.subr.mxu0 0.0
      %7481 = vmatpush2.msra.mxu0 0.0
      %7482 = vmatprep.subr.mxu0 0.0
      %7483 = vmatpush2.msra.mxu0 0.0
      %7484 = vmatprep.subr.mxu0 0.0
      %7485 = vmatpush2.msra.mxu0 0.0
      %7486 = vmatprep.mubr.f32.mxu0 0.0
      %7487 = vmatmul.mubr.f32.gmra.mxu0 %v7414
      %v7488 = vpop.f32.mrf.mxu0
      %v7489 = vadd.f32 0.0, %v7488
      %v7490 = vpop.f32.mrf.mxu0
      %7491 = vmatprep.mubr.f32.mxu0 0.0
      %7492 = vmatmul.mubr.f32.gmra.mxu0 %v7417
      %v7493 = vpop.f32.mrf.mxu0
      %v7494 = vadd.f32 0.0, %v7493
      %v7495 = vpop.f32.mrf.mxu0
      %7496 = vmatprep.mubr.f32.mxu0 0.0
      %7497 = vmatmul.mubr.f32.gmra.mxu0 %v7420
      %v7498 = vpop.f32.mrf.mxu0
      %v7499 = vadd.f32 0.0, %v7498
      %v7500 = vpop.f32.mrf.mxu0
      %7501 = vdwg.mxu0
      %v7502 = vadd.f32 %v7340, %v7489
      %v7503 = vadd.f32 %v7345, %v7494
      %v7504 = vadd.f32 %v7350, %v7499
      %s7505 = scalar_lea.vmem %s4, 44
      %v7506 = vld [vmem:[%s7505] sm:$0x7]
      %s7507 = scalar_lea.vmem %s5, 11
      %v7508 = vld [vmem:[%s7507] sm:$0x1]
      %v7509 = vlaneseq
      %v7510 = vshrl.u32 %v7509, 7
      %v7511 = vsub.s32 0, %v7510
      %v7512 = vrot.slane %v7506, %v7511
      %v7513 = vmul.f32 %v7512, %v6962
      %v7514 = vmul.f32 %v7512, %v6967
      %v7515 = vmul.f32 %v7512, %v6972
      %v7517 = vlaneseq
      %v7518 = vshrl.u32 %v7517, 7
      %v7519 = vsub.s32 0, %v7518
      %v7520 = vrot.slane %v7508, %v7519
      %v7522 = vadd.f32 %v7520, %v7513
      %v7523 = vadd.f32 %v7520, %v7514
      %v7524 = vadd.f32 %v7520, %v7515
      %v7525 = vlaneseq
      %v7526 = vshrl.u32 %v7525, 7
      %v7527 = vsub.s32 1, %v7526
      %v7528 = vrot.slane %v7506, %v7527
      %v7529 = vmul.f32 %v7528, %v6889
      %v7530 = vmul.f32 %v7528, %v6890
      %v7531 = vmul.f32 %v7528, %v6891
      %v7532 = vadd.f32 %v7522, %v7529
      %v7533 = vadd.f32 %v7523, %v7530
      %v7534 = vadd.f32 %v7524, %v7531
      %v7535 = vlaneseq
      %v7536 = vshrl.u32 %v7535, 7
      %v7537 = vsub.s32 2, %v7536
      %v7538 = vrot.slane %v7506, %v7537
      %v7539 = vmul.f32 %v7538, %v7042
      %v7540 = vmul.f32 %v7538, %v7047
      %v7541 = vmul.f32 %v7538, %v7052
      %v7542 = vadd.f32 %v7532, %v7539
      %v7543 = vadd.f32 %v7533, %v7540
      %v7544 = vadd.f32 %v7534, %v7541
      %v7545 = vmul.f32 %v7542, 0.5
      %v7546 = vmul.f32 %v7543, 0.5
      %v7547 = vmul.f32 %v7544, 0.5
      %v7548 = vmul.f32 %v7542, 0.70710677
      %v7549 = vmul.f32 %v7543, 0.70710677
      %v7550 = vmul.f32 %v7544, 0.70710677
      %v7551 = verf.f32.pop %v7548
      %v7552 = verf.f32.pop %v7549
      %v7553 = verf.f32.pop %v7550
      %v7554 = vadd.f32 %v7551, 1.0
      %v7555 = vadd.f32 %v7552, 1.0
      %v7556 = vadd.f32 %v7553, 1.0
      %v7557 = vmul.f32 %v7545, %v7554
      %v7558 = vmul.f32 %v7546, %v7555
      %v7559 = vmul.f32 %v7547, %v7556
      %s7560 = scalar_lea.vmem %s1, 928
      %v7561 = vld [vmem:[%s7560] sm:$0xff]
      %v7562 = vld [vmem:[%s7560 + $0x8] sm:$0xff]
      %v7563 = vld [vmem:[%s7560 + $0x10] sm:$0xff]
      %v7564 = vld [vmem:[%s7560 + $0x18] sm:$0xff]
      %v7566 = vsel %vm361, %v7557, 0
      %v7569 = vsel %vm361, %v7558, 0
      %v7572 = vsel %vm361, %v7559, 0
      %7574 = vmatprep.subr.mxu0 0.0
      %7575 = vmatpush1.msra.mxu0 0.0
      %7576 = vmatprep.subr.mxu0 0.0
      %7577 = vmatpush1.msra.mxu0 0.0
      %7578 = vmatprep.subr.mxu0 0.0
      %7579 = vmatpush1.msra.mxu0 0.0
      %7580 = vmatprep.subr.mxu0 0.0
      %7581 = vmatpush1.msra.mxu0 0.0
      %7582 = vmatprep.subr.mxu0 0.0
      %7583 = vmatpush1.msra.mxu0 0.0
      %7584 = vmatprep.subr.mxu0 0.0
      %7585 = vmatpush1.msra.mxu0 0.0
      %7586 = vmatprep.subr.mxu0 0.0
      %7587 = vmatpush1.msra.mxu0 0.0
      %7588 = vmatprep.subr.mxu0 0.0
      %7589 = vmatpush1.msra.mxu0 0.0
      %7590 = vmatprep.subr.mxu0 0.0
      %7591 = vmatpush1.msra.mxu0 0.0
      %7592 = vmatprep.subr.mxu0 0.0
      %7593 = vmatpush1.msra.mxu0 0.0
      %7594 = vmatprep.subr.mxu0 0.0
      %7595 = vmatpush1.msra.mxu0 0.0
      %7596 = vmatprep.subr.mxu0 0.0
      %7597 = vmatpush1.msra.mxu0 0.0
      %7598 = vmatprep.subr.mxu0 0.0
      %7599 = vmatpush1.msra.mxu0 %v7564
      %7600 = vmatprep.subr.mxu0 0.0
      %7601 = vmatpush1.msra.mxu0 %v7563
      %7602 = vmatprep.subr.mxu0 0.0
      %7603 = vmatpush1.msra.mxu0 %v7562
      %7604 = vmatprep.subr.mxu0 0.0
      %7605 = vmatpush1.msra.mxu0 %v7561
      %7606 = vmatprep.subr.mxu0 0.0
      %7607 = vmatpush2.msra.mxu0 0.0
      %7608 = vmatprep.subr.mxu0 0.0
      %7609 = vmatpush2.msra.mxu0 0.0
      %7610 = vmatprep.subr.mxu0 0.0
      %7611 = vmatpush2.msra.mxu0 0.0
      %7612 = vmatprep.subr.mxu0 0.0
      %7613 = vmatpush2.msra.mxu0 0.0
      %7614 = vmatprep.subr.mxu0 0.0
      %7615 = vmatpush2.msra.mxu0 0.0
      %7616 = vmatprep.subr.mxu0 0.0
      %7617 = vmatpush2.msra.mxu0 0.0
      %7618 = vmatprep.subr.mxu0 0.0
      %7619 = vmatpush2.msra.mxu0 0.0
      %7620 = vmatprep.subr.mxu0 0.0
      %7621 = vmatpush2.msra.mxu0 0.0
      %7622 = vmatprep.subr.mxu0 0.0
      %7623 = vmatpush2.msra.mxu0 0.0
      %7624 = vmatprep.subr.mxu0 0.0
      %7625 = vmatpush2.msra.mxu0 0.0
      %7626 = vmatprep.subr.mxu0 0.0
      %7627 = vmatpush2.msra.mxu0 0.0
      %7628 = vmatprep.subr.mxu0 0.0
      %7629 = vmatpush2.msra.mxu0 0.0
      %7630 = vmatprep.subr.mxu0 0.0
      %7631 = vmatpush2.msra.mxu0 0.0
      %7632 = vmatprep.subr.mxu0 0.0
      %7633 = vmatpush2.msra.mxu0 0.0
      %7634 = vmatprep.subr.mxu0 0.0
      %7635 = vmatpush2.msra.mxu0 0.0
      %7636 = vmatprep.subr.mxu0 0.0
      %7637 = vmatpush2.msra.mxu0 0.0
      %7638 = vmatprep.mubr.f32.mxu0 0.0
      %7639 = vmatmul.mubr.f32.gmra.mxu0 %v7566
      %v7640 = vpop.f32.mrf.mxu0
      %v7641 = vadd.f32 0.0, %v7640
      %v7642 = vpop.f32.mrf.mxu0
      %7643 = vmatprep.mubr.f32.mxu0 0.0
      %7644 = vmatmul.mubr.f32.gmra.mxu0 %v7569
      %v7645 = vpop.f32.mrf.mxu0
      %v7646 = vadd.f32 0.0, %v7645
      %v7647 = vpop.f32.mrf.mxu0
      %7648 = vmatprep.mubr.f32.mxu0 0.0
      %7649 = vmatmul.mubr.f32.gmra.mxu0 %v7572
      %v7650 = vpop.f32.mrf.mxu0
      %v7651 = vadd.f32 0.0, %v7650
      %v7652 = vpop.f32.mrf.mxu0
      %7653 = vdwg.mxu0
      %v7654 = vadd.f32 %v7502, %v7641
      %v7655 = vadd.f32 %v7503, %v7646
      %v7656 = vadd.f32 %v7504, %v7651
      %s7657 = scalar_lea.vmem %s2, 43
      %v7658 = vld [vmem:[%s7657] sm:$0x1]
      %v7660 = vlaneseq
      %v7661 = vshrl.u32 %v7660, 7
      %v7662 = vsub.s32 0, %v7661
      %v7663 = vrot.slane %v7658, %v7662
      %v7665 = vadd.f32 %v7654, %v7663
      %v7666 = vadd.f32 %v7655, %v7663
      %v7667 = vadd.f32 %v7656, %v7663
      %v7668 = vsel %vm1135, %v6784, %v7665
      %v7669 = vsel %vm2642, %v6785, %v7666
      %v7670 = vsel %vm2643, %v6786, %v7667
      %v7671 = vadd.f32 %v7668, %v6713
      %v7672 = vadd.f32 %v7669, %v6718
      %v7673 = vadd.f32 %v7670, %v6723
      %v7674 = vsel %vm361, %v7671, 0.0
      %7675 = vadd.xlane.f32.xlu0 %v7674
      %v7676 = vpop.xlane.xlu0 %7675
      %v7677 = vsel %vm361, %v7672, 0.0
      %7678 = vadd.xlane.f32.xlu0 %v7677
      %v7679 = vpop.xlane.xlu0 %7678
      %v7680 = vsel %vm368, %v7673, 0.0
      %7681 = vadd.xlane.f32.xlu0 %v7680
      %v7682 = vpop.xlane.xlu0 %7681
      %v7683 = vmul.f32 %v7676, %v372
      %v7684 = vmul.f32 %v7679, %v372
      %v7685 = vmul.f32 %v7682, %v372
      %v7686 = vsub.f32 %v7671, %v7683
      %v7687 = vsub.f32 %v7672, %v7684
      %v7688 = vsub.f32 %v7673, %v7685
      %v7689 = vmul.f32 %v7686, %v7686
      %v7690 = vmul.f32 %v7687, %v7687
      %v7691 = vmul.f32 %v7688, %v7688
      %v7692 = vsel %vm361, %v7689, 0.0
      %7693 = vadd.xlane.f32.xlu0 %v7692
      %v7694 = vpop.xlane.xlu0 %7693
      %v7695 = vsel %vm361, %v7690, 0.0
      %7696 = vadd.xlane.f32.xlu0 %v7695
      %v7697 = vpop.xlane.xlu0 %7696
      %v7698 = vsel %vm368, %v7691, 0.0
      %7699 = vadd.xlane.f32.xlu0 %v7698
      %v7700 = vpop.xlane.xlu0 %7699
      %v7701 = vmul.f32 %v7694, %v372
      %v7702 = vmul.f32 %v7697, %v372
      %v7703 = vmul.f32 %v7700, %v372
      %v7704 = vadd.f32 %v7701, 1e-05
      %v7705 = vadd.f32 %v7702, 1e-05
      %v7706 = vadd.f32 %v7703, 1e-05
      %v7707 = vrsqrt.pop %v7704
      %v7708 = vrsqrt.pop %v7705
      %v7709 = vrsqrt.pop %v7706
      %v7710 = vmul.f32 %v7686, %v7707
      %v7711 = vmul.f32 %v7687, %v7708
      %v7712 = vmul.f32 %v7688, %v7709
      %s7713 = scalar_lea.vmem %s2, 28
      %v7714 = vld [vmem:[%s7713] sm:$0x1]
      %v7716 = vlaneseq
      %v7717 = vshrl.u32 %v7716, 7
      %v7718 = vsub.s32 0, %v7717
      %v7719 = vrot.slane %v7714, %v7718
      %v7721 = vmul.f32 %v7710, %v7719
      %v7722 = vmul.f32 %v7711, %v7719
      %v7723 = vmul.f32 %v7712, %v7719
      %s7724 = scalar_lea.vmem %s2, 29
      %v7725 = vld [vmem:[%s7724] sm:$0x1]
      %v7727 = vlaneseq
      %v7728 = vshrl.u32 %v7727, 7
      %v7729 = vsub.s32 0, %v7728
      %v7730 = vrot.slane %v7725, %v7729
      %v7732 = vadd.f32 %v7721, %v7730
      %v7733 = vadd.f32 %v7722, %v7730
      %v7734 = vadd.f32 %v7723, %v7730
      %s7735 = scalar_lea.vmem %s1, 736
      %v7736 = vld [vmem:[%s7735] sm:$0xff]
      %v7737 = vld [vmem:[%s7735 + $0x8] sm:$0xff]
      %v7738 = vld [vmem:[%s7735 + $0x10] sm:$0xff]
      %v7739 = vld [vmem:[%s7735 + $0x18] sm:$0xff]
      %s7740 = scalar_lea.vmem %s2, 44
      %v7741 = vld [vmem:[%s7740] sm:$0x1]
      %v7743 = vlaneseq
      %v7744 = vshrl.u32 %v7743, 7
      %v7745 = vsub.s32 0, %v7744
      %v7746 = vrot.slane %v7741, %v7745
      %v7749 = vsel %vm361, %v7732, 0
      %v7752 = vsel %vm361, %v7733, 0
      %v7755 = vsel %vm361, %v7734, 0
      %7757 = vmatprep.subr.mxu0 0.0
      %7758 = vmatpush1.msra.mxu0 0.0
      %7759 = vmatprep.subr.mxu0 0.0
      %7760 = vmatpush1.msra.mxu0 0.0
      %7761 = vmatprep.subr.mxu0 0.0
      %7762 = vmatpush1.msra.mxu0 0.0
      %7763 = vmatprep.subr.mxu0 0.0
      %7764 = vmatpush1.msra.mxu0 0.0
      %7765 = vmatprep.subr.mxu0 0.0
      %7766 = vmatpush1.msra.mxu0 0.0
      %7767 = vmatprep.subr.mxu0 0.0
      %7768 = vmatpush1.msra.mxu0 0.0
      %7769 = vmatprep.subr.mxu0 0.0
      %7770 = vmatpush1.msra.mxu0 0.0
      %7771 = vmatprep.subr.mxu0 0.0
      %7772 = vmatpush1.msra.mxu0 0.0
      %7773 = vmatprep.subr.mxu0 0.0
      %7774 = vmatpush1.msra.mxu0 0.0
      %7775 = vmatprep.subr.mxu0 0.0
      %7776 = vmatpush1.msra.mxu0 0.0
      %7777 = vmatprep.subr.mxu0 0.0
      %7778 = vmatpush1.msra.mxu0 0.0
      %7779 = vmatprep.subr.mxu0 0.0
      %7780 = vmatpush1.msra.mxu0 0.0
      %7781 = vmatprep.subr.mxu0 0.0
      %7782 = vmatpush1.msra.mxu0 %v7739
      %7783 = vmatprep.subr.mxu0 0.0
      %7784 = vmatpush1.msra.mxu0 %v7738
      %7785 = vmatprep.subr.mxu0 0.0
      %7786 = vmatpush1.msra.mxu0 %v7737
      %7787 = vmatprep.subr.mxu0 0.0
      %7788 = vmatpush1.msra.mxu0 %v7736
      %7789 = vmatprep.subr.mxu0 0.0
      %7790 = vmatpush2.msra.mxu0 0.0
      %7791 = vmatprep.subr.mxu0 0.0
      %7792 = vmatpush2.msra.mxu0 0.0
      %7793 = vmatprep.subr.mxu0 0.0
      %7794 = vmatpush2.msra.mxu0 0.0
      %7795 = vmatprep.subr.mxu0 0.0
      %7796 = vmatpush2.msra.mxu0 0.0
      %7797 = vmatprep.subr.mxu0 0.0
      %7798 = vmatpush2.msra.mxu0 0.0
      %7799 = vmatprep.subr.mxu0 0.0
      %7800 = vmatpush2.msra.mxu0 0.0
      %7801 = vmatprep.subr.mxu0 0.0
      %7802 = vmatpush2.msra.mxu0 0.0
      %7803 = vmatprep.subr.mxu0 0.0
      %7804 = vmatpush2.msra.mxu0 0.0
      %7805 = vmatprep.subr.mxu0 0.0
      %7806 = vmatpush2.msra.mxu0 0.0
      %7807 = vmatprep.subr.mxu0 0.0
      %7808 = vmatpush2.msra.mxu0 0.0
      %7809 = vmatprep.subr.mxu0 0.0
      %7810 = vmatpush2.msra.mxu0 0.0
      %7811 = vmatprep.subr.mxu0 0.0
      %7812 = vmatpush2.msra.mxu0 0.0
      %7813 = vmatprep.subr.mxu0 0.0
      %7814 = vmatpush2.msra.mxu0 0.0
      %7815 = vmatprep.subr.mxu0 0.0
      %7816 = vmatpush2.msra.mxu0 0.0
      %7817 = vmatprep.subr.mxu0 0.0
      %7818 = vmatpush2.msra.mxu0 0.0
      %7819 = vmatprep.subr.mxu0 0.0
      %7820 = vmatpush2.msra.mxu0 0.0
      %7821 = vmatprep.mubr.f32.mxu0 0.0
      %7822 = vmatmul.mubr.f32.gmra.mxu0 %v7749
      %v7823 = vpop.f32.mrf.mxu0
      %v7824 = vadd.f32 %v7746, %v7823
      %v7825 = vpop.f32.mrf.mxu0
      %7826 = vmatprep.mubr.f32.mxu0 0.0
      %7827 = vmatmul.mubr.f32.gmra.mxu0 %v7752
      %v7828 = vpop.f32.mrf.mxu0
      %v7829 = vadd.f32 %v7746, %v7828
      %v7830 = vpop.f32.mrf.mxu0
      %7831 = vmatprep.mubr.f32.mxu0 0.0
      %7832 = vmatmul.mubr.f32.gmra.mxu0 %v7755
      %v7833 = vpop.f32.mrf.mxu0
      %v7834 = vadd.f32 %v7746, %v7833
      %v7835 = vpop.f32.mrf.mxu0
      %7836 = vdwg.mxu0
      %v7837 = vsel %vm1135, 0.0, %v7824
      %v7838 = vsel %vm2642, 0.0, %v7829
      %v7839 = vsel %vm2643, 0.0, %v7834
      %v7841 = vsel %vm431, %v7839, 0
      %7843 = vmatprep.subr.mxu0 0.0
      %7844 = vmatpush1.msra.mxu0 0.0
      %7845 = vmatprep.subr.mxu0 0.0
      %7846 = vmatpush1.msra.mxu0 0.0
      %7847 = vmatprep.subr.mxu0 0.0
      %7848 = vmatpush1.msra.mxu0 0.0
      %7849 = vmatprep.subr.mxu0 0.0
      %7850 = vmatpush1.msra.mxu0 0.0
      %7851 = vmatprep.subr.mxu0 0.0
      %7852 = vmatpush1.msra.mxu0 0.0
      %7853 = vmatprep.subr.mxu0 0.0
      %7854 = vmatpush1.msra.mxu0 0.0
      %7855 = vmatprep.subr.mxu0 0.0
      %7856 = vmatpush1.msra.mxu0 0.0
      %7857 = vmatprep.subr.mxu0 0.0
      %7858 = vmatpush1.msra.mxu0 0.0
      %7859 = vmatprep.subr.mxu0 0.0
      %7860 = vmatpush1.msra.mxu0 0.0
      %7861 = vmatprep.subr.mxu0 0.0
      %7862 = vmatpush1.msra.mxu0 0.0
      %7863 = vmatprep.subr.mxu0 0.0
      %7864 = vmatpush1.msra.mxu0 0.0
      %7865 = vmatprep.subr.mxu0 0.0
      %7866 = vmatpush1.msra.mxu0 0.0
      %7867 = vmatprep.subr.mxu0 0.0
      %7868 = vmatpush1.msra.mxu0 0.0
      %7869 = vmatprep.subr.mxu0 0.0
      %7870 = vmatpush1.msra.mxu0 %v7841
      %7871 = vmatprep.subr.mxu0 0.0
      %7872 = vmatpush1.msra.mxu0 %v7838
      %7873 = vmatprep.subr.mxu0 0.0
      %7874 = vmatpush1.msra.mxu0 %v7837
      %7875 = vmatprep.subr.mxu0 0.0
      %7876 = vmatpush2.msra.mxu0 0.0
      %7877 = vmatprep.subr.mxu0 0.0
      %7878 = vmatpush2.msra.mxu0 0.0
      %7879 = vmatprep.subr.mxu0 0.0
      %7880 = vmatpush2.msra.mxu0 0.0
      %7881 = vmatprep.subr.mxu0 0.0
      %7882 = vmatpush2.msra.mxu0 0.0
      %7883 = vmatprep.subr.mxu0 0.0
      %7884 = vmatpush2.msra.mxu0 0.0
      %7885 = vmatprep.subr.mxu0 0.0
      %7886 = vmatpush2.msra.mxu0 0.0
      %7887 = vmatprep.subr.mxu0 0.0
      %7888 = vmatpush2.msra.mxu0 0.0
      %7889 = vmatprep.subr.mxu0 0.0
      %7890 = vmatpush2.msra.mxu0 0.0
      %7891 = vmatprep.subr.mxu0 0.0
      %7892 = vmatpush2.msra.mxu0 0.0
      %7893 = vmatprep.subr.mxu0 0.0
      %7894 = vmatpush2.msra.mxu0 0.0
      %7895 = vmatprep.subr.mxu0 0.0
      %7896 = vmatpush2.msra.mxu0 0.0
      %7897 = vmatprep.subr.mxu0 0.0
      %7898 = vmatpush2.msra.mxu0 0.0
      %7899 = vmatprep.subr.mxu0 0.0
      %7900 = vmatpush2.msra.mxu0 0.0
      %7901 = vmatprep.subr.mxu0 0.0
      %7902 = vmatpush2.msra.mxu0 0.0
      %7903 = vmatprep.subr.mxu0 0.0
      %7904 = vmatpush2.msra.mxu0 0.0
      %7905 = vmatprep.subr.mxu0 0.0
      %7906 = vmatpush2.msra.mxu0 0.0
      %7907 = vmatprep.mubr.f32.mxu0 0.0
      %7908 = vmatmul.mubr.f32.gmra.mxu0 %v2648
      %v7909 = vpop.f32.mrf.mxu0
      %v7910 = vadd.f32 0.0, %v7909
      %v7911 = vpop.f32.mrf.mxu0
      %7912 = vmatprep.mubr.f32.mxu0 0.0
      %7913 = vmatmul.mubr.f32.gmra.mxu0 %v2651
      %v7914 = vpop.f32.mrf.mxu0
      %v7915 = vadd.f32 0.0, %v7914
      %v7916 = vpop.f32.mrf.mxu0
      %7917 = vmatprep.mubr.f32.mxu0 0.0
      %7918 = vmatmul.mubr.f32.gmra.mxu0 %v2654
      %v7919 = vpop.f32.mrf.mxu0
      %v7920 = vadd.f32 0.0, %v7919
      %v7921 = vpop.f32.mrf.mxu0
      %7922 = vdwg.mxu0
      %7923 = vmatprep.subr.mxu0 0.0
      %7924 = vmatpush1.msra.mxu0 0.0
      %7925 = vmatprep.subr.mxu0 0.0
      %7926 = vmatpush1.msra.mxu0 0.0
      %7927 = vmatprep.subr.mxu0 0.0
      %7928 = vmatpush1.msra.mxu0 0.0
      %7929 = vmatprep.subr.mxu0 0.0
      %7930 = vmatpush1.msra.mxu0 0.0
      %7931 = vmatprep.subr.mxu0 0.0
      %7932 = vmatpush1.msra.mxu0 0.0
      %7933 = vmatprep.subr.mxu0 0.0
      %7934 = vmatpush1.msra.mxu0 0.0
      %7935 = vmatprep.subr.mxu0 0.0
      %7936 = vmatpush1.msra.mxu0 0.0
      %7937 = vmatprep.subr.mxu0 0.0
      %7938 = vmatpush1.msra.mxu0 0.0
      %7939 = vmatprep.subr.mxu0 0.0
      %7940 = vmatpush1.msra.mxu0 0.0
      %7941 = vmatprep.subr.mxu0 0.0
      %7942 = vmatpush1.msra.mxu0 0.0
      %7943 = vmatprep.subr.mxu0 0.0
      %7944 = vmatpush1.msra.mxu0 0.0
      %7945 = vmatprep.subr.mxu0 0.0
      %7946 = vmatpush1.msra.mxu0 0.0
      %7947 = vmatprep.subr.mxu0 0.0
      %7948 = vmatpush1.msra.mxu0 0.0
      %7949 = vmatprep.subr.mxu0 0.0
      %7950 = vmatpush1.msra.mxu0 %v7841
      %7951 = vmatprep.subr.mxu0 0.0
      %7952 = vmatpush1.msra.mxu0 %v7838
      %7953 = vmatprep.subr.mxu0 0.0
      %7954 = vmatpush1.msra.mxu0 %v7837
      %7955 = vmatprep.subr.mxu0 0.0
      %7956 = vmatpush2.msra.mxu0 0.0
      %7957 = vmatprep.subr.mxu0 0.0
      %7958 = vmatpush2.msra.mxu0 0.0
      %7959 = vmatprep.subr.mxu0 0.0
      %7960 = vmatpush2.msra.mxu0 0.0
      %7961 = vmatprep.subr.mxu0 0.0
      %7962 = vmatpush2.msra.mxu0 0.0
      %7963 = vmatprep.subr.mxu0 0.0
      %7964 = vmatpush2.msra.mxu0 0.0
      %7965 = vmatprep.subr.mxu0 0.0
      %7966 = vmatpush2.msra.mxu0 0.0
      %7967 = vmatprep.subr.mxu0 0.0
      %7968 = vmatpush2.msra.mxu0 0.0
      %7969 = vmatprep.subr.mxu0 0.0
      %7970 = vmatpush2.msra.mxu0 0.0
      %7971 = vmatprep.subr.mxu0 0.0
      %7972 = vmatpush2.msra.mxu0 0.0
      %7973 = vmatprep.subr.mxu0 0.0
      %7974 = vmatpush2.msra.mxu0 0.0
      %7975 = vmatprep.subr.mxu0 0.0
      %7976 = vmatpush2.msra.mxu0 0.0
      %7977 = vmatprep.subr.mxu0 0.0
      %7978 = vmatpush2.msra.mxu0 0.0
      %7979 = vmatprep.subr.mxu0 0.0
      %7980 = vmatpush2.msra.mxu0 0.0
      %7981 = vmatprep.subr.mxu0 0.0
      %7982 = vmatpush2.msra.mxu0 0.0
      %7983 = vmatprep.subr.mxu0 0.0
      %7984 = vmatpush2.msra.mxu0 0.0
      %7985 = vmatprep.subr.mxu0 0.0
      %7986 = vmatpush2.msra.mxu0 0.0
      %7987 = vmatprep.mubr.f32.mxu0 0.0
      %7988 = vmatmul.mubr.f32.gmra.mxu0 %v2740
      %v7989 = vpop.f32.mrf.mxu0
      %v7990 = vadd.f32 0.0, %v7989
      %v7991 = vpop.f32.mrf.mxu0
      %7992 = vmatprep.mubr.f32.mxu0 0.0
      %7993 = vmatmul.mubr.f32.gmra.mxu0 %v2743
      %v7994 = vpop.f32.mrf.mxu0
      %v7995 = vadd.f32 0.0, %v7994
      %v7996 = vpop.f32.mrf.mxu0
      %7997 = vmatprep.mubr.f32.mxu0 0.0
      %7998 = vmatmul.mubr.f32.gmra.mxu0 %v2746
      %v7999 = vpop.f32.mrf.mxu0
      %v8000 = vadd.f32 0.0, %v7999
      %v8001 = vpop.f32.mrf.mxu0
      %8002 = vdwg.mxu0
      %s8003 = scalar_lea.vmem %s4, 48
      %v8004 = vld [vmem:[%s8003] sm:$0x7]
      %s8005 = scalar_lea.vmem %s5, 12
      %v8006 = vld [vmem:[%s8005] sm:$0x1]
      %v8007 = vlaneseq
      %v8008 = vshrl.u32 %v8007, 7
      %v8009 = vsub.s32 0, %v8008
      %v8010 = vrot.slane %v8004, %v8009
      %v8011 = vmul.f32 %v8010, %v7910
      %v8012 = vmul.f32 %v8010, %v7915
      %v8013 = vmul.f32 %v8010, %v7920
      %v8015 = vlaneseq
      %v8016 = vshrl.u32 %v8015, 7
      %v8017 = vsub.s32 0, %v8016
      %v8018 = vrot.slane %v8006, %v8017
      %v8020 = vadd.f32 %v8018, %v8011
      %v8021 = vadd.f32 %v8018, %v8012
      %v8022 = vadd.f32 %v8018, %v8013
      %v8023 = vlaneseq
      %v8024 = vshrl.u32 %v8023, 7
      %v8025 = vsub.s32 1, %v8024
      %v8026 = vrot.slane %v8004, %v8025
      %v8027 = vmul.f32 %v8026, %v7837
      %v8028 = vmul.f32 %v8026, %v7838
      %v8029 = vmul.f32 %v8026, %v7839
      %v8030 = vadd.f32 %v8020, %v8027
      %v8031 = vadd.f32 %v8021, %v8028
      %v8032 = vadd.f32 %v8022, %v8029
      %v8033 = vlaneseq
      %v8034 = vshrl.u32 %v8033, 7
      %v8035 = vsub.s32 2, %v8034
      %v8036 = vrot.slane %v8004, %v8035
      %v8037 = vmul.f32 %v8036, %v7990
      %v8038 = vmul.f32 %v8036, %v7995
      %v8039 = vmul.f32 %v8036, %v8000
      %v8040 = vadd.f32 %v8030, %v8037
      %v8041 = vadd.f32 %v8031, %v8038
      %v8042 = vadd.f32 %v8032, %v8039
      %v8043 = vmul.f32 %v8040, 0.5
      %v8044 = vmul.f32 %v8041, 0.5
      %v8045 = vmul.f32 %v8042, 0.5
      %v8046 = vmul.f32 %v8040, 0.70710677
      %v8047 = vmul.f32 %v8041, 0.70710677
      %v8048 = vmul.f32 %v8042, 0.70710677
      %v8049 = verf.f32.pop %v8046
      %v8050 = verf.f32.pop %v8047
      %v8051 = verf.f32.pop %v8048
      %v8052 = vadd.f32 %v8049, 1.0
      %v8053 = vadd.f32 %v8050, 1.0
      %v8054 = vadd.f32 %v8051, 1.0
      %v8055 = vmul.f32 %v8043, %v8052
      %v8056 = vmul.f32 %v8044, %v8053
      %v8057 = vmul.f32 %v8045, %v8054
      %s8058 = scalar_lea.vmem %s1, 960
      %v8059 = vld [vmem:[%s8058] sm:$0xff]
      %v8060 = vld [vmem:[%s8058 + $0x8] sm:$0xff]
      %v8061 = vld [vmem:[%s8058 + $0x10] sm:$0xff]
      %v8062 = vld [vmem:[%s8058 + $0x18] sm:$0xff]
      %s8063 = scalar_lea.vmem %s4, 52
      %v8064 = vld [vmem:[%s8063] sm:$0x7]
      %s8065 = scalar_lea.vmem %s5, 13
      %v8066 = vld [vmem:[%s8065] sm:$0x1]
      %v8067 = vlaneseq
      %v8068 = vshrl.u32 %v8067, 7
      %v8069 = vsub.s32 0, %v8068
      %v8070 = vrot.slane %v8064, %v8069
      %v8071 = vmul.f32 %v8070, %v7910
      %v8072 = vmul.f32 %v8070, %v7915
      %v8073 = vmul.f32 %v8070, %v7920
      %v8075 = vlaneseq
      %v8076 = vshrl.u32 %v8075, 7
      %v8077 = vsub.s32 0, %v8076
      %v8078 = vrot.slane %v8066, %v8077
      %v8080 = vadd.f32 %v8078, %v8071
      %v8081 = vadd.f32 %v8078, %v8072
      %v8082 = vadd.f32 %v8078, %v8073
      %v8083 = vlaneseq
      %v8084 = vshrl.u32 %v8083, 7
      %v8085 = vsub.s32 1, %v8084
      %v8086 = vrot.slane %v8064, %v8085
      %v8087 = vmul.f32 %v8086, %v7837
      %v8088 = vmul.f32 %v8086, %v7838
      %v8089 = vmul.f32 %v8086, %v7839
      %v8090 = vadd.f32 %v8080, %v8087
      %v8091 = vadd.f32 %v8081, %v8088
      %v8092 = vadd.f32 %v8082, %v8089
      %v8093 = vlaneseq
      %v8094 = vshrl.u32 %v8093, 7
      %v8095 = vsub.s32 2, %v8094
      %v8096 = vrot.slane %v8064, %v8095
      %v8097 = vmul.f32 %v8096, %v7990
      %v8098 = vmul.f32 %v8096, %v7995
      %v8099 = vmul.f32 %v8096, %v8000
      %v8100 = vadd.f32 %v8090, %v8097
      %v8101 = vadd.f32 %v8091, %v8098
      %v8102 = vadd.f32 %v8092, %v8099
      %v8103 = vmul.f32 %v8100, 0.5
      %v8104 = vmul.f32 %v8101, 0.5
      %v8105 = vmul.f32 %v8102, 0.5
      %v8106 = vmul.f32 %v8100, 0.70710677
      %v8107 = vmul.f32 %v8101, 0.70710677
      %v8108 = vmul.f32 %v8102, 0.70710677
      %v8109 = verf.f32.pop %v8106
      %v8110 = verf.f32.pop %v8107
      %v8111 = verf.f32.pop %v8108
      %v8112 = vadd.f32 %v8109, 1.0
      %v8113 = vadd.f32 %v8110, 1.0
      %v8114 = vadd.f32 %v8111, 1.0
      %v8115 = vmul.f32 %v8103, %v8112
      %v8116 = vmul.f32 %v8104, %v8113
      %v8117 = vmul.f32 %v8105, %v8114
      %s8118 = scalar_lea.vmem %s1, 992
      %v8119 = vld [vmem:[%s8118] sm:$0xff]
      %v8120 = vld [vmem:[%s8118 + $0x8] sm:$0xff]
      %v8121 = vld [vmem:[%s8118 + $0x10] sm:$0xff]
      %v8122 = vld [vmem:[%s8118 + $0x18] sm:$0xff]
      %v8124 = vsel %vm361, %v8115, 0
      %v8127 = vsel %vm361, %v8116, 0
      %v8130 = vsel %vm361, %v8117, 0
      %8132 = vmatprep.subr.mxu0 0.0
      %8133 = vmatpush1.msra.mxu0 0.0
      %8134 = vmatprep.subr.mxu0 0.0
      %8135 = vmatpush1.msra.mxu0 0.0
      %8136 = vmatprep.subr.mxu0 0.0
      %8137 = vmatpush1.msra.mxu0 0.0
      %8138 = vmatprep.subr.mxu0 0.0
      %8139 = vmatpush1.msra.mxu0 0.0
      %8140 = vmatprep.subr.mxu0 0.0
      %8141 = vmatpush1.msra.mxu0 0.0
      %8142 = vmatprep.subr.mxu0 0.0
      %8143 = vmatpush1.msra.mxu0 0.0
      %8144 = vmatprep.subr.mxu0 0.0
      %8145 = vmatpush1.msra.mxu0 0.0
      %8146 = vmatprep.subr.mxu0 0.0
      %8147 = vmatpush1.msra.mxu0 0.0
      %8148 = vmatprep.subr.mxu0 0.0
      %8149 = vmatpush1.msra.mxu0 0.0
      %8150 = vmatprep.subr.mxu0 0.0
      %8151 = vmatpush1.msra.mxu0 0.0
      %8152 = vmatprep.subr.mxu0 0.0
      %8153 = vmatpush1.msra.mxu0 0.0
      %8154 = vmatprep.subr.mxu0 0.0
      %8155 = vmatpush1.msra.mxu0 0.0
      %8156 = vmatprep.subr.mxu0 0.0
      %8157 = vmatpush1.msra.mxu0 %v8122
      %8158 = vmatprep.subr.mxu0 0.0
      %8159 = vmatpush1.msra.mxu0 %v8121
      %8160 = vmatprep.subr.mxu0 0.0
      %8161 = vmatpush1.msra.mxu0 %v8120
      %8162 = vmatprep.subr.mxu0 0.0
      %8163 = vmatpush1.msra.mxu0 %v8119
      %8164 = vmatprep.subr.mxu0 0.0
      %8165 = vmatpush2.msra.mxu0 0.0
      %8166 = vmatprep.subr.mxu0 0.0
      %8167 = vmatpush2.msra.mxu0 0.0
      %8168 = vmatprep.subr.mxu0 0.0
      %8169 = vmatpush2.msra.mxu0 0.0
      %8170 = vmatprep.subr.mxu0 0.0
      %8171 = vmatpush2.msra.mxu0 0.0
      %8172 = vmatprep.subr.mxu0 0.0
      %8173 = vmatpush2.msra.mxu0 0.0
      %8174 = vmatprep.subr.mxu0 0.0
      %8175 = vmatpush2.msra.mxu0 0.0
      %8176 = vmatprep.subr.mxu0 0.0
      %8177 = vmatpush2.msra.mxu0 0.0
      %8178 = vmatprep.subr.mxu0 0.0
      %8179 = vmatpush2.msra.mxu0 0.0
      %8180 = vmatprep.subr.mxu0 0.0
      %8181 = vmatpush2.msra.mxu0 0.0
      %8182 = vmatprep.subr.mxu0 0.0
      %8183 = vmatpush2.msra.mxu0 0.0
      %8184 = vmatprep.subr.mxu0 0.0
      %8185 = vmatpush2.msra.mxu0 0.0
      %8186 = vmatprep.subr.mxu0 0.0
      %8187 = vmatpush2.msra.mxu0 0.0
      %8188 = vmatprep.subr.mxu0 0.0
      %8189 = vmatpush2.msra.mxu0 0.0
      %8190 = vmatprep.subr.mxu0 0.0
      %8191 = vmatpush2.msra.mxu0 0.0
      %8192 = vmatprep.subr.mxu0 0.0
      %8193 = vmatpush2.msra.mxu0 0.0
      %8194 = vmatprep.subr.mxu0 0.0
      %8195 = vmatpush2.msra.mxu0 0.0
      %8196 = vmatprep.mubr.f32.mxu0 0.0
      %8197 = vmatmul.mubr.f32.gmra.mxu0 %v8124
      %v8198 = vpop.f32.mrf.mxu0
      %v8199 = vadd.f32 0.0, %v8198
      %v8200 = vpop.f32.mrf.mxu0
      %8201 = vmatprep.mubr.f32.mxu0 0.0
      %8202 = vmatmul.mubr.f32.gmra.mxu0 %v8127
      %v8203 = vpop.f32.mrf.mxu0
      %v8204 = vadd.f32 0.0, %v8203
      %v8205 = vpop.f32.mrf.mxu0
      %8206 = vmatprep.mubr.f32.mxu0 0.0
      %8207 = vmatmul.mubr.f32.gmra.mxu0 %v8130
      %v8208 = vpop.f32.mrf.mxu0
      %v8209 = vadd.f32 0.0, %v8208
      %v8210 = vpop.f32.mrf.mxu0
      %8211 = vdwg.mxu0
      %v8213 = vsel %vm361, %v8055, 0
      %v8216 = vsel %vm361, %v8056, 0
      %v8219 = vsel %vm361, %v8057, 0
      %8221 = vmatprep.subr.mxu0 0.0
      %8222 = vmatpush1.msra.mxu0 0.0
      %8223 = vmatprep.subr.mxu0 0.0
      %8224 = vmatpush1.msra.mxu0 0.0
      %8225 = vmatprep.subr.mxu0 0.0
      %8226 = vmatpush1.msra.mxu0 0.0
      %8227 = vmatprep.subr.mxu0 0.0
      %8228 = vmatpush1.msra.mxu0 0.0
      %8229 = vmatprep.subr.mxu0 0.0
      %8230 = vmatpush1.msra.mxu0 0.0
      %8231 = vmatprep.subr.mxu0 0.0
      %8232 = vmatpush1.msra.mxu0 0.0
      %8233 = vmatprep.subr.mxu0 0.0
      %8234 = vmatpush1.msra.mxu0 0.0
      %8235 = vmatprep.subr.mxu0 0.0
      %8236 = vmatpush1.msra.mxu0 0.0
      %8237 = vmatprep.subr.mxu0 0.0
      %8238 = vmatpush1.msra.mxu0 0.0
      %8239 = vmatprep.subr.mxu0 0.0
      %8240 = vmatpush1.msra.mxu0 0.0
      %8241 = vmatprep.subr.mxu0 0.0
      %8242 = vmatpush1.msra.mxu0 0.0
      %8243 = vmatprep.subr.mxu0 0.0
      %8244 = vmatpush1.msra.mxu0 0.0
      %8245 = vmatprep.subr.mxu0 0.0
      %8246 = vmatpush1.msra.mxu0 %v8062
      %8247 = vmatprep.subr.mxu0 0.0
      %8248 = vmatpush1.msra.mxu0 %v8061
      %8249 = vmatprep.subr.mxu0 0.0
      %8250 = vmatpush1.msra.mxu0 %v8060
      %8251 = vmatprep.subr.mxu0 0.0
      %8252 = vmatpush1.msra.mxu0 %v8059
      %8253 = vmatprep.subr.mxu0 0.0
      %8254 = vmatpush2.msra.mxu0 0.0
      %8255 = vmatprep.subr.mxu0 0.0
      %8256 = vmatpush2.msra.mxu0 0.0
      %8257 = vmatprep.subr.mxu0 0.0
      %8258 = vmatpush2.msra.mxu0 0.0
      %8259 = vmatprep.subr.mxu0 0.0
      %8260 = vmatpush2.msra.mxu0 0.0
      %8261 = vmatprep.subr.mxu0 0.0
      %8262 = vmatpush2.msra.mxu0 0.0
      %8263 = vmatprep.subr.mxu0 0.0
      %8264 = vmatpush2.msra.mxu0 0.0
      %8265 = vmatprep.subr.mxu0 0.0
      %8266 = vmatpush2.msra.mxu0 0.0
      %8267 = vmatprep.subr.mxu0 0.0
      %8268 = vmatpush2.msra.mxu0 0.0
      %8269 = vmatprep.subr.mxu0 0.0
      %8270 = vmatpush2.msra.mxu0 0.0
      %8271 = vmatprep.subr.mxu0 0.0
      %8272 = vmatpush2.msra.mxu0 0.0
      %8273 = vmatprep.subr.mxu0 0.0
      %8274 = vmatpush2.msra.mxu0 0.0
      %8275 = vmatprep.subr.mxu0 0.0
      %8276 = vmatpush2.msra.mxu0 0.0
      %8277 = vmatprep.subr.mxu0 0.0
      %8278 = vmatpush2.msra.mxu0 0.0
      %8279 = vmatprep.subr.mxu0 0.0
      %8280 = vmatpush2.msra.mxu0 0.0
      %8281 = vmatprep.subr.mxu0 0.0
      %8282 = vmatpush2.msra.mxu0 0.0
      %8283 = vmatprep.subr.mxu0 0.0
      %8284 = vmatpush2.msra.mxu0 0.0
      %8285 = vmatprep.mubr.f32.mxu0 0.0
      %8286 = vmatmul.mubr.f32.gmra.mxu0 %v8213
      %v8287 = vpop.f32.mrf.mxu0
      %v8288 = vadd.f32 %v8199, %v8287
      %v8289 = vpop.f32.mrf.mxu0
      %8290 = vmatprep.mubr.f32.mxu0 0.0
      %8291 = vmatmul.mubr.f32.gmra.mxu0 %v8216
      %v8292 = vpop.f32.mrf.mxu0
      %v8293 = vadd.f32 %v8204, %v8292
      %v8294 = vpop.f32.mrf.mxu0
      %8295 = vmatprep.mubr.f32.mxu0 0.0
      %8296 = vmatmul.mubr.f32.gmra.mxu0 %v8219
      %v8297 = vpop.f32.mrf.mxu0
      %v8298 = vadd.f32 %v8209, %v8297
      %v8299 = vpop.f32.mrf.mxu0
      %8300 = vdwg.mxu0
      %s8301 = scalar_lea.vmem %s4, 56
      %v8302 = vld [vmem:[%s8301] sm:$0x7]
      %s8303 = scalar_lea.vmem %s5, 14
      %v8304 = vld [vmem:[%s8303] sm:$0x1]
      %v8305 = vlaneseq
      %v8306 = vshrl.u32 %v8305, 7
      %v8307 = vsub.s32 0, %v8306
      %v8308 = vrot.slane %v8302, %v8307
      %v8309 = vmul.f32 %v8308, %v7910
      %v8310 = vmul.f32 %v8308, %v7915
      %v8311 = vmul.f32 %v8308, %v7920
      %v8313 = vlaneseq
      %v8314 = vshrl.u32 %v8313, 7
      %v8315 = vsub.s32 0, %v8314
      %v8316 = vrot.slane %v8304, %v8315
      %v8318 = vadd.f32 %v8316, %v8309
      %v8319 = vadd.f32 %v8316, %v8310
      %v8320 = vadd.f32 %v8316, %v8311
      %v8321 = vlaneseq
      %v8322 = vshrl.u32 %v8321, 7
      %v8323 = vsub.s32 1, %v8322
      %v8324 = vrot.slane %v8302, %v8323
      %v8325 = vmul.f32 %v8324, %v7837
      %v8326 = vmul.f32 %v8324, %v7838
      %v8327 = vmul.f32 %v8324, %v7839
      %v8328 = vadd.f32 %v8318, %v8325
      %v8329 = vadd.f32 %v8319, %v8326
      %v8330 = vadd.f32 %v8320, %v8327
      %v8331 = vlaneseq
      %v8332 = vshrl.u32 %v8331, 7
      %v8333 = vsub.s32 2, %v8332
      %v8334 = vrot.slane %v8302, %v8333
      %v8335 = vmul.f32 %v8334, %v7990
      %v8336 = vmul.f32 %v8334, %v7995
      %v8337 = vmul.f32 %v8334, %v8000
      %v8338 = vadd.f32 %v8328, %v8335
      %v8339 = vadd.f32 %v8329, %v8336
      %v8340 = vadd.f32 %v8330, %v8337
      %v8341 = vmul.f32 %v8338, 0.5
      %v8342 = vmul.f32 %v8339, 0.5
      %v8343 = vmul.f32 %v8340, 0.5
      %v8344 = vmul.f32 %v8338, 0.70710677
      %v8345 = vmul.f32 %v8339, 0.70710677
      %v8346 = vmul.f32 %v8340, 0.70710677
      %v8347 = verf.f32.pop %v8344
      %v8348 = verf.f32.pop %v8345
      %v8349 = verf.f32.pop %v8346
      %v8350 = vadd.f32 %v8347, 1.0
      %v8351 = vadd.f32 %v8348, 1.0
      %v8352 = vadd.f32 %v8349, 1.0
      %v8353 = vmul.f32 %v8341, %v8350
      %v8354 = vmul.f32 %v8342, %v8351
      %v8355 = vmul.f32 %v8343, %v8352
      %s8356 = scalar_lea.vmem %s1, 1024
      %v8357 = vld [vmem:[%s8356] sm:$0xff]
      %v8358 = vld [vmem:[%s8356 + $0x8] sm:$0xff]
      %v8359 = vld [vmem:[%s8356 + $0x10] sm:$0xff]
      %v8360 = vld [vmem:[%s8356 + $0x18] sm:$0xff]
      %v8362 = vsel %vm361, %v8353, 0
      %v8365 = vsel %vm361, %v8354, 0
      %v8368 = vsel %vm361, %v8355, 0
      %8370 = vmatprep.subr.mxu0 0.0
      %8371 = vmatpush1.msra.mxu0 0.0
      %8372 = vmatprep.subr.mxu0 0.0
      %8373 = vmatpush1.msra.mxu0 0.0
      %8374 = vmatprep.subr.mxu0 0.0
      %8375 = vmatpush1.msra.mxu0 0.0
      %8376 = vmatprep.subr.mxu0 0.0
      %8377 = vmatpush1.msra.mxu0 0.0
      %8378 = vmatprep.subr.mxu0 0.0
      %8379 = vmatpush1.msra.mxu0 0.0
      %8380 = vmatprep.subr.mxu0 0.0
      %8381 = vmatpush1.msra.mxu0 0.0
      %8382 = vmatprep.subr.mxu0 0.0
      %8383 = vmatpush1.msra.mxu0 0.0
      %8384 = vmatprep.subr.mxu0 0.0
      %8385 = vmatpush1.msra.mxu0 0.0
      %8386 = vmatprep.subr.mxu0 0.0
      %8387 = vmatpush1.msra.mxu0 0.0
      %8388 = vmatprep.subr.mxu0 0.0
      %8389 = vmatpush1.msra.mxu0 0.0
      %8390 = vmatprep.subr.mxu0 0.0
      %8391 = vmatpush1.msra.mxu0 0.0
      %8392 = vmatprep.subr.mxu0 0.0
      %8393 = vmatpush1.msra.mxu0 0.0
      %8394 = vmatprep.subr.mxu0 0.0
      %8395 = vmatpush1.msra.mxu0 %v8360
      %8396 = vmatprep.subr.mxu0 0.0
      %8397 = vmatpush1.msra.mxu0 %v8359
      %8398 = vmatprep.subr.mxu0 0.0
      %8399 = vmatpush1.msra.mxu0 %v8358
      %8400 = vmatprep.subr.mxu0 0.0
      %8401 = vmatpush1.msra.mxu0 %v8357
      %8402 = vmatprep.subr.mxu0 0.0
      %8403 = vmatpush2.msra.mxu0 0.0
      %8404 = vmatprep.subr.mxu0 0.0
      %8405 = vmatpush2.msra.mxu0 0.0
      %8406 = vmatprep.subr.mxu0 0.0
      %8407 = vmatpush2.msra.mxu0 0.0
      %8408 = vmatprep.subr.mxu0 0.0
      %8409 = vmatpush2.msra.mxu0 0.0
      %8410 = vmatprep.subr.mxu0 0.0
      %8411 = vmatpush2.msra.mxu0 0.0
      %8412 = vmatprep.subr.mxu0 0.0
      %8413 = vmatpush2.msra.mxu0 0.0
      %8414 = vmatprep.subr.mxu0 0.0
      %8415 = vmatpush2.msra.mxu0 0.0
      %8416 = vmatprep.subr.mxu0 0.0
      %8417 = vmatpush2.msra.mxu0 0.0
      %8418 = vmatprep.subr.mxu0 0.0
      %8419 = vmatpush2.msra.mxu0 0.0
      %8420 = vmatprep.subr.mxu0 0.0
      %8421 = vmatpush2.msra.mxu0 0.0
      %8422 = vmatprep.subr.mxu0 0.0
      %8423 = vmatpush2.msra.mxu0 0.0
      %8424 = vmatprep.subr.mxu0 0.0
      %8425 = vmatpush2.msra.mxu0 0.0
      %8426 = vmatprep.subr.mxu0 0.0
      %8427 = vmatpush2.msra.mxu0 0.0
      %8428 = vmatprep.subr.mxu0 0.0
      %8429 = vmatpush2.msra.mxu0 0.0
      %8430 = vmatprep.subr.mxu0 0.0
      %8431 = vmatpush2.msra.mxu0 0.0
      %8432 = vmatprep.subr.mxu0 0.0
      %8433 = vmatpush2.msra.mxu0 0.0
      %8434 = vmatprep.mubr.f32.mxu0 0.0
      %8435 = vmatmul.mubr.f32.gmra.mxu0 %v8362
      %v8436 = vpop.f32.mrf.mxu0
      %v8437 = vadd.f32 0.0, %v8436
      %v8438 = vpop.f32.mrf.mxu0
      %8439 = vmatprep.mubr.f32.mxu0 0.0
      %8440 = vmatmul.mubr.f32.gmra.mxu0 %v8365
      %v8441 = vpop.f32.mrf.mxu0
      %v8442 = vadd.f32 0.0, %v8441
      %v8443 = vpop.f32.mrf.mxu0
      %8444 = vmatprep.mubr.f32.mxu0 0.0
      %8445 = vmatmul.mubr.f32.gmra.mxu0 %v8368
      %v8446 = vpop.f32.mrf.mxu0
      %v8447 = vadd.f32 0.0, %v8446
      %v8448 = vpop.f32.mrf.mxu0
      %8449 = vdwg.mxu0
      %v8450 = vadd.f32 %v8288, %v8437
      %v8451 = vadd.f32 %v8293, %v8442
      %v8452 = vadd.f32 %v8298, %v8447
      %s8453 = scalar_lea.vmem %s4, 60
      %v8454 = vld [vmem:[%s8453] sm:$0x7]
      %s8455 = scalar_lea.vmem %s5, 15
      %v8456 = vld [vmem:[%s8455] sm:$0x1]
      %v8457 = vlaneseq
      %v8458 = vshrl.u32 %v8457, 7
      %v8459 = vsub.s32 0, %v8458
      %v8460 = vrot.slane %v8454, %v8459
      %v8461 = vmul.f32 %v8460, %v7910
      %v8462 = vmul.f32 %v8460, %v7915
      %v8463 = vmul.f32 %v8460, %v7920
      %v8465 = vlaneseq
      %v8466 = vshrl.u32 %v8465, 7
      %v8467 = vsub.s32 0, %v8466
      %v8468 = vrot.slane %v8456, %v8467
      %v8470 = vadd.f32 %v8468, %v8461
      %v8471 = vadd.f32 %v8468, %v8462
      %v8472 = vadd.f32 %v8468, %v8463
      %v8473 = vlaneseq
      %v8474 = vshrl.u32 %v8473, 7
      %v8475 = vsub.s32 1, %v8474
      %v8476 = vrot.slane %v8454, %v8475
      %v8477 = vmul.f32 %v8476, %v7837
      %v8478 = vmul.f32 %v8476, %v7838
      %v8479 = vmul.f32 %v8476, %v7839
      %v8480 = vadd.f32 %v8470, %v8477
      %v8481 = vadd.f32 %v8471, %v8478
      %v8482 = vadd.f32 %v8472, %v8479
      %v8483 = vlaneseq
      %v8484 = vshrl.u32 %v8483, 7
      %v8485 = vsub.s32 2, %v8484
      %v8486 = vrot.slane %v8454, %v8485
      %v8487 = vmul.f32 %v8486, %v7990
      %v8488 = vmul.f32 %v8486, %v7995
      %v8489 = vmul.f32 %v8486, %v8000
      %v8490 = vadd.f32 %v8480, %v8487
      %v8491 = vadd.f32 %v8481, %v8488
      %v8492 = vadd.f32 %v8482, %v8489
      %v8493 = vmul.f32 %v8490, 0.5
      %v8494 = vmul.f32 %v8491, 0.5
      %v8495 = vmul.f32 %v8492, 0.5
      %v8496 = vmul.f32 %v8490, 0.70710677
      %v8497 = vmul.f32 %v8491, 0.70710677
      %v8498 = vmul.f32 %v8492, 0.70710677
      %v8499 = verf.f32.pop %v8496
      %v8500 = verf.f32.pop %v8497
      %v8501 = verf.f32.pop %v8498
      %v8502 = vadd.f32 %v8499, 1.0
      %v8503 = vadd.f32 %v8500, 1.0
      %v8504 = vadd.f32 %v8501, 1.0
      %v8505 = vmul.f32 %v8493, %v8502
      %v8506 = vmul.f32 %v8494, %v8503
      %v8507 = vmul.f32 %v8495, %v8504
      %s8508 = scalar_lea.vmem %s1, 1056
      %v8509 = vld [vmem:[%s8508] sm:$0xff]
      %v8510 = vld [vmem:[%s8508 + $0x8] sm:$0xff]
      %v8511 = vld [vmem:[%s8508 + $0x10] sm:$0xff]
      %v8512 = vld [vmem:[%s8508 + $0x18] sm:$0xff]
      %v8514 = vsel %vm361, %v8505, 0
      %v8517 = vsel %vm361, %v8506, 0
      %v8520 = vsel %vm361, %v8507, 0
      %8522 = vmatprep.subr.mxu0 0.0
      %8523 = vmatpush1.msra.mxu0 0.0
      %8524 = vmatprep.subr.mxu0 0.0
      %8525 = vmatpush1.msra.mxu0 0.0
      %8526 = vmatprep.subr.mxu0 0.0
      %8527 = vmatpush1.msra.mxu0 0.0
      %8528 = vmatprep.subr.mxu0 0.0
      %8529 = vmatpush1.msra.mxu0 0.0
      %8530 = vmatprep.subr.mxu0 0.0
      %8531 = vmatpush1.msra.mxu0 0.0
      %8532 = vmatprep.subr.mxu0 0.0
      %8533 = vmatpush1.msra.mxu0 0.0
      %8534 = vmatprep.subr.mxu0 0.0
      %8535 = vmatpush1.msra.mxu0 0.0
      %8536 = vmatprep.subr.mxu0 0.0
      %8537 = vmatpush1.msra.mxu0 0.0
      %8538 = vmatprep.subr.mxu0 0.0
      %8539 = vmatpush1.msra.mxu0 0.0
      %8540 = vmatprep.subr.mxu0 0.0
      %8541 = vmatpush1.msra.mxu0 0.0
      %8542 = vmatprep.subr.mxu0 0.0
      %8543 = vmatpush1.msra.mxu0 0.0
      %8544 = vmatprep.subr.mxu0 0.0
      %8545 = vmatpush1.msra.mxu0 0.0
      %8546 = vmatprep.subr.mxu0 0.0
      %8547 = vmatpush1.msra.mxu0 %v8512
      %8548 = vmatprep.subr.mxu0 0.0
      %8549 = vmatpush1.msra.mxu0 %v8511
      %8550 = vmatprep.subr.mxu0 0.0
      %8551 = vmatpush1.msra.mxu0 %v8510
      %8552 = vmatprep.subr.mxu0 0.0
      %8553 = vmatpush1.msra.mxu0 %v8509
      %8554 = vmatprep.subr.mxu0 0.0
      %8555 = vmatpush2.msra.mxu0 0.0
      %8556 = vmatprep.subr.mxu0 0.0
      %8557 = vmatpush2.msra.mxu0 0.0
      %8558 = vmatprep.subr.mxu0 0.0
      %8559 = vmatpush2.msra.mxu0 0.0
      %8560 = vmatprep.subr.mxu0 0.0
      %8561 = vmatpush2.msra.mxu0 0.0
      %8562 = vmatprep.subr.mxu0 0.0
      %8563 = vmatpush2.msra.mxu0 0.0
      %8564 = vmatprep.subr.mxu0 0.0
      %8565 = vmatpush2.msra.mxu0 0.0
      %8566 = vmatprep.subr.mxu0 0.0
      %8567 = vmatpush2.msra.mxu0 0.0
      %8568 = vmatprep.subr.mxu0 0.0
      %8569 = vmatpush2.msra.mxu0 0.0
      %8570 = vmatprep.subr.mxu0 0.0
      %8571 = vmatpush2.msra.mxu0 0.0
      %8572 = vmatprep.subr.mxu0 0.0
      %8573 = vmatpush2.msra.mxu0 0.0
      %8574 = vmatprep.subr.mxu0 0.0
      %8575 = vmatpush2.msra.mxu0 0.0
      %8576 = vmatprep.subr.mxu0 0.0
      %8577 = vmatpush2.msra.mxu0 0.0
      %8578 = vmatprep.subr.mxu0 0.0
      %8579 = vmatpush2.msra.mxu0 0.0
      %8580 = vmatprep.subr.mxu0 0.0
      %8581 = vmatpush2.msra.mxu0 0.0
      %8582 = vmatprep.subr.mxu0 0.0
      %8583 = vmatpush2.msra.mxu0 0.0
      %8584 = vmatprep.subr.mxu0 0.0
      %8585 = vmatpush2.msra.mxu0 0.0
      %8586 = vmatprep.mubr.f32.mxu0 0.0
      %8587 = vmatmul.mubr.f32.gmra.mxu0 %v8514
      %v8588 = vpop.f32.mrf.mxu0
      %v8589 = vadd.f32 0.0, %v8588
      %v8590 = vpop.f32.mrf.mxu0
      %8591 = vmatprep.mubr.f32.mxu0 0.0
      %8592 = vmatmul.mubr.f32.gmra.mxu0 %v8517
      %v8593 = vpop.f32.mrf.mxu0
      %v8594 = vadd.f32 0.0, %v8593
      %v8595 = vpop.f32.mrf.mxu0
      %8596 = vmatprep.mubr.f32.mxu0 0.0
      %8597 = vmatmul.mubr.f32.gmra.mxu0 %v8520
      %v8598 = vpop.f32.mrf.mxu0
      %v8599 = vadd.f32 0.0, %v8598
      %v8600 = vpop.f32.mrf.mxu0
      %8601 = vdwg.mxu0
      %v8602 = vadd.f32 %v8450, %v8589
      %v8603 = vadd.f32 %v8451, %v8594
      %v8604 = vadd.f32 %v8452, %v8599
      %s8605 = scalar_lea.vmem %s2, 45
      %v8606 = vld [vmem:[%s8605] sm:$0x1]
      %v8608 = vlaneseq
      %v8609 = vshrl.u32 %v8608, 7
      %v8610 = vsub.s32 0, %v8609
      %v8611 = vrot.slane %v8606, %v8610
      %v8613 = vadd.f32 %v8602, %v8611
      %v8614 = vadd.f32 %v8603, %v8611
      %v8615 = vadd.f32 %v8604, %v8611
      %v8616 = vsel %vm1135, %v7732, %v8613
      %v8617 = vsel %vm2642, %v7733, %v8614
      %v8618 = vsel %vm2643, %v7734, %v8615
      %v8619 = vadd.f32 %v8616, %v7671
      %v8620 = vadd.f32 %v8617, %v7672
      %v8621 = vadd.f32 %v8618, %v7673
      %s8622 = scalar_lea.vmem %s2, 30
      %v8623 = vld [vmem:[%s8622] sm:$0x1]
      %v8625 = vlaneseq
      %v8626 = vshrl.u32 %v8625, 7
      %v8627 = vsub.s32 0, %v8626
      %v8628 = vrot.slane %v8623, %v8627
      %v8630 = vmul.f32 %v7710, %v8628
      %v8631 = vmul.f32 %v7711, %v8628
      %v8632 = vmul.f32 %v7712, %v8628
      %s8633 = scalar_lea.vmem %s2, 31
      %v8634 = vld [vmem:[%s8633] sm:$0x1]
      %v8636 = vlaneseq
      %v8637 = vshrl.u32 %v8636, 7
      %v8638 = vsub.s32 0, %v8637
      %v8639 = vrot.slane %v8634, %v8638
      %v8641 = vadd.f32 %v8630, %v8639
      %v8642 = vadd.f32 %v8631, %v8639
      %v8643 = vadd.f32 %v8632, %v8639
      %s8644 = scalar_lea.vmem %s1, 768
      %v8645 = vld [vmem:[%s8644] sm:$0xff]
      %v8646 = vld [vmem:[%s8644 + $0x8] sm:$0xff]
      %v8647 = vld [vmem:[%s8644 + $0x10] sm:$0xff]
      %v8648 = vld [vmem:[%s8644 + $0x18] sm:$0xff]
      %s8649 = scalar_lea.vmem %s2, 46
      %v8650 = vld [vmem:[%s8649] sm:$0x1]
      %v8652 = vlaneseq
      %v8653 = vshrl.u32 %v8652, 7
      %v8654 = vsub.s32 0, %v8653
      %v8655 = vrot.slane %v8650, %v8654
      %v8658 = vsel %vm361, %v8641, 0
      %v8661 = vsel %vm361, %v8642, 0
      %v8664 = vsel %vm361, %v8643, 0
      %8666 = vmatprep.subr.mxu0 0.0
      %8667 = vmatpush1.msra.mxu0 0.0
      %8668 = vmatprep.subr.mxu0 0.0
      %8669 = vmatpush1.msra.mxu0 0.0
      %8670 = vmatprep.subr.mxu0 0.0
      %8671 = vmatpush1.msra.mxu0 0.0
      %8672 = vmatprep.subr.mxu0 0.0
      %8673 = vmatpush1.msra.mxu0 0.0
      %8674 = vmatprep.subr.mxu0 0.0
      %8675 = vmatpush1.msra.mxu0 0.0
      %8676 = vmatprep.subr.mxu0 0.0
      %8677 = vmatpush1.msra.mxu0 0.0
      %8678 = vmatprep.subr.mxu0 0.0
      %8679 = vmatpush1.msra.mxu0 0.0
      %8680 = vmatprep.subr.mxu0 0.0
      %8681 = vmatpush1.msra.mxu0 0.0
      %8682 = vmatprep.subr.mxu0 0.0
      %8683 = vmatpush1.msra.mxu0 0.0
      %8684 = vmatprep.subr.mxu0 0.0
      %8685 = vmatpush1.msra.mxu0 0.0
      %8686 = vmatprep.subr.mxu0 0.0
      %8687 = vmatpush1.msra.mxu0 0.0
      %8688 = vmatprep.subr.mxu0 0.0
      %8689 = vmatpush1.msra.mxu0 0.0
      %8690 = vmatprep.subr.mxu0 0.0
      %8691 = vmatpush1.msra.mxu0 %v8648
      %8692 = vmatprep.subr.mxu0 0.0
      %8693 = vmatpush1.msra.mxu0 %v8647
      %8694 = vmatprep.subr.mxu0 0.0
      %8695 = vmatpush1.msra.mxu0 %v8646
      %8696 = vmatprep.subr.mxu0 0.0
      %8697 = vmatpush1.msra.mxu0 %v8645
      %8698 = vmatprep.subr.mxu0 0.0
      %8699 = vmatpush2.msra.mxu0 0.0
      %8700 = vmatprep.subr.mxu0 0.0
      %8701 = vmatpush2.msra.mxu0 0.0
      %8702 = vmatprep.subr.mxu0 0.0
      %8703 = vmatpush2.msra.mxu0 0.0
      %8704 = vmatprep.subr.mxu0 0.0
      %8705 = vmatpush2.msra.mxu0 0.0
      %8706 = vmatprep.subr.mxu0 0.0
      %8707 = vmatpush2.msra.mxu0 0.0
      %8708 = vmatprep.subr.mxu0 0.0
      %8709 = vmatpush2.msra.mxu0 0.0
      %8710 = vmatprep.subr.mxu0 0.0
      %8711 = vmatpush2.msra.mxu0 0.0
      %8712 = vmatprep.subr.mxu0 0.0
      %8713 = vmatpush2.msra.mxu0 0.0
      %8714 = vmatprep.subr.mxu0 0.0
      %8715 = vmatpush2.msra.mxu0 0.0
      %8716 = vmatprep.subr.mxu0 0.0
      %8717 = vmatpush2.msra.mxu0 0.0
      %8718 = vmatprep.subr.mxu0 0.0
      %8719 = vmatpush2.msra.mxu0 0.0
      %8720 = vmatprep.subr.mxu0 0.0
      %8721 = vmatpush2.msra.mxu0 0.0
      %8722 = vmatprep.subr.mxu0 0.0
      %8723 = vmatpush2.msra.mxu0 0.0
      %8724 = vmatprep.subr.mxu0 0.0
      %8725 = vmatpush2.msra.mxu0 0.0
      %8726 = vmatprep.subr.mxu0 0.0
      %8727 = vmatpush2.msra.mxu0 0.0
      %8728 = vmatprep.subr.mxu0 0.0
      %8729 = vmatpush2.msra.mxu0 0.0
      %8730 = vmatprep.mubr.f32.mxu0 0.0
      %8731 = vmatmul.mubr.f32.gmra.mxu0 %v8658
      %v8732 = vpop.f32.mrf.mxu0
      %v8733 = vadd.f32 %v8655, %v8732
      %v8734 = vpop.f32.mrf.mxu0
      %8735 = vmatprep.mubr.f32.mxu0 0.0
      %8736 = vmatmul.mubr.f32.gmra.mxu0 %v8661
      %v8737 = vpop.f32.mrf.mxu0
      %v8738 = vadd.f32 %v8655, %v8737
      %v8739 = vpop.f32.mrf.mxu0
      %8740 = vmatprep.mubr.f32.mxu0 0.0
      %8741 = vmatmul.mubr.f32.gmra.mxu0 %v8664
      %v8742 = vpop.f32.mrf.mxu0
      %v8743 = vadd.f32 %v8655, %v8742
      %v8744 = vpop.f32.mrf.mxu0
      %8745 = vdwg.mxu0
      %v8746 = vmul.f32 %v8733, 0.5
      %v8747 = vmul.f32 %v8738, 0.5
      %v8748 = vmul.f32 %v8743, 0.5
      %v8749 = vmul.f32 %v8733, 0.70710677
      %v8750 = vmul.f32 %v8738, 0.70710677
      %v8751 = vmul.f32 %v8743, 0.70710677
      %v8752 = verf.f32.pop %v8749
      %v8753 = verf.f32.pop %v8750
      %v8754 = verf.f32.pop %v8751
      %v8755 = vadd.f32 %v8752, 1.0
      %v8756 = vadd.f32 %v8753, 1.0
      %v8757 = vadd.f32 %v8754, 1.0
      %v8758 = vmul.f32 %v8746, %v8755
      %v8759 = vmul.f32 %v8747, %v8756
      %v8760 = vmul.f32 %v8748, %v8757
      %s8761 = scalar_lea.vmem %s1, 800
      %v8762 = vld [vmem:[%s8761] sm:$0xff]
      %v8763 = vld [vmem:[%s8761 + $0x8] sm:$0xff]
      %v8764 = vld [vmem:[%s8761 + $0x10] sm:$0xff]
      %v8765 = vld [vmem:[%s8761 + $0x18] sm:$0xff]
      %s8766 = scalar_lea.vmem %s2, 47
      %v8767 = vld [vmem:[%s8766] sm:$0x1]
      %v8769 = vlaneseq
      %v8770 = vshrl.u32 %v8769, 7
      %v8771 = vsub.s32 0, %v8770
      %v8772 = vrot.slane %v8767, %v8771
      %v8775 = vsel %vm361, %v8758, 0
      %v8778 = vsel %vm361, %v8759, 0
      %v8781 = vsel %vm361, %v8760, 0
      %8783 = vmatprep.subr.mxu0 0.0
      %8784 = vmatpush1.msra.mxu0 0.0
      %8785 = vmatprep.subr.mxu0 0.0
      %8786 = vmatpush1.msra.mxu0 0.0
      %8787 = vmatprep.subr.mxu0 0.0
      %8788 = vmatpush1.msra.mxu0 0.0
      %8789 = vmatprep.subr.mxu0 0.0
      %8790 = vmatpush1.msra.mxu0 0.0
      %8791 = vmatprep.subr.mxu0 0.0
      %8792 = vmatpush1.msra.mxu0 0.0
      %8793 = vmatprep.subr.mxu0 0.0
      %8794 = vmatpush1.msra.mxu0 0.0
      %8795 = vmatprep.subr.mxu0 0.0
      %8796 = vmatpush1.msra.mxu0 0.0
      %8797 = vmatprep.subr.mxu0 0.0
      %8798 = vmatpush1.msra.mxu0 0.0
      %8799 = vmatprep.subr.mxu0 0.0
      %8800 = vmatpush1.msra.mxu0 0.0
      %8801 = vmatprep.subr.mxu0 0.0
      %8802 = vmatpush1.msra.mxu0 0.0
      %8803 = vmatprep.subr.mxu0 0.0
      %8804 = vmatpush1.msra.mxu0 0.0
      %8805 = vmatprep.subr.mxu0 0.0
      %8806 = vmatpush1.msra.mxu0 0.0
      %8807 = vmatprep.subr.mxu0 0.0
      %8808 = vmatpush1.msra.mxu0 %v8765
      %8809 = vmatprep.subr.mxu0 0.0
      %8810 = vmatpush1.msra.mxu0 %v8764
      %8811 = vmatprep.subr.mxu0 0.0
      %8812 = vmatpush1.msra.mxu0 %v8763
      %8813 = vmatprep.subr.mxu0 0.0
      %8814 = vmatpush1.msra.mxu0 %v8762
      %8815 = vmatprep.subr.mxu0 0.0
      %8816 = vmatpush2.msra.mxu0 0.0
      %8817 = vmatprep.subr.mxu0 0.0
      %8818 = vmatpush2.msra.mxu0 0.0
      %8819 = vmatprep.subr.mxu0 0.0
      %8820 = vmatpush2.msra.mxu0 0.0
      %8821 = vmatprep.subr.mxu0 0.0
      %8822 = vmatpush2.msra.mxu0 0.0
      %8823 = vmatprep.subr.mxu0 0.0
      %8824 = vmatpush2.msra.mxu0 0.0
      %8825 = vmatprep.subr.mxu0 0.0
      %8826 = vmatpush2.msra.mxu0 0.0
      %8827 = vmatprep.subr.mxu0 0.0
      %8828 = vmatpush2.msra.mxu0 0.0
      %8829 = vmatprep.subr.mxu0 0.0
      %8830 = vmatpush2.msra.mxu0 0.0
      %8831 = vmatprep.subr.mxu0 0.0
      %8832 = vmatpush2.msra.mxu0 0.0
      %8833 = vmatprep.subr.mxu0 0.0
      %8834 = vmatpush2.msra.mxu0 0.0
      %8835 = vmatprep.subr.mxu0 0.0
      %8836 = vmatpush2.msra.mxu0 0.0
      %8837 = vmatprep.subr.mxu0 0.0
      %8838 = vmatpush2.msra.mxu0 0.0
      %8839 = vmatprep.subr.mxu0 0.0
      %8840 = vmatpush2.msra.mxu0 0.0
      %8841 = vmatprep.subr.mxu0 0.0
      %8842 = vmatpush2.msra.mxu0 0.0
      %8843 = vmatprep.subr.mxu0 0.0
      %8844 = vmatpush2.msra.mxu0 0.0
      %8845 = vmatprep.subr.mxu0 0.0
      %8846 = vmatpush2.msra.mxu0 0.0
      %8847 = vmatprep.mubr.f32.mxu0 0.0
      %8848 = vmatmul.mubr.f32.gmra.mxu0 %v8775
      %v8849 = vpop.f32.mrf.mxu0
      %v8850 = vadd.f32 %v8772, %v8849
      %v8851 = vpop.f32.mrf.mxu0
      %8852 = vmatprep.mubr.f32.mxu0 0.0
      %8853 = vmatmul.mubr.f32.gmra.mxu0 %v8778
      %v8854 = vpop.f32.mrf.mxu0
      %v8855 = vadd.f32 %v8772, %v8854
      %v8856 = vpop.f32.mrf.mxu0
      %8857 = vmatprep.mubr.f32.mxu0 0.0
      %8858 = vmatmul.mubr.f32.gmra.mxu0 %v8781
      %v8859 = vpop.f32.mrf.mxu0
      %v8860 = vadd.f32 %v8772, %v8859
      %v8861 = vpop.f32.mrf.mxu0
      %8862 = vdwg.mxu0
      %v8863 = vadd.f32 %v8850, %v8619
      %v8864 = vadd.f32 %v8855, %v8620
      %v8865 = vadd.f32 %v8860, %v8621
      %8866 = vst.msk [vmem:[%s251] sm:$0xff] %vm361, %v8863
      %8867 = vst.msk [vmem:[%s251 + $0x8] sm:$0xff] %vm361, %v8864
      %8868 = vst.msk [vmem:[%s251 + $0x10] sm:$0x1] %vm368, %v8865
      %p8869 = scmp.lt.s32.totalorder %s17, 1
      %s8870 = scalar_select %p8869, %s17, 1
      %s8871 = smul.addr %s8870, 3
      %s8872 = smul.addr %s8871, 8
      %s8873 = scalar_lea.vmem %s6, %s8872
      // Predicated region
      $region45: #{vit_encoder_forward.1} parent=43 // pred_check
        %p8874 = pneg %p166
      $region46: #{vit_encoder_forward.1} parent=43 // pred_check_branch
        %8876 = sbr.rel (%p8874) target = $region48
      $region47: #{vit_encoder_forward.1} parent=43 // pred_region
        _
      $region48: #{vit_encoder_forward.1} parent=43 // pred_fallthru
        _
    $region44: #{vit_encoder_forward.1} parent=5 // pred_fallthru
      _
    %p8877 = scmp.le.s32.totalorder 2, %s12
    // Predicated region
    $region49: #{vit_encoder_forward.1} parent=5 // pred_check
      %p8878 = pneg %p8877
    $region50: #{vit_encoder_forward.1} parent=5 // pred_check_branch
      %8880 = sbr.rel (%p8878) target = $region52
    $region51: #{vit_encoder_forward.1} parent=5 // pred_region
      %s8881 = ssub.s32 %s12, 2
      // Predicated region
      $region53: #{vit_encoder_forward.1} parent=51 // pred_check
        %p8882 = pneg %p172
      $region54: #{vit_encoder_forward.1} parent=51 // pred_check_branch
        %8884 = sbr.rel (%p8882) target = $region56
      $region55: #{vit_encoder_forward.1} parent=51 // pred_region
        %p8885 = scmp.lt.s32.totalorder %s18, 1
        %s8886 = scalar_select %p8885, %s18, 1
        %s8887 = smul.addr %s8886, 3
        %s8888 = smul.addr %s8887, 8
        %s8889 = scalar_lea.vmem %s6, %s8888
      $region56: #{vit_encoder_forward.1} parent=51 // pred_fallthru
        _
    $region52: #{vit_encoder_forward.1} parent=5 // pred_fallthru
      _
  $region6: #{vit_encoder_forward.1} parent=0 // loop_footer
    %s16 = sadd.s32 1, %s12
  $region7: #{vit_encoder_forward.1} parent=0 // loop_footer_branch
    %11 = sbr.rel target = $region3
  $region8: #{vit_encoder_forward.1} parent=0 // loop_exit
    _

</llo_original>
